<compile_context>
chip_gen: v7x
topology: tpu7x:2x2x1
jax: 0.10.0
libtpu: 0.0.40
codegen_flags: <defaults>
</compile_context>

<pallas_src>
import functools

import numpy as np

import jax
import jax.numpy as jnp
from jax import lax
from jax.experimental import pallas as pl
from jax.experimental.pallas import tpu as pltpu


def _full_spec(shape):
    rank = len(shape)

    def idx(i):
        return (0,) * rank

    return pl.BlockSpec(shape, idx)


def _se_res2net_block2d_kernel(*refs, B, H, W, Cin, Co, Cb, scale, k, dil, pad,
                               has_shortcut, eps):
    f32 = jnp.float32
    bf16 = jnp.bfloat16
    BH = B * H
    CoW = Co * W
    CbW = Cb * W
    npos = float(BH * W)

    it = iter(refs)
    x_ref = next(it)
    k1_ref, b1_ref, g1_ref, be1_ref = next(it), next(it), next(it), next(it)
    if has_shortcut:
        ks_ref, bs_ref = next(it), next(it)
    m_ref, bb_ref, gb_ref, beb_ref = next(it), next(it), next(it), next(it)
    k2_ref, b2_ref, g2_ref, be2_ref = next(it), next(it), next(it), next(it)
    p_ref, pT_ref, pbr_ref, pbrT_ref = next(it), next(it), next(it), next(it)
    q_ref, qT_ref = next(it), next(it)
    wse1_ref, bse1_ref, wse2_ref, bse2_ref = next(it), next(it), next(it), next(it)
    o_ref = next(it)

    def batchnorm(val, gamma, beta, p, pT):
        # Training-mode BN (biased variance) over all (b, h, w) positions per channel.
        # One pass over `val`; per-channel reduce / broadcast via tiny 0/1 matmuls.
        s = jnp.concatenate([jnp.sum(val, axis=0, keepdims=True),
                             jnp.sum(val * val, axis=0, keepdims=True)], axis=0)
        ch = jnp.dot(s, p, preferred_element_type=f32)                # (2, C)
        lane = jnp.dot(ch, pT, preferred_element_type=f32) / npos     # (2, lanes)
        mean = lane[0:1]
        var = jnp.maximum(lane[1:2] - mean * mean, 0.0)
        inv = lax.rsqrt(var + eps)
        return (val - mean) * (inv * gamma) + beta

    # ---------------- tdnn1 (1x1 conv + bias + ReLU + BN) and shortcut: slab matmuls ----------------
    x = x_ref[...]                                                     # (BH, Cin*W) bf16
    y1 = jnp.dot(x, k1_ref[...], preferred_element_type=f32) + b1_ref[...]
    y1 = jnp.maximum(y1, 0.0)
    y1 = batchnorm(y1, g1_ref[...], be1_ref[...], p_ref[...], pT_ref[...])

    if has_shortcut:
        resid = jnp.dot(x, ks_ref[...], preferred_element_type=f32) + bs_ref[...]
    else:
        resid = x.astype(f32)

    # ---------------- Res2Net branches ----------------
    # reflect pad along time by value-concat; the d1-shift (with reflect) + channel mixing is
    # folded into static (Cb*W, Cb*W) tap matrices -> k matmuls per (branch, batch element).
    pieces = [y1[:, 0:CbW]]                                            # chunk 0 passes through
    prev = None
    for s in range(1, scale):
        xb = y1[:, s * CbW:(s + 1) * CbW]
        if s >= 2:
            xb = xb + prev
        outs = []
        for b in range(B):
            xbb = xb[b * H:(b + 1) * H]                                # (H, Cb*W)
            top = [xbb[t:t + 1] for t in range(pad, 0, -1)]            # reflect (no edge repeat)
            bot = [xbb[H - 1 - t:H - t] for t in range(1, pad + 1)]
            xp = jnp.concatenate(top + [xbb] + bot, axis=0).astype(bf16)   # (H + 2*pad, Cb*W)
            acc = jnp.zeros((H, CbW), f32)
            for i in range(k):
                acc = acc + jnp.dot(xp[i * dil:i * dil + H], m_ref[(s - 1) * k + i],
                                    preferred_element_type=f32)
            outs.append(jnp.maximum(acc + bb_ref[s - 1], 0.0))
        zb = outs[0] if B == 1 else jnp.concatenate(outs, axis=0)      # (BH, Cb*W)
        zb = batchnorm(zb, gb_ref[s - 1], beb_ref[s - 1], pbr_ref[...], pbrT_ref[...])
        prev = zb
        pieces.append(zb)

    # ---------------- tdnn2 (1x1 conv + bias + ReLU + BN) ----------------
    z = pieces[0] if scale == 1 else jnp.concatenate(pieces, axis=1)   # (BH, Co*W)
    t = jnp.dot(z.astype(bf16), k2_ref[...], preferred_element_type=f32) + b2_ref[...]
    t = jnp.maximum(t, 0.0)
    t = batchnorm(t, g2_ref[...], be2_ref[...], p_ref[...], pT_ref[...])

    # ---------------- SE block (batched over B) + residual add, single output store ----------------
    u = jnp.concatenate([jnp.sum(t[b * H:(b + 1) * H], axis=0, keepdims=True)
                         for b in range(B)], axis=0)                   # (B, Co*W)
    sq = jnp.dot(u, q_ref[...], preferred_element_type=f32) / float(H * Co)   # (B, W)
    h1 = jnp.maximum(jnp.dot(sq, wse1_ref[...], preferred_element_type=f32) + bse1_ref[...], 0.0)
    sc = jnp.dot(h1, wse2_ref[...], preferred_element_type=f32) + bse2_ref[...]
    sc = 1.0 / (1.0 + jnp.exp(-sc))                                    # sigmoid, (B, W)
    sc_l = jnp.dot(sc, qT_ref[...], preferred_element_type=f32)        # (B, Co*W) tiled per channel
    if B == 1:
        sc_rows = jnp.broadcast_to(sc_l, (H, CoW))
    else:
        sc_rows = jnp.concatenate(
            [jnp.broadcast_to(sc_l[b:b + 1], (H, CoW)) for b in range(B)], axis=0)
    o_ref[...] = t * sc_rows + resid


def se_res2net_block2d(x, params, *, scale, kernel_size, dilation, eps=1e-5):
    """Forward of SERes2NetBlock2d.  x: (B, d1, d2, in_channels), d1 must be 40."""
    f32 = jnp.float32
    bf16 = jnp.bfloat16
    B, d1, d2, Cin = x.shape
    Co = params["tdnn1"]["w"].shape[0]
    assert Co % scale == 0
    Cb = Co // scale
    k, dil = kernel_size, dilation
    assert (dil * (k - 1)) % 2 == 0, "even effective kernel would change the length"
    pad = (dil * (k - 1)) // 2
    H, W = d2, d1                          # conv NCHW view: H = time (d2), W = d1
    assert pad < H and pad < W             # torch reflect-pad constraint
    has_shortcut = "shortcut" in params
    assert params["se"]["w1"].shape[1] == W, "SEBlock2D hard-codes Linear(40, 5)"
    BH, CoW, CbW = B * H, Co * W, Cb * W

    # Single layout change at the block boundary:
    # (B, d1, d2, ch) -> rows = (b, d2), lanes = c*W + w (channel-major, 640 lanes -> dense vregs).
    x3 = jnp.transpose(x, (0, 2, 3, 1)).reshape(BH, Cin * W).astype(bf16)

    eyeW = jnp.eye(W, dtype=f32)

    def kron_pointwise(w):                 # torch (Co', Ci', 1, 1) -> (Ci'*W, Co'*W)
        co, ci = w.shape[0], w.shape[1]
        return jnp.kron(jnp.transpose(w.reshape(co, ci)), eyeW)

    def lane_vec(v):                       # per-channel vector -> (1, C*W) lane vector
        return jnp.repeat(v.astype(f32), W).reshape(1, -1)

    # Static d1-shift / reflect selection matrices (numpy, trace-time constants).
    half = (k - 1) // 2
    offs = (np.arange(k) - half) * dil
    wsrc = np.arange(W)[None, :] + offs[:, None]            # (k, W_out)
    wsrc = np.where(wsrc < 0, -wsrc, wsrc)
    wsrc = np.where(wsrc >= W, 2 * (W - 1) - wsrc, wsrc)
    sel = (np.arange(W)[:, None, None] == wsrc[None, :, :]).astype(np.float32)  # (W_in, j, W_out)

    def tap_mats(wconv):                   # torch (Cb, Cb, k, k) -> (k, Cb*W, Cb*W)
        mats = []
        for i in range(k):
            m = jnp.zeros((CbW, CbW), f32)
            for j in range(k):
                m = m + jnp.kron(jnp.transpose(wconv[:, :, i, j]), jnp.asarray(sel[:, j, :]))
            mats.append(m)
        return jnp.stack(mats)

    p1 = params["tdnn1"]
    operands = [x3, kron_pointwise(p1["w"]).astype(bf16),
                lane_vec(p1["b"]), lane_vec(p1["gamma"]), lane_vec(p1["beta"])]
    if has_shortcut:
        ps = params["shortcut"]
        operands += [kron_pointwise(ps["w"]).astype(bf16), lane_vec(ps["b"])]

    mtaps = jnp.concatenate([tap_mats(p["w"]) for p in params["res2net"]], axis=0).astype(bf16)
    bbl = jnp.stack([lane_vec(p["b"]) for p in params["res2net"]])        # (scale-1, 1, Cb*W)
    gbl = jnp.stack([lane_vec(p["gamma"]) for p in params["res2net"]])
    bebl = jnp.stack([lane_vec(p["beta"]) for p in params["res2net"]])

    p2 = params["tdnn2"]
    k2 = kron_pointwise(p2["w"]).astype(bf16)

    # 0/1 reduce / broadcast matrices: per-channel (BN) and per-d1 (SE squeeze & scale).
    p_full = jnp.kron(jnp.eye(Co, dtype=f32), jnp.ones((W, 1), f32))      # (Co*W, Co)
    p_br = jnp.kron(jnp.eye(Cb, dtype=f32), jnp.ones((W, 1), f32))        # (Cb*W, Cb)
    q_mat = jnp.kron(jnp.ones((Co, 1), f32), eyeW)                        # (Co*W, W)

    se = params["se"]
    operands += [mtaps, bbl, gbl, bebl,
                 k2, lane_vec(p2["b"]), lane_vec(p2["gamma"]), lane_vec(p2["beta"]),
                 p_full, jnp.transpose(p_full), p_br, jnp.transpose(p_br),
                 q_mat, jnp.transpose(q_mat),
                 jnp.transpose(se["w1"]).astype(f32), se["b1"].reshape(1, -1).astype(f32),
                 jnp.transpose(se["w2"]).astype(f32), se["b2"].reshape(1, -1).astype(f32)]

    kern = functools.partial(
        _se_res2net_block2d_kernel,
        B=B, H=H, W=W, Cin=Cin, Co=Co, Cb=Cb, scale=scale,
        k=k, dil=dil, pad=pad, has_shortcut=has_shortcut, eps=eps)

    out2 = pl.pallas_call(
        kern,
        out_shape=jax.ShapeDtypeStruct((BH, CoW), f32),
        grid=(1,),
        in_specs=[_full_spec(a.shape) for a in operands],
        out_specs=_full_spec((BH, CoW)),
        compiler_params=pltpu.CompilerParams(
            dimension_semantics=("arbitrary",),
            vmem_limit_bytes=32 * 1024 * 1024),
    )(*operands)

    out = out2.reshape(B, H, Co, W)
    return jnp.transpose(out, (0, 3, 1, 2))            # back to (B, d1, d2, Co)


def init_params(key, *, in_channels, out_channels, scale, kernel_size):
    """Deterministic parameters in the torch layouts the module uses."""
    Cb = out_channels // scale
    keys = iter(jax.random.split(key, 32))

    def nrm(shape, s=0.1):
        return (s * jax.random.normal(next(keys), shape)).astype(jnp.float32)

    def d2block_p(ci, co, k):
        return {"w": nrm((co, ci, k, k)), "b": nrm((co,)),
                "gamma": jnp.ones((co,), jnp.float32),
                "beta": jnp.zeros((co,), jnp.float32)}

    p = {
        "tdnn1": d2block_p(in_channels, out_channels, 1),
        "res2net": [d2block_p(Cb, Cb, kernel_size) for _ in range(scale - 1)],
        "tdnn2": d2block_p(out_channels, out_channels, 1),
        # SEBlock2D ignores se_channels: hard-coded Linear(40, 5) / Linear(5, 40)
        "se": {"w1": nrm((5, 40)), "b1": nrm((5,)),
               "w2": nrm((40, 5)), "b2": nrm((40,))},
    }
    if in_channels != out_channels:
        p["shortcut"] = {"w": nrm((out_channels, in_channels, 1, 1)),
                         "b": nrm((out_channels,))}
    return p


if __name__ == "__main__":
    # d1 must be 40 because SEBlock2D hard-codes nn.Linear(40, 5).
    B, d1, d2 = 2, 40, 16
    in_channels, out_channels = 8, 16
    scale, kernel_size, dilation = 4, 3, 2

    key = jax.random.PRNGKey(0)
    pkey, xkey = jax.random.split(key)
    params = init_params(pkey, in_channels=in_channels, out_channels=out_channels,
                         scale=scale, kernel_size=kernel_size)
    x = jax.random.normal(xkey, (B, d1, d2, in_channels), dtype=jnp.float32)

    fwd = jax.jit(functools.partial(se_res2net_block2d, scale=scale,
                                    kernel_size=kernel_size, dilation=dilation))
    out = jax.block_until_ready(fwd(x, params))

    assert out.shape == (B, d1, d2, out_channels), out.shape
    assert bool(jnp.all(jnp.isfinite(out)))
    print("KERNEL_OK")
</pallas_src>

<mosaic_0001>
module attributes {stable_mosaic.version = 11 : i64} {
  func.func @_se_res2net_block2d_kernel(%arg0: i32, %arg1: memref<32x320xbf16, #tpu.memory_space<vmem>>, %arg2: memref<320x640xbf16, #tpu.memory_space<vmem>>, %arg3: memref<1x640xf32, #tpu.memory_space<vmem>>, %arg4: memref<1x640xf32, #tpu.memory_space<vmem>>, %arg5: memref<1x640xf32, #tpu.memory_space<vmem>>, %arg6: memref<320x640xbf16, #tpu.memory_space<vmem>>, %arg7: memref<1x640xf32, #tpu.memory_space<vmem>>, %arg8: memref<9x160x160xbf16, #tpu.memory_space<vmem>>, %arg9: memref<3x1x160xf32, #tpu.memory_space<vmem>>, %arg10: memref<3x1x160xf32, #tpu.memory_space<vmem>>, %arg11: memref<3x1x160xf32, #tpu.memory_space<vmem>>, %arg12: memref<640x640xbf16, #tpu.memory_space<vmem>>, %arg13: memref<1x640xf32, #tpu.memory_space<vmem>>, %arg14: memref<1x640xf32, #tpu.memory_space<vmem>>, %arg15: memref<1x640xf32, #tpu.memory_space<vmem>>, %arg16: memref<640x16xf32, #tpu.memory_space<vmem>>, %arg17: memref<16x640xf32, #tpu.memory_space<vmem>>, %arg18: memref<160x4xf32, #tpu.memory_space<vmem>>, %arg19: memref<4x160xf32, #tpu.memory_space<vmem>>, %arg20: memref<640x40xf32, #tpu.memory_space<vmem>>, %arg21: memref<40x640xf32, #tpu.memory_space<vmem>>, %arg22: memref<40x5xf32, #tpu.memory_space<vmem>>, %arg23: memref<1x5xf32, #tpu.memory_space<vmem>>, %arg24: memref<5x40xf32, #tpu.memory_space<vmem>>, %arg25: memref<1x40xf32, #tpu.memory_space<vmem>>, %arg26: memref<32x640xf32, #tpu.memory_space<vmem>>) attributes {dimension_semantics = [#tpu.dimension_semantics<arbitrary>], iteration_bounds = array<i64: 1>, scalar_prefetch = 0 : i64, scratch_operands = 0 : i64, tpu.core_type = #tpu.core_type<tc>, window_params = [{pipeline_mode = #tpu.pipeline_mode<synchronous>, transform_indices = @transform_0, window_bounds = array<i64: 32, 320>}, {pipeline_mode = #tpu.pipeline_mode<synchronous>, transform_indices = @transform_1, window_bounds = array<i64: 320, 640>}, {pipeline_mode = #tpu.pipeline_mode<synchronous>, transform_indices = @transform_2, window_bounds = array<i64: 1, 640>}, {pipeline_mode = #tpu.pipeline_mode<synchronous>, transform_indices = @transform_3, window_bounds = array<i64: 1, 640>}, {pipeline_mode = #tpu.pipeline_mode<synchronous>, transform_indices = @transform_4, window_bounds = array<i64: 1, 640>}, {pipeline_mode = #tpu.pipeline_mode<synchronous>, transform_indices = @transform_5, window_bounds = array<i64: 320, 640>}, {pipeline_mode = #tpu.pipeline_mode<synchronous>, transform_indices = @transform_6, window_bounds = array<i64: 1, 640>}, {pipeline_mode = #tpu.pipeline_mode<synchronous>, transform_indices = @transform_7, window_bounds = array<i64: 9, 160, 160>}, {pipeline_mode = #tpu.pipeline_mode<synchronous>, transform_indices = @transform_8, window_bounds = array<i64: 3, 1, 160>}, {pipeline_mode = #tpu.pipeline_mode<synchronous>, transform_indices = @transform_9, window_bounds = array<i64: 3, 1, 160>}, {pipeline_mode = #tpu.pipeline_mode<synchronous>, transform_indices = @transform_10, window_bounds = array<i64: 3, 1, 160>}, {pipeline_mode = #tpu.pipeline_mode<synchronous>, transform_indices = @transform_11, window_bounds = array<i64: 640, 640>}, {pipeline_mode = #tpu.pipeline_mode<synchronous>, transform_indices = @transform_12, window_bounds = array<i64: 1, 640>}, {pipeline_mode = #tpu.pipeline_mode<synchronous>, transform_indices = @transform_13, window_bounds = array<i64: 1, 640>}, {pipeline_mode = #tpu.pipeline_mode<synchronous>, transform_indices = @transform_14, window_bounds = array<i64: 1, 640>}, {pipeline_mode = #tpu.pipeline_mode<synchronous>, transform_indices = @transform_15, window_bounds = array<i64: 640, 16>}, {pipeline_mode = #tpu.pipeline_mode<synchronous>, transform_indices = @transform_16, window_bounds = array<i64: 16, 640>}, {pipeline_mode = #tpu.pipeline_mode<synchronous>, transform_indices = @transform_17, window_bounds = array<i64: 160, 4>}, {pipeline_mode = #tpu.pipeline_mode<synchronous>, transform_indices = @transform_18, window_bounds = array<i64: 4, 160>}, {pipeline_mode = #tpu.pipeline_mode<synchronous>, transform_indices = @transform_19, window_bounds = array<i64: 640, 40>}, {pipeline_mode = #tpu.pipeline_mode<synchronous>, transform_indices = @transform_20, window_bounds = array<i64: 40, 640>}, {pipeline_mode = #tpu.pipeline_mode<synchronous>, transform_indices = @transform_21, window_bounds = array<i64: 40, 5>}, {pipeline_mode = #tpu.pipeline_mode<synchronous>, transform_indices = @transform_22, window_bounds = array<i64: 1, 5>}, {pipeline_mode = #tpu.pipeline_mode<synchronous>, transform_indices = @transform_23, window_bounds = array<i64: 5, 40>}, {pipeline_mode = #tpu.pipeline_mode<synchronous>, transform_indices = @transform_24, window_bounds = array<i64: 1, 40>}, {pipeline_mode = #tpu.pipeline_mode<synchronous>, transform_indices = @transform_25, window_bounds = array<i64: 32, 640>}]} {
    %c0 = arith.constant 0 : index
    %c0_0 = arith.constant 0 : index
    %0 = vector.load %arg1[%c0, %c0_0] : memref<32x320xbf16, #tpu.memory_space<vmem>>, vector<32x320xbf16>
    %c0_1 = arith.constant 0 : index
    %c0_2 = arith.constant 0 : index
    %1 = vector.load %arg2[%c0_1, %c0_2] : memref<320x640xbf16, #tpu.memory_space<vmem>>, vector<320x640xbf16>
    %cst = arith.constant dense<0.000000e+00> : vector<32x640xf32>
    %2 = tpu.matmul %0, %1, %cst {dimension_numbers = #tpu.dot_dimension_numbers<[1], [0], [0], [1], [0, 0, 1, 1], [], []>} : vector<32x320xbf16>, vector<320x640xbf16>, vector<32x640xf32> -> vector<32x640xf32>
    %c0_3 = arith.constant 0 : index
    %c0_4 = arith.constant 0 : index
    %3 = vector.load %arg3[%c0_3, %c0_4] : memref<1x640xf32, #tpu.memory_space<vmem>>, vector<1x640xf32>
    %4 = vector.broadcast %3 : vector<1x640xf32> to vector<32x640xf32>
    %5 = arith.addf %2, %4 : vector<32x640xf32>
    %cst_5 = arith.constant 0.000000e+00 : f32
    %6 = vector.broadcast %cst_5 : f32 to vector<32x640xf32>
    %7 = arith.maximumf %5, %6 : vector<32x640xf32>
    %c0_6 = arith.constant 0 : index
    %c0_7 = arith.constant 0 : index
    %8 = vector.load %arg4[%c0_6, %c0_7] : memref<1x640xf32, #tpu.memory_space<vmem>>, vector<1x640xf32>
    %c0_8 = arith.constant 0 : index
    %c0_9 = arith.constant 0 : index
    %9 = vector.load %arg5[%c0_8, %c0_9] : memref<1x640xf32, #tpu.memory_space<vmem>>, vector<1x640xf32>
    %c0_10 = arith.constant 0 : index
    %c0_11 = arith.constant 0 : index
    %10 = vector.load %arg16[%c0_10, %c0_11] : memref<640x16xf32, #tpu.memory_space<vmem>>, vector<640x16xf32>
    %c0_12 = arith.constant 0 : index
    %c0_13 = arith.constant 0 : index
    %11 = vector.load %arg17[%c0_12, %c0_13] : memref<16x640xf32, #tpu.memory_space<vmem>>, vector<16x640xf32>
    %cst_14 = arith.constant dense<0.000000e+00> : vector<640xf32>
    %12 = vector.multi_reduction <add>, %7, %cst_14 [0] : vector<32x640xf32> to vector<640xf32>
    %13 = vector.shape_cast %12 : vector<640xf32> to vector<1x640xf32>
    %14 = arith.mulf %7, %7 : vector<32x640xf32>
    %cst_15 = arith.constant dense<0.000000e+00> : vector<640xf32>
    %15 = vector.multi_reduction <add>, %14, %cst_15 [0] : vector<32x640xf32> to vector<640xf32>
    %16 = vector.shape_cast %15 : vector<640xf32> to vector<1x640xf32>
    %17 = tpu.concatenate %13, %16 in 0 : vector<1x640xf32>, vector<1x640xf32> -> vector<2x640xf32>
    %cst_16 = arith.constant dense<0.000000e+00> : vector<2x16xf32>
    %18 = tpu.matmul %17, %10, %cst_16 {dimension_numbers = #tpu.dot_dimension_numbers<[1], [0], [0], [1], [0, 0, 1, 1], [], []>} : vector<2x640xf32>, vector<640x16xf32>, vector<2x16xf32> -> vector<2x16xf32>
    %cst_17 = arith.constant dense<0.000000e+00> : vector<2x640xf32>
    %19 = tpu.matmul %18, %11, %cst_17 {dimension_numbers = #tpu.dot_dimension_numbers<[1], [0], [0], [1], [0, 0, 1, 1], [], []>} : vector<2x16xf32>, vector<16x640xf32>, vector<2x640xf32> -> vector<2x640xf32>
    %cst_18 = arith.constant 1.280000e+03 : f32
    %20 = vector.broadcast %cst_18 : f32 to vector<2x640xf32>
    %21 = arith.divf %19, %20 : vector<2x640xf32>
    %22 = vector.extract_strided_slice %21 {offsets = [0, 0], sizes = [1, 640], strides = [1, 1]} : vector<2x640xf32> to vector<1x640xf32>
    %23 = vector.extract_strided_slice %21 {offsets = [1, 0], sizes = [1, 640], strides = [1, 1]} : vector<2x640xf32> to vector<1x640xf32>
    %24 = arith.mulf %22, %22 : vector<1x640xf32>
    %25 = arith.subf %23, %24 : vector<1x640xf32>
    %cst_19 = arith.constant 0.000000e+00 : f32
    %26 = vector.broadcast %cst_19 : f32 to vector<1x640xf32>
    %27 = arith.maximumf %25, %26 : vector<1x640xf32>
    %cst_20 = arith.constant 9.99999974E-6 : f32
    %28 = vector.broadcast %cst_20 : f32 to vector<1x640xf32>
    %29 = arith.addf %27, %28 : vector<1x640xf32>
    %30 = math.rsqrt %29 : vector<1x640xf32>
    %31 = vector.broadcast %22 : vector<1x640xf32> to vector<32x640xf32>
    %32 = arith.subf %7, %31 : vector<32x640xf32>
    %33 = arith.mulf %30, %8 : vector<1x640xf32>
    %34 = vector.broadcast %33 : vector<1x640xf32> to vector<32x640xf32>
    %35 = arith.mulf %32, %34 : vector<32x640xf32>
    %36 = vector.broadcast %9 : vector<1x640xf32> to vector<32x640xf32>
    %37 = arith.addf %35, %36 : vector<32x640xf32>
    %c0_21 = arith.constant 0 : index
    %c0_22 = arith.constant 0 : index
    %38 = vector.load %arg6[%c0_21, %c0_22] : memref<320x640xbf16, #tpu.memory_space<vmem>>, vector<320x640xbf16>
    %cst_23 = arith.constant dense<0.000000e+00> : vector<32x640xf32>
    %39 = tpu.matmul %0, %38, %cst_23 {dimension_numbers = #tpu.dot_dimension_numbers<[1], [0], [0], [1], [0, 0, 1, 1], [], []>} : vector<32x320xbf16>, vector<320x640xbf16>, vector<32x640xf32> -> vector<32x640xf32>
    %c0_24 = arith.constant 0 : index
    %c0_25 = arith.constant 0 : index
    %40 = vector.load %arg7[%c0_24, %c0_25] : memref<1x640xf32, #tpu.memory_space<vmem>>, vector<1x640xf32>
    %41 = vector.broadcast %40 : vector<1x640xf32> to vector<32x640xf32>
    %42 = arith.addf %39, %41 : vector<32x640xf32>
    %43 = vector.extract_strided_slice %37 {offsets = [0, 0], sizes = [32, 160], strides = [1, 1]} : vector<32x640xf32> to vector<32x160xf32>
    %44 = vector.extract_strided_slice %37 {offsets = [0, 160], sizes = [32, 160], strides = [1, 1]} : vector<32x640xf32> to vector<32x160xf32>
    %45 = vector.extract_strided_slice %44 {offsets = [0, 0], sizes = [16, 160], strides = [1, 1]} : vector<32x160xf32> to vector<16x160xf32>
    %46 = vector.extract_strided_slice %45 {offsets = [2, 0], sizes = [1, 160], strides = [1, 1]} : vector<16x160xf32> to vector<1x160xf32>
    %47 = vector.extract_strided_slice %45 {offsets = [1, 0], sizes = [1, 160], strides = [1, 1]} : vector<16x160xf32> to vector<1x160xf32>
    %48 = vector.extract_strided_slice %45 {offsets = [14, 0], sizes = [1, 160], strides = [1, 1]} : vector<16x160xf32> to vector<1x160xf32>
    %49 = vector.extract_strided_slice %45 {offsets = [13, 0], sizes = [1, 160], strides = [1, 1]} : vector<16x160xf32> to vector<1x160xf32>
    %50 = tpu.concatenate %46, %47, %45, %48, %49 in 0 : vector<1x160xf32>, vector<1x160xf32>, vector<16x160xf32>, vector<1x160xf32>, vector<1x160xf32> -> vector<20x160xf32>
    %51 = arith.truncf %50 : vector<20x160xf32> to vector<20x160xbf16>
    %cst_26 = arith.constant 0.000000e+00 : f32
    %52 = vector.broadcast %cst_26 : f32 to vector<16x160xf32>
    %53 = vector.extract_strided_slice %51 {offsets = [0, 0], sizes = [16, 160], strides = [1, 1]} : vector<20x160xbf16> to vector<16x160xbf16>
    %c0_27 = arith.constant 0 : index
    %c0_28 = arith.constant 0 : index
    %c0_29 = arith.constant 0 : index
    %54 = vector.load %arg8[%c0_27, %c0_28, %c0_29] : memref<9x160x160xbf16, #tpu.memory_space<vmem>>, vector<1x160x160xbf16>
    %55 = vector.shape_cast %54 : vector<1x160x160xbf16> to vector<160x160xbf16>
    %cst_30 = arith.constant dense<0.000000e+00> : vector<16x160xf32>
    %56 = tpu.matmul %53, %55, %cst_30 {dimension_numbers = #tpu.dot_dimension_numbers<[1], [0], [0], [1], [0, 0, 1, 1], [], []>} : vector<16x160xbf16>, vector<160x160xbf16>, vector<16x160xf32> -> vector<16x160xf32>
    %57 = arith.addf %52, %56 : vector<16x160xf32>
    %58 = vector.extract_strided_slice %51 {offsets = [2, 0], sizes = [16, 160], strides = [1, 1]} : vector<20x160xbf16> to vector<16x160xbf16>
    %c1 = arith.constant 1 : index
    %c0_31 = arith.constant 0 : index
    %c0_32 = arith.constant 0 : index
    %59 = vector.load %arg8[%c1, %c0_31, %c0_32] : memref<9x160x160xbf16, #tpu.memory_space<vmem>>, vector<1x160x160xbf16>
    %60 = vector.shape_cast %59 : vector<1x160x160xbf16> to vector<160x160xbf16>
    %cst_33 = arith.constant dense<0.000000e+00> : vector<16x160xf32>
    %61 = tpu.matmul %58, %60, %cst_33 {dimension_numbers = #tpu.dot_dimension_numbers<[1], [0], [0], [1], [0, 0, 1, 1], [], []>} : vector<16x160xbf16>, vector<160x160xbf16>, vector<16x160xf32> -> vector<16x160xf32>
    %62 = arith.addf %57, %61 : vector<16x160xf32>
    %63 = vector.extract_strided_slice %51 {offsets = [4, 0], sizes = [16, 160], strides = [1, 1]} : vector<20x160xbf16> to vector<16x160xbf16>
    %c2 = arith.constant 2 : index
    %c0_34 = arith.constant 0 : index
    %c0_35 = arith.constant 0 : index
    %64 = vector.load %arg8[%c2, %c0_34, %c0_35] : memref<9x160x160xbf16, #tpu.memory_space<vmem>>, vector<1x160x160xbf16>
    %65 = vector.shape_cast %64 : vector<1x160x160xbf16> to vector<160x160xbf16>
    %cst_36 = arith.constant dense<0.000000e+00> : vector<16x160xf32>
    %66 = tpu.matmul %63, %65, %cst_36 {dimension_numbers = #tpu.dot_dimension_numbers<[1], [0], [0], [1], [0, 0, 1, 1], [], []>} : vector<16x160xbf16>, vector<160x160xbf16>, vector<16x160xf32> -> vector<16x160xf32>
    %67 = arith.addf %62, %66 : vector<16x160xf32>
    %c0_37 = arith.constant 0 : index
    %c0_38 = arith.constant 0 : index
    %c0_39 = arith.constant 0 : index
    %68 = vector.load %arg9[%c0_37, %c0_38, %c0_39] : memref<3x1x160xf32, #tpu.memory_space<vmem>>, vector<1x1x160xf32>
    %69 = vector.shape_cast %68 : vector<1x1x160xf32> to vector<1x160xf32>
    %70 = vector.broadcast %69 : vector<1x160xf32> to vector<16x160xf32>
    %71 = arith.addf %67, %70 : vector<16x160xf32>
    %cst_40 = arith.constant 0.000000e+00 : f32
    %72 = vector.broadcast %cst_40 : f32 to vector<16x160xf32>
    %73 = arith.maximumf %71, %72 : vector<16x160xf32>
    %74 = vector.extract_strided_slice %44 {offsets = [16, 0], sizes = [16, 160], strides = [1, 1]} : vector<32x160xf32> to vector<16x160xf32>
    %75 = vector.extract_strided_slice %74 {offsets = [2, 0], sizes = [1, 160], strides = [1, 1]} : vector<16x160xf32> to vector<1x160xf32>
    %76 = vector.extract_strided_slice %74 {offsets = [1, 0], sizes = [1, 160], strides = [1, 1]} : vector<16x160xf32> to vector<1x160xf32>
    %77 = vector.extract_strided_slice %74 {offsets = [14, 0], sizes = [1, 160], strides = [1, 1]} : vector<16x160xf32> to vector<1x160xf32>
    %78 = vector.extract_strided_slice %74 {offsets = [13, 0], sizes = [1, 160], strides = [1, 1]} : vector<16x160xf32> to vector<1x160xf32>
    %79 = tpu.concatenate %75, %76, %74, %77, %78 in 0 : vector<1x160xf32>, vector<1x160xf32>, vector<16x160xf32>, vector<1x160xf32>, vector<1x160xf32> -> vector<20x160xf32>
    %80 = arith.truncf %79 : vector<20x160xf32> to vector<20x160xbf16>
    %cst_41 = arith.constant 0.000000e+00 : f32
    %81 = vector.broadcast %cst_41 : f32 to vector<16x160xf32>
    %82 = vector.extract_strided_slice %80 {offsets = [0, 0], sizes = [16, 160], strides = [1, 1]} : vector<20x160xbf16> to vector<16x160xbf16>
    %c0_42 = arith.constant 0 : index
    %c0_43 = arith.constant 0 : index
    %c0_44 = arith.constant 0 : index
    %83 = vector.load %arg8[%c0_42, %c0_43, %c0_44] : memref<9x160x160xbf16, #tpu.memory_space<vmem>>, vector<1x160x160xbf16>
    %84 = vector.shape_cast %83 : vector<1x160x160xbf16> to vector<160x160xbf16>
    %cst_45 = arith.constant dense<0.000000e+00> : vector<16x160xf32>
    %85 = tpu.matmul %82, %84, %cst_45 {dimension_numbers = #tpu.dot_dimension_numbers<[1], [0], [0], [1], [0, 0, 1, 1], [], []>} : vector<16x160xbf16>, vector<160x160xbf16>, vector<16x160xf32> -> vector<16x160xf32>
    %86 = arith.addf %81, %85 : vector<16x160xf32>
    %87 = vector.extract_strided_slice %80 {offsets = [2, 0], sizes = [16, 160], strides = [1, 1]} : vector<20x160xbf16> to vector<16x160xbf16>
    %c1_46 = arith.constant 1 : index
    %c0_47 = arith.constant 0 : index
    %c0_48 = arith.constant 0 : index
    %88 = vector.load %arg8[%c1_46, %c0_47, %c0_48] : memref<9x160x160xbf16, #tpu.memory_space<vmem>>, vector<1x160x160xbf16>
    %89 = vector.shape_cast %88 : vector<1x160x160xbf16> to vector<160x160xbf16>
    %cst_49 = arith.constant dense<0.000000e+00> : vector<16x160xf32>
    %90 = tpu.matmul %87, %89, %cst_49 {dimension_numbers = #tpu.dot_dimension_numbers<[1], [0], [0], [1], [0, 0, 1, 1], [], []>} : vector<16x160xbf16>, vector<160x160xbf16>, vector<16x160xf32> -> vector<16x160xf32>
    %91 = arith.addf %86, %90 : vector<16x160xf32>
    %92 = vector.extract_strided_slice %80 {offsets = [4, 0], sizes = [16, 160], strides = [1, 1]} : vector<20x160xbf16> to vector<16x160xbf16>
    %c2_50 = arith.constant 2 : index
    %c0_51 = arith.constant 0 : index
    %c0_52 = arith.constant 0 : index
    %93 = vector.load %arg8[%c2_50, %c0_51, %c0_52] : memref<9x160x160xbf16, #tpu.memory_space<vmem>>, vector<1x160x160xbf16>
    %94 = vector.shape_cast %93 : vector<1x160x160xbf16> to vector<160x160xbf16>
    %cst_53 = arith.constant dense<0.000000e+00> : vector<16x160xf32>
    %95 = tpu.matmul %92, %94, %cst_53 {dimension_numbers = #tpu.dot_dimension_numbers<[1], [0], [0], [1], [0, 0, 1, 1], [], []>} : vector<16x160xbf16>, vector<160x160xbf16>, vector<16x160xf32> -> vector<16x160xf32>
    %96 = arith.addf %91, %95 : vector<16x160xf32>
    %c0_54 = arith.constant 0 : index
    %c0_55 = arith.constant 0 : index
    %c0_56 = arith.constant 0 : index
    %97 = vector.load %arg9[%c0_54, %c0_55, %c0_56] : memref<3x1x160xf32, #tpu.memory_space<vmem>>, vector<1x1x160xf32>
    %98 = vector.shape_cast %97 : vector<1x1x160xf32> to vector<1x160xf32>
    %99 = vector.broadcast %98 : vector<1x160xf32> to vector<16x160xf32>
    %100 = arith.addf %96, %99 : vector<16x160xf32>
    %cst_57 = arith.constant 0.000000e+00 : f32
    %101 = vector.broadcast %cst_57 : f32 to vector<16x160xf32>
    %102 = arith.maximumf %100, %101 : vector<16x160xf32>
    %103 = tpu.concatenate %73, %102 in 0 : vector<16x160xf32>, vector<16x160xf32> -> vector<32x160xf32>
    %c0_58 = arith.constant 0 : index
    %c0_59 = arith.constant 0 : index
    %c0_60 = arith.constant 0 : index
    %104 = vector.load %arg10[%c0_58, %c0_59, %c0_60] : memref<3x1x160xf32, #tpu.memory_space<vmem>>, vector<1x1x160xf32>
    %105 = vector.shape_cast %104 : vector<1x1x160xf32> to vector<1x160xf32>
    %c0_61 = arith.constant 0 : index
    %c0_62 = arith.constant 0 : index
    %c0_63 = arith.constant 0 : index
    %106 = vector.load %arg11[%c0_61, %c0_62, %c0_63] : memref<3x1x160xf32, #tpu.memory_space<vmem>>, vector<1x1x160xf32>
    %107 = vector.shape_cast %106 : vector<1x1x160xf32> to vector<1x160xf32>
    %c0_64 = arith.constant 0 : index
    %c0_65 = arith.constant 0 : index
    %108 = vector.load %arg18[%c0_64, %c0_65] : memref<160x4xf32, #tpu.memory_space<vmem>>, vector<160x4xf32>
    %c0_66 = arith.constant 0 : index
    %c0_67 = arith.constant 0 : index
    %109 = vector.load %arg19[%c0_66, %c0_67] : memref<4x160xf32, #tpu.memory_space<vmem>>, vector<4x160xf32>
    %cst_68 = arith.constant dense<0.000000e+00> : vector<160xf32>
    %110 = vector.multi_reduction <add>, %103, %cst_68 [0] : vector<32x160xf32> to vector<160xf32>
    %111 = vector.shape_cast %110 : vector<160xf32> to vector<1x160xf32>
    %112 = arith.mulf %103, %103 : vector<32x160xf32>
    %cst_69 = arith.constant dense<0.000000e+00> : vector<160xf32>
    %113 = vector.multi_reduction <add>, %112, %cst_69 [0] : vector<32x160xf32> to vector<160xf32>
    %114 = vector.shape_cast %113 : vector<160xf32> to vector<1x160xf32>
    %115 = tpu.concatenate %111, %114 in 0 : vector<1x160xf32>, vector<1x160xf32> -> vector<2x160xf32>
    %cst_70 = arith.constant dense<0.000000e+00> : vector<2x4xf32>
    %116 = tpu.matmul %115, %108, %cst_70 {dimension_numbers = #tpu.dot_dimension_numbers<[1], [0], [0], [1], [0, 0, 1, 1], [], []>} : vector<2x160xf32>, vector<160x4xf32>, vector<2x4xf32> -> vector<2x4xf32>
    %cst_71 = arith.constant dense<0.000000e+00> : vector<2x160xf32>
    %117 = tpu.matmul %116, %109, %cst_71 {dimension_numbers = #tpu.dot_dimension_numbers<[1], [0], [0], [1], [0, 0, 1, 1], [], []>} : vector<2x4xf32>, vector<4x160xf32>, vector<2x160xf32> -> vector<2x160xf32>
    %cst_72 = arith.constant 1.280000e+03 : f32
    %118 = vector.broadcast %cst_72 : f32 to vector<2x160xf32>
    %119 = arith.divf %117, %118 : vector<2x160xf32>
    %120 = vector.extract_strided_slice %119 {offsets = [0, 0], sizes = [1, 160], strides = [1, 1]} : vector<2x160xf32> to vector<1x160xf32>
    %121 = vector.extract_strided_slice %119 {offsets = [1, 0], sizes = [1, 160], strides = [1, 1]} : vector<2x160xf32> to vector<1x160xf32>
    %122 = arith.mulf %120, %120 : vector<1x160xf32>
    %123 = arith.subf %121, %122 : vector<1x160xf32>
    %cst_73 = arith.constant 0.000000e+00 : f32
    %124 = vector.broadcast %cst_73 : f32 to vector<1x160xf32>
    %125 = arith.maximumf %123, %124 : vector<1x160xf32>
    %cst_74 = arith.constant 9.99999974E-6 : f32
    %126 = vector.broadcast %cst_74 : f32 to vector<1x160xf32>
    %127 = arith.addf %125, %126 : vector<1x160xf32>
    %128 = math.rsqrt %127 : vector<1x160xf32>
    %129 = vector.broadcast %120 : vector<1x160xf32> to vector<32x160xf32>
    %130 = arith.subf %103, %129 : vector<32x160xf32>
    %131 = arith.mulf %128, %105 : vector<1x160xf32>
    %132 = vector.broadcast %131 : vector<1x160xf32> to vector<32x160xf32>
    %133 = arith.mulf %130, %132 : vector<32x160xf32>
    %134 = vector.broadcast %107 : vector<1x160xf32> to vector<32x160xf32>
    %135 = arith.addf %133, %134 : vector<32x160xf32>
    %136 = vector.extract_strided_slice %37 {offsets = [0, 320], sizes = [32, 160], strides = [1, 1]} : vector<32x640xf32> to vector<32x160xf32>
    %137 = arith.addf %136, %135 : vector<32x160xf32>
    %138 = vector.extract_strided_slice %137 {offsets = [0, 0], sizes = [16, 160], strides = [1, 1]} : vector<32x160xf32> to vector<16x160xf32>
    %139 = vector.extract_strided_slice %138 {offsets = [2, 0], sizes = [1, 160], strides = [1, 1]} : vector<16x160xf32> to vector<1x160xf32>
    %140 = vector.extract_strided_slice %138 {offsets = [1, 0], sizes = [1, 160], strides = [1, 1]} : vector<16x160xf32> to vector<1x160xf32>
    %141 = vector.extract_strided_slice %138 {offsets = [14, 0], sizes = [1, 160], strides = [1, 1]} : vector<16x160xf32> to vector<1x160xf32>
    %142 = vector.extract_strided_slice %138 {offsets = [13, 0], sizes = [1, 160], strides = [1, 1]} : vector<16x160xf32> to vector<1x160xf32>
    %143 = tpu.concatenate %139, %140, %138, %141, %142 in 0 : vector<1x160xf32>, vector<1x160xf32>, vector<16x160xf32>, vector<1x160xf32>, vector<1x160xf32> -> vector<20x160xf32>
    %144 = arith.truncf %143 : vector<20x160xf32> to vector<20x160xbf16>
    %cst_75 = arith.constant 0.000000e+00 : f32
    %145 = vector.broadcast %cst_75 : f32 to vector<16x160xf32>
    %146 = vector.extract_strided_slice %144 {offsets = [0, 0], sizes = [16, 160], strides = [1, 1]} : vector<20x160xbf16> to vector<16x160xbf16>
    %c3 = arith.constant 3 : index
    %c0_76 = arith.constant 0 : index
    %c0_77 = arith.constant 0 : index
    %147 = vector.load %arg8[%c3, %c0_76, %c0_77] : memref<9x160x160xbf16, #tpu.memory_space<vmem>>, vector<1x160x160xbf16>
    %148 = vector.shape_cast %147 : vector<1x160x160xbf16> to vector<160x160xbf16>
    %cst_78 = arith.constant dense<0.000000e+00> : vector<16x160xf32>
    %149 = tpu.matmul %146, %148, %cst_78 {dimension_numbers = #tpu.dot_dimension_numbers<[1], [0], [0], [1], [0, 0, 1, 1], [], []>} : vector<16x160xbf16>, vector<160x160xbf16>, vector<16x160xf32> -> vector<16x160xf32>
    %150 = arith.addf %145, %149 : vector<16x160xf32>
    %151 = vector.extract_strided_slice %144 {offsets = [2, 0], sizes = [16, 160], strides = [1, 1]} : vector<20x160xbf16> to vector<16x160xbf16>
    %c4 = arith.constant 4 : index
    %c0_79 = arith.constant 0 : index
    %c0_80 = arith.constant 0 : index
    %152 = vector.load %arg8[%c4, %c0_79, %c0_80] : memref<9x160x160xbf16, #tpu.memory_space<vmem>>, vector<1x160x160xbf16>
    %153 = vector.shape_cast %152 : vector<1x160x160xbf16> to vector<160x160xbf16>
    %cst_81 = arith.constant dense<0.000000e+00> : vector<16x160xf32>
    %154 = tpu.matmul %151, %153, %cst_81 {dimension_numbers = #tpu.dot_dimension_numbers<[1], [0], [0], [1], [0, 0, 1, 1], [], []>} : vector<16x160xbf16>, vector<160x160xbf16>, vector<16x160xf32> -> vector<16x160xf32>
    %155 = arith.addf %150, %154 : vector<16x160xf32>
    %156 = vector.extract_strided_slice %144 {offsets = [4, 0], sizes = [16, 160], strides = [1, 1]} : vector<20x160xbf16> to vector<16x160xbf16>
    %c5 = arith.constant 5 : index
    %c0_82 = arith.constant 0 : index
    %c0_83 = arith.constant 0 : index
    %157 = vector.load %arg8[%c5, %c0_82, %c0_83] : memref<9x160x160xbf16, #tpu.memory_space<vmem>>, vector<1x160x160xbf16>
    %158 = vector.shape_cast %157 : vector<1x160x160xbf16> to vector<160x160xbf16>
    %cst_84 = arith.constant dense<0.000000e+00> : vector<16x160xf32>
    %159 = tpu.matmul %156, %158, %cst_84 {dimension_numbers = #tpu.dot_dimension_numbers<[1], [0], [0], [1], [0, 0, 1, 1], [], []>} : vector<16x160xbf16>, vector<160x160xbf16>, vector<16x160xf32> -> vector<16x160xf32>
    %160 = arith.addf %155, %159 : vector<16x160xf32>
    %c1_85 = arith.constant 1 : index
    %c0_86 = arith.constant 0 : index
    %c0_87 = arith.constant 0 : index
    %161 = vector.load %arg9[%c1_85, %c0_86, %c0_87] : memref<3x1x160xf32, #tpu.memory_space<vmem>>, vector<1x1x160xf32>
    %162 = vector.shape_cast %161 : vector<1x1x160xf32> to vector<1x160xf32>
    %163 = vector.broadcast %162 : vector<1x160xf32> to vector<16x160xf32>
    %164 = arith.addf %160, %163 : vector<16x160xf32>
    %cst_88 = arith.constant 0.000000e+00 : f32
    %165 = vector.broadcast %cst_88 : f32 to vector<16x160xf32>
    %166 = arith.maximumf %164, %165 : vector<16x160xf32>
    %167 = vector.extract_strided_slice %137 {offsets = [16, 0], sizes = [16, 160], strides = [1, 1]} : vector<32x160xf32> to vector<16x160xf32>
    %168 = vector.extract_strided_slice %167 {offsets = [2, 0], sizes = [1, 160], strides = [1, 1]} : vector<16x160xf32> to vector<1x160xf32>
    %169 = vector.extract_strided_slice %167 {offsets = [1, 0], sizes = [1, 160], strides = [1, 1]} : vector<16x160xf32> to vector<1x160xf32>
    %170 = vector.extract_strided_slice %167 {offsets = [14, 0], sizes = [1, 160], strides = [1, 1]} : vector<16x160xf32> to vector<1x160xf32>
    %171 = vector.extract_strided_slice %167 {offsets = [13, 0], sizes = [1, 160], strides = [1, 1]} : vector<16x160xf32> to vector<1x160xf32>
    %172 = tpu.concatenate %168, %169, %167, %170, %171 in 0 : vector<1x160xf32>, vector<1x160xf32>, vector<16x160xf32>, vector<1x160xf32>, vector<1x160xf32> -> vector<20x160xf32>
    %173 = arith.truncf %172 : vector<20x160xf32> to vector<20x160xbf16>
    %cst_89 = arith.constant 0.000000e+00 : f32
    %174 = vector.broadcast %cst_89 : f32 to vector<16x160xf32>
    %175 = vector.extract_strided_slice %173 {offsets = [0, 0], sizes = [16, 160], strides = [1, 1]} : vector<20x160xbf16> to vector<16x160xbf16>
    %c3_90 = arith.constant 3 : index
    %c0_91 = arith.constant 0 : index
    %c0_92 = arith.constant 0 : index
    %176 = vector.load %arg8[%c3_90, %c0_91, %c0_92] : memref<9x160x160xbf16, #tpu.memory_space<vmem>>, vector<1x160x160xbf16>
    %177 = vector.shape_cast %176 : vector<1x160x160xbf16> to vector<160x160xbf16>
    %cst_93 = arith.constant dense<0.000000e+00> : vector<16x160xf32>
    %178 = tpu.matmul %175, %177, %cst_93 {dimension_numbers = #tpu.dot_dimension_numbers<[1], [0], [0], [1], [0, 0, 1, 1], [], []>} : vector<16x160xbf16>, vector<160x160xbf16>, vector<16x160xf32> -> vector<16x160xf32>
    %179 = arith.addf %174, %178 : vector<16x160xf32>
    %180 = vector.extract_strided_slice %173 {offsets = [2, 0], sizes = [16, 160], strides = [1, 1]} : vector<20x160xbf16> to vector<16x160xbf16>
    %c4_94 = arith.constant 4 : index
    %c0_95 = arith.constant 0 : index
    %c0_96 = arith.constant 0 : index
    %181 = vector.load %arg8[%c4_94, %c0_95, %c0_96] : memref<9x160x160xbf16, #tpu.memory_space<vmem>>, vector<1x160x160xbf16>
    %182 = vector.shape_cast %181 : vector<1x160x160xbf16> to vector<160x160xbf16>
    %cst_97 = arith.constant dense<0.000000e+00> : vector<16x160xf32>
    %183 = tpu.matmul %180, %182, %cst_97 {dimension_numbers = #tpu.dot_dimension_numbers<[1], [0], [0], [1], [0, 0, 1, 1], [], []>} : vector<16x160xbf16>, vector<160x160xbf16>, vector<16x160xf32> -> vector<16x160xf32>
    %184 = arith.addf %179, %183 : vector<16x160xf32>
    %185 = vector.extract_strided_slice %173 {offsets = [4, 0], sizes = [16, 160], strides = [1, 1]} : vector<20x160xbf16> to vector<16x160xbf16>
    %c5_98 = arith.constant 5 : index
    %c0_99 = arith.constant 0 : index
    %c0_100 = arith.constant 0 : index
    %186 = vector.load %arg8[%c5_98, %c0_99, %c0_100] : memref<9x160x160xbf16, #tpu.memory_space<vmem>>, vector<1x160x160xbf16>
    %187 = vector.shape_cast %186 : vector<1x160x160xbf16> to vector<160x160xbf16>
    %cst_101 = arith.constant dense<0.000000e+00> : vector<16x160xf32>
    %188 = tpu.matmul %185, %187, %cst_101 {dimension_numbers = #tpu.dot_dimension_numbers<[1], [0], [0], [1], [0, 0, 1, 1], [], []>} : vector<16x160xbf16>, vector<160x160xbf16>, vector<16x160xf32> -> vector<16x160xf32>
    %189 = arith.addf %184, %188 : vector<16x160xf32>
    %c1_102 = arith.constant 1 : index
    %c0_103 = arith.constant 0 : index
    %c0_104 = arith.constant 0 : index
    %190 = vector.load %arg9[%c1_102, %c0_103, %c0_104] : memref<3x1x160xf32, #tpu.memory_space<vmem>>, vector<1x1x160xf32>
    %191 = vector.shape_cast %190 : vector<1x1x160xf32> to vector<1x160xf32>
    %192 = vector.broadcast %191 : vector<1x160xf32> to vector<16x160xf32>
    %193 = arith.addf %189, %192 : vector<16x160xf32>
    %cst_105 = arith.constant 0.000000e+00 : f32
    %194 = vector.broadcast %cst_105 : f32 to vector<16x160xf32>
    %195 = arith.maximumf %193, %194 : vector<16x160xf32>
    %196 = tpu.concatenate %166, %195 in 0 : vector<16x160xf32>, vector<16x160xf32> -> vector<32x160xf32>
    %c1_106 = arith.constant 1 : index
    %c0_107 = arith.constant 0 : index
    %c0_108 = arith.constant 0 : index
    %197 = vector.load %arg10[%c1_106, %c0_107, %c0_108] : memref<3x1x160xf32, #tpu.memory_space<vmem>>, vector<1x1x160xf32>
    %198 = vector.shape_cast %197 : vector<1x1x160xf32> to vector<1x160xf32>
    %c1_109 = arith.constant 1 : index
    %c0_110 = arith.constant 0 : index
    %c0_111 = arith.constant 0 : index
    %199 = vector.load %arg11[%c1_109, %c0_110, %c0_111] : memref<3x1x160xf32, #tpu.memory_space<vmem>>, vector<1x1x160xf32>
    %200 = vector.shape_cast %199 : vector<1x1x160xf32> to vector<1x160xf32>
    %c0_112 = arith.constant 0 : index
    %c0_113 = arith.constant 0 : index
    %201 = vector.load %arg18[%c0_112, %c0_113] : memref<160x4xf32, #tpu.memory_space<vmem>>, vector<160x4xf32>
    %c0_114 = arith.constant 0 : index
    %c0_115 = arith.constant 0 : index
    %202 = vector.load %arg19[%c0_114, %c0_115] : memref<4x160xf32, #tpu.memory_space<vmem>>, vector<4x160xf32>
    %cst_116 = arith.constant dense<0.000000e+00> : vector<160xf32>
    %203 = vector.multi_reduction <add>, %196, %cst_116 [0] : vector<32x160xf32> to vector<160xf32>
    %204 = vector.shape_cast %203 : vector<160xf32> to vector<1x160xf32>
    %205 = arith.mulf %196, %196 : vector<32x160xf32>
    %cst_117 = arith.constant dense<0.000000e+00> : vector<160xf32>
    %206 = vector.multi_reduction <add>, %205, %cst_117 [0] : vector<32x160xf32> to vector<160xf32>
    %207 = vector.shape_cast %206 : vector<160xf32> to vector<1x160xf32>
    %208 = tpu.concatenate %204, %207 in 0 : vector<1x160xf32>, vector<1x160xf32> -> vector<2x160xf32>
    %cst_118 = arith.constant dense<0.000000e+00> : vector<2x4xf32>
    %209 = tpu.matmul %208, %201, %cst_118 {dimension_numbers = #tpu.dot_dimension_numbers<[1], [0], [0], [1], [0, 0, 1, 1], [], []>} : vector<2x160xf32>, vector<160x4xf32>, vector<2x4xf32> -> vector<2x4xf32>
    %cst_119 = arith.constant dense<0.000000e+00> : vector<2x160xf32>
    %210 = tpu.matmul %209, %202, %cst_119 {dimension_numbers = #tpu.dot_dimension_numbers<[1], [0], [0], [1], [0, 0, 1, 1], [], []>} : vector<2x4xf32>, vector<4x160xf32>, vector<2x160xf32> -> vector<2x160xf32>
    %cst_120 = arith.constant 1.280000e+03 : f32
    %211 = vector.broadcast %cst_120 : f32 to vector<2x160xf32>
    %212 = arith.divf %210, %211 : vector<2x160xf32>
    %213 = vector.extract_strided_slice %212 {offsets = [0, 0], sizes = [1, 160], strides = [1, 1]} : vector<2x160xf32> to vector<1x160xf32>
    %214 = vector.extract_strided_slice %212 {offsets = [1, 0], sizes = [1, 160], strides = [1, 1]} : vector<2x160xf32> to vector<1x160xf32>
    %215 = arith.mulf %213, %213 : vector<1x160xf32>
    %216 = arith.subf %214, %215 : vector<1x160xf32>
    %cst_121 = arith.constant 0.000000e+00 : f32
    %217 = vector.broadcast %cst_121 : f32 to vector<1x160xf32>
    %218 = arith.maximumf %216, %217 : vector<1x160xf32>
    %cst_122 = arith.constant 9.99999974E-6 : f32
    %219 = vector.broadcast %cst_122 : f32 to vector<1x160xf32>
    %220 = arith.addf %218, %219 : vector<1x160xf32>
    %221 = math.rsqrt %220 : vector<1x160xf32>
    %222 = vector.broadcast %213 : vector<1x160xf32> to vector<32x160xf32>
    %223 = arith.subf %196, %222 : vector<32x160xf32>
    %224 = arith.mulf %221, %198 : vector<1x160xf32>
    %225 = vector.broadcast %224 : vector<1x160xf32> to vector<32x160xf32>
    %226 = arith.mulf %223, %225 : vector<32x160xf32>
    %227 = vector.broadcast %200 : vector<1x160xf32> to vector<32x160xf32>
    %228 = arith.addf %226, %227 : vector<32x160xf32>
    %229 = vector.extract_strided_slice %37 {offsets = [0, 480], sizes = [32, 160], strides = [1, 1]} : vector<32x640xf32> to vector<32x160xf32>
    %230 = arith.addf %229, %228 : vector<32x160xf32>
    %231 = vector.extract_strided_slice %230 {offsets = [0, 0], sizes = [16, 160], strides = [1, 1]} : vector<32x160xf32> to vector<16x160xf32>
    %232 = vector.extract_strided_slice %231 {offsets = [2, 0], sizes = [1, 160], strides = [1, 1]} : vector<16x160xf32> to vector<1x160xf32>
    %233 = vector.extract_strided_slice %231 {offsets = [1, 0], sizes = [1, 160], strides = [1, 1]} : vector<16x160xf32> to vector<1x160xf32>
    %234 = vector.extract_strided_slice %231 {offsets = [14, 0], sizes = [1, 160], strides = [1, 1]} : vector<16x160xf32> to vector<1x160xf32>
    %235 = vector.extract_strided_slice %231 {offsets = [13, 0], sizes = [1, 160], strides = [1, 1]} : vector<16x160xf32> to vector<1x160xf32>
    %236 = tpu.concatenate %232, %233, %231, %234, %235 in 0 : vector<1x160xf32>, vector<1x160xf32>, vector<16x160xf32>, vector<1x160xf32>, vector<1x160xf32> -> vector<20x160xf32>
    %237 = arith.truncf %236 : vector<20x160xf32> to vector<20x160xbf16>
    %cst_123 = arith.constant 0.000000e+00 : f32
    %238 = vector.broadcast %cst_123 : f32 to vector<16x160xf32>
    %239 = vector.extract_strided_slice %237 {offsets = [0, 0], sizes = [16, 160], strides = [1, 1]} : vector<20x160xbf16> to vector<16x160xbf16>
    %c6 = arith.constant 6 : index
    %c0_124 = arith.constant 0 : index
    %c0_125 = arith.constant 0 : index
    %240 = vector.load %arg8[%c6, %c0_124, %c0_125] : memref<9x160x160xbf16, #tpu.memory_space<vmem>>, vector<1x160x160xbf16>
    %241 = vector.shape_cast %240 : vector<1x160x160xbf16> to vector<160x160xbf16>
    %cst_126 = arith.constant dense<0.000000e+00> : vector<16x160xf32>
    %242 = tpu.matmul %239, %241, %cst_126 {dimension_numbers = #tpu.dot_dimension_numbers<[1], [0], [0], [1], [0, 0, 1, 1], [], []>} : vector<16x160xbf16>, vector<160x160xbf16>, vector<16x160xf32> -> vector<16x160xf32>
    %243 = arith.addf %238, %242 : vector<16x160xf32>
    %244 = vector.extract_strided_slice %237 {offsets = [2, 0], sizes = [16, 160], strides = [1, 1]} : vector<20x160xbf16> to vector<16x160xbf16>
    %c7 = arith.constant 7 : index
    %c0_127 = arith.constant 0 : index
    %c0_128 = arith.constant 0 : index
    %245 = vector.load %arg8[%c7, %c0_127, %c0_128] : memref<9x160x160xbf16, #tpu.memory_space<vmem>>, vector<1x160x160xbf16>
    %246 = vector.shape_cast %245 : vector<1x160x160xbf16> to vector<160x160xbf16>
    %cst_129 = arith.constant dense<0.000000e+00> : vector<16x160xf32>
    %247 = tpu.matmul %244, %246, %cst_129 {dimension_numbers = #tpu.dot_dimension_numbers<[1], [0], [0], [1], [0, 0, 1, 1], [], []>} : vector<16x160xbf16>, vector<160x160xbf16>, vector<16x160xf32> -> vector<16x160xf32>
    %248 = arith.addf %243, %247 : vector<16x160xf32>
    %249 = vector.extract_strided_slice %237 {offsets = [4, 0], sizes = [16, 160], strides = [1, 1]} : vector<20x160xbf16> to vector<16x160xbf16>
    %c8 = arith.constant 8 : index
    %c0_130 = arith.constant 0 : index
    %c0_131 = arith.constant 0 : index
    %250 = vector.load %arg8[%c8, %c0_130, %c0_131] : memref<9x160x160xbf16, #tpu.memory_space<vmem>>, vector<1x160x160xbf16>
    %251 = vector.shape_cast %250 : vector<1x160x160xbf16> to vector<160x160xbf16>
    %cst_132 = arith.constant dense<0.000000e+00> : vector<16x160xf32>
    %252 = tpu.matmul %249, %251, %cst_132 {dimension_numbers = #tpu.dot_dimension_numbers<[1], [0], [0], [1], [0, 0, 1, 1], [], []>} : vector<16x160xbf16>, vector<160x160xbf16>, vector<16x160xf32> -> vector<16x160xf32>
    %253 = arith.addf %248, %252 : vector<16x160xf32>
    %c2_133 = arith.constant 2 : index
    %c0_134 = arith.constant 0 : index
    %c0_135 = arith.constant 0 : index
    %254 = vector.load %arg9[%c2_133, %c0_134, %c0_135] : memref<3x1x160xf32, #tpu.memory_space<vmem>>, vector<1x1x160xf32>
    %255 = vector.shape_cast %254 : vector<1x1x160xf32> to vector<1x160xf32>
    %256 = vector.broadcast %255 : vector<1x160xf32> to vector<16x160xf32>
    %257 = arith.addf %253, %256 : vector<16x160xf32>
    %cst_136 = arith.constant 0.000000e+00 : f32
    %258 = vector.broadcast %cst_136 : f32 to vector<16x160xf32>
    %259 = arith.maximumf %257, %258 : vector<16x160xf32>
    %260 = vector.extract_strided_slice %230 {offsets = [16, 0], sizes = [16, 160], strides = [1, 1]} : vector<32x160xf32> to vector<16x160xf32>
    %261 = vector.extract_strided_slice %260 {offsets = [2, 0], sizes = [1, 160], strides = [1, 1]} : vector<16x160xf32> to vector<1x160xf32>
    %262 = vector.extract_strided_slice %260 {offsets = [1, 0], sizes = [1, 160], strides = [1, 1]} : vector<16x160xf32> to vector<1x160xf32>
    %263 = vector.extract_strided_slice %260 {offsets = [14, 0], sizes = [1, 160], strides = [1, 1]} : vector<16x160xf32> to vector<1x160xf32>
    %264 = vector.extract_strided_slice %260 {offsets = [13, 0], sizes = [1, 160], strides = [1, 1]} : vector<16x160xf32> to vector<1x160xf32>
    %265 = tpu.concatenate %261, %262, %260, %263, %264 in 0 : vector<1x160xf32>, vector<1x160xf32>, vector<16x160xf32>, vector<1x160xf32>, vector<1x160xf32> -> vector<20x160xf32>
    %266 = arith.truncf %265 : vector<20x160xf32> to vector<20x160xbf16>
    %cst_137 = arith.constant 0.000000e+00 : f32
    %267 = vector.broadcast %cst_137 : f32 to vector<16x160xf32>
    %268 = vector.extract_strided_slice %266 {offsets = [0, 0], sizes = [16, 160], strides = [1, 1]} : vector<20x160xbf16> to vector<16x160xbf16>
    %c6_138 = arith.constant 6 : index
    %c0_139 = arith.constant 0 : index
    %c0_140 = arith.constant 0 : index
    %269 = vector.load %arg8[%c6_138, %c0_139, %c0_140] : memref<9x160x160xbf16, #tpu.memory_space<vmem>>, vector<1x160x160xbf16>
    %270 = vector.shape_cast %269 : vector<1x160x160xbf16> to vector<160x160xbf16>
    %cst_141 = arith.constant dense<0.000000e+00> : vector<16x160xf32>
    %271 = tpu.matmul %268, %270, %cst_141 {dimension_numbers = #tpu.dot_dimension_numbers<[1], [0], [0], [1], [0, 0, 1, 1], [], []>} : vector<16x160xbf16>, vector<160x160xbf16>, vector<16x160xf32> -> vector<16x160xf32>
    %272 = arith.addf %267, %271 : vector<16x160xf32>
    %273 = vector.extract_strided_slice %266 {offsets = [2, 0], sizes = [16, 160], strides = [1, 1]} : vector<20x160xbf16> to vector<16x160xbf16>
    %c7_142 = arith.constant 7 : index
    %c0_143 = arith.constant 0 : index
    %c0_144 = arith.constant 0 : index
    %274 = vector.load %arg8[%c7_142, %c0_143, %c0_144] : memref<9x160x160xbf16, #tpu.memory_space<vmem>>, vector<1x160x160xbf16>
    %275 = vector.shape_cast %274 : vector<1x160x160xbf16> to vector<160x160xbf16>
    %cst_145 = arith.constant dense<0.000000e+00> : vector<16x160xf32>
    %276 = tpu.matmul %273, %275, %cst_145 {dimension_numbers = #tpu.dot_dimension_numbers<[1], [0], [0], [1], [0, 0, 1, 1], [], []>} : vector<16x160xbf16>, vector<160x160xbf16>, vector<16x160xf32> -> vector<16x160xf32>
    %277 = arith.addf %272, %276 : vector<16x160xf32>
    %278 = vector.extract_strided_slice %266 {offsets = [4, 0], sizes = [16, 160], strides = [1, 1]} : vector<20x160xbf16> to vector<16x160xbf16>
    %c8_146 = arith.constant 8 : index
    %c0_147 = arith.constant 0 : index
    %c0_148 = arith.constant 0 : index
    %279 = vector.load %arg8[%c8_146, %c0_147, %c0_148] : memref<9x160x160xbf16, #tpu.memory_space<vmem>>, vector<1x160x160xbf16>
    %280 = vector.shape_cast %279 : vector<1x160x160xbf16> to vector<160x160xbf16>
    %cst_149 = arith.constant dense<0.000000e+00> : vector<16x160xf32>
    %281 = tpu.matmul %278, %280, %cst_149 {dimension_numbers = #tpu.dot_dimension_numbers<[1], [0], [0], [1], [0, 0, 1, 1], [], []>} : vector<16x160xbf16>, vector<160x160xbf16>, vector<16x160xf32> -> vector<16x160xf32>
    %282 = arith.addf %277, %281 : vector<16x160xf32>
    %c2_150 = arith.constant 2 : index
    %c0_151 = arith.constant 0 : index
    %c0_152 = arith.constant 0 : index
    %283 = vector.load %arg9[%c2_150, %c0_151, %c0_152] : memref<3x1x160xf32, #tpu.memory_space<vmem>>, vector<1x1x160xf32>
    %284 = vector.shape_cast %283 : vector<1x1x160xf32> to vector<1x160xf32>
    %285 = vector.broadcast %284 : vector<1x160xf32> to vector<16x160xf32>
    %286 = arith.addf %282, %285 : vector<16x160xf32>
    %cst_153 = arith.constant 0.000000e+00 : f32
    %287 = vector.broadcast %cst_153 : f32 to vector<16x160xf32>
    %288 = arith.maximumf %286, %287 : vector<16x160xf32>
    %289 = tpu.concatenate %259, %288 in 0 : vector<16x160xf32>, vector<16x160xf32> -> vector<32x160xf32>
    %c2_154 = arith.constant 2 : index
    %c0_155 = arith.constant 0 : index
    %c0_156 = arith.constant 0 : index
    %290 = vector.load %arg10[%c2_154, %c0_155, %c0_156] : memref<3x1x160xf32, #tpu.memory_space<vmem>>, vector<1x1x160xf32>
    %291 = vector.shape_cast %290 : vector<1x1x160xf32> to vector<1x160xf32>
    %c2_157 = arith.constant 2 : index
    %c0_158 = arith.constant 0 : index
    %c0_159 = arith.constant 0 : index
    %292 = vector.load %arg11[%c2_157, %c0_158, %c0_159] : memref<3x1x160xf32, #tpu.memory_space<vmem>>, vector<1x1x160xf32>
    %293 = vector.shape_cast %292 : vector<1x1x160xf32> to vector<1x160xf32>
    %c0_160 = arith.constant 0 : index
    %c0_161 = arith.constant 0 : index
    %294 = vector.load %arg18[%c0_160, %c0_161] : memref<160x4xf32, #tpu.memory_space<vmem>>, vector<160x4xf32>
    %c0_162 = arith.constant 0 : index
    %c0_163 = arith.constant 0 : index
    %295 = vector.load %arg19[%c0_162, %c0_163] : memref<4x160xf32, #tpu.memory_space<vmem>>, vector<4x160xf32>
    %cst_164 = arith.constant dense<0.000000e+00> : vector<160xf32>
    %296 = vector.multi_reduction <add>, %289, %cst_164 [0] : vector<32x160xf32> to vector<160xf32>
    %297 = vector.shape_cast %296 : vector<160xf32> to vector<1x160xf32>
    %298 = arith.mulf %289, %289 : vector<32x160xf32>
    %cst_165 = arith.constant dense<0.000000e+00> : vector<160xf32>
    %299 = vector.multi_reduction <add>, %298, %cst_165 [0] : vector<32x160xf32> to vector<160xf32>
    %300 = vector.shape_cast %299 : vector<160xf32> to vector<1x160xf32>
    %301 = tpu.concatenate %297, %300 in 0 : vector<1x160xf32>, vector<1x160xf32> -> vector<2x160xf32>
    %cst_166 = arith.constant dense<0.000000e+00> : vector<2x4xf32>
    %302 = tpu.matmul %301, %294, %cst_166 {dimension_numbers = #tpu.dot_dimension_numbers<[1], [0], [0], [1], [0, 0, 1, 1], [], []>} : vector<2x160xf32>, vector<160x4xf32>, vector<2x4xf32> -> vector<2x4xf32>
    %cst_167 = arith.constant dense<0.000000e+00> : vector<2x160xf32>
    %303 = tpu.matmul %302, %295, %cst_167 {dimension_numbers = #tpu.dot_dimension_numbers<[1], [0], [0], [1], [0, 0, 1, 1], [], []>} : vector<2x4xf32>, vector<4x160xf32>, vector<2x160xf32> -> vector<2x160xf32>
    %cst_168 = arith.constant 1.280000e+03 : f32
    %304 = vector.broadcast %cst_168 : f32 to vector<2x160xf32>
    %305 = arith.divf %303, %304 : vector<2x160xf32>
    %306 = vector.extract_strided_slice %305 {offsets = [0, 0], sizes = [1, 160], strides = [1, 1]} : vector<2x160xf32> to vector<1x160xf32>
    %307 = vector.extract_strided_slice %305 {offsets = [1, 0], sizes = [1, 160], strides = [1, 1]} : vector<2x160xf32> to vector<1x160xf32>
    %308 = arith.mulf %306, %306 : vector<1x160xf32>
    %309 = arith.subf %307, %308 : vector<1x160xf32>
    %cst_169 = arith.constant 0.000000e+00 : f32
    %310 = vector.broadcast %cst_169 : f32 to vector<1x160xf32>
    %311 = arith.maximumf %309, %310 : vector<1x160xf32>
    %cst_170 = arith.constant 9.99999974E-6 : f32
    %312 = vector.broadcast %cst_170 : f32 to vector<1x160xf32>
    %313 = arith.addf %311, %312 : vector<1x160xf32>
    %314 = math.rsqrt %313 : vector<1x160xf32>
    %315 = vector.broadcast %306 : vector<1x160xf32> to vector<32x160xf32>
    %316 = arith.subf %289, %315 : vector<32x160xf32>
    %317 = arith.mulf %314, %291 : vector<1x160xf32>
    %318 = vector.broadcast %317 : vector<1x160xf32> to vector<32x160xf32>
    %319 = arith.mulf %316, %318 : vector<32x160xf32>
    %320 = vector.broadcast %293 : vector<1x160xf32> to vector<32x160xf32>
    %321 = arith.addf %319, %320 : vector<32x160xf32>
    %322 = tpu.concatenate %43, %135, %228, %321 in 1 : vector<32x160xf32>, vector<32x160xf32>, vector<32x160xf32>, vector<32x160xf32> -> vector<32x640xf32>
    %323 = arith.truncf %322 : vector<32x640xf32> to vector<32x640xbf16>
    %c0_171 = arith.constant 0 : index
    %c0_172 = arith.constant 0 : index
    %324 = vector.load %arg12[%c0_171, %c0_172] : memref<640x640xbf16, #tpu.memory_space<vmem>>, vector<640x640xbf16>
    %cst_173 = arith.constant dense<0.000000e+00> : vector<32x640xf32>
    %325 = tpu.matmul %323, %324, %cst_173 {dimension_numbers = #tpu.dot_dimension_numbers<[1], [0], [0], [1], [0, 0, 1, 1], [], []>} : vector<32x640xbf16>, vector<640x640xbf16>, vector<32x640xf32> -> vector<32x640xf32>
    %c0_174 = arith.constant 0 : index
    %c0_175 = arith.constant 0 : index
    %326 = vector.load %arg13[%c0_174, %c0_175] : memref<1x640xf32, #tpu.memory_space<vmem>>, vector<1x640xf32>
    %327 = vector.broadcast %326 : vector<1x640xf32> to vector<32x640xf32>
    %328 = arith.addf %325, %327 : vector<32x640xf32>
    %cst_176 = arith.constant 0.000000e+00 : f32
    %329 = vector.broadcast %cst_176 : f32 to vector<32x640xf32>
    %330 = arith.maximumf %328, %329 : vector<32x640xf32>
    %c0_177 = arith.constant 0 : index
    %c0_178 = arith.constant 0 : index
    %331 = vector.load %arg14[%c0_177, %c0_178] : memref<1x640xf32, #tpu.memory_space<vmem>>, vector<1x640xf32>
    %c0_179 = arith.constant 0 : index
    %c0_180 = arith.constant 0 : index
    %332 = vector.load %arg15[%c0_179, %c0_180] : memref<1x640xf32, #tpu.memory_space<vmem>>, vector<1x640xf32>
    %c0_181 = arith.constant 0 : index
    %c0_182 = arith.constant 0 : index
    %333 = vector.load %arg16[%c0_181, %c0_182] : memref<640x16xf32, #tpu.memory_space<vmem>>, vector<640x16xf32>
    %c0_183 = arith.constant 0 : index
    %c0_184 = arith.constant 0 : index
    %334 = vector.load %arg17[%c0_183, %c0_184] : memref<16x640xf32, #tpu.memory_space<vmem>>, vector<16x640xf32>
    %cst_185 = arith.constant dense<0.000000e+00> : vector<640xf32>
    %335 = vector.multi_reduction <add>, %330, %cst_185 [0] : vector<32x640xf32> to vector<640xf32>
    %336 = vector.shape_cast %335 : vector<640xf32> to vector<1x640xf32>
    %337 = arith.mulf %330, %330 : vector<32x640xf32>
    %cst_186 = arith.constant dense<0.000000e+00> : vector<640xf32>
    %338 = vector.multi_reduction <add>, %337, %cst_186 [0] : vector<32x640xf32> to vector<640xf32>
    %339 = vector.shape_cast %338 : vector<640xf32> to vector<1x640xf32>
    %340 = tpu.concatenate %336, %339 in 0 : vector<1x640xf32>, vector<1x640xf32> -> vector<2x640xf32>
    %cst_187 = arith.constant dense<0.000000e+00> : vector<2x16xf32>
    %341 = tpu.matmul %340, %333, %cst_187 {dimension_numbers = #tpu.dot_dimension_numbers<[1], [0], [0], [1], [0, 0, 1, 1], [], []>} : vector<2x640xf32>, vector<640x16xf32>, vector<2x16xf32> -> vector<2x16xf32>
    %cst_188 = arith.constant dense<0.000000e+00> : vector<2x640xf32>
    %342 = tpu.matmul %341, %334, %cst_188 {dimension_numbers = #tpu.dot_dimension_numbers<[1], [0], [0], [1], [0, 0, 1, 1], [], []>} : vector<2x16xf32>, vector<16x640xf32>, vector<2x640xf32> -> vector<2x640xf32>
    %cst_189 = arith.constant 1.280000e+03 : f32
    %343 = vector.broadcast %cst_189 : f32 to vector<2x640xf32>
    %344 = arith.divf %342, %343 : vector<2x640xf32>
    %345 = vector.extract_strided_slice %344 {offsets = [0, 0], sizes = [1, 640], strides = [1, 1]} : vector<2x640xf32> to vector<1x640xf32>
    %346 = vector.extract_strided_slice %344 {offsets = [1, 0], sizes = [1, 640], strides = [1, 1]} : vector<2x640xf32> to vector<1x640xf32>
    %347 = arith.mulf %345, %345 : vector<1x640xf32>
    %348 = arith.subf %346, %347 : vector<1x640xf32>
    %cst_190 = arith.constant 0.000000e+00 : f32
    %349 = vector.broadcast %cst_190 : f32 to vector<1x640xf32>
    %350 = arith.maximumf %348, %349 : vector<1x640xf32>
    %cst_191 = arith.constant 9.99999974E-6 : f32
    %351 = vector.broadcast %cst_191 : f32 to vector<1x640xf32>
    %352 = arith.addf %350, %351 : vector<1x640xf32>
    %353 = math.rsqrt %352 : vector<1x640xf32>
    %354 = vector.broadcast %345 : vector<1x640xf32> to vector<32x640xf32>
    %355 = arith.subf %330, %354 : vector<32x640xf32>
    %356 = arith.mulf %353, %331 : vector<1x640xf32>
    %357 = vector.broadcast %356 : vector<1x640xf32> to vector<32x640xf32>
    %358 = arith.mulf %355, %357 : vector<32x640xf32>
    %359 = vector.broadcast %332 : vector<1x640xf32> to vector<32x640xf32>
    %360 = arith.addf %358, %359 : vector<32x640xf32>
    %361 = vector.extract_strided_slice %360 {offsets = [0, 0], sizes = [16, 640], strides = [1, 1]} : vector<32x640xf32> to vector<16x640xf32>
    %cst_192 = arith.constant dense<0.000000e+00> : vector<640xf32>
    %362 = vector.multi_reduction <add>, %361, %cst_192 [0] : vector<16x640xf32> to vector<640xf32>
    %363 = vector.shape_cast %362 : vector<640xf32> to vector<1x640xf32>
    %364 = vector.extract_strided_slice %360 {offsets = [16, 0], sizes = [16, 640], strides = [1, 1]} : vector<32x640xf32> to vector<16x640xf32>
    %cst_193 = arith.constant dense<0.000000e+00> : vector<640xf32>
    %365 = vector.multi_reduction <add>, %364, %cst_193 [0] : vector<16x640xf32> to vector<640xf32>
    %366 = vector.shape_cast %365 : vector<640xf32> to vector<1x640xf32>
    %367 = tpu.concatenate %363, %366 in 0 : vector<1x640xf32>, vector<1x640xf32> -> vector<2x640xf32>
    %c0_194 = arith.constant 0 : index
    %c0_195 = arith.constant 0 : index
    %368 = vector.load %arg20[%c0_194, %c0_195] : memref<640x40xf32, #tpu.memory_space<vmem>>, vector<640x40xf32>
    %cst_196 = arith.constant dense<0.000000e+00> : vector<2x40xf32>
    %369 = tpu.matmul %367, %368, %cst_196 {dimension_numbers = #tpu.dot_dimension_numbers<[1], [0], [0], [1], [0, 0, 1, 1], [], []>} : vector<2x640xf32>, vector<640x40xf32>, vector<2x40xf32> -> vector<2x40xf32>
    %cst_197 = arith.constant 2.560000e+02 : f32
    %370 = vector.broadcast %cst_197 : f32 to vector<2x40xf32>
    %371 = arith.divf %369, %370 : vector<2x40xf32>
    %c0_198 = arith.constant 0 : index
    %c0_199 = arith.constant 0 : index
    %372 = vector.load %arg22[%c0_198, %c0_199] : memref<40x5xf32, #tpu.memory_space<vmem>>, vector<40x5xf32>
    %cst_200 = arith.constant dense<0.000000e+00> : vector<2x5xf32>
    %373 = tpu.matmul %371, %372, %cst_200 {dimension_numbers = #tpu.dot_dimension_numbers<[1], [0], [0], [1], [0, 0, 1, 1], [], []>} : vector<2x40xf32>, vector<40x5xf32>, vector<2x5xf32> -> vector<2x5xf32>
    %c0_201 = arith.constant 0 : index
    %c0_202 = arith.constant 0 : index
    %374 = vector.load %arg23[%c0_201, %c0_202] : memref<1x5xf32, #tpu.memory_space<vmem>>, vector<1x5xf32>
    %375 = vector.broadcast %374 : vector<1x5xf32> to vector<2x5xf32>
    %376 = arith.addf %373, %375 : vector<2x5xf32>
    %cst_203 = arith.constant 0.000000e+00 : f32
    %377 = vector.broadcast %cst_203 : f32 to vector<2x5xf32>
    %378 = arith.maximumf %376, %377 : vector<2x5xf32>
    %c0_204 = arith.constant 0 : index
    %c0_205 = arith.constant 0 : index
    %379 = vector.load %arg24[%c0_204, %c0_205] : memref<5x40xf32, #tpu.memory_space<vmem>>, vector<5x40xf32>
    %cst_206 = arith.constant dense<0.000000e+00> : vector<2x40xf32>
    %380 = tpu.matmul %378, %379, %cst_206 {dimension_numbers = #tpu.dot_dimension_numbers<[1], [0], [0], [1], [0, 0, 1, 1], [], []>} : vector<2x5xf32>, vector<5x40xf32>, vector<2x40xf32> -> vector<2x40xf32>
    %c0_207 = arith.constant 0 : index
    %c0_208 = arith.constant 0 : index
    %381 = vector.load %arg25[%c0_207, %c0_208] : memref<1x40xf32, #tpu.memory_space<vmem>>, vector<1x40xf32>
    %382 = vector.broadcast %381 : vector<1x40xf32> to vector<2x40xf32>
    %383 = arith.addf %380, %382 : vector<2x40xf32>
    %cst_209 = arith.constant 0.000000e+00 : f32
    %384 = vector.broadcast %cst_209 : f32 to vector<2x40xf32>
    %385 = arith.subf %384, %383 : vector<2x40xf32>
    %386 = math.exp %385 : vector<2x40xf32>
    %cst_210 = arith.constant 1.000000e+00 : f32
    %387 = vector.broadcast %cst_210 : f32 to vector<2x40xf32>
    %388 = arith.addf %387, %386 : vector<2x40xf32>
    %cst_211 = arith.constant 1.000000e+00 : f32
    %389 = vector.broadcast %cst_211 : f32 to vector<2x40xf32>
    %390 = arith.divf %389, %388 : vector<2x40xf32>
    %c0_212 = arith.constant 0 : index
    %c0_213 = arith.constant 0 : index
    %391 = vector.load %arg21[%c0_212, %c0_213] : memref<40x640xf32, #tpu.memory_space<vmem>>, vector<40x640xf32>
    %cst_214 = arith.constant dense<0.000000e+00> : vector<2x640xf32>
    %392 = tpu.matmul %390, %391, %cst_214 {dimension_numbers = #tpu.dot_dimension_numbers<[1], [0], [0], [1], [0, 0, 1, 1], [], []>} : vector<2x40xf32>, vector<40x640xf32>, vector<2x640xf32> -> vector<2x640xf32>
    %393 = vector.extract_strided_slice %392 {offsets = [0, 0], sizes = [1, 640], strides = [1, 1]} : vector<2x640xf32> to vector<1x640xf32>
    %394 = vector.shape_cast %393 : vector<1x640xf32> to vector<1x640xf32>
    %395 = vector.broadcast %394 : vector<1x640xf32> to vector<16x640xf32>
    %396 = vector.extract_strided_slice %392 {offsets = [1, 0], sizes = [1, 640], strides = [1, 1]} : vector<2x640xf32> to vector<1x640xf32>
    %397 = vector.shape_cast %396 : vector<1x640xf32> to vector<1x640xf32>
    %398 = vector.broadcast %397 : vector<1x640xf32> to vector<16x640xf32>
    %399 = tpu.concatenate %395, %398 in 0 : vector<16x640xf32>, vector<16x640xf32> -> vector<32x640xf32>
    %400 = arith.mulf %360, %399 : vector<32x640xf32>
    %401 = arith.addf %400, %42 : vector<32x640xf32>
    %c0_215 = arith.constant 0 : index
    %c0_216 = arith.constant 0 : index
    %402 = vector.load %arg26[%c0_215, %c0_216] : memref<32x640xf32, #tpu.memory_space<vmem>>, vector<32x640xf32>
    tpu.vector_store %arg26[%c0_215, %c0_216], %401 {strides = array<i32>} : memref<32x640xf32, #tpu.memory_space<vmem>>, vector<32x640xf32>,
    return
  }
  func.func @transform_0(%arg0: i32) -> (i32, i32) {
    %c0_i32 = arith.constant 0 : i32
    %c0_i32_0 = arith.constant 0 : i32
    %c0_i32_1 = arith.constant 0 : i32
    return %c0_i32, %c0_i32_0 : i32, i32
  }
  func.func @transform_1(%arg0: i32) -> (i32, i32) {
    %c0_i32 = arith.constant 0 : i32
    %c0_i32_0 = arith.constant 0 : i32
    %c0_i32_1 = arith.constant 0 : i32
    return %c0_i32, %c0_i32_0 : i32, i32
  }
  func.func @transform_2(%arg0: i32) -> (i32, i32) {
    %c0_i32 = arith.constant 0 : i32
    %c0_i32_0 = arith.constant 0 : i32
    %c0_i32_1 = arith.constant 0 : i32
    return %c0_i32, %c0_i32_0 : i32, i32
  }
  func.func @transform_3(%arg0: i32) -> (i32, i32) {
    %c0_i32 = arith.constant 0 : i32
    %c0_i32_0 = arith.constant 0 : i32
    %c0_i32_1 = arith.constant 0 : i32
    return %c0_i32, %c0_i32_0 : i32, i32
  }
  func.func @transform_4(%arg0: i32) -> (i32, i32) {
    %c0_i32 = arith.constant 0 : i32
    %c0_i32_0 = arith.constant 0 : i32
    %c0_i32_1 = arith.constant 0 : i32
    return %c0_i32, %c0_i32_0 : i32, i32
  }
  func.func @transform_5(%arg0: i32) -> (i32, i32) {
    %c0_i32 = arith.constant 0 : i32
    %c0_i32_0 = arith.constant 0 : i32
    %c0_i32_1 = arith.constant 0 : i32
    return %c0_i32, %c0_i32_0 : i32, i32
  }
  func.func @transform_6(%arg0: i32) -> (i32, i32) {
    %c0_i32 = arith.constant 0 : i32
    %c0_i32_0 = arith.constant 0 : i32
    %c0_i32_1 = arith.constant 0 : i32
    return %c0_i32, %c0_i32_0 : i32, i32
  }
  func.func @transform_7(%arg0: i32) -> (i32, i32, i32) {
    %c0_i32 = arith.constant 0 : i32
    %c0_i32_0 = arith.constant 0 : i32
    %c0_i32_1 = arith.constant 0 : i32
    %c0_i32_2 = arith.constant 0 : i32
    return %c0_i32, %c0_i32_0, %c0_i32_1 : i32, i32, i32
  }
  func.func @transform_8(%arg0: i32) -> (i32, i32, i32) {
    %c0_i32 = arith.constant 0 : i32
    %c0_i32_0 = arith.constant 0 : i32
    %c0_i32_1 = arith.constant 0 : i32
    %c0_i32_2 = arith.constant 0 : i32
    return %c0_i32, %c0_i32_0, %c0_i32_1 : i32, i32, i32
  }
  func.func @transform_9(%arg0: i32) -> (i32, i32, i32) {
    %c0_i32 = arith.constant 0 : i32
    %c0_i32_0 = arith.constant 0 : i32
    %c0_i32_1 = arith.constant 0 : i32
    %c0_i32_2 = arith.constant 0 : i32
    return %c0_i32, %c0_i32_0, %c0_i32_1 : i32, i32, i32
  }
  func.func @transform_10(%arg0: i32) -> (i32, i32, i32) {
    %c0_i32 = arith.constant 0 : i32
    %c0_i32_0 = arith.constant 0 : i32
    %c0_i32_1 = arith.constant 0 : i32
    %c0_i32_2 = arith.constant 0 : i32
    return %c0_i32, %c0_i32_0, %c0_i32_1 : i32, i32, i32
  }
  func.func @transform_11(%arg0: i32) -> (i32, i32) {
    %c0_i32 = arith.constant 0 : i32
    %c0_i32_0 = arith.constant 0 : i32
    %c0_i32_1 = arith.constant 0 : i32
    return %c0_i32, %c0_i32_0 : i32, i32
  }
  func.func @transform_12(%arg0: i32) -> (i32, i32) {
    %c0_i32 = arith.constant 0 : i32
    %c0_i32_0 = arith.constant 0 : i32
    %c0_i32_1 = arith.constant 0 : i32
    return %c0_i32, %c0_i32_0 : i32, i32
  }
  func.func @transform_13(%arg0: i32) -> (i32, i32) {
    %c0_i32 = arith.constant 0 : i32
    %c0_i32_0 = arith.constant 0 : i32
    %c0_i32_1 = arith.constant 0 : i32
    return %c0_i32, %c0_i32_0 : i32, i32
  }
  func.func @transform_14(%arg0: i32) -> (i32, i32) {
    %c0_i32 = arith.constant 0 : i32
    %c0_i32_0 = arith.constant 0 : i32
    %c0_i32_1 = arith.constant 0 : i32
    return %c0_i32, %c0_i32_0 : i32, i32
  }
  func.func @transform_15(%arg0: i32) -> (i32, i32) {
    %c0_i32 = arith.constant 0 : i32
    %c0_i32_0 = arith.constant 0 : i32
    %c0_i32_1 = arith.constant 0 : i32
    return %c0_i32, %c0_i32_0 : i32, i32
  }
  func.func @transform_16(%arg0: i32) -> (i32, i32) {
    %c0_i32 = arith.constant 0 : i32
    %c0_i32_0 = arith.constant 0 : i32
    %c0_i32_1 = arith.constant 0 : i32
    return %c0_i32, %c0_i32_0 : i32, i32
  }
  func.func @transform_17(%arg0: i32) -> (i32, i32) {
    %c0_i32 = arith.constant 0 : i32
    %c0_i32_0 = arith.constant 0 : i32
    %c0_i32_1 = arith.constant 0 : i32
    return %c0_i32, %c0_i32_0 : i32, i32
  }
  func.func @transform_18(%arg0: i32) -> (i32, i32) {
    %c0_i32 = arith.constant 0 : i32
    %c0_i32_0 = arith.constant 0 : i32
    %c0_i32_1 = arith.constant 0 : i32
    return %c0_i32, %c0_i32_0 : i32, i32
  }
  func.func @transform_19(%arg0: i32) -> (i32, i32) {
    %c0_i32 = arith.constant 0 : i32
    %c0_i32_0 = arith.constant 0 : i32
    %c0_i32_1 = arith.constant 0 : i32
    return %c0_i32, %c0_i32_0 : i32, i32
  }
  func.func @transform_20(%arg0: i32) -> (i32, i32) {
    %c0_i32 = arith.constant 0 : i32
    %c0_i32_0 = arith.constant 0 : i32
    %c0_i32_1 = arith.constant 0 : i32
    return %c0_i32, %c0_i32_0 : i32, i32
  }
  func.func @transform_21(%arg0: i32) -> (i32, i32) {
    %c0_i32 = arith.constant 0 : i32
    %c0_i32_0 = arith.constant 0 : i32
    %c0_i32_1 = arith.constant 0 : i32
    return %c0_i32, %c0_i32_0 : i32, i32
  }
  func.func @transform_22(%arg0: i32) -> (i32, i32) {
    %c0_i32 = arith.constant 0 : i32
    %c0_i32_0 = arith.constant 0 : i32
    %c0_i32_1 = arith.constant 0 : i32
    return %c0_i32, %c0_i32_0 : i32, i32
  }
  func.func @transform_23(%arg0: i32) -> (i32, i32) {
    %c0_i32 = arith.constant 0 : i32
    %c0_i32_0 = arith.constant 0 : i32
    %c0_i32_1 = arith.constant 0 : i32
    return %c0_i32, %c0_i32_0 : i32, i32
  }
  func.func @transform_24(%arg0: i32) -> (i32, i32) {
    %c0_i32 = arith.constant 0 : i32
    %c0_i32_0 = arith.constant 0 : i32
    %c0_i32_1 = arith.constant 0 : i32
    return %c0_i32, %c0_i32_0 : i32, i32
  }
  func.func @transform_25(%arg0: i32) -> (i32, i32) {
    %c0_i32 = arith.constant 0 : i32
    %c0_i32_0 = arith.constant 0 : i32
    %c0_i32_1 = arith.constant 0 : i32
    return %c0_i32, %c0_i32_0 : i32, i32
  }
}

</mosaic_0001>

<llo_original>
// kernel: se_res2net_block2d.1
$region0: #{se_res2net_block2d.1}
  #allocation0 [shape = 'u32[]', space=smem, size = 0x4, offset = 0x4, fixed_abs, tag = 'smem constant byte address 0x4 - core index']
  #allocation1 [shape = 'u32[144,128]{1,0:T(1,128)}', space=vmem, size = 0x12000, scoped, tag = 'internal scratch']
  %s0 = inlined_call_operand.vmem [shape: bf16[32,320], index: 0, kind: input, shape index: {}]
  %s1 = inlined_call_operand.vmem [shape: bf16[320,640], index: 1, kind: input, shape index: {}]
  %s2 = inlined_call_operand.vmem [shape: f32[1,640], index: 2, kind: input, shape index: {}]
  %s3 = inlined_call_operand.vmem [shape: f32[1,640], index: 3, kind: input, shape index: {}]
  %s4 = inlined_call_operand.vmem [shape: f32[1,640], index: 4, kind: input, shape index: {}]
  %s5 = inlined_call_operand.vmem [shape: bf16[320,640], index: 5, kind: input, shape index: {}]
  %s6 = inlined_call_operand.vmem [shape: f32[1,640], index: 6, kind: input, shape index: {}]
  %s7 = inlined_call_operand.vmem [shape: bf16[9,160,160], index: 7, kind: input, shape index: {}]
  %s8 = inlined_call_operand.vmem [shape: f32[3,1,160], index: 8, kind: input, shape index: {}]
  %s9 = inlined_call_operand.vmem [shape: f32[3,1,160], index: 9, kind: input, shape index: {}]
  %s10 = inlined_call_operand.vmem [shape: f32[3,1,160], index: 10, kind: input, shape index: {}]
  %s11 = inlined_call_operand.vmem [shape: bf16[640,640], index: 11, kind: input, shape index: {}]
  %s12 = inlined_call_operand.vmem [shape: f32[1,640], index: 12, kind: input, shape index: {}]
  %s13 = inlined_call_operand.vmem [shape: f32[1,640], index: 13, kind: input, shape index: {}]
  %s14 = inlined_call_operand.vmem [shape: f32[1,640], index: 14, kind: input, shape index: {}]
  %s15 = inlined_call_operand.vmem [shape: f32[640,16], index: 15, kind: input, shape index: {}]
  %s16 = inlined_call_operand.vmem [shape: f32[16,640], index: 16, kind: input, shape index: {}]
  %s17 = inlined_call_operand.vmem [shape: f32[160,4], index: 17, kind: input, shape index: {}]
  %s18 = inlined_call_operand.vmem [shape: f32[4,160], index: 18, kind: input, shape index: {}]
  %s19 = inlined_call_operand.vmem [shape: f32[640,40], index: 19, kind: input, shape index: {}]
  %s20 = inlined_call_operand.vmem [shape: f32[40,640], index: 20, kind: input, shape index: {}]
  %s21 = inlined_call_operand.vmem [shape: f32[40,5], index: 21, kind: input, shape index: {}]
  %s22 = inlined_call_operand.vmem [shape: f32[1,5], index: 22, kind: input, shape index: {}]
  %s23 = inlined_call_operand.vmem [shape: f32[5,40], index: 23, kind: input, shape index: {}]
  %s24 = inlined_call_operand.vmem [shape: f32[1,40], index: 24, kind: input, shape index: {}]
  %s25 = inlined_call_operand.vmem [shape: f32[32,640], index: 25, kind: output, shape index: {}]
  %s26 = sld [smem:[#allocation0]]
  $region110: #{se_res2net_block2d.1} parent=0
    _
  %s28 = ssub.s32 1, %s26
  %s29 = scalar_select 0, %s28, %s26
  // Predicated region
  $region2: #{se_res2net_block2d.1} parent=0 // pred_check
    _
  $region3: #{se_res2net_block2d.1} parent=0 // pred_check_branch
    %31 = sbr.rel (0) target = $region5
  $region4: #{se_res2net_block2d.1} parent=0 // pred_region
    _
  $region5: #{se_res2net_block2d.1} parent=0 // pred_fallthru
    _
  // Predicated region
  $region6: #{se_res2net_block2d.1} parent=0 // pred_check
    _
  $region7: #{se_res2net_block2d.1} parent=0 // pred_check_branch
    %33 = sbr.rel (0) target = $region9
  $region8: #{se_res2net_block2d.1} parent=0 // pred_region
    _
  $region9: #{se_res2net_block2d.1} parent=0 // pred_fallthru
    _
  // Predicated region
  $region10: #{se_res2net_block2d.1} parent=0 // pred_check
    _
  $region11: #{se_res2net_block2d.1} parent=0 // pred_check_branch
    %35 = sbr.rel (0) target = $region13
  $region12: #{se_res2net_block2d.1} parent=0 // pred_region
    _
  $region13: #{se_res2net_block2d.1} parent=0 // pred_fallthru
    _
  // Predicated region
  $region14: #{se_res2net_block2d.1} parent=0 // pred_check
    _
  $region15: #{se_res2net_block2d.1} parent=0 // pred_check_branch
    %37 = sbr.rel (0) target = $region17
  $region16: #{se_res2net_block2d.1} parent=0 // pred_region
    _
  $region17: #{se_res2net_block2d.1} parent=0 // pred_fallthru
    _
  // Predicated region
  $region18: #{se_res2net_block2d.1} parent=0 // pred_check
    _
  $region19: #{se_res2net_block2d.1} parent=0 // pred_check_branch
    %39 = sbr.rel (0) target = $region21
  $region20: #{se_res2net_block2d.1} parent=0 // pred_region
    _
  $region21: #{se_res2net_block2d.1} parent=0 // pred_fallthru
    _
  // Predicated region
  $region22: #{se_res2net_block2d.1} parent=0 // pred_check
    _
  $region23: #{se_res2net_block2d.1} parent=0 // pred_check_branch
    %41 = sbr.rel (0) target = $region25
  $region24: #{se_res2net_block2d.1} parent=0 // pred_region
    _
  $region25: #{se_res2net_block2d.1} parent=0 // pred_fallthru
    _
  // Predicated region
  $region26: #{se_res2net_block2d.1} parent=0 // pred_check
    _
  $region27: #{se_res2net_block2d.1} parent=0 // pred_check_branch
    %43 = sbr.rel (0) target = $region29
  $region28: #{se_res2net_block2d.1} parent=0 // pred_region
    _
  $region29: #{se_res2net_block2d.1} parent=0 // pred_fallthru
    _
  // Predicated region
  $region30: #{se_res2net_block2d.1} parent=0 // pred_check
    _
  $region31: #{se_res2net_block2d.1} parent=0 // pred_check_branch
    %45 = sbr.rel (0) target = $region33
  $region32: #{se_res2net_block2d.1} parent=0 // pred_region
    _
  $region33: #{se_res2net_block2d.1} parent=0 // pred_fallthru
    _
  // Predicated region
  $region34: #{se_res2net_block2d.1} parent=0 // pred_check
    _
  $region35: #{se_res2net_block2d.1} parent=0 // pred_check_branch
    %47 = sbr.rel (0) target = $region37
  $region36: #{se_res2net_block2d.1} parent=0 // pred_region
    _
  $region37: #{se_res2net_block2d.1} parent=0 // pred_fallthru
    _
  // Predicated region
  $region38: #{se_res2net_block2d.1} parent=0 // pred_check
    _
  $region39: #{se_res2net_block2d.1} parent=0 // pred_check_branch
    %49 = sbr.rel (0) target = $region41
  $region40: #{se_res2net_block2d.1} parent=0 // pred_region
    _
  $region41: #{se_res2net_block2d.1} parent=0 // pred_fallthru
    _
  // Predicated region
  $region42: #{se_res2net_block2d.1} parent=0 // pred_check
    _
  $region43: #{se_res2net_block2d.1} parent=0 // pred_check_branch
    %51 = sbr.rel (0) target = $region45
  $region44: #{se_res2net_block2d.1} parent=0 // pred_region
    _
  $region45: #{se_res2net_block2d.1} parent=0 // pred_fallthru
    _
  // Predicated region
  $region46: #{se_res2net_block2d.1} parent=0 // pred_check
    _
  $region47: #{se_res2net_block2d.1} parent=0 // pred_check_branch
    %53 = sbr.rel (0) target = $region49
  $region48: #{se_res2net_block2d.1} parent=0 // pred_region
    _
  $region49: #{se_res2net_block2d.1} parent=0 // pred_fallthru
    _
  // Predicated region
  $region50: #{se_res2net_block2d.1} parent=0 // pred_check
    _
  $region51: #{se_res2net_block2d.1} parent=0 // pred_check_branch
    %55 = sbr.rel (0) target = $region53
  $region52: #{se_res2net_block2d.1} parent=0 // pred_region
    _
  $region53: #{se_res2net_block2d.1} parent=0 // pred_fallthru
    _
  // Predicated region
  $region54: #{se_res2net_block2d.1} parent=0 // pred_check
    _
  $region55: #{se_res2net_block2d.1} parent=0 // pred_check_branch
    %57 = sbr.rel (0) target = $region57
  $region56: #{se_res2net_block2d.1} parent=0 // pred_region
    _
  $region57: #{se_res2net_block2d.1} parent=0 // pred_fallthru
    _
  // Predicated region
  $region58: #{se_res2net_block2d.1} parent=0 // pred_check
    _
  $region59: #{se_res2net_block2d.1} parent=0 // pred_check_branch
    %59 = sbr.rel (0) target = $region61
  $region60: #{se_res2net_block2d.1} parent=0 // pred_region
    _
  $region61: #{se_res2net_block2d.1} parent=0 // pred_fallthru
    _
  // Predicated region
  $region62: #{se_res2net_block2d.1} parent=0 // pred_check
    _
  $region63: #{se_res2net_block2d.1} parent=0 // pred_check_branch
    %61 = sbr.rel (0) target = $region65
  $region64: #{se_res2net_block2d.1} parent=0 // pred_region
    _
  $region65: #{se_res2net_block2d.1} parent=0 // pred_fallthru
    _
  // Predicated region
  $region66: #{se_res2net_block2d.1} parent=0 // pred_check
    _
  $region67: #{se_res2net_block2d.1} parent=0 // pred_check_branch
    %63 = sbr.rel (0) target = $region69
  $region68: #{se_res2net_block2d.1} parent=0 // pred_region
    _
  $region69: #{se_res2net_block2d.1} parent=0 // pred_fallthru
    _
  // Predicated region
  $region70: #{se_res2net_block2d.1} parent=0 // pred_check
    _
  $region71: #{se_res2net_block2d.1} parent=0 // pred_check_branch
    %65 = sbr.rel (0) target = $region73
  $region72: #{se_res2net_block2d.1} parent=0 // pred_region
    _
  $region73: #{se_res2net_block2d.1} parent=0 // pred_fallthru
    _
  // Predicated region
  $region74: #{se_res2net_block2d.1} parent=0 // pred_check
    _
  $region75: #{se_res2net_block2d.1} parent=0 // pred_check_branch
    %67 = sbr.rel (0) target = $region77
  $region76: #{se_res2net_block2d.1} parent=0 // pred_region
    _
  $region77: #{se_res2net_block2d.1} parent=0 // pred_fallthru
    _
  // Predicated region
  $region78: #{se_res2net_block2d.1} parent=0 // pred_check
    _
  $region79: #{se_res2net_block2d.1} parent=0 // pred_check_branch
    %69 = sbr.rel (0) target = $region81
  $region80: #{se_res2net_block2d.1} parent=0 // pred_region
    _
  $region81: #{se_res2net_block2d.1} parent=0 // pred_fallthru
    _
  // Predicated region
  $region82: #{se_res2net_block2d.1} parent=0 // pred_check
    _
  $region83: #{se_res2net_block2d.1} parent=0 // pred_check_branch
    %71 = sbr.rel (0) target = $region85
  $region84: #{se_res2net_block2d.1} parent=0 // pred_region
    _
  $region85: #{se_res2net_block2d.1} parent=0 // pred_fallthru
    _
  // Predicated region
  $region86: #{se_res2net_block2d.1} parent=0 // pred_check
    _
  $region87: #{se_res2net_block2d.1} parent=0 // pred_check_branch
    %73 = sbr.rel (0) target = $region89
  $region88: #{se_res2net_block2d.1} parent=0 // pred_region
    _
  $region89: #{se_res2net_block2d.1} parent=0 // pred_fallthru
    _
  // Predicated region
  $region90: #{se_res2net_block2d.1} parent=0 // pred_check
    _
  $region91: #{se_res2net_block2d.1} parent=0 // pred_check_branch
    %75 = sbr.rel (0) target = $region93
  $region92: #{se_res2net_block2d.1} parent=0 // pred_region
    _
  $region93: #{se_res2net_block2d.1} parent=0 // pred_fallthru
    _
  // Predicated region
  $region94: #{se_res2net_block2d.1} parent=0 // pred_check
    _
  $region95: #{se_res2net_block2d.1} parent=0 // pred_check_branch
    %77 = sbr.rel (0) target = $region97
  $region96: #{se_res2net_block2d.1} parent=0 // pred_region
    _
  $region97: #{se_res2net_block2d.1} parent=0 // pred_fallthru
    _
  // Predicated region
  $region98: #{se_res2net_block2d.1} parent=0 // pred_check
    _
  $region99: #{se_res2net_block2d.1} parent=0 // pred_check_branch
    %79 = sbr.rel (0) target = $region101
  $region100: #{se_res2net_block2d.1} parent=0 // pred_region
    _
  $region101: #{se_res2net_block2d.1} parent=0 // pred_fallthru
    _
  %v81 = vld [vmem:[%s0] sm:$0xff]
  %v82 = vld [vmem:[%s0 + $0x8] sm:$0xf]
  %v83 = vld [vmem:[%s0 + $0xc] sm:$0xff]
  %v84 = vld [vmem:[%s0 + $0x14] sm:$0xf]
  %v85 = vld [vmem:[%s0 + $0x18] sm:$0xff]
  %v86 = vld [vmem:[%s0 + $0x20] sm:$0xf]
  %v87 = vld [vmem:[%s0 + $0x24] sm:$0xff]
  %v88 = vld [vmem:[%s0 + $0x2c] sm:$0xf]
  %v89 = vld [vmem:[%s1] sm:$0xff]
  %v90 = vld [vmem:[%s1 + $0x8] sm:$0xff]
  %v91 = vld [vmem:[%s1 + $0x10] sm:$0xf]
  %v92 = vld [vmem:[%s1 + $0x14] sm:$0xff]
  %v93 = vld [vmem:[%s1 + $0x1c] sm:$0xff]
  %v94 = vld [vmem:[%s1 + $0x24] sm:$0xf]
  %v95 = vld [vmem:[%s1 + $0x28] sm:$0xff]
  %v96 = vld [vmem:[%s1 + $0x30] sm:$0xff]
  %v97 = vld [vmem:[%s1 + $0x38] sm:$0xf]
  %v98 = vld [vmem:[%s1 + $0x3c] sm:$0xff]
  %v99 = vld [vmem:[%s1 + $0x44] sm:$0xff]
  %v100 = vld [vmem:[%s1 + $0x4c] sm:$0xf]
  %v101 = vld [vmem:[%s1 + $0x50] sm:$0xff]
  %v102 = vld [vmem:[%s1 + $0x58] sm:$0xff]
  %v103 = vld [vmem:[%s1 + $0x60] sm:$0xf]
  %v104 = vld [vmem:[%s1 + $0x64] sm:$0xff]
  %v105 = vld [vmem:[%s1 + $0x6c] sm:$0xff]
  %v106 = vld [vmem:[%s1 + $0x74] sm:$0xf]
  %v107 = vld [vmem:[%s1 + $0x78] sm:$0xff]
  %v108 = vld [vmem:[%s1 + $0x80] sm:$0xff]
  %v109 = vld [vmem:[%s1 + $0x88] sm:$0xf]
  %v110 = vld [vmem:[%s1 + $0x8c] sm:$0xff]
  %v111 = vld [vmem:[%s1 + $0x94] sm:$0xff]
  %v112 = vld [vmem:[%s1 + $0x9c] sm:$0xf]
  %v113 = vld [vmem:[%s1 + $0xa0] sm:$0xff]
  %v114 = vld [vmem:[%s1 + $0xa8] sm:$0xff]
  %v115 = vld [vmem:[%s1 + $0xb0] sm:$0xf]
  %v116 = vld [vmem:[%s1 + $0xb4] sm:$0xff]
  %v117 = vld [vmem:[%s1 + $0xbc] sm:$0xff]
  %v118 = vld [vmem:[%s1 + $0xc4] sm:$0xf]
  %v119 = vld [vmem:[%s1 + $0xc8] sm:$0xff]
  %v120 = vld [vmem:[%s1 + $0xd0] sm:$0xff]
  %v121 = vld [vmem:[%s1 + $0xd8] sm:$0xf]
  %v122 = vld [vmem:[%s1 + $0xdc] sm:$0xff]
  %v123 = vld [vmem:[%s1 + $0xe4] sm:$0xff]
  %v124 = vld [vmem:[%s1 + $0xec] sm:$0xf]
  %v125 = vld [vmem:[%s1 + $0xf0] sm:$0xff]
  %v126 = vld [vmem:[%s1 + $0xf8] sm:$0xff]
  %v127 = vld [vmem:[%s1 + $0x100] sm:$0xf]
  %v128 = vld [vmem:[%s1 + $0x104] sm:$0xff]
  %v129 = vld [vmem:[%s1 + $0x10c] sm:$0xff]
  %v130 = vld [vmem:[%s1 + $0x114] sm:$0xf]
  %v131 = vld [vmem:[%s1 + $0x118] sm:$0xff]
  %v132 = vld [vmem:[%s1 + $0x120] sm:$0xff]
  %v133 = vld [vmem:[%s1 + $0x128] sm:$0xf]
  %v134 = vld [vmem:[%s1 + $0x12c] sm:$0xff]
  %v135 = vld [vmem:[%s1 + $0x134] sm:$0xff]
  %v136 = vld [vmem:[%s1 + $0x13c] sm:$0xf]
  %v137 = vld [vmem:[%s1 + $0x140] sm:$0xff]
  %v138 = vld [vmem:[%s1 + $0x148] sm:$0xff]
  %v139 = vld [vmem:[%s1 + $0x150] sm:$0xf]
  %v140 = vld [vmem:[%s1 + $0x154] sm:$0xff]
  %v141 = vld [vmem:[%s1 + $0x15c] sm:$0xff]
  %v142 = vld [vmem:[%s1 + $0x164] sm:$0xf]
  %v143 = vld [vmem:[%s1 + $0x168] sm:$0xff]
  %v144 = vld [vmem:[%s1 + $0x170] sm:$0xff]
  %v145 = vld [vmem:[%s1 + $0x178] sm:$0xf]
  %v146 = vld [vmem:[%s1 + $0x17c] sm:$0xff]
  %v147 = vld [vmem:[%s1 + $0x184] sm:$0xff]
  %v148 = vld [vmem:[%s1 + $0x18c] sm:$0xf]
  %v149 = vld [vmem:[%s1 + $0x190] sm:$0xff]
  %v150 = vld [vmem:[%s1 + $0x198] sm:$0xff]
  %v151 = vld [vmem:[%s1 + $0x1a0] sm:$0xf]
  %v152 = vld [vmem:[%s1 + $0x1a4] sm:$0xff]
  %v153 = vld [vmem:[%s1 + $0x1ac] sm:$0xff]
  %v154 = vld [vmem:[%s1 + $0x1b4] sm:$0xf]
  %v155 = vld [vmem:[%s1 + $0x1b8] sm:$0xff]
  %v156 = vld [vmem:[%s1 + $0x1c0] sm:$0xff]
  %v157 = vld [vmem:[%s1 + $0x1c8] sm:$0xf]
  %v158 = vld [vmem:[%s1 + $0x1cc] sm:$0xff]
  %v159 = vld [vmem:[%s1 + $0x1d4] sm:$0xff]
  %v160 = vld [vmem:[%s1 + $0x1dc] sm:$0xf]
  %v161 = vld [vmem:[%s1 + $0x1e0] sm:$0xff]
  %v162 = vld [vmem:[%s1 + $0x1e8] sm:$0xff]
  %v163 = vld [vmem:[%s1 + $0x1f0] sm:$0xf]
  %v164 = vld [vmem:[%s1 + $0x1f4] sm:$0xff]
  %v165 = vld [vmem:[%s1 + $0x1fc] sm:$0xff]
  %v166 = vld [vmem:[%s1 + $0x204] sm:$0xf]
  %v167 = vld [vmem:[%s1 + $0x208] sm:$0xff]
  %v168 = vld [vmem:[%s1 + $0x210] sm:$0xff]
  %v169 = vld [vmem:[%s1 + $0x218] sm:$0xf]
  %v170 = vld [vmem:[%s1 + $0x21c] sm:$0xff]
  %v171 = vld [vmem:[%s1 + $0x224] sm:$0xff]
  %v172 = vld [vmem:[%s1 + $0x22c] sm:$0xf]
  %v173 = vld [vmem:[%s1 + $0x230] sm:$0xff]
  %v174 = vld [vmem:[%s1 + $0x238] sm:$0xff]
  %v175 = vld [vmem:[%s1 + $0x240] sm:$0xf]
  %v176 = vld [vmem:[%s1 + $0x244] sm:$0xff]
  %v177 = vld [vmem:[%s1 + $0x24c] sm:$0xff]
  %v178 = vld [vmem:[%s1 + $0x254] sm:$0xf]
  %v179 = vld [vmem:[%s1 + $0x258] sm:$0xff]
  %v180 = vld [vmem:[%s1 + $0x260] sm:$0xff]
  %v181 = vld [vmem:[%s1 + $0x268] sm:$0xf]
  %v182 = vld [vmem:[%s1 + $0x26c] sm:$0xff]
  %v183 = vld [vmem:[%s1 + $0x274] sm:$0xff]
  %v184 = vld [vmem:[%s1 + $0x27c] sm:$0xf]
  %v185 = vld [vmem:[%s1 + $0x280] sm:$0xff]
  %v186 = vld [vmem:[%s1 + $0x288] sm:$0xff]
  %v187 = vld [vmem:[%s1 + $0x290] sm:$0xf]
  %v188 = vld [vmem:[%s1 + $0x294] sm:$0xff]
  %v189 = vld [vmem:[%s1 + $0x29c] sm:$0xff]
  %v190 = vld [vmem:[%s1 + $0x2a4] sm:$0xf]
  %v191 = vld [vmem:[%s1 + $0x2a8] sm:$0xff]
  %v192 = vld [vmem:[%s1 + $0x2b0] sm:$0xff]
  %v193 = vld [vmem:[%s1 + $0x2b8] sm:$0xf]
  %v194 = vld [vmem:[%s1 + $0x2bc] sm:$0xff]
  %v195 = vld [vmem:[%s1 + $0x2c4] sm:$0xff]
  %v196 = vld [vmem:[%s1 + $0x2cc] sm:$0xf]
  %v197 = vld [vmem:[%s1 + $0x2d0] sm:$0xff]
  %v198 = vld [vmem:[%s1 + $0x2d8] sm:$0xff]
  %v199 = vld [vmem:[%s1 + $0x2e0] sm:$0xf]
  %v200 = vld [vmem:[%s1 + $0x2e4] sm:$0xff]
  %v201 = vld [vmem:[%s1 + $0x2ec] sm:$0xff]
  %v202 = vld [vmem:[%s1 + $0x2f4] sm:$0xf]
  %v203 = vld [vmem:[%s1 + $0x2f8] sm:$0xff]
  %v204 = vld [vmem:[%s1 + $0x300] sm:$0xff]
  %v205 = vld [vmem:[%s1 + $0x308] sm:$0xf]
  %v206 = vld [vmem:[%s1 + $0x30c] sm:$0xff]
  %v207 = vld [vmem:[%s1 + $0x314] sm:$0xff]
  %v208 = vld [vmem:[%s1 + $0x31c] sm:$0xf]
  %v209 = vld [vmem:[%s2] sm:$0x1f]
  %v211 = vlaneseq
  %v212 = vshrl.u32 %v211, 7
  %v213 = vsub.s32 0, %v212
  %v214 = vrot.slane %v209, %v213
  %v215 = vlaneseq
  %v216 = vshrl.u32 %v215, 7
  %v217 = vsub.s32 1, %v216
  %v218 = vrot.slane %v209, %v217
  %v219 = vlaneseq
  %v220 = vshrl.u32 %v219, 7
  %v221 = vsub.s32 2, %v220
  %v222 = vrot.slane %v209, %v221
  %v223 = vlaneseq
  %v224 = vshrl.u32 %v223, 7
  %v225 = vsub.s32 3, %v224
  %v226 = vrot.slane %v209, %v225
  %v227 = vlaneseq
  %v228 = vshrl.u32 %v227, 7
  %v229 = vsub.s32 4, %v228
  %v230 = vrot.slane %v209, %v229
  %v244 = vunpack.c.l.b16 %v81
  %v245 = vunpack.c.h.b16 %v81
  %v246 = vunpack.c.l.b16 %v82
  %v247 = vunpack.c.l.b16 %v83
  %v248 = vunpack.c.h.b16 %v83
  %v249 = vunpack.c.l.b16 %v84
  %v250 = vunpack.c.l.b16 %v85
  %v251 = vunpack.c.h.b16 %v85
  %v252 = vunpack.c.l.b16 %v86
  %v253 = vunpack.c.l.b16 %v87
  %v254 = vunpack.c.h.b16 %v87
  %v255 = vunpack.c.l.b16 %v88
  %v256 = vpack.c.b16 %v247, %v244
  %v257 = vpack.c.b16 %v248, %v245
  %v258 = vpack.c.b16 %v249, %v246
  %v259 = vpack.c.b16 %v253, %v250
  %v260 = vpack.c.b16 %v254, %v251
  %v261 = vpack.c.b16 %v255, %v252
  %v386 = vunpack.c.l.b16 %v89
  %v387 = vunpack.c.h.b16 %v89
  %v388 = vunpack.c.l.b16 %v90
  %v389 = vunpack.c.h.b16 %v90
  %v390 = vunpack.c.l.b16 %v91
  %v391 = vunpack.c.l.b16 %v92
  %v392 = vunpack.c.h.b16 %v92
  %v393 = vunpack.c.l.b16 %v93
  %v394 = vunpack.c.h.b16 %v93
  %v395 = vunpack.c.l.b16 %v94
  %v396 = vunpack.c.l.b16 %v95
  %v397 = vunpack.c.h.b16 %v95
  %v398 = vunpack.c.l.b16 %v96
  %v399 = vunpack.c.h.b16 %v96
  %v400 = vunpack.c.l.b16 %v97
  %v401 = vunpack.c.l.b16 %v98
  %v402 = vunpack.c.h.b16 %v98
  %v403 = vunpack.c.l.b16 %v99
  %v404 = vunpack.c.h.b16 %v99
  %v405 = vunpack.c.l.b16 %v100
  %v406 = vunpack.c.l.b16 %v101
  %v407 = vunpack.c.h.b16 %v101
  %v408 = vunpack.c.l.b16 %v102
  %v409 = vunpack.c.h.b16 %v102
  %v410 = vunpack.c.l.b16 %v103
  %v411 = vunpack.c.l.b16 %v104
  %v412 = vunpack.c.h.b16 %v104
  %v413 = vunpack.c.l.b16 %v105
  %v414 = vunpack.c.h.b16 %v105
  %v415 = vunpack.c.l.b16 %v106
  %v416 = vunpack.c.l.b16 %v107
  %v417 = vunpack.c.h.b16 %v107
  %v418 = vunpack.c.l.b16 %v108
  %v419 = vunpack.c.h.b16 %v108
  %v420 = vunpack.c.l.b16 %v109
  %v421 = vunpack.c.l.b16 %v110
  %v422 = vunpack.c.h.b16 %v110
  %v423 = vunpack.c.l.b16 %v111
  %v424 = vunpack.c.h.b16 %v111
  %v425 = vunpack.c.l.b16 %v112
  %v426 = vunpack.c.l.b16 %v113
  %v427 = vunpack.c.h.b16 %v113
  %v428 = vunpack.c.l.b16 %v114
  %v429 = vunpack.c.h.b16 %v114
  %v430 = vunpack.c.l.b16 %v115
  %v431 = vunpack.c.l.b16 %v116
  %v432 = vunpack.c.h.b16 %v116
  %v433 = vunpack.c.l.b16 %v117
  %v434 = vunpack.c.h.b16 %v117
  %v435 = vunpack.c.l.b16 %v118
  %v436 = vunpack.c.l.b16 %v119
  %v437 = vunpack.c.h.b16 %v119
  %v438 = vunpack.c.l.b16 %v120
  %v439 = vunpack.c.h.b16 %v120
  %v440 = vunpack.c.l.b16 %v121
  %v441 = vunpack.c.l.b16 %v122
  %v442 = vunpack.c.h.b16 %v122
  %v443 = vunpack.c.l.b16 %v123
  %v444 = vunpack.c.h.b16 %v123
  %v445 = vunpack.c.l.b16 %v124
  %v446 = vunpack.c.l.b16 %v125
  %v447 = vunpack.c.h.b16 %v125
  %v448 = vunpack.c.l.b16 %v126
  %v449 = vunpack.c.h.b16 %v126
  %v450 = vunpack.c.l.b16 %v127
  %v451 = vunpack.c.l.b16 %v128
  %v452 = vunpack.c.h.b16 %v128
  %v453 = vunpack.c.l.b16 %v129
  %v454 = vunpack.c.h.b16 %v129
  %v455 = vunpack.c.l.b16 %v130
  %v456 = vunpack.c.l.b16 %v131
  %v457 = vunpack.c.h.b16 %v131
  %v458 = vunpack.c.l.b16 %v132
  %v459 = vunpack.c.h.b16 %v132
  %v460 = vunpack.c.l.b16 %v133
  %v461 = vunpack.c.l.b16 %v134
  %v462 = vunpack.c.h.b16 %v134
  %v463 = vunpack.c.l.b16 %v135
  %v464 = vunpack.c.h.b16 %v135
  %v465 = vunpack.c.l.b16 %v136
  %v466 = vunpack.c.l.b16 %v137
  %v467 = vunpack.c.h.b16 %v137
  %v468 = vunpack.c.l.b16 %v138
  %v469 = vunpack.c.h.b16 %v138
  %v470 = vunpack.c.l.b16 %v139
  %v471 = vunpack.c.l.b16 %v140
  %v472 = vunpack.c.h.b16 %v140
  %v473 = vunpack.c.l.b16 %v141
  %v474 = vunpack.c.h.b16 %v141
  %v475 = vunpack.c.l.b16 %v142
  %v476 = vunpack.c.l.b16 %v143
  %v477 = vunpack.c.h.b16 %v143
  %v478 = vunpack.c.l.b16 %v144
  %v479 = vunpack.c.h.b16 %v144
  %v480 = vunpack.c.l.b16 %v145
  %v481 = vunpack.c.l.b16 %v146
  %v482 = vunpack.c.h.b16 %v146
  %v483 = vunpack.c.l.b16 %v147
  %v484 = vunpack.c.h.b16 %v147
  %v485 = vunpack.c.l.b16 %v148
  %v486 = vunpack.c.l.b16 %v149
  %v487 = vunpack.c.h.b16 %v149
  %v488 = vunpack.c.l.b16 %v150
  %v489 = vunpack.c.h.b16 %v150
  %v490 = vunpack.c.l.b16 %v151
  %v491 = vunpack.c.l.b16 %v152
  %v492 = vunpack.c.h.b16 %v152
  %v493 = vunpack.c.l.b16 %v153
  %v494 = vunpack.c.h.b16 %v153
  %v495 = vunpack.c.l.b16 %v154
  %v496 = vunpack.c.l.b16 %v155
  %v497 = vunpack.c.h.b16 %v155
  %v498 = vunpack.c.l.b16 %v156
  %v499 = vunpack.c.h.b16 %v156
  %v500 = vunpack.c.l.b16 %v157
  %v501 = vunpack.c.l.b16 %v158
  %v502 = vunpack.c.h.b16 %v158
  %v503 = vunpack.c.l.b16 %v159
  %v504 = vunpack.c.h.b16 %v159
  %v505 = vunpack.c.l.b16 %v160
  %v506 = vunpack.c.l.b16 %v161
  %v507 = vunpack.c.h.b16 %v161
  %v508 = vunpack.c.l.b16 %v162
  %v509 = vunpack.c.h.b16 %v162
  %v510 = vunpack.c.l.b16 %v163
  %v511 = vunpack.c.l.b16 %v164
  %v512 = vunpack.c.h.b16 %v164
  %v513 = vunpack.c.l.b16 %v165
  %v514 = vunpack.c.h.b16 %v165
  %v515 = vunpack.c.l.b16 %v166
  %v516 = vunpack.c.l.b16 %v167
  %v517 = vunpack.c.h.b16 %v167
  %v518 = vunpack.c.l.b16 %v168
  %v519 = vunpack.c.h.b16 %v168
  %v520 = vunpack.c.l.b16 %v169
  %v521 = vunpack.c.l.b16 %v170
  %v522 = vunpack.c.h.b16 %v170
  %v523 = vunpack.c.l.b16 %v171
  %v524 = vunpack.c.h.b16 %v171
  %v525 = vunpack.c.l.b16 %v172
  %v526 = vunpack.c.l.b16 %v173
  %v527 = vunpack.c.h.b16 %v173
  %v528 = vunpack.c.l.b16 %v174
  %v529 = vunpack.c.h.b16 %v174
  %v530 = vunpack.c.l.b16 %v175
  %v531 = vunpack.c.l.b16 %v176
  %v532 = vunpack.c.h.b16 %v176
  %v533 = vunpack.c.l.b16 %v177
  %v534 = vunpack.c.h.b16 %v177
  %v535 = vunpack.c.l.b16 %v178
  %v536 = vunpack.c.l.b16 %v179
  %v537 = vunpack.c.h.b16 %v179
  %v538 = vunpack.c.l.b16 %v180
  %v539 = vunpack.c.h.b16 %v180
  %v540 = vunpack.c.l.b16 %v181
  %v541 = vunpack.c.l.b16 %v182
  %v542 = vunpack.c.h.b16 %v182
  %v543 = vunpack.c.l.b16 %v183
  %v544 = vunpack.c.h.b16 %v183
  %v545 = vunpack.c.l.b16 %v184
  %v546 = vunpack.c.l.b16 %v185
  %v547 = vunpack.c.h.b16 %v185
  %v548 = vunpack.c.l.b16 %v186
  %v549 = vunpack.c.h.b16 %v186
  %v550 = vunpack.c.l.b16 %v187
  %v551 = vunpack.c.l.b16 %v188
  %v552 = vunpack.c.h.b16 %v188
  %v553 = vunpack.c.l.b16 %v189
  %v554 = vunpack.c.h.b16 %v189
  %v555 = vunpack.c.l.b16 %v190
  %v556 = vunpack.c.l.b16 %v191
  %v557 = vunpack.c.h.b16 %v191
  %v558 = vunpack.c.l.b16 %v192
  %v559 = vunpack.c.h.b16 %v192
  %v560 = vunpack.c.l.b16 %v193
  %v561 = vunpack.c.l.b16 %v194
  %v562 = vunpack.c.h.b16 %v194
  %v563 = vunpack.c.l.b16 %v195
  %v564 = vunpack.c.h.b16 %v195
  %v565 = vunpack.c.l.b16 %v196
  %v566 = vunpack.c.l.b16 %v197
  %v567 = vunpack.c.h.b16 %v197
  %v568 = vunpack.c.l.b16 %v198
  %v569 = vunpack.c.h.b16 %v198
  %v570 = vunpack.c.l.b16 %v199
  %v571 = vunpack.c.l.b16 %v200
  %v572 = vunpack.c.h.b16 %v200
  %v573 = vunpack.c.l.b16 %v201
  %v574 = vunpack.c.h.b16 %v201
  %v575 = vunpack.c.l.b16 %v202
  %v576 = vunpack.c.l.b16 %v203
  %v577 = vunpack.c.h.b16 %v203
  %v578 = vunpack.c.l.b16 %v204
  %v579 = vunpack.c.h.b16 %v204
  %v580 = vunpack.c.l.b16 %v205
  %v581 = vunpack.c.l.b16 %v206
  %v582 = vunpack.c.h.b16 %v206
  %v583 = vunpack.c.l.b16 %v207
  %v584 = vunpack.c.h.b16 %v207
  %v585 = vunpack.c.l.b16 %v208
  %v586 = vpack.c.b16 %v391, %v386
  %v587 = vpack.c.b16 %v392, %v387
  %v588 = vpack.c.b16 %v393, %v388
  %v589 = vpack.c.b16 %v394, %v389
  %v590 = vpack.c.b16 %v395, %v390
  %v591 = vpack.c.b16 %v401, %v396
  %v592 = vpack.c.b16 %v402, %v397
  %v593 = vpack.c.b16 %v403, %v398
  %v594 = vpack.c.b16 %v404, %v399
  %v595 = vpack.c.b16 %v405, %v400
  %v596 = vpack.c.b16 %v411, %v406
  %v597 = vpack.c.b16 %v412, %v407
  %v598 = vpack.c.b16 %v413, %v408
  %v599 = vpack.c.b16 %v414, %v409
  %v600 = vpack.c.b16 %v415, %v410
  %v601 = vpack.c.b16 %v421, %v416
  %v602 = vpack.c.b16 %v422, %v417
  %v603 = vpack.c.b16 %v423, %v418
  %v604 = vpack.c.b16 %v424, %v419
  %v605 = vpack.c.b16 %v425, %v420
  %v606 = vpack.c.b16 %v431, %v426
  %v607 = vpack.c.b16 %v432, %v427
  %v608 = vpack.c.b16 %v433, %v428
  %v609 = vpack.c.b16 %v434, %v429
  %v610 = vpack.c.b16 %v435, %v430
  %v611 = vpack.c.b16 %v441, %v436
  %v612 = vpack.c.b16 %v442, %v437
  %v613 = vpack.c.b16 %v443, %v438
  %v614 = vpack.c.b16 %v444, %v439
  %v615 = vpack.c.b16 %v445, %v440
  %v616 = vpack.c.b16 %v451, %v446
  %v617 = vpack.c.b16 %v452, %v447
  %v618 = vpack.c.b16 %v453, %v448
  %v619 = vpack.c.b16 %v454, %v449
  %v620 = vpack.c.b16 %v455, %v450
  %v621 = vpack.c.b16 %v461, %v456
  %v622 = vpack.c.b16 %v462, %v457
  %v623 = vpack.c.b16 %v463, %v458
  %v624 = vpack.c.b16 %v464, %v459
  %v625 = vpack.c.b16 %v465, %v460
  %v626 = vpack.c.b16 %v471, %v466
  %v627 = vpack.c.b16 %v472, %v467
  %v628 = vpack.c.b16 %v473, %v468
  %v629 = vpack.c.b16 %v474, %v469
  %v630 = vpack.c.b16 %v475, %v470
  %v631 = vpack.c.b16 %v481, %v476
  %v632 = vpack.c.b16 %v482, %v477
  %v633 = vpack.c.b16 %v483, %v478
  %v634 = vpack.c.b16 %v484, %v479
  %v635 = vpack.c.b16 %v485, %v480
  %v636 = vpack.c.b16 %v491, %v486
  %v637 = vpack.c.b16 %v492, %v487
  %v638 = vpack.c.b16 %v493, %v488
  %v639 = vpack.c.b16 %v494, %v489
  %v640 = vpack.c.b16 %v495, %v490
  %v641 = vpack.c.b16 %v501, %v496
  %v642 = vpack.c.b16 %v502, %v497
  %v643 = vpack.c.b16 %v503, %v498
  %v644 = vpack.c.b16 %v504, %v499
  %v645 = vpack.c.b16 %v505, %v500
  %v646 = vpack.c.b16 %v511, %v506
  %v647 = vpack.c.b16 %v512, %v507
  %v648 = vpack.c.b16 %v513, %v508
  %v649 = vpack.c.b16 %v514, %v509
  %v650 = vpack.c.b16 %v515, %v510
  %v651 = vpack.c.b16 %v521, %v516
  %v652 = vpack.c.b16 %v522, %v517
  %v653 = vpack.c.b16 %v523, %v518
  %v654 = vpack.c.b16 %v524, %v519
  %v655 = vpack.c.b16 %v525, %v520
  %v656 = vpack.c.b16 %v531, %v526
  %v657 = vpack.c.b16 %v532, %v527
  %v658 = vpack.c.b16 %v533, %v528
  %v659 = vpack.c.b16 %v534, %v529
  %v660 = vpack.c.b16 %v535, %v530
  %v661 = vpack.c.b16 %v541, %v536
  %v662 = vpack.c.b16 %v542, %v537
  %v663 = vpack.c.b16 %v543, %v538
  %v664 = vpack.c.b16 %v544, %v539
  %v665 = vpack.c.b16 %v545, %v540
  %v666 = vpack.c.b16 %v551, %v546
  %v667 = vpack.c.b16 %v552, %v547
  %v668 = vpack.c.b16 %v553, %v548
  %v669 = vpack.c.b16 %v554, %v549
  %v670 = vpack.c.b16 %v555, %v550
  %v671 = vpack.c.b16 %v561, %v556
  %v672 = vpack.c.b16 %v562, %v557
  %v673 = vpack.c.b16 %v563, %v558
  %v674 = vpack.c.b16 %v564, %v559
  %v675 = vpack.c.b16 %v565, %v560
  %v676 = vpack.c.b16 %v571, %v566
  %v677 = vpack.c.b16 %v572, %v567
  %v678 = vpack.c.b16 %v573, %v568
  %v679 = vpack.c.b16 %v574, %v569
  %v680 = vpack.c.b16 %v575, %v570
  %v681 = vpack.c.b16 %v581, %v576
  %v682 = vpack.c.b16 %v582, %v577
  %v683 = vpack.c.b16 %v583, %v578
  %v684 = vpack.c.b16 %v584, %v579
  %v685 = vpack.c.b16 %v585, %v580
  %vm786 = vcmask 523264
  %v788 = vsel %vm786, %v258, 0
  %v791 = vsel %vm786, %v261, 0
  %793 = vmatprep.subr.bf16.mxu0 %v587
  %794 = vmatpush1.bf16.msra.mxu0 %v586
  %795 = vmatprep.subr.bf16.mxu0 %v592
  %796 = vmatpush1.bf16.msra.mxu0 %v591
  %797 = vmatprep.subr.bf16.mxu0 %v597
  %798 = vmatpush1.bf16.msra.mxu0 %v596
  %799 = vmatprep.subr.bf16.mxu0 %v602
  %800 = vmatpush1.bf16.msra.mxu0 %v601
  %801 = vmatprep.subr.bf16.mxu0 %v607
  %802 = vmatpush1.bf16.msra.mxu0 %v606
  %803 = vmatprep.subr.bf16.mxu0 %v612
  %804 = vmatpush1.bf16.msra.mxu0 %v611
  %805 = vmatprep.subr.bf16.mxu0 %v617
  %806 = vmatpush1.bf16.msra.mxu0 %v616
  %807 = vmatprep.subr.bf16.mxu0 %v622
  %808 = vmatpush1.bf16.msra.mxu0 %v621
  %809 = vmatprep.subr.bf16.mxu0 %v627
  %810 = vmatpush1.bf16.msra.mxu0 %v626
  %811 = vmatprep.subr.bf16.mxu0 %v632
  %812 = vmatpush1.bf16.msra.mxu0 %v631
  %813 = vmatprep.subr.bf16.mxu0 %v637
  %814 = vmatpush1.bf16.msra.mxu0 %v636
  %815 = vmatprep.subr.bf16.mxu0 %v642
  %816 = vmatpush1.bf16.msra.mxu0 %v641
  %817 = vmatprep.subr.bf16.mxu0 %v647
  %818 = vmatpush1.bf16.msra.mxu0 %v646
  %819 = vmatprep.subr.bf16.mxu0 %v652
  %820 = vmatpush1.bf16.msra.mxu0 %v651
  %821 = vmatprep.subr.bf16.mxu0 %v657
  %822 = vmatpush1.bf16.msra.mxu0 %v656
  %823 = vmatprep.subr.bf16.mxu0 %v662
  %824 = vmatpush1.bf16.msra.mxu0 %v661
  %825 = vmatprep.mubr.bf16.mxu0 %v257
  %826 = vmatmul.mubr.bf16.gmra.mrb[0].mxu0 %v256
  %v827 = vpop.f32.mrb[0].mxu0
  %v828 = vadd.f32 %v214, %v827
  %v829 = vpop.f32.mrb[0].mxu0
  %v830 = vadd.f32 %v218, %v829
  %v831 = vpop.f32.mrb[0].mxu0
  %v832 = vadd.f32 %v214, %v831
  %v833 = vpop.f32.mrb[0].mxu0
  %v834 = vadd.f32 %v218, %v833
  %835 = vmatprep.mubr.bf16.mxu0 %v260
  %836 = vmatmul.mubr.bf16.gmra.mrb[0].mxu0 %v259
  %v837 = vpop.f32.mrb[0].mxu0
  %v838 = vadd.f32 %v214, %v837
  %v839 = vpop.f32.mrb[0].mxu0
  %v840 = vadd.f32 %v218, %v839
  %v841 = vpop.f32.mrb[0].mxu0
  %v842 = vadd.f32 %v214, %v841
  %v843 = vpop.f32.mrb[0].mxu0
  %v844 = vadd.f32 %v218, %v843
  %845 = vdwg.mxu0
  %846 = vmatprep.subr.bf16.mxu0 %v667
  %847 = vmatpush1.bf16.msra.mxu0 %v666
  %848 = vmatprep.subr.bf16.mxu0 %v672
  %849 = vmatpush1.bf16.msra.mxu0 %v671
  %850 = vmatprep.subr.bf16.mxu0 %v677
  %851 = vmatpush1.bf16.msra.mxu0 %v676
  %852 = vmatprep.subr.bf16.mxu0 %v682
  %853 = vmatpush1.bf16.msra.mxu0 %v681
  %854 = vmatprep.subr.bf16.mxu0 0
  %855 = vmatpush1.bf16.msra.mxu0 0
  %856 = vmatprep.subr.bf16.mxu0 0
  %857 = vmatpush1.bf16.msra.mxu0 0
  %858 = vmatprep.subr.bf16.mxu0 0
  %859 = vmatpush1.bf16.msra.mxu0 0
  %860 = vmatprep.subr.bf16.mxu0 0
  %861 = vmatpush1.bf16.msra.mxu0 0
  %862 = vmatprep.subr.bf16.mxu0 0
  %863 = vmatpush1.bf16.msra.mxu0 0
  %864 = vmatprep.subr.bf16.mxu0 0
  %865 = vmatpush1.bf16.msra.mxu0 0
  %866 = vmatprep.subr.bf16.mxu0 0
  %867 = vmatpush1.bf16.msra.mxu0 0
  %868 = vmatprep.subr.bf16.mxu0 0
  %869 = vmatpush1.bf16.msra.mxu0 0
  %870 = vmatprep.subr.bf16.mxu0 0
  %871 = vmatpush1.bf16.msra.mxu0 0
  %872 = vmatprep.subr.bf16.mxu0 0
  %873 = vmatpush1.bf16.msra.mxu0 0
  %874 = vmatprep.subr.bf16.mxu0 0
  %875 = vmatpush1.bf16.msra.mxu0 0
  %876 = vmatprep.subr.bf16.mxu0 0
  %877 = vmatpush1.bf16.msra.mxu0 0
  %878 = vmatprep.mubr.bf16.mxu0 0
  %879 = vmatmul.mubr.bf16.gmra.mrb[0].mxu0 %v788
  %v880 = vpop.f32.mrb[0].mxu0
  %v881 = vadd.f32 %v828, %v880
  %v882 = vpop.f32.mrb[0].mxu0
  %v883 = vadd.f32 %v830, %v882
  %v884 = vpop.f32.mrb[0].mxu0
  %v885 = vadd.f32 %v832, %v884
  %v886 = vpop.f32.mrb[0].mxu0
  %v887 = vadd.f32 %v834, %v886
  %888 = vmatprep.mubr.bf16.mxu0 0
  %889 = vmatmul.mubr.bf16.gmra.mrb[0].mxu0 %v791
  %v890 = vpop.f32.mrb[0].mxu0
  %v891 = vadd.f32 %v838, %v890
  %v892 = vpop.f32.mrb[0].mxu0
  %v893 = vadd.f32 %v840, %v892
  %v894 = vpop.f32.mrb[0].mxu0
  %v895 = vadd.f32 %v842, %v894
  %v896 = vpop.f32.mrb[0].mxu0
  %v897 = vadd.f32 %v844, %v896
  %898 = vdwg.mxu0
  %899 = vmatprep.subr.bf16.mxu0 %v589
  %900 = vmatpush1.bf16.msra.mxu0 %v588
  %901 = vmatprep.subr.bf16.mxu0 %v594
  %902 = vmatpush1.bf16.msra.mxu0 %v593
  %903 = vmatprep.subr.bf16.mxu0 %v599
  %904 = vmatpush1.bf16.msra.mxu0 %v598
  %905 = vmatprep.subr.bf16.mxu0 %v604
  %906 = vmatpush1.bf16.msra.mxu0 %v603
  %907 = vmatprep.subr.bf16.mxu0 %v609
  %908 = vmatpush1.bf16.msra.mxu0 %v608
  %909 = vmatprep.subr.bf16.mxu0 %v614
  %910 = vmatpush1.bf16.msra.mxu0 %v613
  %911 = vmatprep.subr.bf16.mxu0 %v619
  %912 = vmatpush1.bf16.msra.mxu0 %v618
  %913 = vmatprep.subr.bf16.mxu0 %v624
  %914 = vmatpush1.bf16.msra.mxu0 %v623
  %915 = vmatprep.subr.bf16.mxu0 %v629
  %916 = vmatpush1.bf16.msra.mxu0 %v628
  %917 = vmatprep.subr.bf16.mxu0 %v634
  %918 = vmatpush1.bf16.msra.mxu0 %v633
  %919 = vmatprep.subr.bf16.mxu0 %v639
  %920 = vmatpush1.bf16.msra.mxu0 %v638
  %921 = vmatprep.subr.bf16.mxu0 %v644
  %922 = vmatpush1.bf16.msra.mxu0 %v643
  %923 = vmatprep.subr.bf16.mxu0 %v649
  %924 = vmatpush1.bf16.msra.mxu0 %v648
  %925 = vmatprep.subr.bf16.mxu0 %v654
  %926 = vmatpush1.bf16.msra.mxu0 %v653
  %927 = vmatprep.subr.bf16.mxu0 %v659
  %928 = vmatpush1.bf16.msra.mxu0 %v658
  %929 = vmatprep.subr.bf16.mxu0 %v664
  %930 = vmatpush1.bf16.msra.mxu0 %v663
  %931 = vmatprep.mubr.bf16.mxu0 %v257
  %932 = vmatmul.mubr.bf16.gmra.mrb[0].mxu0 %v256
  %v933 = vpop.f32.mrb[0].mxu0
  %v934 = vadd.f32 %v222, %v933
  %v935 = vpop.f32.mrb[0].mxu0
  %v936 = vadd.f32 %v226, %v935
  %v937 = vpop.f32.mrb[0].mxu0
  %v938 = vadd.f32 %v222, %v937
  %v939 = vpop.f32.mrb[0].mxu0
  %v940 = vadd.f32 %v226, %v939
  %941 = vmatprep.mubr.bf16.mxu0 %v260
  %942 = vmatmul.mubr.bf16.gmra.mrb[0].mxu0 %v259
  %v943 = vpop.f32.mrb[0].mxu0
  %v944 = vadd.f32 %v222, %v943
  %v945 = vpop.f32.mrb[0].mxu0
  %v946 = vadd.f32 %v226, %v945
  %v947 = vpop.f32.mrb[0].mxu0
  %v948 = vadd.f32 %v222, %v947
  %v949 = vpop.f32.mrb[0].mxu0
  %v950 = vadd.f32 %v226, %v949
  %951 = vdwg.mxu0
  %952 = vmatprep.subr.bf16.mxu0 %v669
  %953 = vmatpush1.bf16.msra.mxu0 %v668
  %954 = vmatprep.subr.bf16.mxu0 %v674
  %955 = vmatpush1.bf16.msra.mxu0 %v673
  %956 = vmatprep.subr.bf16.mxu0 %v679
  %957 = vmatpush1.bf16.msra.mxu0 %v678
  %958 = vmatprep.subr.bf16.mxu0 %v684
  %959 = vmatpush1.bf16.msra.mxu0 %v683
  %960 = vmatprep.subr.bf16.mxu0 0
  %961 = vmatpush1.bf16.msra.mxu0 0
  %962 = vmatprep.subr.bf16.mxu0 0
  %963 = vmatpush1.bf16.msra.mxu0 0
  %964 = vmatprep.subr.bf16.mxu0 0
  %965 = vmatpush1.bf16.msra.mxu0 0
  %966 = vmatprep.subr.bf16.mxu0 0
  %967 = vmatpush1.bf16.msra.mxu0 0
  %968 = vmatprep.subr.bf16.mxu0 0
  %969 = vmatpush1.bf16.msra.mxu0 0
  %970 = vmatprep.subr.bf16.mxu0 0
  %971 = vmatpush1.bf16.msra.mxu0 0
  %972 = vmatprep.subr.bf16.mxu0 0
  %973 = vmatpush1.bf16.msra.mxu0 0
  %974 = vmatprep.subr.bf16.mxu0 0
  %975 = vmatpush1.bf16.msra.mxu0 0
  %976 = vmatprep.subr.bf16.mxu0 0
  %977 = vmatpush1.bf16.msra.mxu0 0
  %978 = vmatprep.subr.bf16.mxu0 0
  %979 = vmatpush1.bf16.msra.mxu0 0
  %980 = vmatprep.subr.bf16.mxu0 0
  %981 = vmatpush1.bf16.msra.mxu0 0
  %982 = vmatprep.subr.bf16.mxu0 0
  %983 = vmatpush1.bf16.msra.mxu0 0
  %984 = vmatprep.mubr.bf16.mxu0 0
  %985 = vmatmul.mubr.bf16.gmra.mrb[0].mxu0 %v788
  %v986 = vpop.f32.mrb[0].mxu0
  %v987 = vadd.f32 %v934, %v986
  %v988 = vpop.f32.mrb[0].mxu0
  %v989 = vadd.f32 %v936, %v988
  %v990 = vpop.f32.mrb[0].mxu0
  %v991 = vadd.f32 %v938, %v990
  %v992 = vpop.f32.mrb[0].mxu0
  %v993 = vadd.f32 %v940, %v992
  %994 = vmatprep.mubr.bf16.mxu0 0
  %995 = vmatmul.mubr.bf16.gmra.mrb[0].mxu0 %v791
  %v996 = vpop.f32.mrb[0].mxu0
  %v997 = vadd.f32 %v944, %v996
  %v998 = vpop.f32.mrb[0].mxu0
  %v999 = vadd.f32 %v946, %v998
  %v1000 = vpop.f32.mrb[0].mxu0
  %v1001 = vadd.f32 %v948, %v1000
  %v1002 = vpop.f32.mrb[0].mxu0
  %v1003 = vadd.f32 %v950, %v1002
  %1004 = vdwg.mxu0
  %1005 = vmatprep.subr.bf16.mxu0 0
  %1006 = vmatpush1.bf16.msra.mxu0 %v590
  %1007 = vmatprep.subr.bf16.mxu0 0
  %1008 = vmatpush1.bf16.msra.mxu0 %v595
  %1009 = vmatprep.subr.bf16.mxu0 0
  %1010 = vmatpush1.bf16.msra.mxu0 %v600
  %1011 = vmatprep.subr.bf16.mxu0 0
  %1012 = vmatpush1.bf16.msra.mxu0 %v605
  %1013 = vmatprep.subr.bf16.mxu0 0
  %1014 = vmatpush1.bf16.msra.mxu0 %v610
  %1015 = vmatprep.subr.bf16.mxu0 0
  %1016 = vmatpush1.bf16.msra.mxu0 %v615
  %1017 = vmatprep.subr.bf16.mxu0 0
  %1018 = vmatpush1.bf16.msra.mxu0 %v620
  %1019 = vmatprep.subr.bf16.mxu0 0
  %1020 = vmatpush1.bf16.msra.mxu0 %v625
  %1021 = vmatprep.subr.bf16.mxu0 0
  %1022 = vmatpush1.bf16.msra.mxu0 %v630
  %1023 = vmatprep.subr.bf16.mxu0 0
  %1024 = vmatpush1.bf16.msra.mxu0 %v635
  %1025 = vmatprep.subr.bf16.mxu0 0
  %1026 = vmatpush1.bf16.msra.mxu0 %v640
  %1027 = vmatprep.subr.bf16.mxu0 0
  %1028 = vmatpush1.bf16.msra.mxu0 %v645
  %1029 = vmatprep.subr.bf16.mxu0 0
  %1030 = vmatpush1.bf16.msra.mxu0 %v650
  %1031 = vmatprep.subr.bf16.mxu0 0
  %1032 = vmatpush1.bf16.msra.mxu0 %v655
  %1033 = vmatprep.subr.bf16.mxu0 0
  %1034 = vmatpush1.bf16.msra.mxu0 %v660
  %1035 = vmatprep.subr.bf16.mxu0 0
  %1036 = vmatpush1.bf16.msra.mxu0 %v665
  %1037 = vmatprep.mubr.bf16.mxu0 %v257
  %1038 = vmatmul.mubr.bf16.gmra.mrb[0].mxu0 %v256
  %v1039 = vpop.f32.mrb[0].mxu0
  %v1040 = vadd.f32 %v230, %v1039
  %v1041 = vpop.f32.mrb[0].mxu0
  %v1042 = vpop.f32.mrb[0].mxu0
  %v1043 = vadd.f32 %v230, %v1042
  %v1044 = vpop.f32.mrb[0].mxu0
  %1045 = vmatprep.mubr.bf16.mxu0 %v260
  %1046 = vmatmul.mubr.bf16.gmra.mrb[0].mxu0 %v259
  %v1047 = vpop.f32.mrb[0].mxu0
  %v1048 = vadd.f32 %v230, %v1047
  %v1049 = vpop.f32.mrb[0].mxu0
  %v1050 = vpop.f32.mrb[0].mxu0
  %v1051 = vadd.f32 %v230, %v1050
  %v1052 = vpop.f32.mrb[0].mxu0
  %1053 = vdwg.mxu0
  %1054 = vmatprep.subr.bf16.mxu0 0
  %1055 = vmatpush1.bf16.msra.mxu0 %v670
  %1056 = vmatprep.subr.bf16.mxu0 0
  %1057 = vmatpush1.bf16.msra.mxu0 %v675
  %1058 = vmatprep.subr.bf16.mxu0 0
  %1059 = vmatpush1.bf16.msra.mxu0 %v680
  %1060 = vmatprep.subr.bf16.mxu0 0
  %1061 = vmatpush1.bf16.msra.mxu0 %v685
  %1062 = vmatprep.subr.bf16.mxu0 0
  %1063 = vmatpush1.bf16.msra.mxu0 0
  %1064 = vmatprep.subr.bf16.mxu0 0
  %1065 = vmatpush1.bf16.msra.mxu0 0
  %1066 = vmatprep.subr.bf16.mxu0 0
  %1067 = vmatpush1.bf16.msra.mxu0 0
  %1068 = vmatprep.subr.bf16.mxu0 0
  %1069 = vmatpush1.bf16.msra.mxu0 0
  %1070 = vmatprep.subr.bf16.mxu0 0
  %1071 = vmatpush1.bf16.msra.mxu0 0
  %1072 = vmatprep.subr.bf16.mxu0 0
  %1073 = vmatpush1.bf16.msra.mxu0 0
  %1074 = vmatprep.subr.bf16.mxu0 0
  %1075 = vmatpush1.bf16.msra.mxu0 0
  %1076 = vmatprep.subr.bf16.mxu0 0
  %1077 = vmatpush1.bf16.msra.mxu0 0
  %1078 = vmatprep.subr.bf16.mxu0 0
  %1079 = vmatpush1.bf16.msra.mxu0 0
  %1080 = vmatprep.subr.bf16.mxu0 0
  %1081 = vmatpush1.bf16.msra.mxu0 0
  %1082 = vmatprep.subr.bf16.mxu0 0
  %1083 = vmatpush1.bf16.msra.mxu0 0
  %1084 = vmatprep.subr.bf16.mxu0 0
  %1085 = vmatpush1.bf16.msra.mxu0 0
  %1086 = vmatprep.mubr.bf16.mxu0 0
  %1087 = vmatmul.mubr.bf16.gmra.mrb[0].mxu0 %v788
  %v1088 = vpop.f32.mrb[0].mxu0
  %v1089 = vadd.f32 %v1040, %v1088
  %v1090 = vpop.f32.mrb[0].mxu0
  %v1091 = vpop.f32.mrb[0].mxu0
  %v1092 = vadd.f32 %v1043, %v1091
  %v1093 = vpop.f32.mrb[0].mxu0
  %1094 = vmatprep.mubr.bf16.mxu0 0
  %1095 = vmatmul.mubr.bf16.gmra.mrb[0].mxu0 %v791
  %v1096 = vpop.f32.mrb[0].mxu0
  %v1097 = vadd.f32 %v1048, %v1096
  %v1098 = vpop.f32.mrb[0].mxu0
  %v1099 = vpop.f32.mrb[0].mxu0
  %v1100 = vadd.f32 %v1051, %v1099
  %v1101 = vpop.f32.mrb[0].mxu0
  %1102 = vdwg.mxu0
  %v1103 = vmax.f32 %v881, 0.0
  %v1104 = vmax.f32 %v883, 0.0
  %v1105 = vmax.f32 %v987, 0.0
  %v1106 = vmax.f32 %v989, 0.0
  %v1107 = vmax.f32 %v1089, 0.0
  %v1108 = vmax.f32 %v885, 0.0
  %v1109 = vmax.f32 %v887, 0.0
  %v1110 = vmax.f32 %v991, 0.0
  %v1111 = vmax.f32 %v993, 0.0
  %v1112 = vmax.f32 %v1092, 0.0
  %v1113 = vmax.f32 %v891, 0.0
  %v1114 = vmax.f32 %v893, 0.0
  %v1115 = vmax.f32 %v997, 0.0
  %v1116 = vmax.f32 %v999, 0.0
  %v1117 = vmax.f32 %v1097, 0.0
  %v1118 = vmax.f32 %v895, 0.0
  %v1119 = vmax.f32 %v897, 0.0
  %v1120 = vmax.f32 %v1001, 0.0
  %v1121 = vmax.f32 %v1003, 0.0
  %v1122 = vmax.f32 %v1100, 0.0
  %v1123 = vld [vmem:[%s3] sm:$0x1f]
  %v1124 = vld [vmem:[%s4] sm:$0x1f]
  %v1125 = vld [vmem:[%s15] sm:$0xff]
  %v1126 = vld [vmem:[%s15 + $0x8] sm:$0xff]
  %v1127 = vld [vmem:[%s15 + $0x10] sm:$0xff]
  %v1128 = vld [vmem:[%s15 + $0x18] sm:$0xff]
  %v1129 = vld [vmem:[%s15 + $0x20] sm:$0xff]
  %v1130 = vld [vmem:[%s15 + $0x28] sm:$0xff]
  %v1131 = vld [vmem:[%s15 + $0x30] sm:$0xff]
  %v1132 = vld [vmem:[%s15 + $0x38] sm:$0xff]
  %v1133 = vld [vmem:[%s15 + $0x40] sm:$0xff]
  %v1134 = vld [vmem:[%s15 + $0x48] sm:$0xff]
  %v1135 = vld [vmem:[%s15 + $0x50] sm:$0xff]
  %v1136 = vld [vmem:[%s15 + $0x58] sm:$0xff]
  %v1137 = vld [vmem:[%s15 + $0x60] sm:$0xff]
  %v1138 = vld [vmem:[%s15 + $0x68] sm:$0xff]
  %v1139 = vld [vmem:[%s15 + $0x70] sm:$0xff]
  %v1140 = vld [vmem:[%s15 + $0x78] sm:$0xff]
  %v1141 = vld [vmem:[%s15 + $0x80] sm:$0xff]
  %v1142 = vld [vmem:[%s15 + $0x88] sm:$0xff]
  %v1143 = vld [vmem:[%s15 + $0x90] sm:$0xff]
  %v1144 = vld [vmem:[%s15 + $0x98] sm:$0xff]
  %v1145 = vld [vmem:[%s15 + $0xa0] sm:$0xff]
  %v1146 = vld [vmem:[%s15 + $0xa8] sm:$0xff]
  %v1147 = vld [vmem:[%s15 + $0xb0] sm:$0xff]
  %v1148 = vld [vmem:[%s15 + $0xb8] sm:$0xff]
  %v1149 = vld [vmem:[%s15 + $0xc0] sm:$0xff]
  %v1150 = vld [vmem:[%s15 + $0xc8] sm:$0xff]
  %v1151 = vld [vmem:[%s15 + $0xd0] sm:$0xff]
  %v1152 = vld [vmem:[%s15 + $0xd8] sm:$0xff]
  %v1153 = vld [vmem:[%s15 + $0xe0] sm:$0xff]
  %v1154 = vld [vmem:[%s15 + $0xe8] sm:$0xff]
  %v1155 = vld [vmem:[%s15 + $0xf0] sm:$0xff]
  %v1156 = vld [vmem:[%s15 + $0xf8] sm:$0xff]
  %v1157 = vld [vmem:[%s15 + $0x100] sm:$0xff]
  %v1158 = vld [vmem:[%s15 + $0x108] sm:$0xff]
  %v1159 = vld [vmem:[%s15 + $0x110] sm:$0xff]
  %v1160 = vld [vmem:[%s15 + $0x118] sm:$0xff]
  %v1161 = vld [vmem:[%s15 + $0x120] sm:$0xff]
  %v1162 = vld [vmem:[%s15 + $0x128] sm:$0xff]
  %v1163 = vld [vmem:[%s15 + $0x130] sm:$0xff]
  %v1164 = vld [vmem:[%s15 + $0x138] sm:$0xff]
  %v1165 = vld [vmem:[%s15 + $0x140] sm:$0xff]
  %v1166 = vld [vmem:[%s15 + $0x148] sm:$0xff]
  %v1167 = vld [vmem:[%s15 + $0x150] sm:$0xff]
  %v1168 = vld [vmem:[%s15 + $0x158] sm:$0xff]
  %v1169 = vld [vmem:[%s15 + $0x160] sm:$0xff]
  %v1170 = vld [vmem:[%s15 + $0x168] sm:$0xff]
  %v1171 = vld [vmem:[%s15 + $0x170] sm:$0xff]
  %v1172 = vld [vmem:[%s15 + $0x178] sm:$0xff]
  %v1173 = vld [vmem:[%s15 + $0x180] sm:$0xff]
  %v1174 = vld [vmem:[%s15 + $0x188] sm:$0xff]
  %v1175 = vld [vmem:[%s15 + $0x190] sm:$0xff]
  %v1176 = vld [vmem:[%s15 + $0x198] sm:$0xff]
  %v1177 = vld [vmem:[%s15 + $0x1a0] sm:$0xff]
  %v1178 = vld [vmem:[%s15 + $0x1a8] sm:$0xff]
  %v1179 = vld [vmem:[%s15 + $0x1b0] sm:$0xff]
  %v1180 = vld [vmem:[%s15 + $0x1b8] sm:$0xff]
  %v1181 = vld [vmem:[%s15 + $0x1c0] sm:$0xff]
  %v1182 = vld [vmem:[%s15 + $0x1c8] sm:$0xff]
  %v1183 = vld [vmem:[%s15 + $0x1d0] sm:$0xff]
  %v1184 = vld [vmem:[%s15 + $0x1d8] sm:$0xff]
  %v1185 = vld [vmem:[%s15 + $0x1e0] sm:$0xff]
  %v1186 = vld [vmem:[%s15 + $0x1e8] sm:$0xff]
  %v1187 = vld [vmem:[%s15 + $0x1f0] sm:$0xff]
  %v1188 = vld [vmem:[%s15 + $0x1f8] sm:$0xff]
  %v1189 = vld [vmem:[%s15 + $0x200] sm:$0xff]
  %v1190 = vld [vmem:[%s15 + $0x208] sm:$0xff]
  %v1191 = vld [vmem:[%s15 + $0x210] sm:$0xff]
  %v1192 = vld [vmem:[%s15 + $0x218] sm:$0xff]
  %v1193 = vld [vmem:[%s15 + $0x220] sm:$0xff]
  %v1194 = vld [vmem:[%s15 + $0x228] sm:$0xff]
  %v1195 = vld [vmem:[%s15 + $0x230] sm:$0xff]
  %v1196 = vld [vmem:[%s15 + $0x238] sm:$0xff]
  %v1197 = vld [vmem:[%s15 + $0x240] sm:$0xff]
  %v1198 = vld [vmem:[%s15 + $0x248] sm:$0xff]
  %v1199 = vld [vmem:[%s15 + $0x250] sm:$0xff]
  %v1200 = vld [vmem:[%s15 + $0x258] sm:$0xff]
  %v1201 = vld [vmem:[%s15 + $0x260] sm:$0xff]
  %v1202 = vld [vmem:[%s15 + $0x268] sm:$0xff]
  %v1203 = vld [vmem:[%s15 + $0x270] sm:$0xff]
  %v1204 = vld [vmem:[%s15 + $0x278] sm:$0xff]
  %v1205 = vld [vmem:[%s16] sm:$0xff]
  %v1206 = vld [vmem:[%s16 + $0x8] sm:$0xff]
  %v1207 = vld [vmem:[%s16 + $0x10] sm:$0xff]
  %v1208 = vld [vmem:[%s16 + $0x18] sm:$0xff]
  %v1209 = vld [vmem:[%s16 + $0x20] sm:$0xff]
  %v1210 = vld [vmem:[%s16 + $0x28] sm:$0xff]
  %v1211 = vld [vmem:[%s16 + $0x30] sm:$0xff]
  %v1212 = vld [vmem:[%s16 + $0x38] sm:$0xff]
  %v1213 = vld [vmem:[%s16 + $0x40] sm:$0xff]
  %v1214 = vld [vmem:[%s16 + $0x48] sm:$0xff]
  %v1215 = vadd.f32 %v1103, %v1108
  %v1216 = vadd.f32 %v1215, %v1113
  %v1217 = vadd.f32 %v1216, %v1118
  %v1218 = vrot.slane %v1217, 4
  %v1219 = vadd.f32 %v1217, %v1218
  %v1220 = vrot.slane %v1219, 2
  %v1221 = vadd.f32 %v1219, %v1220
  %v1222 = vrot.slane %v1221, 1
  %v1223 = vadd.f32 %v1221, %v1222
  %v1224 = vadd.f32 %v1104, %v1109
  %v1225 = vadd.f32 %v1224, %v1114
  %v1226 = vadd.f32 %v1225, %v1119
  %v1227 = vrot.slane %v1226, 4
  %v1228 = vadd.f32 %v1226, %v1227
  %v1229 = vrot.slane %v1228, 2
  %v1230 = vadd.f32 %v1228, %v1229
  %v1231 = vrot.slane %v1230, 1
  %v1232 = vadd.f32 %v1230, %v1231
  %v1233 = vadd.f32 %v1105, %v1110
  %v1234 = vadd.f32 %v1233, %v1115
  %v1235 = vadd.f32 %v1234, %v1120
  %v1236 = vrot.slane %v1235, 4
  %v1237 = vadd.f32 %v1235, %v1236
  %v1238 = vrot.slane %v1237, 2
  %v1239 = vadd.f32 %v1237, %v1238
  %v1240 = vrot.slane %v1239, 1
  %v1241 = vadd.f32 %v1239, %v1240
  %v1242 = vadd.f32 %v1106, %v1111
  %v1243 = vadd.f32 %v1242, %v1116
  %v1244 = vadd.f32 %v1243, %v1121
  %v1245 = vrot.slane %v1244, 4
  %v1246 = vadd.f32 %v1244, %v1245
  %v1247 = vrot.slane %v1246, 2
  %v1248 = vadd.f32 %v1246, %v1247
  %v1249 = vrot.slane %v1248, 1
  %v1250 = vadd.f32 %v1248, %v1249
  %v1251 = vadd.f32 %v1107, %v1112
  %v1252 = vadd.f32 %v1251, %v1117
  %v1253 = vadd.f32 %v1252, %v1122
  %v1254 = vrot.slane %v1253, 4
  %v1255 = vadd.f32 %v1253, %v1254
  %v1256 = vrot.slane %v1255, 2
  %v1257 = vadd.f32 %v1255, %v1256
  %v1258 = vrot.slane %v1257, 1
  %v1259 = vadd.f32 %v1257, %v1258
  %v1260 = vmul.f32 %v1103, %v1103
  %v1261 = vmul.f32 %v1104, %v1104
  %v1262 = vmul.f32 %v1105, %v1105
  %v1263 = vmul.f32 %v1106, %v1106
  %v1264 = vmul.f32 %v1107, %v1107
  %v1265 = vmul.f32 %v1108, %v1108
  %v1266 = vmul.f32 %v1109, %v1109
  %v1267 = vmul.f32 %v1110, %v1110
  %v1268 = vmul.f32 %v1111, %v1111
  %v1269 = vmul.f32 %v1112, %v1112
  %v1270 = vmul.f32 %v1113, %v1113
  %v1271 = vmul.f32 %v1114, %v1114
  %v1272 = vmul.f32 %v1115, %v1115
  %v1273 = vmul.f32 %v1116, %v1116
  %v1274 = vmul.f32 %v1117, %v1117
  %v1275 = vmul.f32 %v1118, %v1118
  %v1276 = vmul.f32 %v1119, %v1119
  %v1277 = vmul.f32 %v1120, %v1120
  %v1278 = vmul.f32 %v1121, %v1121
  %v1279 = vmul.f32 %v1122, %v1122
  %v1280 = vadd.f32 %v1260, %v1265
  %v1281 = vadd.f32 %v1280, %v1270
  %v1282 = vadd.f32 %v1281, %v1275
  %v1283 = vrot.slane %v1282, 4
  %v1284 = vadd.f32 %v1282, %v1283
  %v1285 = vrot.slane %v1284, 2
  %v1286 = vadd.f32 %v1284, %v1285
  %v1287 = vrot.slane %v1286, 1
  %v1288 = vadd.f32 %v1286, %v1287
  %v1289 = vadd.f32 %v1261, %v1266
  %v1290 = vadd.f32 %v1289, %v1271
  %v1291 = vadd.f32 %v1290, %v1276
  %v1292 = vrot.slane %v1291, 4
  %v1293 = vadd.f32 %v1291, %v1292
  %v1294 = vrot.slane %v1293, 2
  %v1295 = vadd.f32 %v1293, %v1294
  %v1296 = vrot.slane %v1295, 1
  %v1297 = vadd.f32 %v1295, %v1296
  %v1298 = vadd.f32 %v1262, %v1267
  %v1299 = vadd.f32 %v1298, %v1272
  %v1300 = vadd.f32 %v1299, %v1277
  %v1301 = vrot.slane %v1300, 4
  %v1302 = vadd.f32 %v1300, %v1301
  %v1303 = vrot.slane %v1302, 2
  %v1304 = vadd.f32 %v1302, %v1303
  %v1305 = vrot.slane %v1304, 1
  %v1306 = vadd.f32 %v1304, %v1305
  %v1307 = vadd.f32 %v1263, %v1268
  %v1308 = vadd.f32 %v1307, %v1273
  %v1309 = vadd.f32 %v1308, %v1278
  %v1310 = vrot.slane %v1309, 4
  %v1311 = vadd.f32 %v1309, %v1310
  %v1312 = vrot.slane %v1311, 2
  %v1313 = vadd.f32 %v1311, %v1312
  %v1314 = vrot.slane %v1313, 1
  %v1315 = vadd.f32 %v1313, %v1314
  %v1316 = vadd.f32 %v1264, %v1269
  %v1317 = vadd.f32 %v1316, %v1274
  %v1318 = vadd.f32 %v1317, %v1279
  %v1319 = vrot.slane %v1318, 4
  %v1320 = vadd.f32 %v1318, %v1319
  %v1321 = vrot.slane %v1320, 2
  %v1322 = vadd.f32 %v1320, %v1321
  %v1323 = vrot.slane %v1322, 1
  %v1324 = vadd.f32 %v1322, %v1323
  %vm1325 = vcmask 1040384
  %v1326 = vsel %vm1325, %v1223, %v1288
  %v1327 = vsel %vm1325, %v1232, %v1297
  %v1328 = vsel %vm1325, %v1241, %v1306
  %v1329 = vsel %vm1325, %v1250, %v1315
  %v1330 = vsel %vm1325, %v1259, %v1324
  %1331 = vmatprep.subr.mxu0 0.0
  %1332 = vmatpush1.msra.mxu0 %v1125
  %1333 = vmatprep.subr.mxu0 0.0
  %1334 = vmatpush1.msra.mxu0 %v1126
  %1335 = vmatprep.subr.mxu0 0.0
  %1336 = vmatpush1.msra.mxu0 %v1127
  %1337 = vmatprep.subr.mxu0 0.0
  %1338 = vmatpush1.msra.mxu0 %v1128
  %1339 = vmatprep.subr.mxu0 0.0
  %1340 = vmatpush1.msra.mxu0 %v1129
  %1341 = vmatprep.subr.mxu0 0.0
  %1342 = vmatpush1.msra.mxu0 %v1130
  %1343 = vmatprep.subr.mxu0 0.0
  %1344 = vmatpush1.msra.mxu0 %v1131
  %1345 = vmatprep.subr.mxu0 0.0
  %1346 = vmatpush1.msra.mxu0 %v1132
  %1347 = vmatprep.subr.mxu0 0.0
  %1348 = vmatpush1.msra.mxu0 %v1133
  %1349 = vmatprep.subr.mxu0 0.0
  %1350 = vmatpush1.msra.mxu0 %v1134
  %1351 = vmatprep.subr.mxu0 0.0
  %1352 = vmatpush1.msra.mxu0 %v1135
  %1353 = vmatprep.subr.mxu0 0.0
  %1354 = vmatpush1.msra.mxu0 %v1136
  %1355 = vmatprep.subr.mxu0 0.0
  %1356 = vmatpush1.msra.mxu0 %v1137
  %1357 = vmatprep.subr.mxu0 0.0
  %1358 = vmatpush1.msra.mxu0 %v1138
  %1359 = vmatprep.subr.mxu0 0.0
  %1360 = vmatpush1.msra.mxu0 %v1139
  %1361 = vmatprep.subr.mxu0 0.0
  %1362 = vmatpush1.msra.mxu0 %v1140
  %1363 = vmatprep.subr.mxu0 0.0
  %1364 = vmatpush1.msra.mxu0 %v1141
  %1365 = vmatprep.subr.mxu0 0.0
  %1366 = vmatpush1.msra.mxu0 %v1142
  %1367 = vmatprep.subr.mxu0 0.0
  %1368 = vmatpush1.msra.mxu0 %v1143
  %1369 = vmatprep.subr.mxu0 0.0
  %1370 = vmatpush1.msra.mxu0 %v1144
  %1371 = vmatprep.subr.mxu0 0.0
  %1372 = vmatpush1.msra.mxu0 %v1145
  %1373 = vmatprep.subr.mxu0 0.0
  %1374 = vmatpush1.msra.mxu0 %v1146
  %1375 = vmatprep.subr.mxu0 0.0
  %1376 = vmatpush1.msra.mxu0 %v1147
  %1377 = vmatprep.subr.mxu0 0.0
  %1378 = vmatpush1.msra.mxu0 %v1148
  %1379 = vmatprep.subr.mxu0 0.0
  %1380 = vmatpush1.msra.mxu0 %v1149
  %1381 = vmatprep.subr.mxu0 0.0
  %1382 = vmatpush1.msra.mxu0 %v1150
  %1383 = vmatprep.subr.mxu0 0.0
  %1384 = vmatpush1.msra.mxu0 %v1151
  %1385 = vmatprep.subr.mxu0 0.0
  %1386 = vmatpush1.msra.mxu0 %v1152
  %1387 = vmatprep.subr.mxu0 0.0
  %1388 = vmatpush1.msra.mxu0 %v1153
  %1389 = vmatprep.subr.mxu0 0.0
  %1390 = vmatpush1.msra.mxu0 %v1154
  %1391 = vmatprep.subr.mxu0 0.0
  %1392 = vmatpush1.msra.mxu0 %v1155
  %1393 = vmatprep.subr.mxu0 0.0
  %1394 = vmatpush1.msra.mxu0 %v1156
  %1395 = vmatprep.mubr.f32.mxu0 %v1327
  %1396 = vmatmul.mubr.f32.gmra.mrb[0].mxu0 %v1326
  %v1397 = vpop.f32.mrb[0].mxu0
  %v1398 = vadd.f32 0.0, %v1397
  %v1399 = vpop.f32.mrb[0].mxu0
  %1400 = vdwg.mxu0
  %1401 = vmatprep.subr.mxu0 0.0
  %1402 = vmatpush1.msra.mxu0 %v1157
  %1403 = vmatprep.subr.mxu0 0.0
  %1404 = vmatpush1.msra.mxu0 %v1158
  %1405 = vmatprep.subr.mxu0 0.0
  %1406 = vmatpush1.msra.mxu0 %v1159
  %1407 = vmatprep.subr.mxu0 0.0
  %1408 = vmatpush1.msra.mxu0 %v1160
  %1409 = vmatprep.subr.mxu0 0.0
  %1410 = vmatpush1.msra.mxu0 %v1161
  %1411 = vmatprep.subr.mxu0 0.0
  %1412 = vmatpush1.msra.mxu0 %v1162
  %1413 = vmatprep.subr.mxu0 0.0
  %1414 = vmatpush1.msra.mxu0 %v1163
  %1415 = vmatprep.subr.mxu0 0.0
  %1416 = vmatpush1.msra.mxu0 %v1164
  %1417 = vmatprep.subr.mxu0 0.0
  %1418 = vmatpush1.msra.mxu0 %v1165
  %1419 = vmatprep.subr.mxu0 0.0
  %1420 = vmatpush1.msra.mxu0 %v1166
  %1421 = vmatprep.subr.mxu0 0.0
  %1422 = vmatpush1.msra.mxu0 %v1167
  %1423 = vmatprep.subr.mxu0 0.0
  %1424 = vmatpush1.msra.mxu0 %v1168
  %1425 = vmatprep.subr.mxu0 0.0
  %1426 = vmatpush1.msra.mxu0 %v1169
  %1427 = vmatprep.subr.mxu0 0.0
  %1428 = vmatpush1.msra.mxu0 %v1170
  %1429 = vmatprep.subr.mxu0 0.0
  %1430 = vmatpush1.msra.mxu0 %v1171
  %1431 = vmatprep.subr.mxu0 0.0
  %1432 = vmatpush1.msra.mxu0 %v1172
  %1433 = vmatprep.subr.mxu0 0.0
  %1434 = vmatpush1.msra.mxu0 %v1173
  %1435 = vmatprep.subr.mxu0 0.0
  %1436 = vmatpush1.msra.mxu0 %v1174
  %1437 = vmatprep.subr.mxu0 0.0
  %1438 = vmatpush1.msra.mxu0 %v1175
  %1439 = vmatprep.subr.mxu0 0.0
  %1440 = vmatpush1.msra.mxu0 %v1176
  %1441 = vmatprep.subr.mxu0 0.0
  %1442 = vmatpush1.msra.mxu0 %v1177
  %1443 = vmatprep.subr.mxu0 0.0
  %1444 = vmatpush1.msra.mxu0 %v1178
  %1445 = vmatprep.subr.mxu0 0.0
  %1446 = vmatpush1.msra.mxu0 %v1179
  %1447 = vmatprep.subr.mxu0 0.0
  %1448 = vmatpush1.msra.mxu0 %v1180
  %1449 = vmatprep.subr.mxu0 0.0
  %1450 = vmatpush1.msra.mxu0 %v1181
  %1451 = vmatprep.subr.mxu0 0.0
  %1452 = vmatpush1.msra.mxu0 %v1182
  %1453 = vmatprep.subr.mxu0 0.0
  %1454 = vmatpush1.msra.mxu0 %v1183
  %1455 = vmatprep.subr.mxu0 0.0
  %1456 = vmatpush1.msra.mxu0 %v1184
  %1457 = vmatprep.subr.mxu0 0.0
  %1458 = vmatpush1.msra.mxu0 %v1185
  %1459 = vmatprep.subr.mxu0 0.0
  %1460 = vmatpush1.msra.mxu0 %v1186
  %1461 = vmatprep.subr.mxu0 0.0
  %1462 = vmatpush1.msra.mxu0 %v1187
  %1463 = vmatprep.subr.mxu0 0.0
  %1464 = vmatpush1.msra.mxu0 %v1188
  %1465 = vmatprep.mubr.f32.mxu0 %v1329
  %1466 = vmatmul.mubr.f32.gmra.mrb[0].mxu0 %v1328
  %v1467 = vpop.f32.mrb[0].mxu0
  %v1468 = vadd.f32 %v1398, %v1467
  %v1469 = vpop.f32.mrb[0].mxu0
  %1470 = vdwg.mxu0
  %1471 = vmatprep.subr.mxu0 0.0
  %1472 = vmatpush1.msra.mxu0 %v1189
  %1473 = vmatprep.subr.mxu0 0.0
  %1474 = vmatpush1.msra.mxu0 %v1190
  %1475 = vmatprep.subr.mxu0 0.0
  %1476 = vmatpush1.msra.mxu0 %v1191
  %1477 = vmatprep.subr.mxu0 0.0
  %1478 = vmatpush1.msra.mxu0 %v1192
  %1479 = vmatprep.subr.mxu0 0.0
  %1480 = vmatpush1.msra.mxu0 %v1193
  %1481 = vmatprep.subr.mxu0 0.0
  %1482 = vmatpush1.msra.mxu0 %v1194
  %1483 = vmatprep.subr.mxu0 0.0
  %1484 = vmatpush1.msra.mxu0 %v1195
  %1485 = vmatprep.subr.mxu0 0.0
  %1486 = vmatpush1.msra.mxu0 %v1196
  %1487 = vmatprep.subr.mxu0 0.0
  %1488 = vmatpush1.msra.mxu0 %v1197
  %1489 = vmatprep.subr.mxu0 0.0
  %1490 = vmatpush1.msra.mxu0 %v1198
  %1491 = vmatprep.subr.mxu0 0.0
  %1492 = vmatpush1.msra.mxu0 %v1199
  %1493 = vmatprep.subr.mxu0 0.0
  %1494 = vmatpush1.msra.mxu0 %v1200
  %1495 = vmatprep.subr.mxu0 0.0
  %1496 = vmatpush1.msra.mxu0 %v1201
  %1497 = vmatprep.subr.mxu0 0.0
  %1498 = vmatpush1.msra.mxu0 %v1202
  %1499 = vmatprep.subr.mxu0 0.0
  %1500 = vmatpush1.msra.mxu0 %v1203
  %1501 = vmatprep.subr.mxu0 0.0
  %1502 = vmatpush1.msra.mxu0 %v1204
  %1503 = vmatprep.subr.mxu0 0.0
  %1504 = vmatpush1.msra.mxu0 0.0
  %1505 = vmatprep.subr.mxu0 0.0
  %1506 = vmatpush1.msra.mxu0 0.0
  %1507 = vmatprep.subr.mxu0 0.0
  %1508 = vmatpush1.msra.mxu0 0.0
  %1509 = vmatprep.subr.mxu0 0.0
  %1510 = vmatpush1.msra.mxu0 0.0
  %1511 = vmatprep.subr.mxu0 0.0
  %1512 = vmatpush1.msra.mxu0 0.0
  %1513 = vmatprep.subr.mxu0 0.0
  %1514 = vmatpush1.msra.mxu0 0.0
  %1515 = vmatprep.subr.mxu0 0.0
  %1516 = vmatpush1.msra.mxu0 0.0
  %1517 = vmatprep.subr.mxu0 0.0
  %1518 = vmatpush1.msra.mxu0 0.0
  %1519 = vmatprep.subr.mxu0 0.0
  %1520 = vmatpush1.msra.mxu0 0.0
  %1521 = vmatprep.subr.mxu0 0.0
  %1522 = vmatpush1.msra.mxu0 0.0
  %1523 = vmatprep.subr.mxu0 0.0
  %1524 = vmatpush1.msra.mxu0 0.0
  %1525 = vmatprep.subr.mxu0 0.0
  %1526 = vmatpush1.msra.mxu0 0.0
  %1527 = vmatprep.subr.mxu0 0.0
  %1528 = vmatpush1.msra.mxu0 0.0
  %1529 = vmatprep.subr.mxu0 0.0
  %1530 = vmatpush1.msra.mxu0 0.0
  %1531 = vmatprep.subr.mxu0 0.0
  %1532 = vmatpush1.msra.mxu0 0.0
  %1533 = vmatprep.subr.mxu0 0.0
  %1534 = vmatpush1.msra.mxu0 0.0
  %1535 = vmatprep.mubr.f32.mxu0 0.0
  %1536 = vmatmul.mubr.f32.gmra.mrb[0].mxu0 %v1330
  %v1537 = vpop.f32.mrb[0].mxu0
  %v1538 = vadd.f32 %v1468, %v1537
  %v1539 = vpop.f32.mrb[0].mxu0
  %1540 = vdwg.mxu0
  %vm1541 = vcmask 130048
  %v1543 = vsel %vm1541, %v1538, 0
  %1545 = vmatprep.subr.mxu0 %v1206
  %1546 = vmatpush1.msra.mxu0 %v1205
  %1547 = vmatprep.subr.mxu0 %v1211
  %1548 = vmatpush1.msra.mxu0 %v1210
  %1549 = vmatprep.subr.mxu0 0.0
  %1550 = vmatpush1.msra.mxu0 0.0
  %1551 = vmatprep.subr.mxu0 0.0
  %1552 = vmatpush1.msra.mxu0 0.0
  %1553 = vmatprep.subr.mxu0 0.0
  %1554 = vmatpush1.msra.mxu0 0.0
  %1555 = vmatprep.subr.mxu0 0.0
  %1556 = vmatpush1.msra.mxu0 0.0
  %1557 = vmatprep.subr.mxu0 0.0
  %1558 = vmatpush1.msra.mxu0 0.0
  %1559 = vmatprep.subr.mxu0 0.0
  %1560 = vmatpush1.msra.mxu0 0.0
  %1561 = vmatprep.subr.mxu0 0.0
  %1562 = vmatpush1.msra.mxu0 0.0
  %1563 = vmatprep.subr.mxu0 0.0
  %1564 = vmatpush1.msra.mxu0 0.0
  %1565 = vmatprep.subr.mxu0 0.0
  %1566 = vmatpush1.msra.mxu0 0.0
  %1567 = vmatprep.subr.mxu0 0.0
  %1568 = vmatpush1.msra.mxu0 0.0
  %1569 = vmatprep.subr.mxu0 0.0
  %1570 = vmatpush1.msra.mxu0 0.0
  %1571 = vmatprep.subr.mxu0 0.0
  %1572 = vmatpush1.msra.mxu0 0.0
  %1573 = vmatprep.subr.mxu0 0.0
  %1574 = vmatpush1.msra.mxu0 0.0
  %1575 = vmatprep.subr.mxu0 0.0
  %1576 = vmatpush1.msra.mxu0 0.0
  %1577 = vmatprep.subr.mxu0 0.0
  %1578 = vmatpush1.msra.mxu0 0.0
  %1579 = vmatprep.subr.mxu0 0.0
  %1580 = vmatpush1.msra.mxu0 0.0
  %1581 = vmatprep.subr.mxu0 0.0
  %1582 = vmatpush1.msra.mxu0 0.0
  %1583 = vmatprep.subr.mxu0 0.0
  %1584 = vmatpush1.msra.mxu0 0.0
  %1585 = vmatprep.subr.mxu0 0.0
  %1586 = vmatpush1.msra.mxu0 0.0
  %1587 = vmatprep.subr.mxu0 0.0
  %1588 = vmatpush1.msra.mxu0 0.0
  %1589 = vmatprep.subr.mxu0 0.0
  %1590 = vmatpush1.msra.mxu0 0.0
  %1591 = vmatprep.subr.mxu0 0.0
  %1592 = vmatpush1.msra.mxu0 0.0
  %1593 = vmatprep.subr.mxu0 0.0
  %1594 = vmatpush1.msra.mxu0 0.0
  %1595 = vmatprep.subr.mxu0 0.0
  %1596 = vmatpush1.msra.mxu0 0.0
  %1597 = vmatprep.subr.mxu0 0.0
  %1598 = vmatpush1.msra.mxu0 0.0
  %1599 = vmatprep.subr.mxu0 0.0
  %1600 = vmatpush1.msra.mxu0 0.0
  %1601 = vmatprep.subr.mxu0 0.0
  %1602 = vmatpush1.msra.mxu0 0.0
  %1603 = vmatprep.subr.mxu0 0.0
  %1604 = vmatpush1.msra.mxu0 0.0
  %1605 = vmatprep.subr.mxu0 0.0
  %1606 = vmatpush1.msra.mxu0 0.0
  %1607 = vmatprep.subr.mxu0 0.0
  %1608 = vmatpush1.msra.mxu0 0.0
  %1609 = vmatprep.mubr.f32.mxu0 0.0
  %1610 = vmatmul.mubr.f32.gmra.mrb[0].mxu0 %v1543
  %v1611 = vpop.f32.mrb[0].mxu0
  %v1612 = vadd.f32 0.0, %v1611
  %v1613 = vpop.f32.mrb[0].mxu0
  %v1614 = vadd.f32 0.0, %v1613
  %1615 = vdwg.mxu0
  %1616 = vmatprep.subr.mxu0 %v1208
  %1617 = vmatpush1.msra.mxu0 %v1207
  %1618 = vmatprep.subr.mxu0 %v1213
  %1619 = vmatpush1.msra.mxu0 %v1212
  %1620 = vmatprep.subr.mxu0 0.0
  %1621 = vmatpush1.msra.mxu0 0.0
  %1622 = vmatprep.subr.mxu0 0.0
  %1623 = vmatpush1.msra.mxu0 0.0
  %1624 = vmatprep.subr.mxu0 0.0
  %1625 = vmatpush1.msra.mxu0 0.0
  %1626 = vmatprep.subr.mxu0 0.0
  %1627 = vmatpush1.msra.mxu0 0.0
  %1628 = vmatprep.subr.mxu0 0.0
  %1629 = vmatpush1.msra.mxu0 0.0
  %1630 = vmatprep.subr.mxu0 0.0
  %1631 = vmatpush1.msra.mxu0 0.0
  %1632 = vmatprep.subr.mxu0 0.0
  %1633 = vmatpush1.msra.mxu0 0.0
  %1634 = vmatprep.subr.mxu0 0.0
  %1635 = vmatpush1.msra.mxu0 0.0
  %1636 = vmatprep.subr.mxu0 0.0
  %1637 = vmatpush1.msra.mxu0 0.0
  %1638 = vmatprep.subr.mxu0 0.0
  %1639 = vmatpush1.msra.mxu0 0.0
  %1640 = vmatprep.subr.mxu0 0.0
  %1641 = vmatpush1.msra.mxu0 0.0
  %1642 = vmatprep.subr.mxu0 0.0
  %1643 = vmatpush1.msra.mxu0 0.0
  %1644 = vmatprep.subr.mxu0 0.0
  %1645 = vmatpush1.msra.mxu0 0.0
  %1646 = vmatprep.subr.mxu0 0.0
  %1647 = vmatpush1.msra.mxu0 0.0
  %1648 = vmatprep.subr.mxu0 0.0
  %1649 = vmatpush1.msra.mxu0 0.0
  %1650 = vmatprep.subr.mxu0 0.0
  %1651 = vmatpush1.msra.mxu0 0.0
  %1652 = vmatprep.subr.mxu0 0.0
  %1653 = vmatpush1.msra.mxu0 0.0
  %1654 = vmatprep.subr.mxu0 0.0
  %1655 = vmatpush1.msra.mxu0 0.0
  %1656 = vmatprep.subr.mxu0 0.0
  %1657 = vmatpush1.msra.mxu0 0.0
  %1658 = vmatprep.subr.mxu0 0.0
  %1659 = vmatpush1.msra.mxu0 0.0
  %1660 = vmatprep.subr.mxu0 0.0
  %1661 = vmatpush1.msra.mxu0 0.0
  %1662 = vmatprep.subr.mxu0 0.0
  %1663 = vmatpush1.msra.mxu0 0.0
  %1664 = vmatprep.subr.mxu0 0.0
  %1665 = vmatpush1.msra.mxu0 0.0
  %1666 = vmatprep.subr.mxu0 0.0
  %1667 = vmatpush1.msra.mxu0 0.0
  %1668 = vmatprep.subr.mxu0 0.0
  %1669 = vmatpush1.msra.mxu0 0.0
  %1670 = vmatprep.subr.mxu0 0.0
  %1671 = vmatpush1.msra.mxu0 0.0
  %1672 = vmatprep.subr.mxu0 0.0
  %1673 = vmatpush1.msra.mxu0 0.0
  %1674 = vmatprep.subr.mxu0 0.0
  %1675 = vmatpush1.msra.mxu0 0.0
  %1676 = vmatprep.subr.mxu0 0.0
  %1677 = vmatpush1.msra.mxu0 0.0
  %1678 = vmatprep.subr.mxu0 0.0
  %1679 = vmatpush1.msra.mxu0 0.0
  %1680 = vmatprep.mubr.f32.mxu0 0.0
  %1681 = vmatmul.mubr.f32.gmra.mrb[0].mxu0 %v1543
  %v1682 = vpop.f32.mrb[0].mxu0
  %v1683 = vadd.f32 0.0, %v1682
  %v1684 = vpop.f32.mrb[0].mxu0
  %v1685 = vadd.f32 0.0, %v1684
  %1686 = vdwg.mxu0
  %1687 = vmatprep.subr.mxu0 0.0
  %1688 = vmatpush1.msra.mxu0 %v1209
  %1689 = vmatprep.subr.mxu0 0.0
  %1690 = vmatpush1.msra.mxu0 %v1214
  %1691 = vmatprep.subr.mxu0 0.0
  %1692 = vmatpush1.msra.mxu0 0.0
  %1693 = vmatprep.subr.mxu0 0.0
  %1694 = vmatpush1.msra.mxu0 0.0
  %1695 = vmatprep.subr.mxu0 0.0
  %1696 = vmatpush1.msra.mxu0 0.0
  %1697 = vmatprep.subr.mxu0 0.0
  %1698 = vmatpush1.msra.mxu0 0.0
  %1699 = vmatprep.subr.mxu0 0.0
  %1700 = vmatpush1.msra.mxu0 0.0
  %1701 = vmatprep.subr.mxu0 0.0
  %1702 = vmatpush1.msra.mxu0 0.0
  %1703 = vmatprep.subr.mxu0 0.0
  %1704 = vmatpush1.msra.mxu0 0.0
  %1705 = vmatprep.subr.mxu0 0.0
  %1706 = vmatpush1.msra.mxu0 0.0
  %1707 = vmatprep.subr.mxu0 0.0
  %1708 = vmatpush1.msra.mxu0 0.0
  %1709 = vmatprep.subr.mxu0 0.0
  %1710 = vmatpush1.msra.mxu0 0.0
  %1711 = vmatprep.subr.mxu0 0.0
  %1712 = vmatpush1.msra.mxu0 0.0
  %1713 = vmatprep.subr.mxu0 0.0
  %1714 = vmatpush1.msra.mxu0 0.0
  %1715 = vmatprep.subr.mxu0 0.0
  %1716 = vmatpush1.msra.mxu0 0.0
  %1717 = vmatprep.subr.mxu0 0.0
  %1718 = vmatpush1.msra.mxu0 0.0
  %1719 = vmatprep.subr.mxu0 0.0
  %1720 = vmatpush1.msra.mxu0 0.0
  %1721 = vmatprep.subr.mxu0 0.0
  %1722 = vmatpush1.msra.mxu0 0.0
  %1723 = vmatprep.subr.mxu0 0.0
  %1724 = vmatpush1.msra.mxu0 0.0
  %1725 = vmatprep.subr.mxu0 0.0
  %1726 = vmatpush1.msra.mxu0 0.0
  %1727 = vmatprep.subr.mxu0 0.0
  %1728 = vmatpush1.msra.mxu0 0.0
  %1729 = vmatprep.subr.mxu0 0.0
  %1730 = vmatpush1.msra.mxu0 0.0
  %1731 = vmatprep.subr.mxu0 0.0
  %1732 = vmatpush1.msra.mxu0 0.0
  %1733 = vmatprep.subr.mxu0 0.0
  %1734 = vmatpush1.msra.mxu0 0.0
  %1735 = vmatprep.subr.mxu0 0.0
  %1736 = vmatpush1.msra.mxu0 0.0
  %1737 = vmatprep.subr.mxu0 0.0
  %1738 = vmatpush1.msra.mxu0 0.0
  %1739 = vmatprep.subr.mxu0 0.0
  %1740 = vmatpush1.msra.mxu0 0.0
  %1741 = vmatprep.subr.mxu0 0.0
  %1742 = vmatpush1.msra.mxu0 0.0
  %1743 = vmatprep.subr.mxu0 0.0
  %1744 = vmatpush1.msra.mxu0 0.0
  %1745 = vmatprep.subr.mxu0 0.0
  %1746 = vmatpush1.msra.mxu0 0.0
  %1747 = vmatprep.subr.mxu0 0.0
  %1748 = vmatpush1.msra.mxu0 0.0
  %1749 = vmatprep.subr.mxu0 0.0
  %1750 = vmatpush1.msra.mxu0 0.0
  %1751 = vmatprep.mubr.f32.mxu0 0.0
  %1752 = vmatmul.mubr.f32.gmra.mrb[0].mxu0 %v1543
  %v1753 = vpop.f32.mrb[0].mxu0
  %v1754 = vadd.f32 0.0, %v1753
  %v1755 = vpop.f32.mrb[0].mxu0
  %1756 = vdwg.mxu0
  %v1757 = vrcp.pop 1280.0
  %v1758 = vmul.f32 %v1612, %v1757
  %v1759 = vmul.f32 %v1614, %v1757
  %v1760 = vmul.f32 %v1683, %v1757
  %v1761 = vmul.f32 %v1685, %v1757
  %v1762 = vmul.f32 %v1754, %v1757
  %v1763 = vmul.f32 %v1758, %v1758
  %v1764 = vmul.f32 %v1759, %v1759
  %v1765 = vmul.f32 %v1760, %v1760
  %v1766 = vmul.f32 %v1761, %v1761
  %v1767 = vmul.f32 %v1762, %v1762
  %v1773 = vrot.slane %v1763, 7
  %v1774 = vrot.slane %v1764, 7
  %v1775 = vrot.slane %v1765, 7
  %v1776 = vrot.slane %v1766, 7
  %v1777 = vrot.slane %v1767, 7
  %v1783 = vsub.f32 %v1758, %v1773
  %v1784 = vsub.f32 %v1759, %v1774
  %v1785 = vsub.f32 %v1760, %v1775
  %v1786 = vsub.f32 %v1761, %v1776
  %v1787 = vsub.f32 %v1762, %v1777
  %v1788 = vmax.f32 %v1783, 0.0
  %v1789 = vmax.f32 %v1784, 0.0
  %v1790 = vmax.f32 %v1785, 0.0
  %v1791 = vmax.f32 %v1786, 0.0
  %v1792 = vmax.f32 %v1787, 0.0
  %v1793 = vadd.f32 %v1788, 1e-05
  %v1794 = vadd.f32 %v1789, 1e-05
  %v1795 = vadd.f32 %v1790, 1e-05
  %v1796 = vadd.f32 %v1791, 1e-05
  %v1797 = vadd.f32 %v1792, 1e-05
  %v1798 = vrsqrt.pop %v1793
  %v1799 = vrsqrt.pop %v1794
  %v1800 = vrsqrt.pop %v1795
  %v1801 = vrsqrt.pop %v1796
  %v1802 = vrsqrt.pop %v1797
  %v1803 = vlaneseq
  %v1804 = vshrl.u32 %v1803, 7
  %v1805 = vsub.s32 0, %v1804
  %v1806 = vrot.slane %v1758, %v1805
  %v1807 = vlaneseq
  %v1808 = vshrl.u32 %v1807, 7
  %v1809 = vsub.s32 0, %v1808
  %v1810 = vrot.slane %v1759, %v1809
  %v1811 = vlaneseq
  %v1812 = vshrl.u32 %v1811, 7
  %v1813 = vsub.s32 0, %v1812
  %v1814 = vrot.slane %v1760, %v1813
  %v1815 = vlaneseq
  %v1816 = vshrl.u32 %v1815, 7
  %v1817 = vsub.s32 0, %v1816
  %v1818 = vrot.slane %v1761, %v1817
  %v1819 = vlaneseq
  %v1820 = vshrl.u32 %v1819, 7
  %v1821 = vsub.s32 0, %v1820
  %v1822 = vrot.slane %v1762, %v1821
  %v1823 = vsub.f32 %v1103, %v1806
  %v1824 = vsub.f32 %v1104, %v1810
  %v1825 = vsub.f32 %v1105, %v1814
  %v1826 = vsub.f32 %v1106, %v1818
  %v1827 = vsub.f32 %v1107, %v1822
  %v1828 = vsub.f32 %v1108, %v1806
  %v1829 = vsub.f32 %v1109, %v1810
  %v1830 = vsub.f32 %v1110, %v1814
  %v1831 = vsub.f32 %v1111, %v1818
  %v1832 = vsub.f32 %v1112, %v1822
  %v1833 = vsub.f32 %v1113, %v1806
  %v1834 = vsub.f32 %v1114, %v1810
  %v1835 = vsub.f32 %v1115, %v1814
  %v1836 = vsub.f32 %v1116, %v1818
  %v1837 = vsub.f32 %v1117, %v1822
  %v1838 = vsub.f32 %v1118, %v1806
  %v1839 = vsub.f32 %v1119, %v1810
  %v1840 = vsub.f32 %v1120, %v1814
  %v1841 = vsub.f32 %v1121, %v1818
  %v1842 = vsub.f32 %v1122, %v1822
  %v1844 = vlaneseq
  %v1845 = vshrl.u32 %v1844, 7
  %v1846 = vsub.s32 0, %v1845
  %v1847 = vrot.slane %v1123, %v1846
  %v1848 = vlaneseq
  %v1849 = vshrl.u32 %v1848, 7
  %v1850 = vsub.s32 1, %v1849
  %v1851 = vrot.slane %v1123, %v1850
  %v1852 = vlaneseq
  %v1853 = vshrl.u32 %v1852, 7
  %v1854 = vsub.s32 2, %v1853
  %v1855 = vrot.slane %v1123, %v1854
  %v1856 = vlaneseq
  %v1857 = vshrl.u32 %v1856, 7
  %v1858 = vsub.s32 3, %v1857
  %v1859 = vrot.slane %v1123, %v1858
  %v1860 = vlaneseq
  %v1861 = vshrl.u32 %v1860, 7
  %v1862 = vsub.s32 4, %v1861
  %v1863 = vrot.slane %v1123, %v1862
  %v1869 = vmul.f32 %v1798, %v1847
  %v1870 = vmul.f32 %v1799, %v1851
  %v1871 = vmul.f32 %v1800, %v1855
  %v1872 = vmul.f32 %v1801, %v1859
  %v1873 = vmul.f32 %v1802, %v1863
  %v1874 = vlaneseq
  %v1875 = vshrl.u32 %v1874, 7
  %v1876 = vsub.s32 1, %v1875
  %v1877 = vrot.slane %v1869, %v1876
  %v1878 = vlaneseq
  %v1879 = vshrl.u32 %v1878, 7
  %v1880 = vsub.s32 1, %v1879
  %v1881 = vrot.slane %v1870, %v1880
  %v1882 = vlaneseq
  %v1883 = vshrl.u32 %v1882, 7
  %v1884 = vsub.s32 1, %v1883
  %v1885 = vrot.slane %v1871, %v1884
  %v1886 = vlaneseq
  %v1887 = vshrl.u32 %v1886, 7
  %v1888 = vsub.s32 1, %v1887
  %v1889 = vrot.slane %v1872, %v1888
  %v1890 = vlaneseq
  %v1891 = vshrl.u32 %v1890, 7
  %v1892 = vsub.s32 1, %v1891
  %v1893 = vrot.slane %v1873, %v1892
  %v1894 = vmul.f32 %v1823, %v1877
  %v1895 = vmul.f32 %v1824, %v1881
  %v1896 = vmul.f32 %v1825, %v1885
  %v1897 = vmul.f32 %v1826, %v1889
  %v1898 = vmul.f32 %v1827, %v1893
  %v1899 = vmul.f32 %v1828, %v1877
  %v1900 = vmul.f32 %v1829, %v1881
  %v1901 = vmul.f32 %v1830, %v1885
  %v1902 = vmul.f32 %v1831, %v1889
  %v1903 = vmul.f32 %v1832, %v1893
  %v1904 = vmul.f32 %v1833, %v1877
  %v1905 = vmul.f32 %v1834, %v1881
  %v1906 = vmul.f32 %v1835, %v1885
  %v1907 = vmul.f32 %v1836, %v1889
  %v1908 = vmul.f32 %v1837, %v1893
  %v1909 = vmul.f32 %v1838, %v1877
  %v1910 = vmul.f32 %v1839, %v1881
  %v1911 = vmul.f32 %v1840, %v1885
  %v1912 = vmul.f32 %v1841, %v1889
  %v1913 = vmul.f32 %v1842, %v1893
  %v1915 = vlaneseq
  %v1916 = vshrl.u32 %v1915, 7
  %v1917 = vsub.s32 0, %v1916
  %v1918 = vrot.slane %v1124, %v1917
  %v1919 = vlaneseq
  %v1920 = vshrl.u32 %v1919, 7
  %v1921 = vsub.s32 1, %v1920
  %v1922 = vrot.slane %v1124, %v1921
  %v1923 = vlaneseq
  %v1924 = vshrl.u32 %v1923, 7
  %v1925 = vsub.s32 2, %v1924
  %v1926 = vrot.slane %v1124, %v1925
  %v1927 = vlaneseq
  %v1928 = vshrl.u32 %v1927, 7
  %v1929 = vsub.s32 3, %v1928
  %v1930 = vrot.slane %v1124, %v1929
  %v1931 = vlaneseq
  %v1932 = vshrl.u32 %v1931, 7
  %v1933 = vsub.s32 4, %v1932
  %v1934 = vrot.slane %v1124, %v1933
  %v1940 = vadd.f32 %v1894, %v1918
  %v1941 = vadd.f32 %v1895, %v1922
  %v1942 = vadd.f32 %v1896, %v1926
  %v1943 = vadd.f32 %v1897, %v1930
  %v1944 = vadd.f32 %v1898, %v1934
  %v1945 = vadd.f32 %v1899, %v1918
  %v1946 = vadd.f32 %v1900, %v1922
  %v1947 = vadd.f32 %v1901, %v1926
  %v1948 = vadd.f32 %v1902, %v1930
  %v1949 = vadd.f32 %v1903, %v1934
  %v1950 = vadd.f32 %v1904, %v1918
  %v1951 = vadd.f32 %v1905, %v1922
  %v1952 = vadd.f32 %v1906, %v1926
  %v1953 = vadd.f32 %v1907, %v1930
  %v1954 = vadd.f32 %v1908, %v1934
  %v1955 = vadd.f32 %v1909, %v1918
  %v1956 = vadd.f32 %v1910, %v1922
  %v1957 = vadd.f32 %v1911, %v1926
  %v1958 = vadd.f32 %v1912, %v1930
  %v1959 = vadd.f32 %v1913, %v1934
  %v1960 = vld [vmem:[%s5] sm:$0xff]
  %v1961 = vld [vmem:[%s5 + $0x8] sm:$0xff]
  %v1962 = vld [vmem:[%s5 + $0x10] sm:$0xf]
  %v1963 = vld [vmem:[%s5 + $0x14] sm:$0xff]
  %v1964 = vld [vmem:[%s5 + $0x1c] sm:$0xff]
  %v1965 = vld [vmem:[%s5 + $0x24] sm:$0xf]
  %v1966 = vld [vmem:[%s5 + $0x28] sm:$0xff]
  %v1967 = vld [vmem:[%s5 + $0x30] sm:$0xff]
  %v1968 = vld [vmem:[%s5 + $0x38] sm:$0xf]
  %v1969 = vld [vmem:[%s5 + $0x3c] sm:$0xff]
  %v1970 = vld [vmem:[%s5 + $0x44] sm:$0xff]
  %v1971 = vld [vmem:[%s5 + $0x4c] sm:$0xf]
  %v1972 = vld [vmem:[%s5 + $0x50] sm:$0xff]
  %v1973 = vld [vmem:[%s5 + $0x58] sm:$0xff]
  %v1974 = vld [vmem:[%s5 + $0x60] sm:$0xf]
  %v1975 = vld [vmem:[%s5 + $0x64] sm:$0xff]
  %v1976 = vld [vmem:[%s5 + $0x6c] sm:$0xff]
  %v1977 = vld [vmem:[%s5 + $0x74] sm:$0xf]
  %v1978 = vld [vmem:[%s5 + $0x78] sm:$0xff]
  %v1979 = vld [vmem:[%s5 + $0x80] sm:$0xff]
  %v1980 = vld [vmem:[%s5 + $0x88] sm:$0xf]
  %v1981 = vld [vmem:[%s5 + $0x8c] sm:$0xff]
  %v1982 = vld [vmem:[%s5 + $0x94] sm:$0xff]
  %v1983 = vld [vmem:[%s5 + $0x9c] sm:$0xf]
  %v1984 = vld [vmem:[%s5 + $0xa0] sm:$0xff]
  %v1985 = vld [vmem:[%s5 + $0xa8] sm:$0xff]
  %v1986 = vld [vmem:[%s5 + $0xb0] sm:$0xf]
  %v1987 = vld [vmem:[%s5 + $0xb4] sm:$0xff]
  %v1988 = vld [vmem:[%s5 + $0xbc] sm:$0xff]
  %v1989 = vld [vmem:[%s5 + $0xc4] sm:$0xf]
  %v1990 = vld [vmem:[%s5 + $0xc8] sm:$0xff]
  %v1991 = vld [vmem:[%s5 + $0xd0] sm:$0xff]
  %v1992 = vld [vmem:[%s5 + $0xd8] sm:$0xf]
  %v1993 = vld [vmem:[%s5 + $0xdc] sm:$0xff]
  %v1994 = vld [vmem:[%s5 + $0xe4] sm:$0xff]
  %v1995 = vld [vmem:[%s5 + $0xec] sm:$0xf]
  %v1996 = vld [vmem:[%s5 + $0xf0] sm:$0xff]
  %v1997 = vld [vmem:[%s5 + $0xf8] sm:$0xff]
  %v1998 = vld [vmem:[%s5 + $0x100] sm:$0xf]
  %v1999 = vld [vmem:[%s5 + $0x104] sm:$0xff]
  %v2000 = vld [vmem:[%s5 + $0x10c] sm:$0xff]
  %v2001 = vld [vmem:[%s5 + $0x114] sm:$0xf]
  %v2002 = vld [vmem:[%s5 + $0x118] sm:$0xff]
  %v2003 = vld [vmem:[%s5 + $0x120] sm:$0xff]
  %v2004 = vld [vmem:[%s5 + $0x128] sm:$0xf]
  %v2005 = vld [vmem:[%s5 + $0x12c] sm:$0xff]
  %v2006 = vld [vmem:[%s5 + $0x134] sm:$0xff]
  %v2007 = vld [vmem:[%s5 + $0x13c] sm:$0xf]
  %v2008 = vld [vmem:[%s5 + $0x140] sm:$0xff]
  %v2009 = vld [vmem:[%s5 + $0x148] sm:$0xff]
  %v2010 = vld [vmem:[%s5 + $0x150] sm:$0xf]
  %v2011 = vld [vmem:[%s5 + $0x154] sm:$0xff]
  %v2012 = vld [vmem:[%s5 + $0x15c] sm:$0xff]
  %v2013 = vld [vmem:[%s5 + $0x164] sm:$0xf]
  %v2014 = vld [vmem:[%s5 + $0x168] sm:$0xff]
  %v2015 = vld [vmem:[%s5 + $0x170] sm:$0xff]
  %v2016 = vld [vmem:[%s5 + $0x178] sm:$0xf]
  %v2017 = vld [vmem:[%s5 + $0x17c] sm:$0xff]
  %v2018 = vld [vmem:[%s5 + $0x184] sm:$0xff]
  %v2019 = vld [vmem:[%s5 + $0x18c] sm:$0xf]
  %v2020 = vld [vmem:[%s5 + $0x190] sm:$0xff]
  %v2021 = vld [vmem:[%s5 + $0x198] sm:$0xff]
  %v2022 = vld [vmem:[%s5 + $0x1a0] sm:$0xf]
  %v2023 = vld [vmem:[%s5 + $0x1a4] sm:$0xff]
  %v2024 = vld [vmem:[%s5 + $0x1ac] sm:$0xff]
  %v2025 = vld [vmem:[%s5 + $0x1b4] sm:$0xf]
  %v2026 = vld [vmem:[%s5 + $0x1b8] sm:$0xff]
  %v2027 = vld [vmem:[%s5 + $0x1c0] sm:$0xff]
  %v2028 = vld [vmem:[%s5 + $0x1c8] sm:$0xf]
  %v2029 = vld [vmem:[%s5 + $0x1cc] sm:$0xff]
  %v2030 = vld [vmem:[%s5 + $0x1d4] sm:$0xff]
  %v2031 = vld [vmem:[%s5 + $0x1dc] sm:$0xf]
  %v2032 = vld [vmem:[%s5 + $0x1e0] sm:$0xff]
  %v2033 = vld [vmem:[%s5 + $0x1e8] sm:$0xff]
  %v2034 = vld [vmem:[%s5 + $0x1f0] sm:$0xf]
  %v2035 = vld [vmem:[%s5 + $0x1f4] sm:$0xff]
  %v2036 = vld [vmem:[%s5 + $0x1fc] sm:$0xff]
  %v2037 = vld [vmem:[%s5 + $0x204] sm:$0xf]
  %v2038 = vld [vmem:[%s5 + $0x208] sm:$0xff]
  %v2039 = vld [vmem:[%s5 + $0x210] sm:$0xff]
  %v2040 = vld [vmem:[%s5 + $0x218] sm:$0xf]
  %v2041 = vld [vmem:[%s5 + $0x21c] sm:$0xff]
  %v2042 = vld [vmem:[%s5 + $0x224] sm:$0xff]
  %v2043 = vld [vmem:[%s5 + $0x22c] sm:$0xf]
  %v2044 = vld [vmem:[%s5 + $0x230] sm:$0xff]
  %v2045 = vld [vmem:[%s5 + $0x238] sm:$0xff]
  %v2046 = vld [vmem:[%s5 + $0x240] sm:$0xf]
  %v2047 = vld [vmem:[%s5 + $0x244] sm:$0xff]
  %v2048 = vld [vmem:[%s5 + $0x24c] sm:$0xff]
  %v2049 = vld [vmem:[%s5 + $0x254] sm:$0xf]
  %v2050 = vld [vmem:[%s5 + $0x258] sm:$0xff]
  %v2051 = vld [vmem:[%s5 + $0x260] sm:$0xff]
  %v2052 = vld [vmem:[%s5 + $0x268] sm:$0xf]
  %v2053 = vld [vmem:[%s5 + $0x26c] sm:$0xff]
  %v2054 = vld [vmem:[%s5 + $0x274] sm:$0xff]
  %v2055 = vld [vmem:[%s5 + $0x27c] sm:$0xf]
  %v2056 = vld [vmem:[%s5 + $0x280] sm:$0xff]
  %v2057 = vld [vmem:[%s5 + $0x288] sm:$0xff]
  %v2058 = vld [vmem:[%s5 + $0x290] sm:$0xf]
  %v2059 = vld [vmem:[%s5 + $0x294] sm:$0xff]
  %v2060 = vld [vmem:[%s5 + $0x29c] sm:$0xff]
  %v2061 = vld [vmem:[%s5 + $0x2a4] sm:$0xf]
  %v2062 = vld [vmem:[%s5 + $0x2a8] sm:$0xff]
  %v2063 = vld [vmem:[%s5 + $0x2b0] sm:$0xff]
  %v2064 = vld [vmem:[%s5 + $0x2b8] sm:$0xf]
  %v2065 = vld [vmem:[%s5 + $0x2bc] sm:$0xff]
  %v2066 = vld [vmem:[%s5 + $0x2c4] sm:$0xff]
  %v2067 = vld [vmem:[%s5 + $0x2cc] sm:$0xf]
  %v2068 = vld [vmem:[%s5 + $0x2d0] sm:$0xff]
  %v2069 = vld [vmem:[%s5 + $0x2d8] sm:$0xff]
  %v2070 = vld [vmem:[%s5 + $0x2e0] sm:$0xf]
  %v2071 = vld [vmem:[%s5 + $0x2e4] sm:$0xff]
  %v2072 = vld [vmem:[%s5 + $0x2ec] sm:$0xff]
  %v2073 = vld [vmem:[%s5 + $0x2f4] sm:$0xf]
  %v2074 = vld [vmem:[%s5 + $0x2f8] sm:$0xff]
  %v2075 = vld [vmem:[%s5 + $0x300] sm:$0xff]
  %v2076 = vld [vmem:[%s5 + $0x308] sm:$0xf]
  %v2077 = vld [vmem:[%s5 + $0x30c] sm:$0xff]
  %v2078 = vld [vmem:[%s5 + $0x314] sm:$0xff]
  %v2079 = vld [vmem:[%s5 + $0x31c] sm:$0xf]
  %v2080 = vld [vmem:[%s6] sm:$0x1f]
  %v2082 = vlaneseq
  %v2083 = vshrl.u32 %v2082, 7
  %v2084 = vsub.s32 0, %v2083
  %v2085 = vrot.slane %v2080, %v2084
  %v2086 = vlaneseq
  %v2087 = vshrl.u32 %v2086, 7
  %v2088 = vsub.s32 1, %v2087
  %v2089 = vrot.slane %v2080, %v2088
  %v2090 = vlaneseq
  %v2091 = vshrl.u32 %v2090, 7
  %v2092 = vsub.s32 2, %v2091
  %v2093 = vrot.slane %v2080, %v2092
  %v2094 = vlaneseq
  %v2095 = vshrl.u32 %v2094, 7
  %v2096 = vsub.s32 3, %v2095
  %v2097 = vrot.slane %v2080, %v2096
  %v2098 = vlaneseq
  %v2099 = vshrl.u32 %v2098, 7
  %v2100 = vsub.s32 4, %v2099
  %v2101 = vrot.slane %v2080, %v2100
  %v2227 = vunpack.c.l.b16 %v1960
  %v2228 = vunpack.c.h.b16 %v1960
  %v2229 = vunpack.c.l.b16 %v1961
  %v2230 = vunpack.c.h.b16 %v1961
  %v2231 = vunpack.c.l.b16 %v1962
  %v2232 = vunpack.c.l.b16 %v1963
  %v2233 = vunpack.c.h.b16 %v1963
  %v2234 = vunpack.c.l.b16 %v1964
  %v2235 = vunpack.c.h.b16 %v1964
  %v2236 = vunpack.c.l.b16 %v1965
  %v2237 = vunpack.c.l.b16 %v1966
  %v2238 = vunpack.c.h.b16 %v1966
  %v2239 = vunpack.c.l.b16 %v1967
  %v2240 = vunpack.c.h.b16 %v1967
  %v2241 = vunpack.c.l.b16 %v1968
  %v2242 = vunpack.c.l.b16 %v1969
  %v2243 = vunpack.c.h.b16 %v1969
  %v2244 = vunpack.c.l.b16 %v1970
  %v2245 = vunpack.c.h.b16 %v1970
  %v2246 = vunpack.c.l.b16 %v1971
  %v2247 = vunpack.c.l.b16 %v1972
  %v2248 = vunpack.c.h.b16 %v1972
  %v2249 = vunpack.c.l.b16 %v1973
  %v2250 = vunpack.c.h.b16 %v1973
  %v2251 = vunpack.c.l.b16 %v1974
  %v2252 = vunpack.c.l.b16 %v1975
  %v2253 = vunpack.c.h.b16 %v1975
  %v2254 = vunpack.c.l.b16 %v1976
  %v2255 = vunpack.c.h.b16 %v1976
  %v2256 = vunpack.c.l.b16 %v1977
  %v2257 = vunpack.c.l.b16 %v1978
  %v2258 = vunpack.c.h.b16 %v1978
  %v2259 = vunpack.c.l.b16 %v1979
  %v2260 = vunpack.c.h.b16 %v1979
  %v2261 = vunpack.c.l.b16 %v1980
  %v2262 = vunpack.c.l.b16 %v1981
  %v2263 = vunpack.c.h.b16 %v1981
  %v2264 = vunpack.c.l.b16 %v1982
  %v2265 = vunpack.c.h.b16 %v1982
  %v2266 = vunpack.c.l.b16 %v1983
  %v2267 = vunpack.c.l.b16 %v1984
  %v2268 = vunpack.c.h.b16 %v1984
  %v2269 = vunpack.c.l.b16 %v1985
  %v2270 = vunpack.c.h.b16 %v1985
  %v2271 = vunpack.c.l.b16 %v1986
  %v2272 = vunpack.c.l.b16 %v1987
  %v2273 = vunpack.c.h.b16 %v1987
  %v2274 = vunpack.c.l.b16 %v1988
  %v2275 = vunpack.c.h.b16 %v1988
  %v2276 = vunpack.c.l.b16 %v1989
  %v2277 = vunpack.c.l.b16 %v1990
  %v2278 = vunpack.c.h.b16 %v1990
  %v2279 = vunpack.c.l.b16 %v1991
  %v2280 = vunpack.c.h.b16 %v1991
  %v2281 = vunpack.c.l.b16 %v1992
  %v2282 = vunpack.c.l.b16 %v1993
  %v2283 = vunpack.c.h.b16 %v1993
  %v2284 = vunpack.c.l.b16 %v1994
  %v2285 = vunpack.c.h.b16 %v1994
  %v2286 = vunpack.c.l.b16 %v1995
  %v2287 = vunpack.c.l.b16 %v1996
  %v2288 = vunpack.c.h.b16 %v1996
  %v2289 = vunpack.c.l.b16 %v1997
  %v2290 = vunpack.c.h.b16 %v1997
  %v2291 = vunpack.c.l.b16 %v1998
  %v2292 = vunpack.c.l.b16 %v1999
  %v2293 = vunpack.c.h.b16 %v1999
  %v2294 = vunpack.c.l.b16 %v2000
  %v2295 = vunpack.c.h.b16 %v2000
  %v2296 = vunpack.c.l.b16 %v2001
  %v2297 = vunpack.c.l.b16 %v2002
  %v2298 = vunpack.c.h.b16 %v2002
  %v2299 = vunpack.c.l.b16 %v2003
  %v2300 = vunpack.c.h.b16 %v2003
  %v2301 = vunpack.c.l.b16 %v2004
  %v2302 = vunpack.c.l.b16 %v2005
  %v2303 = vunpack.c.h.b16 %v2005
  %v2304 = vunpack.c.l.b16 %v2006
  %v2305 = vunpack.c.h.b16 %v2006
  %v2306 = vunpack.c.l.b16 %v2007
  %v2307 = vunpack.c.l.b16 %v2008
  %v2308 = vunpack.c.h.b16 %v2008
  %v2309 = vunpack.c.l.b16 %v2009
  %v2310 = vunpack.c.h.b16 %v2009
  %v2311 = vunpack.c.l.b16 %v2010
  %v2312 = vunpack.c.l.b16 %v2011
  %v2313 = vunpack.c.h.b16 %v2011
  %v2314 = vunpack.c.l.b16 %v2012
  %v2315 = vunpack.c.h.b16 %v2012
  %v2316 = vunpack.c.l.b16 %v2013
  %v2317 = vunpack.c.l.b16 %v2014
  %v2318 = vunpack.c.h.b16 %v2014
  %v2319 = vunpack.c.l.b16 %v2015
  %v2320 = vunpack.c.h.b16 %v2015
  %v2321 = vunpack.c.l.b16 %v2016
  %v2322 = vunpack.c.l.b16 %v2017
  %v2323 = vunpack.c.h.b16 %v2017
  %v2324 = vunpack.c.l.b16 %v2018
  %v2325 = vunpack.c.h.b16 %v2018
  %v2326 = vunpack.c.l.b16 %v2019
  %v2327 = vunpack.c.l.b16 %v2020
  %v2328 = vunpack.c.h.b16 %v2020
  %v2329 = vunpack.c.l.b16 %v2021
  %v2330 = vunpack.c.h.b16 %v2021
  %v2331 = vunpack.c.l.b16 %v2022
  %v2332 = vunpack.c.l.b16 %v2023
  %v2333 = vunpack.c.h.b16 %v2023
  %v2334 = vunpack.c.l.b16 %v2024
  %v2335 = vunpack.c.h.b16 %v2024
  %v2336 = vunpack.c.l.b16 %v2025
  %v2337 = vunpack.c.l.b16 %v2026
  %v2338 = vunpack.c.h.b16 %v2026
  %v2339 = vunpack.c.l.b16 %v2027
  %v2340 = vunpack.c.h.b16 %v2027
  %v2341 = vunpack.c.l.b16 %v2028
  %v2342 = vunpack.c.l.b16 %v2029
  %v2343 = vunpack.c.h.b16 %v2029
  %v2344 = vunpack.c.l.b16 %v2030
  %v2345 = vunpack.c.h.b16 %v2030
  %v2346 = vunpack.c.l.b16 %v2031
  %v2347 = vunpack.c.l.b16 %v2032
  %v2348 = vunpack.c.h.b16 %v2032
  %v2349 = vunpack.c.l.b16 %v2033
  %v2350 = vunpack.c.h.b16 %v2033
  %v2351 = vunpack.c.l.b16 %v2034
  %v2352 = vunpack.c.l.b16 %v2035
  %v2353 = vunpack.c.h.b16 %v2035
  %v2354 = vunpack.c.l.b16 %v2036
  %v2355 = vunpack.c.h.b16 %v2036
  %v2356 = vunpack.c.l.b16 %v2037
  %v2357 = vunpack.c.l.b16 %v2038
  %v2358 = vunpack.c.h.b16 %v2038
  %v2359 = vunpack.c.l.b16 %v2039
  %v2360 = vunpack.c.h.b16 %v2039
  %v2361 = vunpack.c.l.b16 %v2040
  %v2362 = vunpack.c.l.b16 %v2041
  %v2363 = vunpack.c.h.b16 %v2041
  %v2364 = vunpack.c.l.b16 %v2042
  %v2365 = vunpack.c.h.b16 %v2042
  %v2366 = vunpack.c.l.b16 %v2043
  %v2367 = vunpack.c.l.b16 %v2044
  %v2368 = vunpack.c.h.b16 %v2044
  %v2369 = vunpack.c.l.b16 %v2045
  %v2370 = vunpack.c.h.b16 %v2045
  %v2371 = vunpack.c.l.b16 %v2046
  %v2372 = vunpack.c.l.b16 %v2047
  %v2373 = vunpack.c.h.b16 %v2047
  %v2374 = vunpack.c.l.b16 %v2048
  %v2375 = vunpack.c.h.b16 %v2048
  %v2376 = vunpack.c.l.b16 %v2049
  %v2377 = vunpack.c.l.b16 %v2050
  %v2378 = vunpack.c.h.b16 %v2050
  %v2379 = vunpack.c.l.b16 %v2051
  %v2380 = vunpack.c.h.b16 %v2051
  %v2381 = vunpack.c.l.b16 %v2052
  %v2382 = vunpack.c.l.b16 %v2053
  %v2383 = vunpack.c.h.b16 %v2053
  %v2384 = vunpack.c.l.b16 %v2054
  %v2385 = vunpack.c.h.b16 %v2054
  %v2386 = vunpack.c.l.b16 %v2055
  %v2387 = vunpack.c.l.b16 %v2056
  %v2388 = vunpack.c.h.b16 %v2056
  %v2389 = vunpack.c.l.b16 %v2057
  %v2390 = vunpack.c.h.b16 %v2057
  %v2391 = vunpack.c.l.b16 %v2058
  %v2392 = vunpack.c.l.b16 %v2059
  %v2393 = vunpack.c.h.b16 %v2059
  %v2394 = vunpack.c.l.b16 %v2060
  %v2395 = vunpack.c.h.b16 %v2060
  %v2396 = vunpack.c.l.b16 %v2061
  %v2397 = vunpack.c.l.b16 %v2062
  %v2398 = vunpack.c.h.b16 %v2062
  %v2399 = vunpack.c.l.b16 %v2063
  %v2400 = vunpack.c.h.b16 %v2063
  %v2401 = vunpack.c.l.b16 %v2064
  %v2402 = vunpack.c.l.b16 %v2065
  %v2403 = vunpack.c.h.b16 %v2065
  %v2404 = vunpack.c.l.b16 %v2066
  %v2405 = vunpack.c.h.b16 %v2066
  %v2406 = vunpack.c.l.b16 %v2067
  %v2407 = vunpack.c.l.b16 %v2068
  %v2408 = vunpack.c.h.b16 %v2068
  %v2409 = vunpack.c.l.b16 %v2069
  %v2410 = vunpack.c.h.b16 %v2069
  %v2411 = vunpack.c.l.b16 %v2070
  %v2412 = vunpack.c.l.b16 %v2071
  %v2413 = vunpack.c.h.b16 %v2071
  %v2414 = vunpack.c.l.b16 %v2072
  %v2415 = vunpack.c.h.b16 %v2072
  %v2416 = vunpack.c.l.b16 %v2073
  %v2417 = vunpack.c.l.b16 %v2074
  %v2418 = vunpack.c.h.b16 %v2074
  %v2419 = vunpack.c.l.b16 %v2075
  %v2420 = vunpack.c.h.b16 %v2075
  %v2421 = vunpack.c.l.b16 %v2076
  %v2422 = vunpack.c.l.b16 %v2077
  %v2423 = vunpack.c.h.b16 %v2077
  %v2424 = vunpack.c.l.b16 %v2078
  %v2425 = vunpack.c.h.b16 %v2078
  %v2426 = vunpack.c.l.b16 %v2079
  %v2427 = vpack.c.b16 %v2232, %v2227
  %v2428 = vpack.c.b16 %v2233, %v2228
  %v2429 = vpack.c.b16 %v2234, %v2229
  %v2430 = vpack.c.b16 %v2235, %v2230
  %v2431 = vpack.c.b16 %v2236, %v2231
  %v2432 = vpack.c.b16 %v2242, %v2237
  %v2433 = vpack.c.b16 %v2243, %v2238
  %v2434 = vpack.c.b16 %v2244, %v2239
  %v2435 = vpack.c.b16 %v2245, %v2240
  %v2436 = vpack.c.b16 %v2246, %v2241
  %v2437 = vpack.c.b16 %v2252, %v2247
  %v2438 = vpack.c.b16 %v2253, %v2248
  %v2439 = vpack.c.b16 %v2254, %v2249
  %v2440 = vpack.c.b16 %v2255, %v2250
  %v2441 = vpack.c.b16 %v2256, %v2251
  %v2442 = vpack.c.b16 %v2262, %v2257
  %v2443 = vpack.c.b16 %v2263, %v2258
  %v2444 = vpack.c.b16 %v2264, %v2259
  %v2445 = vpack.c.b16 %v2265, %v2260
  %v2446 = vpack.c.b16 %v2266, %v2261
  %v2447 = vpack.c.b16 %v2272, %v2267
  %v2448 = vpack.c.b16 %v2273, %v2268
  %v2449 = vpack.c.b16 %v2274, %v2269
  %v2450 = vpack.c.b16 %v2275, %v2270
  %v2451 = vpack.c.b16 %v2276, %v2271
  %v2452 = vpack.c.b16 %v2282, %v2277
  %v2453 = vpack.c.b16 %v2283, %v2278
  %v2454 = vpack.c.b16 %v2284, %v2279
  %v2455 = vpack.c.b16 %v2285, %v2280
  %v2456 = vpack.c.b16 %v2286, %v2281
  %v2457 = vpack.c.b16 %v2292, %v2287
  %v2458 = vpack.c.b16 %v2293, %v2288
  %v2459 = vpack.c.b16 %v2294, %v2289
  %v2460 = vpack.c.b16 %v2295, %v2290
  %v2461 = vpack.c.b16 %v2296, %v2291
  %v2462 = vpack.c.b16 %v2302, %v2297
  %v2463 = vpack.c.b16 %v2303, %v2298
  %v2464 = vpack.c.b16 %v2304, %v2299
  %v2465 = vpack.c.b16 %v2305, %v2300
  %v2466 = vpack.c.b16 %v2306, %v2301
  %v2467 = vpack.c.b16 %v2312, %v2307
  %v2468 = vpack.c.b16 %v2313, %v2308
  %v2469 = vpack.c.b16 %v2314, %v2309
  %v2470 = vpack.c.b16 %v2315, %v2310
  %v2471 = vpack.c.b16 %v2316, %v2311
  %v2472 = vpack.c.b16 %v2322, %v2317
  %v2473 = vpack.c.b16 %v2323, %v2318
  %v2474 = vpack.c.b16 %v2324, %v2319
  %v2475 = vpack.c.b16 %v2325, %v2320
  %v2476 = vpack.c.b16 %v2326, %v2321
  %v2477 = vpack.c.b16 %v2332, %v2327
  %v2478 = vpack.c.b16 %v2333, %v2328
  %v2479 = vpack.c.b16 %v2334, %v2329
  %v2480 = vpack.c.b16 %v2335, %v2330
  %v2481 = vpack.c.b16 %v2336, %v2331
  %v2482 = vpack.c.b16 %v2342, %v2337
  %v2483 = vpack.c.b16 %v2343, %v2338
  %v2484 = vpack.c.b16 %v2344, %v2339
  %v2485 = vpack.c.b16 %v2345, %v2340
  %v2486 = vpack.c.b16 %v2346, %v2341
  %v2487 = vpack.c.b16 %v2352, %v2347
  %v2488 = vpack.c.b16 %v2353, %v2348
  %v2489 = vpack.c.b16 %v2354, %v2349
  %v2490 = vpack.c.b16 %v2355, %v2350
  %v2491 = vpack.c.b16 %v2356, %v2351
  %v2492 = vpack.c.b16 %v2362, %v2357
  %v2493 = vpack.c.b16 %v2363, %v2358
  %v2494 = vpack.c.b16 %v2364, %v2359
  %v2495 = vpack.c.b16 %v2365, %v2360
  %v2496 = vpack.c.b16 %v2366, %v2361
  %v2497 = vpack.c.b16 %v2372, %v2367
  %v2498 = vpack.c.b16 %v2373, %v2368
  %v2499 = vpack.c.b16 %v2374, %v2369
  %v2500 = vpack.c.b16 %v2375, %v2370
  %v2501 = vpack.c.b16 %v2376, %v2371
  %v2502 = vpack.c.b16 %v2382, %v2377
  %v2503 = vpack.c.b16 %v2383, %v2378
  %v2504 = vpack.c.b16 %v2384, %v2379
  %v2505 = vpack.c.b16 %v2385, %v2380
  %v2506 = vpack.c.b16 %v2386, %v2381
  %v2507 = vpack.c.b16 %v2392, %v2387
  %v2508 = vpack.c.b16 %v2393, %v2388
  %v2509 = vpack.c.b16 %v2394, %v2389
  %v2510 = vpack.c.b16 %v2395, %v2390
  %v2511 = vpack.c.b16 %v2396, %v2391
  %v2512 = vpack.c.b16 %v2402, %v2397
  %v2513 = vpack.c.b16 %v2403, %v2398
  %v2514 = vpack.c.b16 %v2404, %v2399
  %v2515 = vpack.c.b16 %v2405, %v2400
  %v2516 = vpack.c.b16 %v2406, %v2401
  %v2517 = vpack.c.b16 %v2412, %v2407
  %v2518 = vpack.c.b16 %v2413, %v2408
  %v2519 = vpack.c.b16 %v2414, %v2409
  %v2520 = vpack.c.b16 %v2415, %v2410
  %v2521 = vpack.c.b16 %v2416, %v2411
  %v2522 = vpack.c.b16 %v2422, %v2417
  %v2523 = vpack.c.b16 %v2423, %v2418
  %v2524 = vpack.c.b16 %v2424, %v2419
  %v2525 = vpack.c.b16 %v2425, %v2420
  %v2526 = vpack.c.b16 %v2426, %v2421
  %2627 = vmatprep.subr.bf16.mxu0 %v2428
  %2628 = vmatpush1.bf16.msra.mxu0 %v2427
  %2629 = vmatprep.subr.bf16.mxu0 %v2433
  %2630 = vmatpush1.bf16.msra.mxu0 %v2432
  %2631 = vmatprep.subr.bf16.mxu0 %v2438
  %2632 = vmatpush1.bf16.msra.mxu0 %v2437
  %2633 = vmatprep.subr.bf16.mxu0 %v2443
  %2634 = vmatpush1.bf16.msra.mxu0 %v2442
  %2635 = vmatprep.subr.bf16.mxu0 %v2448
  %2636 = vmatpush1.bf16.msra.mxu0 %v2447
  %2637 = vmatprep.subr.bf16.mxu0 %v2453
  %2638 = vmatpush1.bf16.msra.mxu0 %v2452
  %2639 = vmatprep.subr.bf16.mxu0 %v2458
  %2640 = vmatpush1.bf16.msra.mxu0 %v2457
  %2641 = vmatprep.subr.bf16.mxu0 %v2463
  %2642 = vmatpush1.bf16.msra.mxu0 %v2462
  %2643 = vmatprep.subr.bf16.mxu0 %v2468
  %2644 = vmatpush1.bf16.msra.mxu0 %v2467
  %2645 = vmatprep.subr.bf16.mxu0 %v2473
  %2646 = vmatpush1.bf16.msra.mxu0 %v2472
  %2647 = vmatprep.subr.bf16.mxu0 %v2478
  %2648 = vmatpush1.bf16.msra.mxu0 %v2477
  %2649 = vmatprep.subr.bf16.mxu0 %v2483
  %2650 = vmatpush1.bf16.msra.mxu0 %v2482
  %2651 = vmatprep.subr.bf16.mxu0 %v2488
  %2652 = vmatpush1.bf16.msra.mxu0 %v2487
  %2653 = vmatprep.subr.bf16.mxu0 %v2493
  %2654 = vmatpush1.bf16.msra.mxu0 %v2492
  %2655 = vmatprep.subr.bf16.mxu0 %v2498
  %2656 = vmatpush1.bf16.msra.mxu0 %v2497
  %2657 = vmatprep.subr.bf16.mxu0 %v2503
  %2658 = vmatpush1.bf16.msra.mxu0 %v2502
  %2659 = vmatprep.mubr.bf16.mxu0 %v257
  %2660 = vmatmul.mubr.bf16.gmra.mrb[0].mxu0 %v256
  %v2661 = vpop.f32.mrb[0].mxu0
  %v2662 = vadd.f32 %v2085, %v2661
  %v2663 = vpop.f32.mrb[0].mxu0
  %v2664 = vadd.f32 %v2089, %v2663
  %v2665 = vpop.f32.mrb[0].mxu0
  %v2666 = vadd.f32 %v2085, %v2665
  %v2667 = vpop.f32.mrb[0].mxu0
  %v2668 = vadd.f32 %v2089, %v2667
  %2669 = vmatprep.mubr.bf16.mxu0 %v260
  %2670 = vmatmul.mubr.bf16.gmra.mrb[0].mxu0 %v259
  %v2671 = vpop.f32.mrb[0].mxu0
  %v2672 = vadd.f32 %v2085, %v2671
  %v2673 = vpop.f32.mrb[0].mxu0
  %v2674 = vadd.f32 %v2089, %v2673
  %v2675 = vpop.f32.mrb[0].mxu0
  %v2676 = vadd.f32 %v2085, %v2675
  %v2677 = vpop.f32.mrb[0].mxu0
  %v2678 = vadd.f32 %v2089, %v2677
  %2679 = vdwg.mxu0
  %2680 = vmatprep.subr.bf16.mxu0 %v2508
  %2681 = vmatpush1.bf16.msra.mxu0 %v2507
  %2682 = vmatprep.subr.bf16.mxu0 %v2513
  %2683 = vmatpush1.bf16.msra.mxu0 %v2512
  %2684 = vmatprep.subr.bf16.mxu0 %v2518
  %2685 = vmatpush1.bf16.msra.mxu0 %v2517
  %2686 = vmatprep.subr.bf16.mxu0 %v2523
  %2687 = vmatpush1.bf16.msra.mxu0 %v2522
  %2688 = vmatprep.subr.bf16.mxu0 0
  %2689 = vmatpush1.bf16.msra.mxu0 0
  %2690 = vmatprep.subr.bf16.mxu0 0
  %2691 = vmatpush1.bf16.msra.mxu0 0
  %2692 = vmatprep.subr.bf16.mxu0 0
  %2693 = vmatpush1.bf16.msra.mxu0 0
  %2694 = vmatprep.subr.bf16.mxu0 0
  %2695 = vmatpush1.bf16.msra.mxu0 0
  %2696 = vmatprep.subr.bf16.mxu0 0
  %2697 = vmatpush1.bf16.msra.mxu0 0
  %2698 = vmatprep.subr.bf16.mxu0 0
  %2699 = vmatpush1.bf16.msra.mxu0 0
  %2700 = vmatprep.subr.bf16.mxu0 0
  %2701 = vmatpush1.bf16.msra.mxu0 0
  %2702 = vmatprep.subr.bf16.mxu0 0
  %2703 = vmatpush1.bf16.msra.mxu0 0
  %2704 = vmatprep.subr.bf16.mxu0 0
  %2705 = vmatpush1.bf16.msra.mxu0 0
  %2706 = vmatprep.subr.bf16.mxu0 0
  %2707 = vmatpush1.bf16.msra.mxu0 0
  %2708 = vmatprep.subr.bf16.mxu0 0
  %2709 = vmatpush1.bf16.msra.mxu0 0
  %2710 = vmatprep.subr.bf16.mxu0 0
  %2711 = vmatpush1.bf16.msra.mxu0 0
  %2712 = vmatprep.mubr.bf16.mxu0 0
  %2713 = vmatmul.mubr.bf16.gmra.mrb[0].mxu0 %v788
  %v2714 = vpop.f32.mrb[0].mxu0
  %v2715 = vadd.f32 %v2662, %v2714
  %v2716 = vpop.f32.mrb[0].mxu0
  %v2717 = vadd.f32 %v2664, %v2716
  %v2718 = vpop.f32.mrb[0].mxu0
  %v2719 = vadd.f32 %v2666, %v2718
  %v2720 = vpop.f32.mrb[0].mxu0
  %v2721 = vadd.f32 %v2668, %v2720
  %2722 = vmatprep.mubr.bf16.mxu0 0
  %2723 = vmatmul.mubr.bf16.gmra.mrb[0].mxu0 %v791
  %v2724 = vpop.f32.mrb[0].mxu0
  %v2725 = vadd.f32 %v2672, %v2724
  %v2726 = vpop.f32.mrb[0].mxu0
  %v2727 = vadd.f32 %v2674, %v2726
  %v2728 = vpop.f32.mrb[0].mxu0
  %v2729 = vadd.f32 %v2676, %v2728
  %v2730 = vpop.f32.mrb[0].mxu0
  %v2731 = vadd.f32 %v2678, %v2730
  %2732 = vdwg.mxu0
  %2733 = vmatprep.subr.bf16.mxu0 %v2430
  %2734 = vmatpush1.bf16.msra.mxu0 %v2429
  %2735 = vmatprep.subr.bf16.mxu0 %v2435
  %2736 = vmatpush1.bf16.msra.mxu0 %v2434
  %2737 = vmatprep.subr.bf16.mxu0 %v2440
  %2738 = vmatpush1.bf16.msra.mxu0 %v2439
  %2739 = vmatprep.subr.bf16.mxu0 %v2445
  %2740 = vmatpush1.bf16.msra.mxu0 %v2444
  %2741 = vmatprep.subr.bf16.mxu0 %v2450
  %2742 = vmatpush1.bf16.msra.mxu0 %v2449
  %2743 = vmatprep.subr.bf16.mxu0 %v2455
  %2744 = vmatpush1.bf16.msra.mxu0 %v2454
  %2745 = vmatprep.subr.bf16.mxu0 %v2460
  %2746 = vmatpush1.bf16.msra.mxu0 %v2459
  %2747 = vmatprep.subr.bf16.mxu0 %v2465
  %2748 = vmatpush1.bf16.msra.mxu0 %v2464
  %2749 = vmatprep.subr.bf16.mxu0 %v2470
  %2750 = vmatpush1.bf16.msra.mxu0 %v2469
  %2751 = vmatprep.subr.bf16.mxu0 %v2475
  %2752 = vmatpush1.bf16.msra.mxu0 %v2474
  %2753 = vmatprep.subr.bf16.mxu0 %v2480
  %2754 = vmatpush1.bf16.msra.mxu0 %v2479
  %2755 = vmatprep.subr.bf16.mxu0 %v2485
  %2756 = vmatpush1.bf16.msra.mxu0 %v2484
  %2757 = vmatprep.subr.bf16.mxu0 %v2490
  %2758 = vmatpush1.bf16.msra.mxu0 %v2489
  %2759 = vmatprep.subr.bf16.mxu0 %v2495
  %2760 = vmatpush1.bf16.msra.mxu0 %v2494
  %2761 = vmatprep.subr.bf16.mxu0 %v2500
  %2762 = vmatpush1.bf16.msra.mxu0 %v2499
  %2763 = vmatprep.subr.bf16.mxu0 %v2505
  %2764 = vmatpush1.bf16.msra.mxu0 %v2504
  %2765 = vmatprep.mubr.bf16.mxu0 %v257
  %2766 = vmatmul.mubr.bf16.gmra.mrb[0].mxu0 %v256
  %v2767 = vpop.f32.mrb[0].mxu0
  %v2768 = vadd.f32 %v2093, %v2767
  %v2769 = vpop.f32.mrb[0].mxu0
  %v2770 = vadd.f32 %v2097, %v2769
  %v2771 = vpop.f32.mrb[0].mxu0
  %v2772 = vadd.f32 %v2093, %v2771
  %v2773 = vpop.f32.mrb[0].mxu0
  %v2774 = vadd.f32 %v2097, %v2773
  %2775 = vmatprep.mubr.bf16.mxu0 %v260
  %2776 = vmatmul.mubr.bf16.gmra.mrb[0].mxu0 %v259
  %v2777 = vpop.f32.mrb[0].mxu0
  %v2778 = vadd.f32 %v2093, %v2777
  %v2779 = vpop.f32.mrb[0].mxu0
  %v2780 = vadd.f32 %v2097, %v2779
  %v2781 = vpop.f32.mrb[0].mxu0
  %v2782 = vadd.f32 %v2093, %v2781
  %v2783 = vpop.f32.mrb[0].mxu0
  %v2784 = vadd.f32 %v2097, %v2783
  %2785 = vdwg.mxu0
  %2786 = vmatprep.subr.bf16.mxu0 %v2510
  %2787 = vmatpush1.bf16.msra.mxu0 %v2509
  %2788 = vmatprep.subr.bf16.mxu0 %v2515
  %2789 = vmatpush1.bf16.msra.mxu0 %v2514
  %2790 = vmatprep.subr.bf16.mxu0 %v2520
  %2791 = vmatpush1.bf16.msra.mxu0 %v2519
  %2792 = vmatprep.subr.bf16.mxu0 %v2525
  %2793 = vmatpush1.bf16.msra.mxu0 %v2524
  %2794 = vmatprep.subr.bf16.mxu0 0
  %2795 = vmatpush1.bf16.msra.mxu0 0
  %2796 = vmatprep.subr.bf16.mxu0 0
  %2797 = vmatpush1.bf16.msra.mxu0 0
  %2798 = vmatprep.subr.bf16.mxu0 0
  %2799 = vmatpush1.bf16.msra.mxu0 0
  %2800 = vmatprep.subr.bf16.mxu0 0
  %2801 = vmatpush1.bf16.msra.mxu0 0
  %2802 = vmatprep.subr.bf16.mxu0 0
  %2803 = vmatpush1.bf16.msra.mxu0 0
  %2804 = vmatprep.subr.bf16.mxu0 0
  %2805 = vmatpush1.bf16.msra.mxu0 0
  %2806 = vmatprep.subr.bf16.mxu0 0
  %2807 = vmatpush1.bf16.msra.mxu0 0
  %2808 = vmatprep.subr.bf16.mxu0 0
  %2809 = vmatpush1.bf16.msra.mxu0 0
  %2810 = vmatprep.subr.bf16.mxu0 0
  %2811 = vmatpush1.bf16.msra.mxu0 0
  %2812 = vmatprep.subr.bf16.mxu0 0
  %2813 = vmatpush1.bf16.msra.mxu0 0
  %2814 = vmatprep.subr.bf16.mxu0 0
  %2815 = vmatpush1.bf16.msra.mxu0 0
  %2816 = vmatprep.subr.bf16.mxu0 0
  %2817 = vmatpush1.bf16.msra.mxu0 0
  %2818 = vmatprep.mubr.bf16.mxu0 0
  %2819 = vmatmul.mubr.bf16.gmra.mrb[0].mxu0 %v788
  %v2820 = vpop.f32.mrb[0].mxu0
  %v2821 = vadd.f32 %v2768, %v2820
  %v2822 = vpop.f32.mrb[0].mxu0
  %v2823 = vadd.f32 %v2770, %v2822
  %v2824 = vpop.f32.mrb[0].mxu0
  %v2825 = vadd.f32 %v2772, %v2824
  %v2826 = vpop.f32.mrb[0].mxu0
  %v2827 = vadd.f32 %v2774, %v2826
  %2828 = vmatprep.mubr.bf16.mxu0 0
  %2829 = vmatmul.mubr.bf16.gmra.mrb[0].mxu0 %v791
  %v2830 = vpop.f32.mrb[0].mxu0
  %v2831 = vadd.f32 %v2778, %v2830
  %v2832 = vpop.f32.mrb[0].mxu0
  %v2833 = vadd.f32 %v2780, %v2832
  %v2834 = vpop.f32.mrb[0].mxu0
  %v2835 = vadd.f32 %v2782, %v2834
  %v2836 = vpop.f32.mrb[0].mxu0
  %v2837 = vadd.f32 %v2784, %v2836
  %2838 = vdwg.mxu0
  %2839 = vmatprep.subr.bf16.mxu0 0
  %2840 = vmatpush1.bf16.msra.mxu0 %v2431
  %2841 = vmatprep.subr.bf16.mxu0 0
  %2842 = vmatpush1.bf16.msra.mxu0 %v2436
  %2843 = vmatprep.subr.bf16.mxu0 0
  %2844 = vmatpush1.bf16.msra.mxu0 %v2441
  %2845 = vmatprep.subr.bf16.mxu0 0
  %2846 = vmatpush1.bf16.msra.mxu0 %v2446
  %2847 = vmatprep.subr.bf16.mxu0 0
  %2848 = vmatpush1.bf16.msra.mxu0 %v2451
  %2849 = vmatprep.subr.bf16.mxu0 0
  %2850 = vmatpush1.bf16.msra.mxu0 %v2456
  %2851 = vmatprep.subr.bf16.mxu0 0
  %2852 = vmatpush1.bf16.msra.mxu0 %v2461
  %2853 = vmatprep.subr.bf16.mxu0 0
  %2854 = vmatpush1.bf16.msra.mxu0 %v2466
  %2855 = vmatprep.subr.bf16.mxu0 0
  %2856 = vmatpush1.bf16.msra.mxu0 %v2471
  %2857 = vmatprep.subr.bf16.mxu0 0
  %2858 = vmatpush1.bf16.msra.mxu0 %v2476
  %2859 = vmatprep.subr.bf16.mxu0 0
  %2860 = vmatpush1.bf16.msra.mxu0 %v2481
  %2861 = vmatprep.subr.bf16.mxu0 0
  %2862 = vmatpush1.bf16.msra.mxu0 %v2486
  %2863 = vmatprep.subr.bf16.mxu0 0
  %2864 = vmatpush1.bf16.msra.mxu0 %v2491
  %2865 = vmatprep.subr.bf16.mxu0 0
  %2866 = vmatpush1.bf16.msra.mxu0 %v2496
  %2867 = vmatprep.subr.bf16.mxu0 0
  %2868 = vmatpush1.bf16.msra.mxu0 %v2501
  %2869 = vmatprep.subr.bf16.mxu0 0
  %2870 = vmatpush1.bf16.msra.mxu0 %v2506
  %2871 = vmatprep.mubr.bf16.mxu0 %v257
  %2872 = vmatmul.mubr.bf16.gmra.mrb[0].mxu0 %v256
  %v2873 = vpop.f32.mrb[0].mxu0
  %v2874 = vadd.f32 %v2101, %v2873
  %v2875 = vpop.f32.mrb[0].mxu0
  %v2876 = vpop.f32.mrb[0].mxu0
  %v2877 = vadd.f32 %v2101, %v2876
  %v2878 = vpop.f32.mrb[0].mxu0
  %2879 = vmatprep.mubr.bf16.mxu0 %v260
  %2880 = vmatmul.mubr.bf16.gmra.mrb[0].mxu0 %v259
  %v2881 = vpop.f32.mrb[0].mxu0
  %v2882 = vadd.f32 %v2101, %v2881
  %v2883 = vpop.f32.mrb[0].mxu0
  %v2884 = vpop.f32.mrb[0].mxu0
  %v2885 = vadd.f32 %v2101, %v2884
  %v2886 = vpop.f32.mrb[0].mxu0
  %2887 = vdwg.mxu0
  %2888 = vmatprep.subr.bf16.mxu0 0
  %2889 = vmatpush1.bf16.msra.mxu0 %v2511
  %2890 = vmatprep.subr.bf16.mxu0 0
  %2891 = vmatpush1.bf16.msra.mxu0 %v2516
  %2892 = vmatprep.subr.bf16.mxu0 0
  %2893 = vmatpush1.bf16.msra.mxu0 %v2521
  %2894 = vmatprep.subr.bf16.mxu0 0
  %2895 = vmatpush1.bf16.msra.mxu0 %v2526
  %2896 = vmatprep.subr.bf16.mxu0 0
  %2897 = vmatpush1.bf16.msra.mxu0 0
  %2898 = vmatprep.subr.bf16.mxu0 0
  %2899 = vmatpush1.bf16.msra.mxu0 0
  %2900 = vmatprep.subr.bf16.mxu0 0
  %2901 = vmatpush1.bf16.msra.mxu0 0
  %2902 = vmatprep.subr.bf16.mxu0 0
  %2903 = vmatpush1.bf16.msra.mxu0 0
  %2904 = vmatprep.subr.bf16.mxu0 0
  %2905 = vmatpush1.bf16.msra.mxu0 0
  %2906 = vmatprep.subr.bf16.mxu0 0
  %2907 = vmatpush1.bf16.msra.mxu0 0
  %2908 = vmatprep.subr.bf16.mxu0 0
  %2909 = vmatpush1.bf16.msra.mxu0 0
  %2910 = vmatprep.subr.bf16.mxu0 0
  %2911 = vmatpush1.bf16.msra.mxu0 0
  %2912 = vmatprep.subr.bf16.mxu0 0
  %2913 = vmatpush1.bf16.msra.mxu0 0
  %2914 = vmatprep.subr.bf16.mxu0 0
  %2915 = vmatpush1.bf16.msra.mxu0 0
  %2916 = vmatprep.subr.bf16.mxu0 0
  %2917 = vmatpush1.bf16.msra.mxu0 0
  %2918 = vmatprep.subr.bf16.mxu0 0
  %2919 = vmatpush1.bf16.msra.mxu0 0
  %2920 = vmatprep.mubr.bf16.mxu0 0
  %2921 = vmatmul.mubr.bf16.gmra.mrb[0].mxu0 %v788
  %v2922 = vpop.f32.mrb[0].mxu0
  %v2923 = vadd.f32 %v2874, %v2922
  %v2924 = vpop.f32.mrb[0].mxu0
  %v2925 = vpop.f32.mrb[0].mxu0
  %v2926 = vadd.f32 %v2877, %v2925
  %v2927 = vpop.f32.mrb[0].mxu0
  %2928 = vmatprep.mubr.bf16.mxu0 0
  %2929 = vmatmul.mubr.bf16.gmra.mrb[0].mxu0 %v791
  %v2930 = vpop.f32.mrb[0].mxu0
  %v2931 = vadd.f32 %v2882, %v2930
  %v2932 = vpop.f32.mrb[0].mxu0
  %v2933 = vpop.f32.mrb[0].mxu0
  %v2934 = vadd.f32 %v2885, %v2933
  %v2935 = vpop.f32.mrb[0].mxu0
  %2936 = vdwg.mxu0
  %v2939 = vrot.slane %v1941, 2
  %v2940 = vrot.slane %v1942, 2
  %vm2945 = vcmask 1041408
  %v2946 = vrot.slane %v1941, 6
  %v2947 = vrot.slane %v1942, 6
  %v2948 = vrot.slane %v1946, 6
  %v2949 = vsel %vm2945, %v2946, %v2948
  %v2950 = vrot.slane %v1947, 6
  %v2951 = vsel %vm2945, %v2947, %v2950
  %v2958 = vrot.slane %v1946, 4
  %v2959 = vrot.slane %v1947, 4
  %v2962 = vrot.slane %v1946, 2
  %v2963 = vrot.slane %v1947, 2
  %v2966 = vsel %vm1325, %v2939, %v1941
  %v2967 = vsel %vm1325, %v2940, %v1942
  %v2968 = vsel %vm2945, %v2966, %v2946
  %v2969 = vsel %vm2945, %v2967, %v2947
  %v2970 = vsel %vm2945, %v2948, %v2958
  %v2971 = vsel %vm2945, %v2950, %v2959
  %vm2972 = vcmask 1042432
  %v2973 = vsel %vm2972, %v2970, %v2962
  %v2974 = vsel %vm2972, %v2971, %v2963
  %v2975 = vpack.c.bf16 %v2949, %v2968
  %v2976 = vpack.c.bf16 %v2951, %v2969
  %v2977 = vpack.c.bf16 %v2973, %v2973
  %v2978 = vpack.c.bf16 %v2974, %v2974
  %v2979 = vld [vmem:[%s7] sm:$0xff]
  %v2980 = vld [vmem:[%s7 + $0x8] sm:$0xff]
  %v2981 = vld [vmem:[%s7 + $0x10] sm:$0xff]
  %v2982 = vld [vmem:[%s7 + $0x18] sm:$0xff]
  %v2983 = vld [vmem:[%s7 + $0x20] sm:$0xff]
  %v2984 = vld [vmem:[%s7 + $0x28] sm:$0xff]
  %v2985 = vld [vmem:[%s7 + $0x30] sm:$0xff]
  %v2986 = vld [vmem:[%s7 + $0x38] sm:$0xff]
  %v2987 = vld [vmem:[%s7 + $0x40] sm:$0xff]
  %v2988 = vld [vmem:[%s7 + $0x48] sm:$0xff]
  %v2989 = vld [vmem:[%s7 + $0x50] sm:$0xff]
  %v2990 = vld [vmem:[%s7 + $0x58] sm:$0xff]
  %v2991 = vld [vmem:[%s7 + $0x60] sm:$0xff]
  %v2992 = vld [vmem:[%s7 + $0x68] sm:$0xff]
  %v2993 = vld [vmem:[%s7 + $0x70] sm:$0xff]
  %v2994 = vld [vmem:[%s7 + $0x78] sm:$0xff]
  %v2995 = vld [vmem:[%s7 + $0x80] sm:$0xff]
  %v2996 = vld [vmem:[%s7 + $0x88] sm:$0xff]
  %v2997 = vld [vmem:[%s7 + $0x90] sm:$0xff]
  %v2998 = vld [vmem:[%s7 + $0x98] sm:$0xff]
  %s2999 = scalar_lea.vmem %s7, 160
  %v3000 = vld [vmem:[%s2999] sm:$0xff]
  %v3001 = vld [vmem:[%s2999 + $0x8] sm:$0xff]
  %v3002 = vld [vmem:[%s2999 + $0x10] sm:$0xff]
  %v3003 = vld [vmem:[%s2999 + $0x18] sm:$0xff]
  %v3004 = vld [vmem:[%s2999 + $0x20] sm:$0xff]
  %v3005 = vld [vmem:[%s2999 + $0x28] sm:$0xff]
  %v3006 = vld [vmem:[%s2999 + $0x30] sm:$0xff]
  %v3007 = vld [vmem:[%s2999 + $0x38] sm:$0xff]
  %v3008 = vld [vmem:[%s2999 + $0x40] sm:$0xff]
  %v3009 = vld [vmem:[%s2999 + $0x48] sm:$0xff]
  %v3010 = vld [vmem:[%s2999 + $0x50] sm:$0xff]
  %v3011 = vld [vmem:[%s2999 + $0x58] sm:$0xff]
  %v3012 = vld [vmem:[%s2999 + $0x60] sm:$0xff]
  %v3013 = vld [vmem:[%s2999 + $0x68] sm:$0xff]
  %v3014 = vld [vmem:[%s2999 + $0x70] sm:$0xff]
  %v3015 = vld [vmem:[%s2999 + $0x78] sm:$0xff]
  %v3016 = vld [vmem:[%s2999 + $0x80] sm:$0xff]
  %v3017 = vld [vmem:[%s2999 + $0x88] sm:$0xff]
  %v3018 = vld [vmem:[%s2999 + $0x90] sm:$0xff]
  %v3019 = vld [vmem:[%s2999 + $0x98] sm:$0xff]
  %vm3024 = vcmask 1046528
  %v3025 = vrot.slane %v2975, 1
  %v3026 = vrot.slane %v2977, 1
  %v3027 = vsel %vm3024, %v3025, %v3026
  %v3028 = vrot.slane %v2976, 1
  %v3029 = vrot.slane %v2978, 1
  %v3030 = vsel %vm3024, %v3028, %v3029
  %3031 = vrot.lane.b32.xlu0 %v3027, 96
  %v3032 = vpop.permute.xlu0 %3031
  %3033 = vrot.lane.b32.xlu0 %v3030, 96
  %v3034 = vpop.permute.xlu0 %3033
  %vm3035 = vcmask 785408
  %v3036 = vsel %vm3035, %v3032, %v3034
  %v3058 = vunpack.c.l.b16 %v3000
  %v3059 = vunpack.c.h.b16 %v3000
  %v3060 = vunpack.c.l.b16 %v3001
  %v3061 = vunpack.c.h.b16 %v3001
  %v3062 = vunpack.c.l.b16 %v3002
  %v3063 = vunpack.c.h.b16 %v3002
  %v3064 = vunpack.c.l.b16 %v3003
  %v3065 = vunpack.c.h.b16 %v3003
  %v3066 = vunpack.c.l.b16 %v3004
  %v3067 = vunpack.c.h.b16 %v3004
  %v3068 = vunpack.c.l.b16 %v3005
  %v3069 = vunpack.c.h.b16 %v3005
  %v3070 = vunpack.c.l.b16 %v3006
  %v3071 = vunpack.c.h.b16 %v3006
  %v3072 = vunpack.c.l.b16 %v3007
  %v3073 = vunpack.c.h.b16 %v3007
  %v3074 = vunpack.c.l.b16 %v3008
  %v3075 = vunpack.c.h.b16 %v3008
  %v3076 = vunpack.c.l.b16 %v3009
  %v3077 = vunpack.c.h.b16 %v3009
  %v3078 = vunpack.c.l.b16 %v3010
  %v3079 = vunpack.c.h.b16 %v3010
  %v3080 = vunpack.c.l.b16 %v3011
  %v3081 = vunpack.c.h.b16 %v3011
  %v3082 = vunpack.c.l.b16 %v3012
  %v3083 = vunpack.c.h.b16 %v3012
  %v3084 = vunpack.c.l.b16 %v3013
  %v3085 = vunpack.c.h.b16 %v3013
  %v3086 = vunpack.c.l.b16 %v3014
  %v3087 = vunpack.c.h.b16 %v3014
  %v3088 = vunpack.c.l.b16 %v3015
  %v3089 = vunpack.c.h.b16 %v3015
  %v3090 = vunpack.c.l.b16 %v3016
  %v3091 = vunpack.c.h.b16 %v3016
  %v3092 = vunpack.c.l.b16 %v3017
  %v3093 = vunpack.c.h.b16 %v3017
  %v3094 = vunpack.c.l.b16 %v3018
  %v3095 = vunpack.c.h.b16 %v3018
  %v3096 = vunpack.c.l.b16 %v3019
  %v3097 = vunpack.c.h.b16 %v3019
  %v3098 = vpack.c.b16 %v3060, %v3058
  %v3099 = vpack.c.b16 %v3061, %v3059
  %v3100 = vpack.c.b16 %v3064, %v3062
  %v3101 = vpack.c.b16 %v3065, %v3063
  %v3102 = vpack.c.b16 %v3068, %v3066
  %v3103 = vpack.c.b16 %v3069, %v3067
  %v3104 = vpack.c.b16 %v3072, %v3070
  %v3105 = vpack.c.b16 %v3073, %v3071
  %v3106 = vpack.c.b16 %v3076, %v3074
  %v3107 = vpack.c.b16 %v3077, %v3075
  %v3108 = vpack.c.b16 %v3080, %v3078
  %v3109 = vpack.c.b16 %v3081, %v3079
  %v3110 = vpack.c.b16 %v3084, %v3082
  %v3111 = vpack.c.b16 %v3085, %v3083
  %v3112 = vpack.c.b16 %v3088, %v3086
  %v3113 = vpack.c.b16 %v3089, %v3087
  %v3114 = vpack.c.b16 %v3092, %v3090
  %v3115 = vpack.c.b16 %v3093, %v3091
  %v3116 = vpack.c.b16 %v3096, %v3094
  %v3117 = vpack.c.b16 %v3097, %v3095
  %vm3138 = vcmask 261120
  %v3140 = vsel %vm3138, %v3034, 0
  %3142 = vmatprep.subr.bf16.mxu0 %v3099
  %3143 = vmatpush1.bf16.msra.mxu0 %v3098
  %3144 = vmatprep.subr.bf16.mxu0 %v3101
  %3145 = vmatpush1.bf16.msra.mxu0 %v3100
  %3146 = vmatprep.subr.bf16.mxu0 %v3103
  %3147 = vmatpush1.bf16.msra.mxu0 %v3102
  %3148 = vmatprep.subr.bf16.mxu0 %v3105
  %3149 = vmatpush1.bf16.msra.mxu0 %v3104
  %3150 = vmatprep.subr.bf16.mxu0 %v3107
  %3151 = vmatpush1.bf16.msra.mxu0 %v3106
  %3152 = vmatprep.subr.bf16.mxu0 %v3109
  %3153 = vmatpush1.bf16.msra.mxu0 %v3108
  %3154 = vmatprep.subr.bf16.mxu0 %v3111
  %3155 = vmatpush1.bf16.msra.mxu0 %v3110
  %3156 = vmatprep.subr.bf16.mxu0 %v3113
  %3157 = vmatpush1.bf16.msra.mxu0 %v3112
  %3158 = vmatprep.subr.bf16.mxu0 %v3115
  %3159 = vmatpush1.bf16.msra.mxu0 %v3114
  %3160 = vmatprep.subr.bf16.mxu0 %v3117
  %3161 = vmatpush1.bf16.msra.mxu0 %v3116
  %3162 = vmatprep.subr.bf16.mxu0 0
  %3163 = vmatpush1.bf16.msra.mxu0 0
  %3164 = vmatprep.subr.bf16.mxu0 0
  %3165 = vmatpush1.bf16.msra.mxu0 0
  %3166 = vmatprep.subr.bf16.mxu0 0
  %3167 = vmatpush1.bf16.msra.mxu0 0
  %3168 = vmatprep.subr.bf16.mxu0 0
  %3169 = vmatpush1.bf16.msra.mxu0 0
  %3170 = vmatprep.subr.bf16.mxu0 0
  %3171 = vmatpush1.bf16.msra.mxu0 0
  %3172 = vmatprep.subr.bf16.mxu0 0
  %3173 = vmatpush1.bf16.msra.mxu0 0
  %3174 = vmatprep.mubr.bf16.mxu0 %v3140
  %3175 = vmatmul.mubr.bf16.gmra.mrb[0].mxu0 %v3036
  %v3176 = vpop.f32.mrb[0].mxu0
  %v3177 = vadd.f32 0.0, %v3176
  %v3178 = vpop.f32.mrb[0].mxu0
  %v3179 = vadd.f32 0.0, %v3178
  %v3180 = vpop.f32.mrb[0].mxu0
  %v3181 = vadd.f32 0.0, %v3180
  %v3182 = vpop.f32.mrb[0].mxu0
  %v3183 = vadd.f32 0.0, %v3182
  %3184 = vdwg.mxu0
  %3185 = vrot.lane.b32.xlu0 %v2975, 96
  %v3186 = vpop.permute.xlu0 %3185
  %3187 = vrot.lane.b32.xlu0 %v2976, 96
  %v3188 = vpop.permute.xlu0 %3187
  %v3189 = vsel %vm3035, %v3186, %v3188
  %v3211 = vunpack.c.l.b16 %v2979
  %v3212 = vunpack.c.h.b16 %v2979
  %v3213 = vunpack.c.l.b16 %v2980
  %v3214 = vunpack.c.h.b16 %v2980
  %v3215 = vunpack.c.l.b16 %v2981
  %v3216 = vunpack.c.h.b16 %v2981
  %v3217 = vunpack.c.l.b16 %v2982
  %v3218 = vunpack.c.h.b16 %v2982
  %v3219 = vunpack.c.l.b16 %v2983
  %v3220 = vunpack.c.h.b16 %v2983
  %v3221 = vunpack.c.l.b16 %v2984
  %v3222 = vunpack.c.h.b16 %v2984
  %v3223 = vunpack.c.l.b16 %v2985
  %v3224 = vunpack.c.h.b16 %v2985
  %v3225 = vunpack.c.l.b16 %v2986
  %v3226 = vunpack.c.h.b16 %v2986
  %v3227 = vunpack.c.l.b16 %v2987
  %v3228 = vunpack.c.h.b16 %v2987
  %v3229 = vunpack.c.l.b16 %v2988
  %v3230 = vunpack.c.h.b16 %v2988
  %v3231 = vunpack.c.l.b16 %v2989
  %v3232 = vunpack.c.h.b16 %v2989
  %v3233 = vunpack.c.l.b16 %v2990
  %v3234 = vunpack.c.h.b16 %v2990
  %v3235 = vunpack.c.l.b16 %v2991
  %v3236 = vunpack.c.h.b16 %v2991
  %v3237 = vunpack.c.l.b16 %v2992
  %v3238 = vunpack.c.h.b16 %v2992
  %v3239 = vunpack.c.l.b16 %v2993
  %v3240 = vunpack.c.h.b16 %v2993
  %v3241 = vunpack.c.l.b16 %v2994
  %v3242 = vunpack.c.h.b16 %v2994
  %v3243 = vunpack.c.l.b16 %v2995
  %v3244 = vunpack.c.h.b16 %v2995
  %v3245 = vunpack.c.l.b16 %v2996
  %v3246 = vunpack.c.h.b16 %v2996
  %v3247 = vunpack.c.l.b16 %v2997
  %v3248 = vunpack.c.h.b16 %v2997
  %v3249 = vunpack.c.l.b16 %v2998
  %v3250 = vunpack.c.h.b16 %v2998
  %v3251 = vpack.c.b16 %v3213, %v3211
  %v3252 = vpack.c.b16 %v3214, %v3212
  %v3253 = vpack.c.b16 %v3217, %v3215
  %v3254 = vpack.c.b16 %v3218, %v3216
  %v3255 = vpack.c.b16 %v3221, %v3219
  %v3256 = vpack.c.b16 %v3222, %v3220
  %v3257 = vpack.c.b16 %v3225, %v3223
  %v3258 = vpack.c.b16 %v3226, %v3224
  %v3259 = vpack.c.b16 %v3229, %v3227
  %v3260 = vpack.c.b16 %v3230, %v3228
  %v3261 = vpack.c.b16 %v3233, %v3231
  %v3262 = vpack.c.b16 %v3234, %v3232
  %v3263 = vpack.c.b16 %v3237, %v3235
  %v3264 = vpack.c.b16 %v3238, %v3236
  %v3265 = vpack.c.b16 %v3241, %v3239
  %v3266 = vpack.c.b16 %v3242, %v3240
  %v3267 = vpack.c.b16 %v3245, %v3243
  %v3268 = vpack.c.b16 %v3246, %v3244
  %v3269 = vpack.c.b16 %v3249, %v3247
  %v3270 = vpack.c.b16 %v3250, %v3248
  %v3292 = vsel %vm3138, %v3188, 0
  %3294 = vmatprep.subr.bf16.mxu0 %v3252
  %3295 = vmatpush1.bf16.msra.mxu0 %v3251
  %3296 = vmatprep.subr.bf16.mxu0 %v3254
  %3297 = vmatpush1.bf16.msra.mxu0 %v3253
  %3298 = vmatprep.subr.bf16.mxu0 %v3256
  %3299 = vmatpush1.bf16.msra.mxu0 %v3255
  %3300 = vmatprep.subr.bf16.mxu0 %v3258
  %3301 = vmatpush1.bf16.msra.mxu0 %v3257
  %3302 = vmatprep.subr.bf16.mxu0 %v3260
  %3303 = vmatpush1.bf16.msra.mxu0 %v3259
  %3304 = vmatprep.subr.bf16.mxu0 %v3262
  %3305 = vmatpush1.bf16.msra.mxu0 %v3261
  %3306 = vmatprep.subr.bf16.mxu0 %v3264
  %3307 = vmatpush1.bf16.msra.mxu0 %v3263
  %3308 = vmatprep.subr.bf16.mxu0 %v3266
  %3309 = vmatpush1.bf16.msra.mxu0 %v3265
  %3310 = vmatprep.subr.bf16.mxu0 %v3268
  %3311 = vmatpush1.bf16.msra.mxu0 %v3267
  %3312 = vmatprep.subr.bf16.mxu0 %v3270
  %3313 = vmatpush1.bf16.msra.mxu0 %v3269
  %3314 = vmatprep.subr.bf16.mxu0 0
  %3315 = vmatpush1.bf16.msra.mxu0 0
  %3316 = vmatprep.subr.bf16.mxu0 0
  %3317 = vmatpush1.bf16.msra.mxu0 0
  %3318 = vmatprep.subr.bf16.mxu0 0
  %3319 = vmatpush1.bf16.msra.mxu0 0
  %3320 = vmatprep.subr.bf16.mxu0 0
  %3321 = vmatpush1.bf16.msra.mxu0 0
  %3322 = vmatprep.subr.bf16.mxu0 0
  %3323 = vmatpush1.bf16.msra.mxu0 0
  %3324 = vmatprep.subr.bf16.mxu0 0
  %3325 = vmatpush1.bf16.msra.mxu0 0
  %3326 = vmatprep.mubr.bf16.mxu0 %v3292
  %3327 = vmatmul.mubr.bf16.gmra.mrb[0].mxu0 %v3189
  %v3328 = vpop.f32.mrb[0].mxu0
  %v3329 = vadd.f32 %v3177, %v3328
  %v3330 = vpop.f32.mrb[0].mxu0
  %v3331 = vadd.f32 %v3179, %v3330
  %v3332 = vpop.f32.mrb[0].mxu0
  %v3333 = vadd.f32 %v3181, %v3332
  %v3334 = vpop.f32.mrb[0].mxu0
  %v3335 = vadd.f32 %v3183, %v3334
  %3336 = vdwg.mxu0
  %s3337 = scalar_lea.vmem %s7, 320
  %v3338 = vld [vmem:[%s3337] sm:$0xff]
  %v3339 = vld [vmem:[%s3337 + $0x8] sm:$0xff]
  %v3340 = vld [vmem:[%s3337 + $0x10] sm:$0xff]
  %v3341 = vld [vmem:[%s3337 + $0x18] sm:$0xff]
  %v3342 = vld [vmem:[%s3337 + $0x20] sm:$0xff]
  %v3343 = vld [vmem:[%s3337 + $0x28] sm:$0xff]
  %v3344 = vld [vmem:[%s3337 + $0x30] sm:$0xff]
  %v3345 = vld [vmem:[%s3337 + $0x38] sm:$0xff]
  %v3346 = vld [vmem:[%s3337 + $0x40] sm:$0xff]
  %v3347 = vld [vmem:[%s3337 + $0x48] sm:$0xff]
  %v3348 = vld [vmem:[%s3337 + $0x50] sm:$0xff]
  %v3349 = vld [vmem:[%s3337 + $0x58] sm:$0xff]
  %v3350 = vld [vmem:[%s3337 + $0x60] sm:$0xff]
  %v3351 = vld [vmem:[%s3337 + $0x68] sm:$0xff]
  %v3352 = vld [vmem:[%s3337 + $0x70] sm:$0xff]
  %v3353 = vld [vmem:[%s3337 + $0x78] sm:$0xff]
  %v3354 = vld [vmem:[%s3337 + $0x80] sm:$0xff]
  %v3355 = vld [vmem:[%s3337 + $0x88] sm:$0xff]
  %v3356 = vld [vmem:[%s3337 + $0x90] sm:$0xff]
  %v3357 = vld [vmem:[%s3337 + $0x98] sm:$0xff]
  %vm3358 = vcmask 1045504
  %v3359 = vrot.slane %v2975, 2
  %v3360 = vrot.slane %v2977, 2
  %v3361 = vsel %vm3358, %v3359, %v3360
  %v3362 = vrot.slane %v2976, 2
  %v3363 = vrot.slane %v2978, 2
  %v3364 = vsel %vm3358, %v3362, %v3363
  %3365 = vrot.lane.b32.xlu0 %v3361, 96
  %v3366 = vpop.permute.xlu0 %3365
  %3367 = vrot.lane.b32.xlu0 %v3364, 96
  %v3368 = vpop.permute.xlu0 %3367
  %v3369 = vsel %vm3035, %v3366, %v3368
  %v3391 = vunpack.c.l.b16 %v3338
  %v3392 = vunpack.c.h.b16 %v3338
  %v3393 = vunpack.c.l.b16 %v3339
  %v3394 = vunpack.c.h.b16 %v3339
  %v3395 = vunpack.c.l.b16 %v3340
  %v3396 = vunpack.c.h.b16 %v3340
  %v3397 = vunpack.c.l.b16 %v3341
  %v3398 = vunpack.c.h.b16 %v3341
  %v3399 = vunpack.c.l.b16 %v3342
  %v3400 = vunpack.c.h.b16 %v3342
  %v3401 = vunpack.c.l.b16 %v3343
  %v3402 = vunpack.c.h.b16 %v3343
  %v3403 = vunpack.c.l.b16 %v3344
  %v3404 = vunpack.c.h.b16 %v3344
  %v3405 = vunpack.c.l.b16 %v3345
  %v3406 = vunpack.c.h.b16 %v3345
  %v3407 = vunpack.c.l.b16 %v3346
  %v3408 = vunpack.c.h.b16 %v3346
  %v3409 = vunpack.c.l.b16 %v3347
  %v3410 = vunpack.c.h.b16 %v3347
  %v3411 = vunpack.c.l.b16 %v3348
  %v3412 = vunpack.c.h.b16 %v3348
  %v3413 = vunpack.c.l.b16 %v3349
  %v3414 = vunpack.c.h.b16 %v3349
  %v3415 = vunpack.c.l.b16 %v3350
  %v3416 = vunpack.c.h.b16 %v3350
  %v3417 = vunpack.c.l.b16 %v3351
  %v3418 = vunpack.c.h.b16 %v3351
  %v3419 = vunpack.c.l.b16 %v3352
  %v3420 = vunpack.c.h.b16 %v3352
  %v3421 = vunpack.c.l.b16 %v3353
  %v3422 = vunpack.c.h.b16 %v3353
  %v3423 = vunpack.c.l.b16 %v3354
  %v3424 = vunpack.c.h.b16 %v3354
  %v3425 = vunpack.c.l.b16 %v3355
  %v3426 = vunpack.c.h.b16 %v3355
  %v3427 = vunpack.c.l.b16 %v3356
  %v3428 = vunpack.c.h.b16 %v3356
  %v3429 = vunpack.c.l.b16 %v3357
  %v3430 = vunpack.c.h.b16 %v3357
  %v3431 = vpack.c.b16 %v3393, %v3391
  %v3432 = vpack.c.b16 %v3394, %v3392
  %v3433 = vpack.c.b16 %v3397, %v3395
  %v3434 = vpack.c.b16 %v3398, %v3396
  %v3435 = vpack.c.b16 %v3401, %v3399
  %v3436 = vpack.c.b16 %v3402, %v3400
  %v3437 = vpack.c.b16 %v3405, %v3403
  %v3438 = vpack.c.b16 %v3406, %v3404
  %v3439 = vpack.c.b16 %v3409, %v3407
  %v3440 = vpack.c.b16 %v3410, %v3408
  %v3441 = vpack.c.b16 %v3413, %v3411
  %v3442 = vpack.c.b16 %v3414, %v3412
  %v3443 = vpack.c.b16 %v3417, %v3415
  %v3444 = vpack.c.b16 %v3418, %v3416
  %v3445 = vpack.c.b16 %v3421, %v3419
  %v3446 = vpack.c.b16 %v3422, %v3420
  %v3447 = vpack.c.b16 %v3425, %v3423
  %v3448 = vpack.c.b16 %v3426, %v3424
  %v3449 = vpack.c.b16 %v3429, %v3427
  %v3450 = vpack.c.b16 %v3430, %v3428
  %v3472 = vsel %vm3138, %v3368, 0
  %3474 = vmatprep.subr.bf16.mxu0 %v3432
  %3475 = vmatpush1.bf16.msra.mxu0 %v3431
  %3476 = vmatprep.subr.bf16.mxu0 %v3434
  %3477 = vmatpush1.bf16.msra.mxu0 %v3433
  %3478 = vmatprep.subr.bf16.mxu0 %v3436
  %3479 = vmatpush1.bf16.msra.mxu0 %v3435
  %3480 = vmatprep.subr.bf16.mxu0 %v3438
  %3481 = vmatpush1.bf16.msra.mxu0 %v3437
  %3482 = vmatprep.subr.bf16.mxu0 %v3440
  %3483 = vmatpush1.bf16.msra.mxu0 %v3439
  %3484 = vmatprep.subr.bf16.mxu0 %v3442
  %3485 = vmatpush1.bf16.msra.mxu0 %v3441
  %3486 = vmatprep.subr.bf16.mxu0 %v3444
  %3487 = vmatpush1.bf16.msra.mxu0 %v3443
  %3488 = vmatprep.subr.bf16.mxu0 %v3446
  %3489 = vmatpush1.bf16.msra.mxu0 %v3445
  %3490 = vmatprep.subr.bf16.mxu0 %v3448
  %3491 = vmatpush1.bf16.msra.mxu0 %v3447
  %3492 = vmatprep.subr.bf16.mxu0 %v3450
  %3493 = vmatpush1.bf16.msra.mxu0 %v3449
  %3494 = vmatprep.subr.bf16.mxu0 0
  %3495 = vmatpush1.bf16.msra.mxu0 0
  %3496 = vmatprep.subr.bf16.mxu0 0
  %3497 = vmatpush1.bf16.msra.mxu0 0
  %3498 = vmatprep.subr.bf16.mxu0 0
  %3499 = vmatpush1.bf16.msra.mxu0 0
  %3500 = vmatprep.subr.bf16.mxu0 0
  %3501 = vmatpush1.bf16.msra.mxu0 0
  %3502 = vmatprep.subr.bf16.mxu0 0
  %3503 = vmatpush1.bf16.msra.mxu0 0
  %3504 = vmatprep.subr.bf16.mxu0 0
  %3505 = vmatpush1.bf16.msra.mxu0 0
  %3506 = vmatprep.mubr.bf16.mxu0 %v3472
  %3507 = vmatmul.mubr.bf16.gmra.mrb[0].mxu0 %v3369
  %v3508 = vpop.f32.mrb[0].mxu0
  %v3509 = vadd.f32 0.0, %v3508
  %v3510 = vpop.f32.mrb[0].mxu0
  %v3511 = vadd.f32 0.0, %v3510
  %v3512 = vpop.f32.mrb[0].mxu0
  %v3513 = vadd.f32 0.0, %v3512
  %v3514 = vpop.f32.mrb[0].mxu0
  %v3515 = vadd.f32 0.0, %v3514
  %3516 = vdwg.mxu0
  %v3517 = vadd.f32 %v3329, %v3509
  %v3518 = vadd.f32 %v3331, %v3511
  %v3519 = vadd.f32 %v3333, %v3513
  %v3520 = vadd.f32 %v3335, %v3515
  %v3521 = vld [vmem:[%s8] sm:$0x3]
  %v3523 = vlaneseq
  %v3524 = vshrl.u32 %v3523, 7
  %v3525 = vsub.s32 0, %v3524
  %v3526 = vrot.slane %v3521, %v3525
  %v3527 = vlaneseq
  %v3528 = vshrl.u32 %v3527, 7
  %v3529 = vsub.s32 1, %v3528
  %v3530 = vrot.slane %v3521, %v3529
  %v3533 = vadd.f32 %v3517, %v3526
  %v3534 = vadd.f32 %v3518, %v3530
  %v3535 = vadd.f32 %v3519, %v3526
  %v3536 = vadd.f32 %v3520, %v3530
  %v3537 = vmax.f32 %v3533, 0.0
  %v3538 = vmax.f32 %v3534, 0.0
  %v3539 = vmax.f32 %v3535, 0.0
  %v3540 = vmax.f32 %v3536, 0.0
  %v3543 = vrot.slane %v1951, 2
  %v3544 = vrot.slane %v1952, 2
  %v3549 = vrot.slane %v1951, 6
  %v3550 = vrot.slane %v1952, 6
  %v3551 = vrot.slane %v1956, 6
  %v3552 = vsel %vm2945, %v3549, %v3551
  %v3553 = vrot.slane %v1957, 6
  %v3554 = vsel %vm2945, %v3550, %v3553
  %v3561 = vrot.slane %v1956, 4
  %v3562 = vrot.slane %v1957, 4
  %v3565 = vrot.slane %v1956, 2
  %v3566 = vrot.slane %v1957, 2
  %v3569 = vsel %vm1325, %v3543, %v1951
  %v3570 = vsel %vm1325, %v3544, %v1952
  %v3571 = vsel %vm2945, %v3569, %v3549
  %v3572 = vsel %vm2945, %v3570, %v3550
  %v3573 = vsel %vm2945, %v3551, %v3561
  %v3574 = vsel %vm2945, %v3553, %v3562
  %v3575 = vsel %vm2972, %v3573, %v3565
  %v3576 = vsel %vm2972, %v3574, %v3566
  %v3577 = vpack.c.bf16 %v3552, %v3571
  %v3578 = vpack.c.bf16 %v3554, %v3572
  %v3579 = vpack.c.bf16 %v3575, %v3575
  %v3580 = vpack.c.bf16 %v3576, %v3576
  %v3585 = vrot.slane %v3577, 1
  %v3586 = vrot.slane %v3579, 1
  %v3587 = vsel %vm3024, %v3585, %v3586
  %v3588 = vrot.slane %v3578, 1
  %v3589 = vrot.slane %v3580, 1
  %v3590 = vsel %vm3024, %v3588, %v3589
  %3591 = vrot.lane.b32.xlu0 %v3587, 96
  %v3592 = vpop.permute.xlu0 %3591
  %3593 = vrot.lane.b32.xlu0 %v3590, 96
  %v3594 = vpop.permute.xlu0 %3593
  %v3595 = vsel %vm3035, %v3592, %v3594
  %v3598 = vsel %vm3138, %v3594, 0
  %3600 = vmatprep.subr.bf16.mxu0 %v3099
  %3601 = vmatpush1.bf16.msra.mxu0 %v3098
  %3602 = vmatprep.subr.bf16.mxu0 %v3101
  %3603 = vmatpush1.bf16.msra.mxu0 %v3100
  %3604 = vmatprep.subr.bf16.mxu0 %v3103
  %3605 = vmatpush1.bf16.msra.mxu0 %v3102
  %3606 = vmatprep.subr.bf16.mxu0 %v3105
  %3607 = vmatpush1.bf16.msra.mxu0 %v3104
  %3608 = vmatprep.subr.bf16.mxu0 %v3107
  %3609 = vmatpush1.bf16.msra.mxu0 %v3106
  %3610 = vmatprep.subr.bf16.mxu0 %v3109
  %3611 = vmatpush1.bf16.msra.mxu0 %v3108
  %3612 = vmatprep.subr.bf16.mxu0 %v3111
  %3613 = vmatpush1.bf16.msra.mxu0 %v3110
  %3614 = vmatprep.subr.bf16.mxu0 %v3113
  %3615 = vmatpush1.bf16.msra.mxu0 %v3112
  %3616 = vmatprep.subr.bf16.mxu0 %v3115
  %3617 = vmatpush1.bf16.msra.mxu0 %v3114
  %3618 = vmatprep.subr.bf16.mxu0 %v3117
  %3619 = vmatpush1.bf16.msra.mxu0 %v3116
  %3620 = vmatprep.subr.bf16.mxu0 0
  %3621 = vmatpush1.bf16.msra.mxu0 0
  %3622 = vmatprep.subr.bf16.mxu0 0
  %3623 = vmatpush1.bf16.msra.mxu0 0
  %3624 = vmatprep.subr.bf16.mxu0 0
  %3625 = vmatpush1.bf16.msra.mxu0 0
  %3626 = vmatprep.subr.bf16.mxu0 0
  %3627 = vmatpush1.bf16.msra.mxu0 0
  %3628 = vmatprep.subr.bf16.mxu0 0
  %3629 = vmatpush1.bf16.msra.mxu0 0
  %3630 = vmatprep.subr.bf16.mxu0 0
  %3631 = vmatpush1.bf16.msra.mxu0 0
  %3632 = vmatprep.mubr.bf16.mxu0 %v3598
  %3633 = vmatmul.mubr.bf16.gmra.mrb[0].mxu0 %v3595
  %v3634 = vpop.f32.mrb[0].mxu0
  %v3635 = vadd.f32 0.0, %v3634
  %v3636 = vpop.f32.mrb[0].mxu0
  %v3637 = vadd.f32 0.0, %v3636
  %v3638 = vpop.f32.mrb[0].mxu0
  %v3639 = vadd.f32 0.0, %v3638
  %v3640 = vpop.f32.mrb[0].mxu0
  %v3641 = vadd.f32 0.0, %v3640
  %3642 = vdwg.mxu0
  %3643 = vrot.lane.b32.xlu0 %v3577, 96
  %v3644 = vpop.permute.xlu0 %3643
  %3645 = vrot.lane.b32.xlu0 %v3578, 96
  %v3646 = vpop.permute.xlu0 %3645
  %v3647 = vsel %vm3035, %v3644, %v3646
  %v3650 = vsel %vm3138, %v3646, 0
  %3652 = vmatprep.subr.bf16.mxu0 %v3252
  %3653 = vmatpush1.bf16.msra.mxu0 %v3251
  %3654 = vmatprep.subr.bf16.mxu0 %v3254
  %3655 = vmatpush1.bf16.msra.mxu0 %v3253
  %3656 = vmatprep.subr.bf16.mxu0 %v3256
  %3657 = vmatpush1.bf16.msra.mxu0 %v3255
  %3658 = vmatprep.subr.bf16.mxu0 %v3258
  %3659 = vmatpush1.bf16.msra.mxu0 %v3257
  %3660 = vmatprep.subr.bf16.mxu0 %v3260
  %3661 = vmatpush1.bf16.msra.mxu0 %v3259
  %3662 = vmatprep.subr.bf16.mxu0 %v3262
  %3663 = vmatpush1.bf16.msra.mxu0 %v3261
  %3664 = vmatprep.subr.bf16.mxu0 %v3264
  %3665 = vmatpush1.bf16.msra.mxu0 %v3263
  %3666 = vmatprep.subr.bf16.mxu0 %v3266
  %3667 = vmatpush1.bf16.msra.mxu0 %v3265
  %3668 = vmatprep.subr.bf16.mxu0 %v3268
  %3669 = vmatpush1.bf16.msra.mxu0 %v3267
  %3670 = vmatprep.subr.bf16.mxu0 %v3270
  %3671 = vmatpush1.bf16.msra.mxu0 %v3269
  %3672 = vmatprep.subr.bf16.mxu0 0
  %3673 = vmatpush1.bf16.msra.mxu0 0
  %3674 = vmatprep.subr.bf16.mxu0 0
  %3675 = vmatpush1.bf16.msra.mxu0 0
  %3676 = vmatprep.subr.bf16.mxu0 0
  %3677 = vmatpush1.bf16.msra.mxu0 0
  %3678 = vmatprep.subr.bf16.mxu0 0
  %3679 = vmatpush1.bf16.msra.mxu0 0
  %3680 = vmatprep.subr.bf16.mxu0 0
  %3681 = vmatpush1.bf16.msra.mxu0 0
  %3682 = vmatprep.subr.bf16.mxu0 0
  %3683 = vmatpush1.bf16.msra.mxu0 0
  %3684 = vmatprep.mubr.bf16.mxu0 %v3650
  %3685 = vmatmul.mubr.bf16.gmra.mrb[0].mxu0 %v3647
  %v3686 = vpop.f32.mrb[0].mxu0
  %v3687 = vadd.f32 %v3635, %v3686
  %v3688 = vpop.f32.mrb[0].mxu0
  %v3689 = vadd.f32 %v3637, %v3688
  %v3690 = vpop.f32.mrb[0].mxu0
  %v3691 = vadd.f32 %v3639, %v3690
  %v3692 = vpop.f32.mrb[0].mxu0
  %v3693 = vadd.f32 %v3641, %v3692
  %3694 = vdwg.mxu0
  %v3695 = vrot.slane %v3577, 2
  %v3696 = vrot.slane %v3579, 2
  %v3697 = vsel %vm3358, %v3695, %v3696
  %v3698 = vrot.slane %v3578, 2
  %v3699 = vrot.slane %v3580, 2
  %v3700 = vsel %vm3358, %v3698, %v3699
  %3701 = vrot.lane.b32.xlu0 %v3697, 96
  %v3702 = vpop.permute.xlu0 %3701
  %3703 = vrot.lane.b32.xlu0 %v3700, 96
  %v3704 = vpop.permute.xlu0 %3703
  %v3705 = vsel %vm3035, %v3702, %v3704
  %v3708 = vsel %vm3138, %v3704, 0
  %3710 = vmatprep.subr.bf16.mxu0 %v3432
  %3711 = vmatpush1.bf16.msra.mxu0 %v3431
  %3712 = vmatprep.subr.bf16.mxu0 %v3434
  %3713 = vmatpush1.bf16.msra.mxu0 %v3433
  %3714 = vmatprep.subr.bf16.mxu0 %v3436
  %3715 = vmatpush1.bf16.msra.mxu0 %v3435
  %3716 = vmatprep.subr.bf16.mxu0 %v3438
  %3717 = vmatpush1.bf16.msra.mxu0 %v3437
  %3718 = vmatprep.subr.bf16.mxu0 %v3440
  %3719 = vmatpush1.bf16.msra.mxu0 %v3439
  %3720 = vmatprep.subr.bf16.mxu0 %v3442
  %3721 = vmatpush1.bf16.msra.mxu0 %v3441
  %3722 = vmatprep.subr.bf16.mxu0 %v3444
  %3723 = vmatpush1.bf16.msra.mxu0 %v3443
  %3724 = vmatprep.subr.bf16.mxu0 %v3446
  %3725 = vmatpush1.bf16.msra.mxu0 %v3445
  %3726 = vmatprep.subr.bf16.mxu0 %v3448
  %3727 = vmatpush1.bf16.msra.mxu0 %v3447
  %3728 = vmatprep.subr.bf16.mxu0 %v3450
  %3729 = vmatpush1.bf16.msra.mxu0 %v3449
  %3730 = vmatprep.subr.bf16.mxu0 0
  %3731 = vmatpush1.bf16.msra.mxu0 0
  %3732 = vmatprep.subr.bf16.mxu0 0
  %3733 = vmatpush1.bf16.msra.mxu0 0
  %3734 = vmatprep.subr.bf16.mxu0 0
  %3735 = vmatpush1.bf16.msra.mxu0 0
  %3736 = vmatprep.subr.bf16.mxu0 0
  %3737 = vmatpush1.bf16.msra.mxu0 0
  %3738 = vmatprep.subr.bf16.mxu0 0
  %3739 = vmatpush1.bf16.msra.mxu0 0
  %3740 = vmatprep.subr.bf16.mxu0 0
  %3741 = vmatpush1.bf16.msra.mxu0 0
  %3742 = vmatprep.mubr.bf16.mxu0 %v3708
  %3743 = vmatmul.mubr.bf16.gmra.mrb[0].mxu0 %v3705
  %v3744 = vpop.f32.mrb[0].mxu0
  %v3745 = vadd.f32 0.0, %v3744
  %v3746 = vpop.f32.mrb[0].mxu0
  %v3747 = vadd.f32 0.0, %v3746
  %v3748 = vpop.f32.mrb[0].mxu0
  %v3749 = vadd.f32 0.0, %v3748
  %v3750 = vpop.f32.mrb[0].mxu0
  %v3751 = vadd.f32 0.0, %v3750
  %3752 = vdwg.mxu0
  %v3753 = vadd.f32 %v3687, %v3745
  %v3754 = vadd.f32 %v3689, %v3747
  %v3755 = vadd.f32 %v3691, %v3749
  %v3756 = vadd.f32 %v3693, %v3751
  %v3757 = vadd.f32 %v3753, %v3526
  %v3758 = vadd.f32 %v3754, %v3530
  %v3759 = vadd.f32 %v3755, %v3526
  %v3760 = vadd.f32 %v3756, %v3530
  %v3761 = vmax.f32 %v3757, 0.0
  %v3762 = vmax.f32 %v3758, 0.0
  %v3763 = vmax.f32 %v3759, 0.0
  %v3764 = vmax.f32 %v3760, 0.0
  %v3765 = vld [vmem:[%s9] sm:$0x3]
  %v3766 = vld [vmem:[%s10] sm:$0x3]
  %v3767 = vld [vmem:[%s17] sm:$0xff]
  %v3768 = vld [vmem:[%s17 + $0x8] sm:$0xff]
  %v3769 = vld [vmem:[%s17 + $0x10] sm:$0xff]
  %v3770 = vld [vmem:[%s17 + $0x18] sm:$0xff]
  %v3771 = vld [vmem:[%s17 + $0x20] sm:$0xff]
  %v3772 = vld [vmem:[%s17 + $0x28] sm:$0xff]
  %v3773 = vld [vmem:[%s17 + $0x30] sm:$0xff]
  %v3774 = vld [vmem:[%s17 + $0x38] sm:$0xff]
  %v3775 = vld [vmem:[%s17 + $0x40] sm:$0xff]
  %v3776 = vld [vmem:[%s17 + $0x48] sm:$0xff]
  %v3777 = vld [vmem:[%s17 + $0x50] sm:$0xff]
  %v3778 = vld [vmem:[%s17 + $0x58] sm:$0xff]
  %v3779 = vld [vmem:[%s17 + $0x60] sm:$0xff]
  %v3780 = vld [vmem:[%s17 + $0x68] sm:$0xff]
  %v3781 = vld [vmem:[%s17 + $0x70] sm:$0xff]
  %v3782 = vld [vmem:[%s17 + $0x78] sm:$0xff]
  %v3783 = vld [vmem:[%s17 + $0x80] sm:$0xff]
  %v3784 = vld [vmem:[%s17 + $0x88] sm:$0xff]
  %v3785 = vld [vmem:[%s17 + $0x90] sm:$0xff]
  %v3786 = vld [vmem:[%s17 + $0x98] sm:$0xff]
  %v3787 = vld [vmem:[%s18] sm:$0xff]
  %v3788 = vadd.f32 %v3537, %v3539
  %v3789 = vadd.f32 %v3788, %v3761
  %v3790 = vadd.f32 %v3789, %v3763
  %v3791 = vrot.slane %v3790, 4
  %v3792 = vadd.f32 %v3790, %v3791
  %v3793 = vrot.slane %v3792, 2
  %v3794 = vadd.f32 %v3792, %v3793
  %v3795 = vrot.slane %v3794, 1
  %v3796 = vadd.f32 %v3794, %v3795
  %v3797 = vsel %vm3138, %v3538, 0.0
  %v3798 = vsel %vm3138, %v3540, 0.0
  %v3799 = vadd.f32 %v3797, %v3798
  %v3800 = vsel %vm3138, %v3762, 0.0
  %v3801 = vadd.f32 %v3799, %v3800
  %v3802 = vsel %vm3138, %v3764, 0.0
  %v3803 = vadd.f32 %v3801, %v3802
  %v3804 = vrot.slane %v3803, 4
  %v3805 = vadd.f32 %v3803, %v3804
  %v3806 = vrot.slane %v3805, 2
  %v3807 = vadd.f32 %v3805, %v3806
  %v3808 = vrot.slane %v3807, 1
  %v3809 = vadd.f32 %v3807, %v3808
  %v3810 = vmul.f32 %v3537, %v3537
  %v3811 = vmul.f32 %v3538, %v3538
  %v3812 = vmul.f32 %v3539, %v3539
  %v3813 = vmul.f32 %v3540, %v3540
  %v3814 = vmul.f32 %v3761, %v3761
  %v3815 = vmul.f32 %v3762, %v3762
  %v3816 = vmul.f32 %v3763, %v3763
  %v3817 = vmul.f32 %v3764, %v3764
  %v3818 = vadd.f32 %v3810, %v3812
  %v3819 = vadd.f32 %v3818, %v3814
  %v3820 = vadd.f32 %v3819, %v3816
  %v3821 = vrot.slane %v3820, 4
  %v3822 = vadd.f32 %v3820, %v3821
  %v3823 = vrot.slane %v3822, 2
  %v3824 = vadd.f32 %v3822, %v3823
  %v3825 = vrot.slane %v3824, 1
  %v3826 = vadd.f32 %v3824, %v3825
  %v3827 = vsel %vm3138, %v3811, 0.0
  %v3828 = vsel %vm3138, %v3813, 0.0
  %v3829 = vadd.f32 %v3827, %v3828
  %v3830 = vsel %vm3138, %v3815, 0.0
  %v3831 = vadd.f32 %v3829, %v3830
  %v3832 = vsel %vm3138, %v3817, 0.0
  %v3833 = vadd.f32 %v3831, %v3832
  %v3834 = vrot.slane %v3833, 4
  %v3835 = vadd.f32 %v3833, %v3834
  %v3836 = vrot.slane %v3835, 2
  %v3837 = vadd.f32 %v3835, %v3836
  %v3838 = vrot.slane %v3837, 1
  %v3839 = vadd.f32 %v3837, %v3838
  %v3840 = vsel %vm1325, %v3796, %v3826
  %v3841 = vsel %vm1325, %v3809, %v3839
  %v3843 = vsel %vm3138, %v3841, 0
  %3845 = vmatprep.subr.mxu0 0.0
  %3846 = vmatpush1.msra.mxu0 %v3767
  %3847 = vmatprep.subr.mxu0 0.0
  %3848 = vmatpush1.msra.mxu0 %v3768
  %3849 = vmatprep.subr.mxu0 0.0
  %3850 = vmatpush1.msra.mxu0 %v3769
  %3851 = vmatprep.subr.mxu0 0.0
  %3852 = vmatpush1.msra.mxu0 %v3770
  %3853 = vmatprep.subr.mxu0 0.0
  %3854 = vmatpush1.msra.mxu0 %v3771
  %3855 = vmatprep.subr.mxu0 0.0
  %3856 = vmatpush1.msra.mxu0 %v3772
  %3857 = vmatprep.subr.mxu0 0.0
  %3858 = vmatpush1.msra.mxu0 %v3773
  %3859 = vmatprep.subr.mxu0 0.0
  %3860 = vmatpush1.msra.mxu0 %v3774
  %3861 = vmatprep.subr.mxu0 0.0
  %3862 = vmatpush1.msra.mxu0 %v3775
  %3863 = vmatprep.subr.mxu0 0.0
  %3864 = vmatpush1.msra.mxu0 %v3776
  %3865 = vmatprep.subr.mxu0 0.0
  %3866 = vmatpush1.msra.mxu0 %v3777
  %3867 = vmatprep.subr.mxu0 0.0
  %3868 = vmatpush1.msra.mxu0 %v3778
  %3869 = vmatprep.subr.mxu0 0.0
  %3870 = vmatpush1.msra.mxu0 %v3779
  %3871 = vmatprep.subr.mxu0 0.0
  %3872 = vmatpush1.msra.mxu0 %v3780
  %3873 = vmatprep.subr.mxu0 0.0
  %3874 = vmatpush1.msra.mxu0 %v3781
  %3875 = vmatprep.subr.mxu0 0.0
  %3876 = vmatpush1.msra.mxu0 %v3782
  %3877 = vmatprep.subr.mxu0 0.0
  %3878 = vmatpush1.msra.mxu0 %v3783
  %3879 = vmatprep.subr.mxu0 0.0
  %3880 = vmatpush1.msra.mxu0 %v3784
  %3881 = vmatprep.subr.mxu0 0.0
  %3882 = vmatpush1.msra.mxu0 %v3785
  %3883 = vmatprep.subr.mxu0 0.0
  %3884 = vmatpush1.msra.mxu0 %v3786
  %3885 = vmatprep.subr.mxu0 0.0
  %3886 = vmatpush1.msra.mxu0 0.0
  %3887 = vmatprep.subr.mxu0 0.0
  %3888 = vmatpush1.msra.mxu0 0.0
  %3889 = vmatprep.subr.mxu0 0.0
  %3890 = vmatpush1.msra.mxu0 0.0
  %3891 = vmatprep.subr.mxu0 0.0
  %3892 = vmatpush1.msra.mxu0 0.0
  %3893 = vmatprep.subr.mxu0 0.0
  %3894 = vmatpush1.msra.mxu0 0.0
  %3895 = vmatprep.subr.mxu0 0.0
  %3896 = vmatpush1.msra.mxu0 0.0
  %3897 = vmatprep.subr.mxu0 0.0
  %3898 = vmatpush1.msra.mxu0 0.0
  %3899 = vmatprep.subr.mxu0 0.0
  %3900 = vmatpush1.msra.mxu0 0.0
  %3901 = vmatprep.subr.mxu0 0.0
  %3902 = vmatpush1.msra.mxu0 0.0
  %3903 = vmatprep.subr.mxu0 0.0
  %3904 = vmatpush1.msra.mxu0 0.0
  %3905 = vmatprep.subr.mxu0 0.0
  %3906 = vmatpush1.msra.mxu0 0.0
  %3907 = vmatprep.subr.mxu0 0.0
  %3908 = vmatpush1.msra.mxu0 0.0
  %3909 = vmatprep.mubr.f32.mxu0 %v3843
  %3910 = vmatmul.mubr.f32.gmra.mrb[0].mxu0 %v3840
  %v3911 = vpop.f32.mrb[0].mxu0
  %v3912 = vadd.f32 0.0, %v3911
  %v3913 = vpop.f32.mrb[0].mxu0
  %3914 = vdwg.mxu0
  %v3916 = vcombine.high %v3787, %v3787
  %vm3917 = vcmask 31744
  %v3919 = vsel %vm3917, %v3912, 0
  %vm3921 = vcmask 1043456
  %v3922 = vsel %vm3921, %v3787, 0
  %v3924 = vsel %vm3921, %v3916, 0
  %3926 = vmatprep.subr.mxu0 %v3924
  %3927 = vmatpush1.msra.mxu0 %v3922
  %3928 = vmatprep.subr.mxu0 0.0
  %3929 = vmatpush1.msra.mxu0 0.0
  %3930 = vmatprep.subr.mxu0 0.0
  %3931 = vmatpush1.msra.mxu0 0.0
  %3932 = vmatprep.subr.mxu0 0.0
  %3933 = vmatpush1.msra.mxu0 0.0
  %3934 = vmatprep.subr.mxu0 0.0
  %3935 = vmatpush1.msra.mxu0 0.0
  %3936 = vmatprep.subr.mxu0 0.0
  %3937 = vmatpush1.msra.mxu0 0.0
  %3938 = vmatprep.subr.mxu0 0.0
  %3939 = vmatpush1.msra.mxu0 0.0
  %3940 = vmatprep.subr.mxu0 0.0
  %3941 = vmatpush1.msra.mxu0 0.0
  %3942 = vmatprep.subr.mxu0 0.0
  %3943 = vmatpush1.msra.mxu0 0.0
  %3944 = vmatprep.subr.mxu0 0.0
  %3945 = vmatpush1.msra.mxu0 0.0
  %3946 = vmatprep.subr.mxu0 0.0
  %3947 = vmatpush1.msra.mxu0 0.0
  %3948 = vmatprep.subr.mxu0 0.0
  %3949 = vmatpush1.msra.mxu0 0.0
  %3950 = vmatprep.subr.mxu0 0.0
  %3951 = vmatpush1.msra.mxu0 0.0
  %3952 = vmatprep.subr.mxu0 0.0
  %3953 = vmatpush1.msra.mxu0 0.0
  %3954 = vmatprep.subr.mxu0 0.0
  %3955 = vmatpush1.msra.mxu0 0.0
  %3956 = vmatprep.subr.mxu0 0.0
  %3957 = vmatpush1.msra.mxu0 0.0
  %3958 = vmatprep.subr.mxu0 0.0
  %3959 = vmatpush1.msra.mxu0 0.0
  %3960 = vmatprep.subr.mxu0 0.0
  %3961 = vmatpush1.msra.mxu0 0.0
  %3962 = vmatprep.subr.mxu0 0.0
  %3963 = vmatpush1.msra.mxu0 0.0
  %3964 = vmatprep.subr.mxu0 0.0
  %3965 = vmatpush1.msra.mxu0 0.0
  %3966 = vmatprep.subr.mxu0 0.0
  %3967 = vmatpush1.msra.mxu0 0.0
  %3968 = vmatprep.subr.mxu0 0.0
  %3969 = vmatpush1.msra.mxu0 0.0
  %3970 = vmatprep.subr.mxu0 0.0
  %3971 = vmatpush1.msra.mxu0 0.0
  %3972 = vmatprep.subr.mxu0 0.0
  %3973 = vmatpush1.msra.mxu0 0.0
  %3974 = vmatprep.subr.mxu0 0.0
  %3975 = vmatpush1.msra.mxu0 0.0
  %3976 = vmatprep.subr.mxu0 0.0
  %3977 = vmatpush1.msra.mxu0 0.0
  %3978 = vmatprep.subr.mxu0 0.0
  %3979 = vmatpush1.msra.mxu0 0.0
  %3980 = vmatprep.subr.mxu0 0.0
  %3981 = vmatpush1.msra.mxu0 0.0
  %3982 = vmatprep.subr.mxu0 0.0
  %3983 = vmatpush1.msra.mxu0 0.0
  %3984 = vmatprep.subr.mxu0 0.0
  %3985 = vmatpush1.msra.mxu0 0.0
  %3986 = vmatprep.subr.mxu0 0.0
  %3987 = vmatpush1.msra.mxu0 0.0
  %3988 = vmatprep.subr.mxu0 0.0
  %3989 = vmatpush1.msra.mxu0 0.0
  %3990 = vmatprep.mubr.f32.mxu0 0.0
  %3991 = vmatmul.mubr.f32.gmra.mrb[0].mxu0 %v3919
  %v3992 = vpop.f32.mrb[0].mxu0
  %v3993 = vadd.f32 0.0, %v3992
  %v3994 = vpop.f32.mrb[0].mxu0
  %v3995 = vadd.f32 0.0, %v3994
  %3996 = vdwg.mxu0
  %v3997 = vmul.f32 %v3993, %v1757
  %v3998 = vmul.f32 %v3995, %v1757
  %v3999 = vmul.f32 %v3997, %v3997
  %v4000 = vmul.f32 %v3998, %v3998
  %v4003 = vrot.slane %v3999, 7
  %v4004 = vrot.slane %v4000, 7
  %v4007 = vsub.f32 %v3997, %v4003
  %v4008 = vsub.f32 %v3998, %v4004
  %v4009 = vmax.f32 %v4007, 0.0
  %v4010 = vmax.f32 %v4008, 0.0
  %v4011 = vadd.f32 %v4009, 1e-05
  %v4012 = vadd.f32 %v4010, 1e-05
  %v4013 = vrsqrt.pop %v4011
  %v4014 = vrsqrt.pop %v4012
  %v4015 = vlaneseq
  %v4016 = vshrl.u32 %v4015, 7
  %v4017 = vsub.s32 0, %v4016
  %v4018 = vrot.slane %v3997, %v4017
  %v4019 = vlaneseq
  %v4020 = vshrl.u32 %v4019, 7
  %v4021 = vsub.s32 0, %v4020
  %v4022 = vrot.slane %v3998, %v4021
  %v4023 = vsub.f32 %v3537, %v4018
  %v4024 = vsub.f32 %v3538, %v4022
  %v4025 = vsub.f32 %v3539, %v4018
  %v4026 = vsub.f32 %v3540, %v4022
  %v4027 = vsub.f32 %v3761, %v4018
  %v4028 = vsub.f32 %v3762, %v4022
  %v4029 = vsub.f32 %v3763, %v4018
  %v4030 = vsub.f32 %v3764, %v4022
  %v4032 = vlaneseq
  %v4033 = vshrl.u32 %v4032, 7
  %v4034 = vsub.s32 0, %v4033
  %v4035 = vrot.slane %v3765, %v4034
  %v4036 = vlaneseq
  %v4037 = vshrl.u32 %v4036, 7
  %v4038 = vsub.s32 1, %v4037
  %v4039 = vrot.slane %v3765, %v4038
  %v4042 = vmul.f32 %v4013, %v4035
  %v4043 = vmul.f32 %v4014, %v4039
  %v4044 = vlaneseq
  %v4045 = vshrl.u32 %v4044, 7
  %v4046 = vsub.s32 1, %v4045
  %v4047 = vrot.slane %v4042, %v4046
  %v4048 = vlaneseq
  %v4049 = vshrl.u32 %v4048, 7
  %v4050 = vsub.s32 1, %v4049
  %v4051 = vrot.slane %v4043, %v4050
  %v4052 = vmul.f32 %v4023, %v4047
  %v4053 = vmul.f32 %v4024, %v4051
  %v4054 = vmul.f32 %v4025, %v4047
  %v4055 = vmul.f32 %v4026, %v4051
  %v4056 = vmul.f32 %v4027, %v4047
  %v4057 = vmul.f32 %v4028, %v4051
  %v4058 = vmul.f32 %v4029, %v4047
  %v4059 = vmul.f32 %v4030, %v4051
  %v4061 = vlaneseq
  %v4062 = vshrl.u32 %v4061, 7
  %v4063 = vsub.s32 0, %v4062
  %v4064 = vrot.slane %v3766, %v4063
  %v4065 = vlaneseq
  %v4066 = vshrl.u32 %v4065, 7
  %v4067 = vsub.s32 1, %v4066
  %v4068 = vrot.slane %v3766, %v4067
  %v4071 = vadd.f32 %v4052, %v4064
  %v4072 = vadd.f32 %v4053, %v4068
  %v4073 = vadd.f32 %v4054, %v4064
  %v4074 = vadd.f32 %v4055, %v4068
  %v4075 = vadd.f32 %v4056, %v4064
  %v4076 = vadd.f32 %v4057, %v4068
  %v4077 = vadd.f32 %v4058, %v4064
  %v4078 = vadd.f32 %v4059, %v4068
  %4087 = vrot.lane.b32.xlu0 %v4071, 64
  %v4088 = vpop.permute.xlu0 %4087
  %4089 = vrot.lane.b32.xlu0 %v4072, 64
  %v4090 = vpop.permute.xlu0 %4089
  %4091 = vrot.lane.b32.xlu0 %v4073, 64
  %v4092 = vpop.permute.xlu0 %4091
  %4093 = vrot.lane.b32.xlu0 %v4074, 64
  %v4094 = vpop.permute.xlu0 %4093
  %4095 = vrot.lane.b32.xlu0 %v4075, 64
  %v4096 = vpop.permute.xlu0 %4095
  %4097 = vrot.lane.b32.xlu0 %v4076, 64
  %v4098 = vpop.permute.xlu0 %4097
  %4099 = vrot.lane.b32.xlu0 %v4077, 64
  %v4100 = vpop.permute.xlu0 %4099
  %4101 = vrot.lane.b32.xlu0 %v4078, 64
  %v4102 = vpop.permute.xlu0 %4101
  %v4103 = vsel %vm786, %v4088, %v4090
  %v4104 = vsel %vm786, %v4092, %v4094
  %v4105 = vsel %vm786, %v4096, %v4098
  %v4106 = vsel %vm786, %v4100, %v4102
  %v4115 = vadd.f32 %v1942, %v4088
  %v4116 = vadd.f32 %v1943, %v4103
  %v4117 = vadd.f32 %v1947, %v4092
  %v4118 = vadd.f32 %v1948, %v4104
  %v4119 = vadd.f32 %v1952, %v4096
  %v4120 = vadd.f32 %v1953, %v4105
  %v4121 = vadd.f32 %v1957, %v4100
  %v4122 = vadd.f32 %v1958, %v4106
  %v4125 = vrot.slane %v4115, 2
  %v4126 = vrot.slane %v4116, 2
  %v4131 = vrot.slane %v4115, 6
  %v4132 = vrot.slane %v4116, 6
  %v4133 = vrot.slane %v4117, 6
  %v4134 = vsel %vm2945, %v4131, %v4133
  %v4135 = vrot.slane %v4118, 6
  %v4136 = vsel %vm2945, %v4132, %v4135
  %v4143 = vrot.slane %v4117, 4
  %v4144 = vrot.slane %v4118, 4
  %v4147 = vrot.slane %v4117, 2
  %v4148 = vrot.slane %v4118, 2
  %v4151 = vsel %vm1325, %v4125, %v4115
  %v4152 = vsel %vm1325, %v4126, %v4116
  %v4153 = vsel %vm2945, %v4151, %v4131
  %v4154 = vsel %vm2945, %v4152, %v4132
  %v4155 = vsel %vm2945, %v4133, %v4143
  %v4156 = vsel %vm2945, %v4135, %v4144
  %v4157 = vsel %vm2972, %v4155, %v4147
  %v4158 = vsel %vm2972, %v4156, %v4148
  %v4159 = vpack.c.bf16 %v4134, %v4153
  %v4160 = vpack.c.bf16 %v4136, %v4154
  %v4161 = vpack.c.bf16 %v4157, %v4157
  %v4162 = vpack.c.bf16 %v4158, %v4158
  %s4163 = scalar_lea.vmem %s7, 480
  %v4164 = vld [vmem:[%s4163] sm:$0xff]
  %v4165 = vld [vmem:[%s4163 + $0x8] sm:$0xff]
  %v4166 = vld [vmem:[%s4163 + $0x10] sm:$0xff]
  %v4167 = vld [vmem:[%s4163 + $0x18] sm:$0xff]
  %v4168 = vld [vmem:[%s4163 + $0x20] sm:$0xff]
  %v4169 = vld [vmem:[%s4163 + $0x28] sm:$0xff]
  %v4170 = vld [vmem:[%s4163 + $0x30] sm:$0xff]
  %v4171 = vld [vmem:[%s4163 + $0x38] sm:$0xff]
  %v4172 = vld [vmem:[%s4163 + $0x40] sm:$0xff]
  %v4173 = vld [vmem:[%s4163 + $0x48] sm:$0xff]
  %v4174 = vld [vmem:[%s4163 + $0x50] sm:$0xff]
  %v4175 = vld [vmem:[%s4163 + $0x58] sm:$0xff]
  %v4176 = vld [vmem:[%s4163 + $0x60] sm:$0xff]
  %v4177 = vld [vmem:[%s4163 + $0x68] sm:$0xff]
  %v4178 = vld [vmem:[%s4163 + $0x70] sm:$0xff]
  %v4179 = vld [vmem:[%s4163 + $0x78] sm:$0xff]
  %v4180 = vld [vmem:[%s4163 + $0x80] sm:$0xff]
  %v4181 = vld [vmem:[%s4163 + $0x88] sm:$0xff]
  %v4182 = vld [vmem:[%s4163 + $0x90] sm:$0xff]
  %v4183 = vld [vmem:[%s4163 + $0x98] sm:$0xff]
  %s4184 = scalar_lea.vmem %s7, 640
  %v4185 = vld [vmem:[%s4184] sm:$0xff]
  %v4186 = vld [vmem:[%s4184 + $0x8] sm:$0xff]
  %v4187 = vld [vmem:[%s4184 + $0x10] sm:$0xff]
  %v4188 = vld [vmem:[%s4184 + $0x18] sm:$0xff]
  %v4189 = vld [vmem:[%s4184 + $0x20] sm:$0xff]
  %v4190 = vld [vmem:[%s4184 + $0x28] sm:$0xff]
  %v4191 = vld [vmem:[%s4184 + $0x30] sm:$0xff]
  %v4192 = vld [vmem:[%s4184 + $0x38] sm:$0xff]
  %v4193 = vld [vmem:[%s4184 + $0x40] sm:$0xff]
  %v4194 = vld [vmem:[%s4184 + $0x48] sm:$0xff]
  %v4195 = vld [vmem:[%s4184 + $0x50] sm:$0xff]
  %v4196 = vld [vmem:[%s4184 + $0x58] sm:$0xff]
  %v4197 = vld [vmem:[%s4184 + $0x60] sm:$0xff]
  %v4198 = vld [vmem:[%s4184 + $0x68] sm:$0xff]
  %v4199 = vld [vmem:[%s4184 + $0x70] sm:$0xff]
  %v4200 = vld [vmem:[%s4184 + $0x78] sm:$0xff]
  %v4201 = vld [vmem:[%s4184 + $0x80] sm:$0xff]
  %v4202 = vld [vmem:[%s4184 + $0x88] sm:$0xff]
  %v4203 = vld [vmem:[%s4184 + $0x90] sm:$0xff]
  %v4204 = vld [vmem:[%s4184 + $0x98] sm:$0xff]
  %v4209 = vrot.slane %v4159, 1
  %v4210 = vrot.slane %v4161, 1
  %v4211 = vsel %vm3024, %v4209, %v4210
  %v4212 = vrot.slane %v4160, 1
  %v4213 = vrot.slane %v4162, 1
  %v4214 = vsel %vm3024, %v4212, %v4213
  %4215 = vrot.lane.b32.xlu0 %v4211, 64
  %v4216 = vpop.permute.xlu0 %4215
  %4217 = vrot.lane.b32.xlu0 %v4214, 64
  %v4218 = vpop.permute.xlu0 %4217
  %vm4219 = vcmask 523264
  %v4220 = vsel %vm4219, %v4216, %v4218
  %v4242 = vunpack.c.l.b16 %v4185
  %v4243 = vunpack.c.h.b16 %v4185
  %v4244 = vunpack.c.l.b16 %v4186
  %v4245 = vunpack.c.h.b16 %v4186
  %v4246 = vunpack.c.l.b16 %v4187
  %v4247 = vunpack.c.h.b16 %v4187
  %v4248 = vunpack.c.l.b16 %v4188
  %v4249 = vunpack.c.h.b16 %v4188
  %v4250 = vunpack.c.l.b16 %v4189
  %v4251 = vunpack.c.h.b16 %v4189
  %v4252 = vunpack.c.l.b16 %v4190
  %v4253 = vunpack.c.h.b16 %v4190
  %v4254 = vunpack.c.l.b16 %v4191
  %v4255 = vunpack.c.h.b16 %v4191
  %v4256 = vunpack.c.l.b16 %v4192
  %v4257 = vunpack.c.h.b16 %v4192
  %v4258 = vunpack.c.l.b16 %v4193
  %v4259 = vunpack.c.h.b16 %v4193
  %v4260 = vunpack.c.l.b16 %v4194
  %v4261 = vunpack.c.h.b16 %v4194
  %v4262 = vunpack.c.l.b16 %v4195
  %v4263 = vunpack.c.h.b16 %v4195
  %v4264 = vunpack.c.l.b16 %v4196
  %v4265 = vunpack.c.h.b16 %v4196
  %v4266 = vunpack.c.l.b16 %v4197
  %v4267 = vunpack.c.h.b16 %v4197
  %v4268 = vunpack.c.l.b16 %v4198
  %v4269 = vunpack.c.h.b16 %v4198
  %v4270 = vunpack.c.l.b16 %v4199
  %v4271 = vunpack.c.h.b16 %v4199
  %v4272 = vunpack.c.l.b16 %v4200
  %v4273 = vunpack.c.h.b16 %v4200
  %v4274 = vunpack.c.l.b16 %v4201
  %v4275 = vunpack.c.h.b16 %v4201
  %v4276 = vunpack.c.l.b16 %v4202
  %v4277 = vunpack.c.h.b16 %v4202
  %v4278 = vunpack.c.l.b16 %v4203
  %v4279 = vunpack.c.h.b16 %v4203
  %v4280 = vunpack.c.l.b16 %v4204
  %v4281 = vunpack.c.h.b16 %v4204
  %v4282 = vpack.c.b16 %v4244, %v4242
  %v4283 = vpack.c.b16 %v4245, %v4243
  %v4284 = vpack.c.b16 %v4248, %v4246
  %v4285 = vpack.c.b16 %v4249, %v4247
  %v4286 = vpack.c.b16 %v4252, %v4250
  %v4287 = vpack.c.b16 %v4253, %v4251
  %v4288 = vpack.c.b16 %v4256, %v4254
  %v4289 = vpack.c.b16 %v4257, %v4255
  %v4290 = vpack.c.b16 %v4260, %v4258
  %v4291 = vpack.c.b16 %v4261, %v4259
  %v4292 = vpack.c.b16 %v4264, %v4262
  %v4293 = vpack.c.b16 %v4265, %v4263
  %v4294 = vpack.c.b16 %v4268, %v4266
  %v4295 = vpack.c.b16 %v4269, %v4267
  %v4296 = vpack.c.b16 %v4272, %v4270
  %v4297 = vpack.c.b16 %v4273, %v4271
  %v4298 = vpack.c.b16 %v4276, %v4274
  %v4299 = vpack.c.b16 %v4277, %v4275
  %v4300 = vpack.c.b16 %v4280, %v4278
  %v4301 = vpack.c.b16 %v4281, %v4279
  %v4323 = vsel %vm3138, %v4218, 0
  %4325 = vmatprep.subr.bf16.mxu0 %v4283
  %4326 = vmatpush1.bf16.msra.mxu0 %v4282
  %4327 = vmatprep.subr.bf16.mxu0 %v4285
  %4328 = vmatpush1.bf16.msra.mxu0 %v4284
  %4329 = vmatprep.subr.bf16.mxu0 %v4287
  %4330 = vmatpush1.bf16.msra.mxu0 %v4286
  %4331 = vmatprep.subr.bf16.mxu0 %v4289
  %4332 = vmatpush1.bf16.msra.mxu0 %v4288
  %4333 = vmatprep.subr.bf16.mxu0 %v4291
  %4334 = vmatpush1.bf16.msra.mxu0 %v4290
  %4335 = vmatprep.subr.bf16.mxu0 %v4293
  %4336 = vmatpush1.bf16.msra.mxu0 %v4292
  %4337 = vmatprep.subr.bf16.mxu0 %v4295
  %4338 = vmatpush1.bf16.msra.mxu0 %v4294
  %4339 = vmatprep.subr.bf16.mxu0 %v4297
  %4340 = vmatpush1.bf16.msra.mxu0 %v4296
  %4341 = vmatprep.subr.bf16.mxu0 %v4299
  %4342 = vmatpush1.bf16.msra.mxu0 %v4298
  %4343 = vmatprep.subr.bf16.mxu0 %v4301
  %4344 = vmatpush1.bf16.msra.mxu0 %v4300
  %4345 = vmatprep.subr.bf16.mxu0 0
  %4346 = vmatpush1.bf16.msra.mxu0 0
  %4347 = vmatprep.subr.bf16.mxu0 0
  %4348 = vmatpush1.bf16.msra.mxu0 0
  %4349 = vmatprep.subr.bf16.mxu0 0
  %4350 = vmatpush1.bf16.msra.mxu0 0
  %4351 = vmatprep.subr.bf16.mxu0 0
  %4352 = vmatpush1.bf16.msra.mxu0 0
  %4353 = vmatprep.subr.bf16.mxu0 0
  %4354 = vmatpush1.bf16.msra.mxu0 0
  %4355 = vmatprep.subr.bf16.mxu0 0
  %4356 = vmatpush1.bf16.msra.mxu0 0
  %4357 = vmatprep.mubr.bf16.mxu0 %v4323
  %4358 = vmatmul.mubr.bf16.gmra.mrb[0].mxu0 %v4220
  %v4359 = vpop.f32.mrb[0].mxu0
  %v4360 = vadd.f32 0.0, %v4359
  %v4361 = vpop.f32.mrb[0].mxu0
  %v4362 = vadd.f32 0.0, %v4361
  %v4363 = vpop.f32.mrb[0].mxu0
  %v4364 = vadd.f32 0.0, %v4363
  %v4365 = vpop.f32.mrb[0].mxu0
  %v4366 = vadd.f32 0.0, %v4365
  %4367 = vdwg.mxu0
  %4368 = vrot.lane.b32.xlu0 %v4159, 64
  %v4369 = vpop.permute.xlu0 %4368
  %4370 = vrot.lane.b32.xlu0 %v4160, 64
  %v4371 = vpop.permute.xlu0 %4370
  %v4372 = vsel %vm4219, %v4369, %v4371
  %v4394 = vunpack.c.l.b16 %v4164
  %v4395 = vunpack.c.h.b16 %v4164
  %v4396 = vunpack.c.l.b16 %v4165
  %v4397 = vunpack.c.h.b16 %v4165
  %v4398 = vunpack.c.l.b16 %v4166
  %v4399 = vunpack.c.h.b16 %v4166
  %v4400 = vunpack.c.l.b16 %v4167
  %v4401 = vunpack.c.h.b16 %v4167
  %v4402 = vunpack.c.l.b16 %v4168
  %v4403 = vunpack.c.h.b16 %v4168
  %v4404 = vunpack.c.l.b16 %v4169
  %v4405 = vunpack.c.h.b16 %v4169
  %v4406 = vunpack.c.l.b16 %v4170
  %v4407 = vunpack.c.h.b16 %v4170
  %v4408 = vunpack.c.l.b16 %v4171
  %v4409 = vunpack.c.h.b16 %v4171
  %v4410 = vunpack.c.l.b16 %v4172
  %v4411 = vunpack.c.h.b16 %v4172
  %v4412 = vunpack.c.l.b16 %v4173
  %v4413 = vunpack.c.h.b16 %v4173
  %v4414 = vunpack.c.l.b16 %v4174
  %v4415 = vunpack.c.h.b16 %v4174
  %v4416 = vunpack.c.l.b16 %v4175
  %v4417 = vunpack.c.h.b16 %v4175
  %v4418 = vunpack.c.l.b16 %v4176
  %v4419 = vunpack.c.h.b16 %v4176
  %v4420 = vunpack.c.l.b16 %v4177
  %v4421 = vunpack.c.h.b16 %v4177
  %v4422 = vunpack.c.l.b16 %v4178
  %v4423 = vunpack.c.h.b16 %v4178
  %v4424 = vunpack.c.l.b16 %v4179
  %v4425 = vunpack.c.h.b16 %v4179
  %v4426 = vunpack.c.l.b16 %v4180
  %v4427 = vunpack.c.h.b16 %v4180
  %v4428 = vunpack.c.l.b16 %v4181
  %v4429 = vunpack.c.h.b16 %v4181
  %v4430 = vunpack.c.l.b16 %v4182
  %v4431 = vunpack.c.h.b16 %v4182
  %v4432 = vunpack.c.l.b16 %v4183
  %v4433 = vunpack.c.h.b16 %v4183
  %v4434 = vpack.c.b16 %v4396, %v4394
  %v4435 = vpack.c.b16 %v4397, %v4395
  %v4436 = vpack.c.b16 %v4400, %v4398
  %v4437 = vpack.c.b16 %v4401, %v4399
  %v4438 = vpack.c.b16 %v4404, %v4402
  %v4439 = vpack.c.b16 %v4405, %v4403
  %v4440 = vpack.c.b16 %v4408, %v4406
  %v4441 = vpack.c.b16 %v4409, %v4407
  %v4442 = vpack.c.b16 %v4412, %v4410
  %v4443 = vpack.c.b16 %v4413, %v4411
  %v4444 = vpack.c.b16 %v4416, %v4414
  %v4445 = vpack.c.b16 %v4417, %v4415
  %v4446 = vpack.c.b16 %v4420, %v4418
  %v4447 = vpack.c.b16 %v4421, %v4419
  %v4448 = vpack.c.b16 %v4424, %v4422
  %v4449 = vpack.c.b16 %v4425, %v4423
  %v4450 = vpack.c.b16 %v4428, %v4426
  %v4451 = vpack.c.b16 %v4429, %v4427
  %v4452 = vpack.c.b16 %v4432, %v4430
  %v4453 = vpack.c.b16 %v4433, %v4431
  %v4475 = vsel %vm3138, %v4371, 0
  %4477 = vmatprep.subr.bf16.mxu0 %v4435
  %4478 = vmatpush1.bf16.msra.mxu0 %v4434
  %4479 = vmatprep.subr.bf16.mxu0 %v4437
  %4480 = vmatpush1.bf16.msra.mxu0 %v4436
  %4481 = vmatprep.subr.bf16.mxu0 %v4439
  %4482 = vmatpush1.bf16.msra.mxu0 %v4438
  %4483 = vmatprep.subr.bf16.mxu0 %v4441
  %4484 = vmatpush1.bf16.msra.mxu0 %v4440
  %4485 = vmatprep.subr.bf16.mxu0 %v4443
  %4486 = vmatpush1.bf16.msra.mxu0 %v4442
  %4487 = vmatprep.subr.bf16.mxu0 %v4445
  %4488 = vmatpush1.bf16.msra.mxu0 %v4444
  %4489 = vmatprep.subr.bf16.mxu0 %v4447
  %4490 = vmatpush1.bf16.msra.mxu0 %v4446
  %4491 = vmatprep.subr.bf16.mxu0 %v4449
  %4492 = vmatpush1.bf16.msra.mxu0 %v4448
  %4493 = vmatprep.subr.bf16.mxu0 %v4451
  %4494 = vmatpush1.bf16.msra.mxu0 %v4450
  %4495 = vmatprep.subr.bf16.mxu0 %v4453
  %4496 = vmatpush1.bf16.msra.mxu0 %v4452
  %4497 = vmatprep.subr.bf16.mxu0 0
  %4498 = vmatpush1.bf16.msra.mxu0 0
  %4499 = vmatprep.subr.bf16.mxu0 0
  %4500 = vmatpush1.bf16.msra.mxu0 0
  %4501 = vmatprep.subr.bf16.mxu0 0
  %4502 = vmatpush1.bf16.msra.mxu0 0
  %4503 = vmatprep.subr.bf16.mxu0 0
  %4504 = vmatpush1.bf16.msra.mxu0 0
  %4505 = vmatprep.subr.bf16.mxu0 0
  %4506 = vmatpush1.bf16.msra.mxu0 0
  %4507 = vmatprep.subr.bf16.mxu0 0
  %4508 = vmatpush1.bf16.msra.mxu0 0
  %4509 = vmatprep.mubr.bf16.mxu0 %v4475
  %4510 = vmatmul.mubr.bf16.gmra.mrb[0].mxu0 %v4372
  %v4511 = vpop.f32.mrb[0].mxu0
  %v4512 = vadd.f32 %v4360, %v4511
  %v4513 = vpop.f32.mrb[0].mxu0
  %v4514 = vadd.f32 %v4362, %v4513
  %v4515 = vpop.f32.mrb[0].mxu0
  %v4516 = vadd.f32 %v4364, %v4515
  %v4517 = vpop.f32.mrb[0].mxu0
  %v4518 = vadd.f32 %v4366, %v4517
  %4519 = vdwg.mxu0
  %s4520 = scalar_lea.vmem %s7, 800
  %v4521 = vld [vmem:[%s4520] sm:$0xff]
  %v4522 = vld [vmem:[%s4520 + $0x8] sm:$0xff]
  %v4523 = vld [vmem:[%s4520 + $0x10] sm:$0xff]
  %v4524 = vld [vmem:[%s4520 + $0x18] sm:$0xff]
  %v4525 = vld [vmem:[%s4520 + $0x20] sm:$0xff]
  %v4526 = vld [vmem:[%s4520 + $0x28] sm:$0xff]
  %v4527 = vld [vmem:[%s4520 + $0x30] sm:$0xff]
  %v4528 = vld [vmem:[%s4520 + $0x38] sm:$0xff]
  %v4529 = vld [vmem:[%s4520 + $0x40] sm:$0xff]
  %v4530 = vld [vmem:[%s4520 + $0x48] sm:$0xff]
  %v4531 = vld [vmem:[%s4520 + $0x50] sm:$0xff]
  %v4532 = vld [vmem:[%s4520 + $0x58] sm:$0xff]
  %v4533 = vld [vmem:[%s4520 + $0x60] sm:$0xff]
  %v4534 = vld [vmem:[%s4520 + $0x68] sm:$0xff]
  %v4535 = vld [vmem:[%s4520 + $0x70] sm:$0xff]
  %v4536 = vld [vmem:[%s4520 + $0x78] sm:$0xff]
  %v4537 = vld [vmem:[%s4520 + $0x80] sm:$0xff]
  %v4538 = vld [vmem:[%s4520 + $0x88] sm:$0xff]
  %v4539 = vld [vmem:[%s4520 + $0x90] sm:$0xff]
  %v4540 = vld [vmem:[%s4520 + $0x98] sm:$0xff]
  %v4541 = vrot.slane %v4159, 2
  %v4542 = vrot.slane %v4161, 2
  %v4543 = vsel %vm3358, %v4541, %v4542
  %v4544 = vrot.slane %v4160, 2
  %v4545 = vrot.slane %v4162, 2
  %v4546 = vsel %vm3358, %v4544, %v4545
  %4547 = vrot.lane.b32.xlu0 %v4543, 64
  %v4548 = vpop.permute.xlu0 %4547
  %4549 = vrot.lane.b32.xlu0 %v4546, 64
  %v4550 = vpop.permute.xlu0 %4549
  %v4551 = vsel %vm4219, %v4548, %v4550
  %v4573 = vunpack.c.l.b16 %v4521
  %v4574 = vunpack.c.h.b16 %v4521
  %v4575 = vunpack.c.l.b16 %v4522
  %v4576 = vunpack.c.h.b16 %v4522
  %v4577 = vunpack.c.l.b16 %v4523
  %v4578 = vunpack.c.h.b16 %v4523
  %v4579 = vunpack.c.l.b16 %v4524
  %v4580 = vunpack.c.h.b16 %v4524
  %v4581 = vunpack.c.l.b16 %v4525
  %v4582 = vunpack.c.h.b16 %v4525
  %v4583 = vunpack.c.l.b16 %v4526
  %v4584 = vunpack.c.h.b16 %v4526
  %v4585 = vunpack.c.l.b16 %v4527
  %v4586 = vunpack.c.h.b16 %v4527
  %v4587 = vunpack.c.l.b16 %v4528
  %v4588 = vunpack.c.h.b16 %v4528
  %v4589 = vunpack.c.l.b16 %v4529
  %v4590 = vunpack.c.h.b16 %v4529
  %v4591 = vunpack.c.l.b16 %v4530
  %v4592 = vunpack.c.h.b16 %v4530
  %v4593 = vunpack.c.l.b16 %v4531
  %v4594 = vunpack.c.h.b16 %v4531
  %v4595 = vunpack.c.l.b16 %v4532
  %v4596 = vunpack.c.h.b16 %v4532
  %v4597 = vunpack.c.l.b16 %v4533
  %v4598 = vunpack.c.h.b16 %v4533
  %v4599 = vunpack.c.l.b16 %v4534
  %v4600 = vunpack.c.h.b16 %v4534
  %v4601 = vunpack.c.l.b16 %v4535
  %v4602 = vunpack.c.h.b16 %v4535
  %v4603 = vunpack.c.l.b16 %v4536
  %v4604 = vunpack.c.h.b16 %v4536
  %v4605 = vunpack.c.l.b16 %v4537
  %v4606 = vunpack.c.h.b16 %v4537
  %v4607 = vunpack.c.l.b16 %v4538
  %v4608 = vunpack.c.h.b16 %v4538
  %v4609 = vunpack.c.l.b16 %v4539
  %v4610 = vunpack.c.h.b16 %v4539
  %v4611 = vunpack.c.l.b16 %v4540
  %v4612 = vunpack.c.h.b16 %v4540
  %v4613 = vpack.c.b16 %v4575, %v4573
  %v4614 = vpack.c.b16 %v4576, %v4574
  %v4615 = vpack.c.b16 %v4579, %v4577
  %v4616 = vpack.c.b16 %v4580, %v4578
  %v4617 = vpack.c.b16 %v4583, %v4581
  %v4618 = vpack.c.b16 %v4584, %v4582
  %v4619 = vpack.c.b16 %v4587, %v4585
  %v4620 = vpack.c.b16 %v4588, %v4586
  %v4621 = vpack.c.b16 %v4591, %v4589
  %v4622 = vpack.c.b16 %v4592, %v4590
  %v4623 = vpack.c.b16 %v4595, %v4593
  %v4624 = vpack.c.b16 %v4596, %v4594
  %v4625 = vpack.c.b16 %v4599, %v4597
  %v4626 = vpack.c.b16 %v4600, %v4598
  %v4627 = vpack.c.b16 %v4603, %v4601
  %v4628 = vpack.c.b16 %v4604, %v4602
  %v4629 = vpack.c.b16 %v4607, %v4605
  %v4630 = vpack.c.b16 %v4608, %v4606
  %v4631 = vpack.c.b16 %v4611, %v4609
  %v4632 = vpack.c.b16 %v4612, %v4610
  %v4654 = vsel %vm3138, %v4550, 0
  %4656 = vmatprep.subr.bf16.mxu0 %v4614
  %4657 = vmatpush1.bf16.msra.mxu0 %v4613
  %4658 = vmatprep.subr.bf16.mxu0 %v4616
  %4659 = vmatpush1.bf16.msra.mxu0 %v4615
  %4660 = vmatprep.subr.bf16.mxu0 %v4618
  %4661 = vmatpush1.bf16.msra.mxu0 %v4617
  %4662 = vmatprep.subr.bf16.mxu0 %v4620
  %4663 = vmatpush1.bf16.msra.mxu0 %v4619
  %4664 = vmatprep.subr.bf16.mxu0 %v4622
  %4665 = vmatpush1.bf16.msra.mxu0 %v4621
  %4666 = vmatprep.subr.bf16.mxu0 %v4624
  %4667 = vmatpush1.bf16.msra.mxu0 %v4623
  %4668 = vmatprep.subr.bf16.mxu0 %v4626
  %4669 = vmatpush1.bf16.msra.mxu0 %v4625
  %4670 = vmatprep.subr.bf16.mxu0 %v4628
  %4671 = vmatpush1.bf16.msra.mxu0 %v4627
  %4672 = vmatprep.subr.bf16.mxu0 %v4630
  %4673 = vmatpush1.bf16.msra.mxu0 %v4629
  %4674 = vmatprep.subr.bf16.mxu0 %v4632
  %4675 = vmatpush1.bf16.msra.mxu0 %v4631
  %4676 = vmatprep.subr.bf16.mxu0 0
  %4677 = vmatpush1.bf16.msra.mxu0 0
  %4678 = vmatprep.subr.bf16.mxu0 0
  %4679 = vmatpush1.bf16.msra.mxu0 0
  %4680 = vmatprep.subr.bf16.mxu0 0
  %4681 = vmatpush1.bf16.msra.mxu0 0
  %4682 = vmatprep.subr.bf16.mxu0 0
  %4683 = vmatpush1.bf16.msra.mxu0 0
  %4684 = vmatprep.subr.bf16.mxu0 0
  %4685 = vmatpush1.bf16.msra.mxu0 0
  %4686 = vmatprep.subr.bf16.mxu0 0
  %4687 = vmatpush1.bf16.msra.mxu0 0
  %4688 = vmatprep.mubr.bf16.mxu0 %v4654
  %4689 = vmatmul.mubr.bf16.gmra.mrb[0].mxu0 %v4551
  %v4690 = vpop.f32.mrb[0].mxu0
  %v4691 = vadd.f32 0.0, %v4690
  %v4692 = vpop.f32.mrb[0].mxu0
  %v4693 = vadd.f32 0.0, %v4692
  %v4694 = vpop.f32.mrb[0].mxu0
  %v4695 = vadd.f32 0.0, %v4694
  %v4696 = vpop.f32.mrb[0].mxu0
  %v4697 = vadd.f32 0.0, %v4696
  %4698 = vdwg.mxu0
  %v4699 = vadd.f32 %v4512, %v4691
  %v4700 = vadd.f32 %v4514, %v4693
  %v4701 = vadd.f32 %v4516, %v4695
  %v4702 = vadd.f32 %v4518, %v4697
  %s4703 = scalar_lea.vmem %s8, 2
  %v4704 = vld [vmem:[%s4703] sm:$0x3]
  %v4706 = vlaneseq
  %v4707 = vshrl.u32 %v4706, 7
  %v4708 = vsub.s32 0, %v4707
  %v4709 = vrot.slane %v4704, %v4708
  %v4710 = vlaneseq
  %v4711 = vshrl.u32 %v4710, 7
  %v4712 = vsub.s32 1, %v4711
  %v4713 = vrot.slane %v4704, %v4712
  %v4716 = vadd.f32 %v4699, %v4709
  %v4717 = vadd.f32 %v4700, %v4713
  %v4718 = vadd.f32 %v4701, %v4709
  %v4719 = vadd.f32 %v4702, %v4713
  %v4720 = vmax.f32 %v4716, 0.0
  %v4721 = vmax.f32 %v4717, 0.0
  %v4722 = vmax.f32 %v4718, 0.0
  %v4723 = vmax.f32 %v4719, 0.0
  %v4726 = vrot.slane %v4119, 2
  %v4727 = vrot.slane %v4120, 2
  %v4732 = vrot.slane %v4119, 6
  %v4733 = vrot.slane %v4120, 6
  %v4734 = vrot.slane %v4121, 6
  %v4735 = vsel %vm2945, %v4732, %v4734
  %v4736 = vrot.slane %v4122, 6
  %v4737 = vsel %vm2945, %v4733, %v4736
  %v4744 = vrot.slane %v4121, 4
  %v4745 = vrot.slane %v4122, 4
  %v4748 = vrot.slane %v4121, 2
  %v4749 = vrot.slane %v4122, 2
  %v4752 = vsel %vm1325, %v4726, %v4119
  %v4753 = vsel %vm1325, %v4727, %v4120
  %v4754 = vsel %vm2945, %v4752, %v4732
  %v4755 = vsel %vm2945, %v4753, %v4733
  %v4756 = vsel %vm2945, %v4734, %v4744
  %v4757 = vsel %vm2945, %v4736, %v4745
  %v4758 = vsel %vm2972, %v4756, %v4748
  %v4759 = vsel %vm2972, %v4757, %v4749
  %v4760 = vpack.c.bf16 %v4735, %v4754
  %v4761 = vpack.c.bf16 %v4737, %v4755
  %v4762 = vpack.c.bf16 %v4758, %v4758
  %v4763 = vpack.c.bf16 %v4759, %v4759
  %v4768 = vrot.slane %v4760, 1
  %v4769 = vrot.slane %v4762, 1
  %v4770 = vsel %vm3024, %v4768, %v4769
  %v4771 = vrot.slane %v4761, 1
  %v4772 = vrot.slane %v4763, 1
  %v4773 = vsel %vm3024, %v4771, %v4772
  %4774 = vrot.lane.b32.xlu0 %v4770, 64
  %v4775 = vpop.permute.xlu0 %4774
  %4776 = vrot.lane.b32.xlu0 %v4773, 64
  %v4777 = vpop.permute.xlu0 %4776
  %v4778 = vsel %vm4219, %v4775, %v4777
  %v4781 = vsel %vm3138, %v4777, 0
  %4783 = vmatprep.subr.bf16.mxu0 %v4283
  %4784 = vmatpush1.bf16.msra.mxu0 %v4282
  %4785 = vmatprep.subr.bf16.mxu0 %v4285
  %4786 = vmatpush1.bf16.msra.mxu0 %v4284
  %4787 = vmatprep.subr.bf16.mxu0 %v4287
  %4788 = vmatpush1.bf16.msra.mxu0 %v4286
  %4789 = vmatprep.subr.bf16.mxu0 %v4289
  %4790 = vmatpush1.bf16.msra.mxu0 %v4288
  %4791 = vmatprep.subr.bf16.mxu0 %v4291
  %4792 = vmatpush1.bf16.msra.mxu0 %v4290
  %4793 = vmatprep.subr.bf16.mxu0 %v4293
  %4794 = vmatpush1.bf16.msra.mxu0 %v4292
  %4795 = vmatprep.subr.bf16.mxu0 %v4295
  %4796 = vmatpush1.bf16.msra.mxu0 %v4294
  %4797 = vmatprep.subr.bf16.mxu0 %v4297
  %4798 = vmatpush1.bf16.msra.mxu0 %v4296
  %4799 = vmatprep.subr.bf16.mxu0 %v4299
  %4800 = vmatpush1.bf16.msra.mxu0 %v4298
  %4801 = vmatprep.subr.bf16.mxu0 %v4301
  %4802 = vmatpush1.bf16.msra.mxu0 %v4300
  %4803 = vmatprep.subr.bf16.mxu0 0
  %4804 = vmatpush1.bf16.msra.mxu0 0
  %4805 = vmatprep.subr.bf16.mxu0 0
  %4806 = vmatpush1.bf16.msra.mxu0 0
  %4807 = vmatprep.subr.bf16.mxu0 0
  %4808 = vmatpush1.bf16.msra.mxu0 0
  %4809 = vmatprep.subr.bf16.mxu0 0
  %4810 = vmatpush1.bf16.msra.mxu0 0
  %4811 = vmatprep.subr.bf16.mxu0 0
  %4812 = vmatpush1.bf16.msra.mxu0 0
  %4813 = vmatprep.subr.bf16.mxu0 0
  %4814 = vmatpush1.bf16.msra.mxu0 0
  %4815 = vmatprep.mubr.bf16.mxu0 %v4781
  %4816 = vmatmul.mubr.bf16.gmra.mrb[0].mxu0 %v4778
  %v4817 = vpop.f32.mrb[0].mxu0
  %v4818 = vadd.f32 0.0, %v4817
  %v4819 = vpop.f32.mrb[0].mxu0
  %v4820 = vadd.f32 0.0, %v4819
  %v4821 = vpop.f32.mrb[0].mxu0
  %v4822 = vadd.f32 0.0, %v4821
  %v4823 = vpop.f32.mrb[0].mxu0
  %v4824 = vadd.f32 0.0, %v4823
  %4825 = vdwg.mxu0
  %4826 = vrot.lane.b32.xlu0 %v4760, 64
  %v4827 = vpop.permute.xlu0 %4826
  %4828 = vrot.lane.b32.xlu0 %v4761, 64
  %v4829 = vpop.permute.xlu0 %4828
  %v4830 = vsel %vm4219, %v4827, %v4829
  %v4833 = vsel %vm3138, %v4829, 0
  %4835 = vmatprep.subr.bf16.mxu0 %v4435
  %4836 = vmatpush1.bf16.msra.mxu0 %v4434
  %4837 = vmatprep.subr.bf16.mxu0 %v4437
  %4838 = vmatpush1.bf16.msra.mxu0 %v4436
  %4839 = vmatprep.subr.bf16.mxu0 %v4439
  %4840 = vmatpush1.bf16.msra.mxu0 %v4438
  %4841 = vmatprep.subr.bf16.mxu0 %v4441
  %4842 = vmatpush1.bf16.msra.mxu0 %v4440
  %4843 = vmatprep.subr.bf16.mxu0 %v4443
  %4844 = vmatpush1.bf16.msra.mxu0 %v4442
  %4845 = vmatprep.subr.bf16.mxu0 %v4445
  %4846 = vmatpush1.bf16.msra.mxu0 %v4444
  %4847 = vmatprep.subr.bf16.mxu0 %v4447
  %4848 = vmatpush1.bf16.msra.mxu0 %v4446
  %4849 = vmatprep.subr.bf16.mxu0 %v4449
  %4850 = vmatpush1.bf16.msra.mxu0 %v4448
  %4851 = vmatprep.subr.bf16.mxu0 %v4451
  %4852 = vmatpush1.bf16.msra.mxu0 %v4450
  %4853 = vmatprep.subr.bf16.mxu0 %v4453
  %4854 = vmatpush1.bf16.msra.mxu0 %v4452
  %4855 = vmatprep.subr.bf16.mxu0 0
  %4856 = vmatpush1.bf16.msra.mxu0 0
  %4857 = vmatprep.subr.bf16.mxu0 0
  %4858 = vmatpush1.bf16.msra.mxu0 0
  %4859 = vmatprep.subr.bf16.mxu0 0
  %4860 = vmatpush1.bf16.msra.mxu0 0
  %4861 = vmatprep.subr.bf16.mxu0 0
  %4862 = vmatpush1.bf16.msra.mxu0 0
  %4863 = vmatprep.subr.bf16.mxu0 0
  %4864 = vmatpush1.bf16.msra.mxu0 0
  %4865 = vmatprep.subr.bf16.mxu0 0
  %4866 = vmatpush1.bf16.msra.mxu0 0
  %4867 = vmatprep.mubr.bf16.mxu0 %v4833
  %4868 = vmatmul.mubr.bf16.gmra.mrb[0].mxu0 %v4830
  %v4869 = vpop.f32.mrb[0].mxu0
  %v4870 = vadd.f32 %v4818, %v4869
  %v4871 = vpop.f32.mrb[0].mxu0
  %v4872 = vadd.f32 %v4820, %v4871
  %v4873 = vpop.f32.mrb[0].mxu0
  %v4874 = vadd.f32 %v4822, %v4873
  %v4875 = vpop.f32.mrb[0].mxu0
  %v4876 = vadd.f32 %v4824, %v4875
  %4877 = vdwg.mxu0
  %v4878 = vrot.slane %v4760, 2
  %v4879 = vrot.slane %v4762, 2
  %v4880 = vsel %vm3358, %v4878, %v4879
  %v4881 = vrot.slane %v4761, 2
  %v4882 = vrot.slane %v4763, 2
  %v4883 = vsel %vm3358, %v4881, %v4882
  %4884 = vrot.lane.b32.xlu0 %v4880, 64
  %v4885 = vpop.permute.xlu0 %4884
  %4886 = vrot.lane.b32.xlu0 %v4883, 64
  %v4887 = vpop.permute.xlu0 %4886
  %v4888 = vsel %vm4219, %v4885, %v4887
  %v4891 = vsel %vm3138, %v4887, 0
  %4893 = vmatprep.subr.bf16.mxu0 %v4614
  %4894 = vmatpush1.bf16.msra.mxu0 %v4613
  %4895 = vmatprep.subr.bf16.mxu0 %v4616
  %4896 = vmatpush1.bf16.msra.mxu0 %v4615
  %4897 = vmatprep.subr.bf16.mxu0 %v4618
  %4898 = vmatpush1.bf16.msra.mxu0 %v4617
  %4899 = vmatprep.subr.bf16.mxu0 %v4620
  %4900 = vmatpush1.bf16.msra.mxu0 %v4619
  %4901 = vmatprep.subr.bf16.mxu0 %v4622
  %4902 = vmatpush1.bf16.msra.mxu0 %v4621
  %4903 = vmatprep.subr.bf16.mxu0 %v4624
  %4904 = vmatpush1.bf16.msra.mxu0 %v4623
  %4905 = vmatprep.subr.bf16.mxu0 %v4626
  %4906 = vmatpush1.bf16.msra.mxu0 %v4625
  %4907 = vmatprep.subr.bf16.mxu0 %v4628
  %4908 = vmatpush1.bf16.msra.mxu0 %v4627
  %4909 = vmatprep.subr.bf16.mxu0 %v4630
  %4910 = vmatpush1.bf16.msra.mxu0 %v4629
  %4911 = vmatprep.subr.bf16.mxu0 %v4632
  %4912 = vmatpush1.bf16.msra.mxu0 %v4631
  %4913 = vmatprep.subr.bf16.mxu0 0
  %4914 = vmatpush1.bf16.msra.mxu0 0
  %4915 = vmatprep.subr.bf16.mxu0 0
  %4916 = vmatpush1.bf16.msra.mxu0 0
  %4917 = vmatprep.subr.bf16.mxu0 0
  %4918 = vmatpush1.bf16.msra.mxu0 0
  %4919 = vmatprep.subr.bf16.mxu0 0
  %4920 = vmatpush1.bf16.msra.mxu0 0
  %4921 = vmatprep.subr.bf16.mxu0 0
  %4922 = vmatpush1.bf16.msra.mxu0 0
  %4923 = vmatprep.subr.bf16.mxu0 0
  %4924 = vmatpush1.bf16.msra.mxu0 0
  %4925 = vmatprep.mubr.bf16.mxu0 %v4891
  %4926 = vmatmul.mubr.bf16.gmra.mrb[0].mxu0 %v4888
  %v4927 = vpop.f32.mrb[0].mxu0
  %v4928 = vadd.f32 0.0, %v4927
  %v4929 = vpop.f32.mrb[0].mxu0
  %v4930 = vadd.f32 0.0, %v4929
  %v4931 = vpop.f32.mrb[0].mxu0
  %v4932 = vadd.f32 0.0, %v4931
  %v4933 = vpop.f32.mrb[0].mxu0
  %v4934 = vadd.f32 0.0, %v4933
  %4935 = vdwg.mxu0
  %v4936 = vadd.f32 %v4870, %v4928
  %v4937 = vadd.f32 %v4872, %v4930
  %v4938 = vadd.f32 %v4874, %v4932
  %v4939 = vadd.f32 %v4876, %v4934
  %v4940 = vadd.f32 %v4936, %v4709
  %v4941 = vadd.f32 %v4937, %v4713
  %v4942 = vadd.f32 %v4938, %v4709
  %v4943 = vadd.f32 %v4939, %v4713
  %v4944 = vmax.f32 %v4940, 0.0
  %v4945 = vmax.f32 %v4941, 0.0
  %v4946 = vmax.f32 %v4942, 0.0
  %v4947 = vmax.f32 %v4943, 0.0
  %s4948 = scalar_lea.vmem %s9, 2
  %v4949 = vld [vmem:[%s4948] sm:$0x3]
  %s4950 = scalar_lea.vmem %s10, 2
  %v4951 = vld [vmem:[%s4950] sm:$0x3]
  %v4952 = vadd.f32 %v4720, %v4722
  %v4953 = vadd.f32 %v4952, %v4944
  %v4954 = vadd.f32 %v4953, %v4946
  %v4955 = vrot.slane %v4954, 4
  %v4956 = vadd.f32 %v4954, %v4955
  %v4957 = vrot.slane %v4956, 2
  %v4958 = vadd.f32 %v4956, %v4957
  %v4959 = vrot.slane %v4958, 1
  %v4960 = vadd.f32 %v4958, %v4959
  %v4961 = vsel %vm3138, %v4721, 0.0
  %v4962 = vsel %vm3138, %v4723, 0.0
  %v4963 = vadd.f32 %v4961, %v4962
  %v4964 = vsel %vm3138, %v4945, 0.0
  %v4965 = vadd.f32 %v4963, %v4964
  %v4966 = vsel %vm3138, %v4947, 0.0
  %v4967 = vadd.f32 %v4965, %v4966
  %v4968 = vrot.slane %v4967, 4
  %v4969 = vadd.f32 %v4967, %v4968
  %v4970 = vrot.slane %v4969, 2
  %v4971 = vadd.f32 %v4969, %v4970
  %v4972 = vrot.slane %v4971, 1
  %v4973 = vadd.f32 %v4971, %v4972
  %v4974 = vmul.f32 %v4720, %v4720
  %v4975 = vmul.f32 %v4721, %v4721
  %v4976 = vmul.f32 %v4722, %v4722
  %v4977 = vmul.f32 %v4723, %v4723
  %v4978 = vmul.f32 %v4944, %v4944
  %v4979 = vmul.f32 %v4945, %v4945
  %v4980 = vmul.f32 %v4946, %v4946
  %v4981 = vmul.f32 %v4947, %v4947
  %v4982 = vadd.f32 %v4974, %v4976
  %v4983 = vadd.f32 %v4982, %v4978
  %v4984 = vadd.f32 %v4983, %v4980
  %v4985 = vrot.slane %v4984, 4
  %v4986 = vadd.f32 %v4984, %v4985
  %v4987 = vrot.slane %v4986, 2
  %v4988 = vadd.f32 %v4986, %v4987
  %v4989 = vrot.slane %v4988, 1
  %v4990 = vadd.f32 %v4988, %v4989
  %v4991 = vsel %vm3138, %v4975, 0.0
  %v4992 = vsel %vm3138, %v4977, 0.0
  %v4993 = vadd.f32 %v4991, %v4992
  %v4994 = vsel %vm3138, %v4979, 0.0
  %v4995 = vadd.f32 %v4993, %v4994
  %v4996 = vsel %vm3138, %v4981, 0.0
  %v4997 = vadd.f32 %v4995, %v4996
  %v4998 = vrot.slane %v4997, 4
  %v4999 = vadd.f32 %v4997, %v4998
  %v5000 = vrot.slane %v4999, 2
  %v5001 = vadd.f32 %v4999, %v5000
  %v5002 = vrot.slane %v5001, 1
  %v5003 = vadd.f32 %v5001, %v5002
  %v5004 = vsel %vm1325, %v4960, %v4990
  %v5005 = vsel %vm1325, %v4973, %v5003
  %v5007 = vsel %vm3138, %v5005, 0
  %5009 = vmatprep.subr.mxu0 0.0
  %5010 = vmatpush1.msra.mxu0 %v3767
  %5011 = vmatprep.subr.mxu0 0.0
  %5012 = vmatpush1.msra.mxu0 %v3768
  %5013 = vmatprep.subr.mxu0 0.0
  %5014 = vmatpush1.msra.mxu0 %v3769
  %5015 = vmatprep.subr.mxu0 0.0
  %5016 = vmatpush1.msra.mxu0 %v3770
  %5017 = vmatprep.subr.mxu0 0.0
  %5018 = vmatpush1.msra.mxu0 %v3771
  %5019 = vmatprep.subr.mxu0 0.0
  %5020 = vmatpush1.msra.mxu0 %v3772
  %5021 = vmatprep.subr.mxu0 0.0
  %5022 = vmatpush1.msra.mxu0 %v3773
  %5023 = vmatprep.subr.mxu0 0.0
  %5024 = vmatpush1.msra.mxu0 %v3774
  %5025 = vmatprep.subr.mxu0 0.0
  %5026 = vmatpush1.msra.mxu0 %v3775
  %5027 = vmatprep.subr.mxu0 0.0
  %5028 = vmatpush1.msra.mxu0 %v3776
  %5029 = vmatprep.subr.mxu0 0.0
  %5030 = vmatpush1.msra.mxu0 %v3777
  %5031 = vmatprep.subr.mxu0 0.0
  %5032 = vmatpush1.msra.mxu0 %v3778
  %5033 = vmatprep.subr.mxu0 0.0
  %5034 = vmatpush1.msra.mxu0 %v3779
  %5035 = vmatprep.subr.mxu0 0.0
  %5036 = vmatpush1.msra.mxu0 %v3780
  %5037 = vmatprep.subr.mxu0 0.0
  %5038 = vmatpush1.msra.mxu0 %v3781
  %5039 = vmatprep.subr.mxu0 0.0
  %5040 = vmatpush1.msra.mxu0 %v3782
  %5041 = vmatprep.subr.mxu0 0.0
  %5042 = vmatpush1.msra.mxu0 %v3783
  %5043 = vmatprep.subr.mxu0 0.0
  %5044 = vmatpush1.msra.mxu0 %v3784
  %5045 = vmatprep.subr.mxu0 0.0
  %5046 = vmatpush1.msra.mxu0 %v3785
  %5047 = vmatprep.subr.mxu0 0.0
  %5048 = vmatpush1.msra.mxu0 %v3786
  %5049 = vmatprep.subr.mxu0 0.0
  %5050 = vmatpush1.msra.mxu0 0.0
  %5051 = vmatprep.subr.mxu0 0.0
  %5052 = vmatpush1.msra.mxu0 0.0
  %5053 = vmatprep.subr.mxu0 0.0
  %5054 = vmatpush1.msra.mxu0 0.0
  %5055 = vmatprep.subr.mxu0 0.0
  %5056 = vmatpush1.msra.mxu0 0.0
  %5057 = vmatprep.subr.mxu0 0.0
  %5058 = vmatpush1.msra.mxu0 0.0
  %5059 = vmatprep.subr.mxu0 0.0
  %5060 = vmatpush1.msra.mxu0 0.0
  %5061 = vmatprep.subr.mxu0 0.0
  %5062 = vmatpush1.msra.mxu0 0.0
  %5063 = vmatprep.subr.mxu0 0.0
  %5064 = vmatpush1.msra.mxu0 0.0
  %5065 = vmatprep.subr.mxu0 0.0
  %5066 = vmatpush1.msra.mxu0 0.0
  %5067 = vmatprep.subr.mxu0 0.0
  %5068 = vmatpush1.msra.mxu0 0.0
  %5069 = vmatprep.subr.mxu0 0.0
  %5070 = vmatpush1.msra.mxu0 0.0
  %5071 = vmatprep.subr.mxu0 0.0
  %5072 = vmatpush1.msra.mxu0 0.0
  %5073 = vmatprep.mubr.f32.mxu0 %v5007
  %5074 = vmatmul.mubr.f32.gmra.mrb[0].mxu0 %v5004
  %v5075 = vpop.f32.mrb[0].mxu0
  %v5076 = vadd.f32 0.0, %v5075
  %v5077 = vpop.f32.mrb[0].mxu0
  %5078 = vdwg.mxu0
  %v5080 = vsel %vm3917, %v5076, 0
  %5082 = vmatprep.subr.mxu0 %v3924
  %5083 = vmatpush1.msra.mxu0 %v3922
  %5084 = vmatprep.subr.mxu0 0.0
  %5085 = vmatpush1.msra.mxu0 0.0
  %5086 = vmatprep.subr.mxu0 0.0
  %5087 = vmatpush1.msra.mxu0 0.0
  %5088 = vmatprep.subr.mxu0 0.0
  %5089 = vmatpush1.msra.mxu0 0.0
  %5090 = vmatprep.subr.mxu0 0.0
  %5091 = vmatpush1.msra.mxu0 0.0
  %5092 = vmatprep.subr.mxu0 0.0
  %5093 = vmatpush1.msra.mxu0 0.0
  %5094 = vmatprep.subr.mxu0 0.0
  %5095 = vmatpush1.msra.mxu0 0.0
  %5096 = vmatprep.subr.mxu0 0.0
  %5097 = vmatpush1.msra.mxu0 0.0
  %5098 = vmatprep.subr.mxu0 0.0
  %5099 = vmatpush1.msra.mxu0 0.0
  %5100 = vmatprep.subr.mxu0 0.0
  %5101 = vmatpush1.msra.mxu0 0.0
  %5102 = vmatprep.subr.mxu0 0.0
  %5103 = vmatpush1.msra.mxu0 0.0
  %5104 = vmatprep.subr.mxu0 0.0
  %5105 = vmatpush1.msra.mxu0 0.0
  %5106 = vmatprep.subr.mxu0 0.0
  %5107 = vmatpush1.msra.mxu0 0.0
  %5108 = vmatprep.subr.mxu0 0.0
  %5109 = vmatpush1.msra.mxu0 0.0
  %5110 = vmatprep.subr.mxu0 0.0
  %5111 = vmatpush1.msra.mxu0 0.0
  %5112 = vmatprep.subr.mxu0 0.0
  %5113 = vmatpush1.msra.mxu0 0.0
  %5114 = vmatprep.subr.mxu0 0.0
  %5115 = vmatpush1.msra.mxu0 0.0
  %5116 = vmatprep.subr.mxu0 0.0
  %5117 = vmatpush1.msra.mxu0 0.0
  %5118 = vmatprep.subr.mxu0 0.0
  %5119 = vmatpush1.msra.mxu0 0.0
  %5120 = vmatprep.subr.mxu0 0.0
  %5121 = vmatpush1.msra.mxu0 0.0
  %5122 = vmatprep.subr.mxu0 0.0
  %5123 = vmatpush1.msra.mxu0 0.0
  %5124 = vmatprep.subr.mxu0 0.0
  %5125 = vmatpush1.msra.mxu0 0.0
  %5126 = vmatprep.subr.mxu0 0.0
  %5127 = vmatpush1.msra.mxu0 0.0
  %5128 = vmatprep.subr.mxu0 0.0
  %5129 = vmatpush1.msra.mxu0 0.0
  %5130 = vmatprep.subr.mxu0 0.0
  %5131 = vmatpush1.msra.mxu0 0.0
  %5132 = vmatprep.subr.mxu0 0.0
  %5133 = vmatpush1.msra.mxu0 0.0
  %5134 = vmatprep.subr.mxu0 0.0
  %5135 = vmatpush1.msra.mxu0 0.0
  %5136 = vmatprep.subr.mxu0 0.0
  %5137 = vmatpush1.msra.mxu0 0.0
  %5138 = vmatprep.subr.mxu0 0.0
  %5139 = vmatpush1.msra.mxu0 0.0
  %5140 = vmatprep.subr.mxu0 0.0
  %5141 = vmatpush1.msra.mxu0 0.0
  %5142 = vmatprep.subr.mxu0 0.0
  %5143 = vmatpush1.msra.mxu0 0.0
  %5144 = vmatprep.subr.mxu0 0.0
  %5145 = vmatpush1.msra.mxu0 0.0
  %5146 = vmatprep.mubr.f32.mxu0 0.0
  %5147 = vmatmul.mubr.f32.gmra.mrb[0].mxu0 %v5080
  %v5148 = vpop.f32.mrb[0].mxu0
  %v5149 = vadd.f32 0.0, %v5148
  %v5150 = vpop.f32.mrb[0].mxu0
  %v5151 = vadd.f32 0.0, %v5150
  %5152 = vdwg.mxu0
  %v5153 = vmul.f32 %v5149, %v1757
  %v5154 = vmul.f32 %v5151, %v1757
  %v5155 = vmul.f32 %v5153, %v5153
  %v5156 = vmul.f32 %v5154, %v5154
  %v5159 = vrot.slane %v5155, 7
  %v5160 = vrot.slane %v5156, 7
  %v5163 = vsub.f32 %v5153, %v5159
  %v5164 = vsub.f32 %v5154, %v5160
  %v5165 = vmax.f32 %v5163, 0.0
  %v5166 = vmax.f32 %v5164, 0.0
  %v5167 = vadd.f32 %v5165, 1e-05
  %v5168 = vadd.f32 %v5166, 1e-05
  %v5169 = vrsqrt.pop %v5167
  %v5170 = vrsqrt.pop %v5168
  %v5171 = vlaneseq
  %v5172 = vshrl.u32 %v5171, 7
  %v5173 = vsub.s32 0, %v5172
  %v5174 = vrot.slane %v5153, %v5173
  %v5175 = vlaneseq
  %v5176 = vshrl.u32 %v5175, 7
  %v5177 = vsub.s32 0, %v5176
  %v5178 = vrot.slane %v5154, %v5177
  %v5179 = vsub.f32 %v4720, %v5174
  %v5180 = vsub.f32 %v4721, %v5178
  %v5181 = vsub.f32 %v4722, %v5174
  %v5182 = vsub.f32 %v4723, %v5178
  %v5183 = vsub.f32 %v4944, %v5174
  %v5184 = vsub.f32 %v4945, %v5178
  %v5185 = vsub.f32 %v4946, %v5174
  %v5186 = vsub.f32 %v4947, %v5178
  %v5188 = vlaneseq
  %v5189 = vshrl.u32 %v5188, 7
  %v5190 = vsub.s32 0, %v5189
  %v5191 = vrot.slane %v4949, %v5190
  %v5192 = vlaneseq
  %v5193 = vshrl.u32 %v5192, 7
  %v5194 = vsub.s32 1, %v5193
  %v5195 = vrot.slane %v4949, %v5194
  %v5198 = vmul.f32 %v5169, %v5191
  %v5199 = vmul.f32 %v5170, %v5195
  %v5200 = vlaneseq
  %v5201 = vshrl.u32 %v5200, 7
  %v5202 = vsub.s32 1, %v5201
  %v5203 = vrot.slane %v5198, %v5202
  %v5204 = vlaneseq
  %v5205 = vshrl.u32 %v5204, 7
  %v5206 = vsub.s32 1, %v5205
  %v5207 = vrot.slane %v5199, %v5206
  %v5208 = vmul.f32 %v5179, %v5203
  %v5209 = vmul.f32 %v5180, %v5207
  %v5210 = vmul.f32 %v5181, %v5203
  %v5211 = vmul.f32 %v5182, %v5207
  %v5212 = vmul.f32 %v5183, %v5203
  %v5213 = vmul.f32 %v5184, %v5207
  %v5214 = vmul.f32 %v5185, %v5203
  %v5215 = vmul.f32 %v5186, %v5207
  %v5217 = vlaneseq
  %v5218 = vshrl.u32 %v5217, 7
  %v5219 = vsub.s32 0, %v5218
  %v5220 = vrot.slane %v4951, %v5219
  %v5221 = vlaneseq
  %v5222 = vshrl.u32 %v5221, 7
  %v5223 = vsub.s32 1, %v5222
  %v5224 = vrot.slane %v4951, %v5223
  %v5227 = vadd.f32 %v5208, %v5220
  %v5228 = vadd.f32 %v5209, %v5224
  %v5229 = vadd.f32 %v5210, %v5220
  %v5230 = vadd.f32 %v5211, %v5224
  %v5231 = vadd.f32 %v5212, %v5220
  %v5232 = vadd.f32 %v5213, %v5224
  %v5233 = vadd.f32 %v5214, %v5220
  %v5234 = vadd.f32 %v5215, %v5224
  %5243 = vrot.lane.b32.xlu0 %v5227, 96
  %v5244 = vpop.permute.xlu0 %5243
  %5245 = vrot.lane.b32.xlu0 %v5228, 96
  %v5246 = vpop.permute.xlu0 %5245
  %5247 = vrot.lane.b32.xlu0 %v5229, 96
  %v5248 = vpop.permute.xlu0 %5247
  %5249 = vrot.lane.b32.xlu0 %v5230, 96
  %v5250 = vpop.permute.xlu0 %5249
  %5251 = vrot.lane.b32.xlu0 %v5231, 96
  %v5252 = vpop.permute.xlu0 %5251
  %5253 = vrot.lane.b32.xlu0 %v5232, 96
  %v5254 = vpop.permute.xlu0 %5253
  %5255 = vrot.lane.b32.xlu0 %v5233, 96
  %v5256 = vpop.permute.xlu0 %5255
  %5257 = vrot.lane.b32.xlu0 %v5234, 96
  %v5258 = vpop.permute.xlu0 %5257
  %vm5259 = vcmask 785408
  %v5260 = vsel %vm5259, %v5244, %v5246
  %v5261 = vsel %vm5259, %v5248, %v5250
  %v5262 = vsel %vm5259, %v5252, %v5254
  %v5263 = vsel %vm5259, %v5256, %v5258
  %v5272 = vadd.f32 %v1943, %v5244
  %v5273 = vadd.f32 %v1944, %v5260
  %v5274 = vadd.f32 %v1948, %v5248
  %v5275 = vadd.f32 %v1949, %v5261
  %v5276 = vadd.f32 %v1953, %v5252
  %v5277 = vadd.f32 %v1954, %v5262
  %v5278 = vadd.f32 %v1958, %v5256
  %v5279 = vadd.f32 %v1959, %v5263
  %v5282 = vrot.slane %v5272, 2
  %v5283 = vrot.slane %v5273, 2
  %v5288 = vrot.slane %v5272, 6
  %v5289 = vrot.slane %v5273, 6
  %v5290 = vrot.slane %v5274, 6
  %v5291 = vsel %vm2945, %v5288, %v5290
  %v5292 = vrot.slane %v5275, 6
  %v5293 = vsel %vm2945, %v5289, %v5292
  %v5300 = vrot.slane %v5274, 4
  %v5301 = vrot.slane %v5275, 4
  %v5304 = vrot.slane %v5274, 2
  %v5305 = vrot.slane %v5275, 2
  %v5308 = vsel %vm1325, %v5282, %v5272
  %v5309 = vsel %vm1325, %v5283, %v5273
  %v5310 = vsel %vm2945, %v5308, %v5288
  %v5311 = vsel %vm2945, %v5309, %v5289
  %v5312 = vsel %vm2945, %v5290, %v5300
  %v5313 = vsel %vm2945, %v5292, %v5301
  %v5314 = vsel %vm2972, %v5312, %v5304
  %v5315 = vsel %vm2972, %v5313, %v5305
  %v5316 = vpack.c.bf16 %v5291, %v5310
  %v5317 = vpack.c.bf16 %v5293, %v5311
  %v5318 = vpack.c.bf16 %v5314, %v5314
  %v5319 = vpack.c.bf16 %v5315, %v5315
  %s5320 = scalar_lea.vmem %s7, 960
  %v5321 = vld [vmem:[%s5320] sm:$0xff]
  %v5322 = vld [vmem:[%s5320 + $0x8] sm:$0xff]
  %v5323 = vld [vmem:[%s5320 + $0x10] sm:$0xff]
  %v5324 = vld [vmem:[%s5320 + $0x18] sm:$0xff]
  %v5325 = vld [vmem:[%s5320 + $0x20] sm:$0xff]
  %v5326 = vld [vmem:[%s5320 + $0x28] sm:$0xff]
  %v5327 = vld [vmem:[%s5320 + $0x30] sm:$0xff]
  %v5328 = vld [vmem:[%s5320 + $0x38] sm:$0xff]
  %v5329 = vld [vmem:[%s5320 + $0x40] sm:$0xff]
  %v5330 = vld [vmem:[%s5320 + $0x48] sm:$0xff]
  %v5331 = vld [vmem:[%s5320 + $0x50] sm:$0xff]
  %v5332 = vld [vmem:[%s5320 + $0x58] sm:$0xff]
  %v5333 = vld [vmem:[%s5320 + $0x60] sm:$0xff]
  %v5334 = vld [vmem:[%s5320 + $0x68] sm:$0xff]
  %v5335 = vld [vmem:[%s5320 + $0x70] sm:$0xff]
  %v5336 = vld [vmem:[%s5320 + $0x78] sm:$0xff]
  %v5337 = vld [vmem:[%s5320 + $0x80] sm:$0xff]
  %v5338 = vld [vmem:[%s5320 + $0x88] sm:$0xff]
  %v5339 = vld [vmem:[%s5320 + $0x90] sm:$0xff]
  %v5340 = vld [vmem:[%s5320 + $0x98] sm:$0xff]
  %s5341 = scalar_lea.vmem %s7, 1120
  %v5342 = vld [vmem:[%s5341] sm:$0xff]
  %v5343 = vld [vmem:[%s5341 + $0x8] sm:$0xff]
  %v5344 = vld [vmem:[%s5341 + $0x10] sm:$0xff]
  %v5345 = vld [vmem:[%s5341 + $0x18] sm:$0xff]
  %v5346 = vld [vmem:[%s5341 + $0x20] sm:$0xff]
  %v5347 = vld [vmem:[%s5341 + $0x28] sm:$0xff]
  %v5348 = vld [vmem:[%s5341 + $0x30] sm:$0xff]
  %v5349 = vld [vmem:[%s5341 + $0x38] sm:$0xff]
  %v5350 = vld [vmem:[%s5341 + $0x40] sm:$0xff]
  %v5351 = vld [vmem:[%s5341 + $0x48] sm:$0xff]
  %v5352 = vld [vmem:[%s5341 + $0x50] sm:$0xff]
  %v5353 = vld [vmem:[%s5341 + $0x58] sm:$0xff]
  %v5354 = vld [vmem:[%s5341 + $0x60] sm:$0xff]
  %v5355 = vld [vmem:[%s5341 + $0x68] sm:$0xff]
  %v5356 = vld [vmem:[%s5341 + $0x70] sm:$0xff]
  %v5357 = vld [vmem:[%s5341 + $0x78] sm:$0xff]
  %v5358 = vld [vmem:[%s5341 + $0x80] sm:$0xff]
  %v5359 = vld [vmem:[%s5341 + $0x88] sm:$0xff]
  %v5360 = vld [vmem:[%s5341 + $0x90] sm:$0xff]
  %v5361 = vld [vmem:[%s5341 + $0x98] sm:$0xff]
  %v5366 = vrot.slane %v5316, 1
  %v5367 = vrot.slane %v5318, 1
  %v5368 = vsel %vm3024, %v5366, %v5367
  %v5369 = vrot.slane %v5317, 1
  %v5370 = vrot.slane %v5319, 1
  %v5371 = vsel %vm3024, %v5369, %v5370
  %5372 = vrot.lane.b32.xlu0 %v5368, 32
  %v5373 = vpop.permute.xlu0 %5372
  %5374 = vrot.lane.b32.xlu0 %v5371, 32
  %v5375 = vpop.permute.xlu0 %5374
  %vm5376 = vcmask 261120
  %v5377 = vsel %vm5376, %v5373, %v5375
  %v5399 = vunpack.c.l.b16 %v5342
  %v5400 = vunpack.c.h.b16 %v5342
  %v5401 = vunpack.c.l.b16 %v5343
  %v5402 = vunpack.c.h.b16 %v5343
  %v5403 = vunpack.c.l.b16 %v5344
  %v5404 = vunpack.c.h.b16 %v5344
  %v5405 = vunpack.c.l.b16 %v5345
  %v5406 = vunpack.c.h.b16 %v5345
  %v5407 = vunpack.c.l.b16 %v5346
  %v5408 = vunpack.c.h.b16 %v5346
  %v5409 = vunpack.c.l.b16 %v5347
  %v5410 = vunpack.c.h.b16 %v5347
  %v5411 = vunpack.c.l.b16 %v5348
  %v5412 = vunpack.c.h.b16 %v5348
  %v5413 = vunpack.c.l.b16 %v5349
  %v5414 = vunpack.c.h.b16 %v5349
  %v5415 = vunpack.c.l.b16 %v5350
  %v5416 = vunpack.c.h.b16 %v5350
  %v5417 = vunpack.c.l.b16 %v5351
  %v5418 = vunpack.c.h.b16 %v5351
  %v5419 = vunpack.c.l.b16 %v5352
  %v5420 = vunpack.c.h.b16 %v5352
  %v5421 = vunpack.c.l.b16 %v5353
  %v5422 = vunpack.c.h.b16 %v5353
  %v5423 = vunpack.c.l.b16 %v5354
  %v5424 = vunpack.c.h.b16 %v5354
  %v5425 = vunpack.c.l.b16 %v5355
  %v5426 = vunpack.c.h.b16 %v5355
  %v5427 = vunpack.c.l.b16 %v5356
  %v5428 = vunpack.c.h.b16 %v5356
  %v5429 = vunpack.c.l.b16 %v5357
  %v5430 = vunpack.c.h.b16 %v5357
  %v5431 = vunpack.c.l.b16 %v5358
  %v5432 = vunpack.c.h.b16 %v5358
  %v5433 = vunpack.c.l.b16 %v5359
  %v5434 = vunpack.c.h.b16 %v5359
  %v5435 = vunpack.c.l.b16 %v5360
  %v5436 = vunpack.c.h.b16 %v5360
  %v5437 = vunpack.c.l.b16 %v5361
  %v5438 = vunpack.c.h.b16 %v5361
  %v5439 = vpack.c.b16 %v5401, %v5399
  %v5440 = vpack.c.b16 %v5402, %v5400
  %v5441 = vpack.c.b16 %v5405, %v5403
  %v5442 = vpack.c.b16 %v5406, %v5404
  %v5443 = vpack.c.b16 %v5409, %v5407
  %v5444 = vpack.c.b16 %v5410, %v5408
  %v5445 = vpack.c.b16 %v5413, %v5411
  %v5446 = vpack.c.b16 %v5414, %v5412
  %v5447 = vpack.c.b16 %v5417, %v5415
  %v5448 = vpack.c.b16 %v5418, %v5416
  %v5449 = vpack.c.b16 %v5421, %v5419
  %v5450 = vpack.c.b16 %v5422, %v5420
  %v5451 = vpack.c.b16 %v5425, %v5423
  %v5452 = vpack.c.b16 %v5426, %v5424
  %v5453 = vpack.c.b16 %v5429, %v5427
  %v5454 = vpack.c.b16 %v5430, %v5428
  %v5455 = vpack.c.b16 %v5433, %v5431
  %v5456 = vpack.c.b16 %v5434, %v5432
  %v5457 = vpack.c.b16 %v5437, %v5435
  %v5458 = vpack.c.b16 %v5438, %v5436
  %v5480 = vsel %vm3138, %v5375, 0
  %5482 = vmatprep.subr.bf16.mxu0 %v5440
  %5483 = vmatpush1.bf16.msra.mxu0 %v5439
  %5484 = vmatprep.subr.bf16.mxu0 %v5442
  %5485 = vmatpush1.bf16.msra.mxu0 %v5441
  %5486 = vmatprep.subr.bf16.mxu0 %v5444
  %5487 = vmatpush1.bf16.msra.mxu0 %v5443
  %5488 = vmatprep.subr.bf16.mxu0 %v5446
  %5489 = vmatpush1.bf16.msra.mxu0 %v5445
  %5490 = vmatprep.subr.bf16.mxu0 %v5448
  %5491 = vmatpush1.bf16.msra.mxu0 %v5447
  %5492 = vmatprep.subr.bf16.mxu0 %v5450
  %5493 = vmatpush1.bf16.msra.mxu0 %v5449
  %5494 = vmatprep.subr.bf16.mxu0 %v5452
  %5495 = vmatpush1.bf16.msra.mxu0 %v5451
  %5496 = vmatprep.subr.bf16.mxu0 %v5454
  %5497 = vmatpush1.bf16.msra.mxu0 %v5453
  %5498 = vmatprep.subr.bf16.mxu0 %v5456
  %5499 = vmatpush1.bf16.msra.mxu0 %v5455
  %5500 = vmatprep.subr.bf16.mxu0 %v5458
  %5501 = vmatpush1.bf16.msra.mxu0 %v5457
  %5502 = vmatprep.subr.bf16.mxu0 0
  %5503 = vmatpush1.bf16.msra.mxu0 0
  %5504 = vmatprep.subr.bf16.mxu0 0
  %5505 = vmatpush1.bf16.msra.mxu0 0
  %5506 = vmatprep.subr.bf16.mxu0 0
  %5507 = vmatpush1.bf16.msra.mxu0 0
  %5508 = vmatprep.subr.bf16.mxu0 0
  %5509 = vmatpush1.bf16.msra.mxu0 0
  %5510 = vmatprep.subr.bf16.mxu0 0
  %5511 = vmatpush1.bf16.msra.mxu0 0
  %5512 = vmatprep.subr.bf16.mxu0 0
  %5513 = vmatpush1.bf16.msra.mxu0 0
  %5514 = vmatprep.mubr.bf16.mxu0 %v5480
  %5515 = vmatmul.mubr.bf16.gmra.mrb[0].mxu0 %v5377
  %v5516 = vpop.f32.mrb[0].mxu0
  %v5517 = vadd.f32 0.0, %v5516
  %v5518 = vpop.f32.mrb[0].mxu0
  %v5519 = vadd.f32 0.0, %v5518
  %v5520 = vpop.f32.mrb[0].mxu0
  %v5521 = vadd.f32 0.0, %v5520
  %v5522 = vpop.f32.mrb[0].mxu0
  %v5523 = vadd.f32 0.0, %v5522
  %5524 = vdwg.mxu0
  %5525 = vrot.lane.b32.xlu0 %v5316, 32
  %v5526 = vpop.permute.xlu0 %5525
  %5527 = vrot.lane.b32.xlu0 %v5317, 32
  %v5528 = vpop.permute.xlu0 %5527
  %v5529 = vsel %vm5376, %v5526, %v5528
  %v5551 = vunpack.c.l.b16 %v5321
  %v5552 = vunpack.c.h.b16 %v5321
  %v5553 = vunpack.c.l.b16 %v5322
  %v5554 = vunpack.c.h.b16 %v5322
  %v5555 = vunpack.c.l.b16 %v5323
  %v5556 = vunpack.c.h.b16 %v5323
  %v5557 = vunpack.c.l.b16 %v5324
  %v5558 = vunpack.c.h.b16 %v5324
  %v5559 = vunpack.c.l.b16 %v5325
  %v5560 = vunpack.c.h.b16 %v5325
  %v5561 = vunpack.c.l.b16 %v5326
  %v5562 = vunpack.c.h.b16 %v5326
  %v5563 = vunpack.c.l.b16 %v5327
  %v5564 = vunpack.c.h.b16 %v5327
  %v5565 = vunpack.c.l.b16 %v5328
  %v5566 = vunpack.c.h.b16 %v5328
  %v5567 = vunpack.c.l.b16 %v5329
  %v5568 = vunpack.c.h.b16 %v5329
  %v5569 = vunpack.c.l.b16 %v5330
  %v5570 = vunpack.c.h.b16 %v5330
  %v5571 = vunpack.c.l.b16 %v5331
  %v5572 = vunpack.c.h.b16 %v5331
  %v5573 = vunpack.c.l.b16 %v5332
  %v5574 = vunpack.c.h.b16 %v5332
  %v5575 = vunpack.c.l.b16 %v5333
  %v5576 = vunpack.c.h.b16 %v5333
  %v5577 = vunpack.c.l.b16 %v5334
  %v5578 = vunpack.c.h.b16 %v5334
  %v5579 = vunpack.c.l.b16 %v5335
  %v5580 = vunpack.c.h.b16 %v5335
  %v5581 = vunpack.c.l.b16 %v5336
  %v5582 = vunpack.c.h.b16 %v5336
  %v5583 = vunpack.c.l.b16 %v5337
  %v5584 = vunpack.c.h.b16 %v5337
  %v5585 = vunpack.c.l.b16 %v5338
  %v5586 = vunpack.c.h.b16 %v5338
  %v5587 = vunpack.c.l.b16 %v5339
  %v5588 = vunpack.c.h.b16 %v5339
  %v5589 = vunpack.c.l.b16 %v5340
  %v5590 = vunpack.c.h.b16 %v5340
  %v5591 = vpack.c.b16 %v5553, %v5551
  %v5592 = vpack.c.b16 %v5554, %v5552
  %v5593 = vpack.c.b16 %v5557, %v5555
  %v5594 = vpack.c.b16 %v5558, %v5556
  %v5595 = vpack.c.b16 %v5561, %v5559
  %v5596 = vpack.c.b16 %v5562, %v5560
  %v5597 = vpack.c.b16 %v5565, %v5563
  %v5598 = vpack.c.b16 %v5566, %v5564
  %v5599 = vpack.c.b16 %v5569, %v5567
  %v5600 = vpack.c.b16 %v5570, %v5568
  %v5601 = vpack.c.b16 %v5573, %v5571
  %v5602 = vpack.c.b16 %v5574, %v5572
  %v5603 = vpack.c.b16 %v5577, %v5575
  %v5604 = vpack.c.b16 %v5578, %v5576
  %v5605 = vpack.c.b16 %v5581, %v5579
  %v5606 = vpack.c.b16 %v5582, %v5580
  %v5607 = vpack.c.b16 %v5585, %v5583
  %v5608 = vpack.c.b16 %v5586, %v5584
  %v5609 = vpack.c.b16 %v5589, %v5587
  %v5610 = vpack.c.b16 %v5590, %v5588
  %v5632 = vsel %vm3138, %v5528, 0
  %5634 = vmatprep.subr.bf16.mxu0 %v5592
  %5635 = vmatpush1.bf16.msra.mxu0 %v5591
  %5636 = vmatprep.subr.bf16.mxu0 %v5594
  %5637 = vmatpush1.bf16.msra.mxu0 %v5593
  %5638 = vmatprep.subr.bf16.mxu0 %v5596
  %5639 = vmatpush1.bf16.msra.mxu0 %v5595
  %5640 = vmatprep.subr.bf16.mxu0 %v5598
  %5641 = vmatpush1.bf16.msra.mxu0 %v5597
  %5642 = vmatprep.subr.bf16.mxu0 %v5600
  %5643 = vmatpush1.bf16.msra.mxu0 %v5599
  %5644 = vmatprep.subr.bf16.mxu0 %v5602
  %5645 = vmatpush1.bf16.msra.mxu0 %v5601
  %5646 = vmatprep.subr.bf16.mxu0 %v5604
  %5647 = vmatpush1.bf16.msra.mxu0 %v5603
  %5648 = vmatprep.subr.bf16.mxu0 %v5606
  %5649 = vmatpush1.bf16.msra.mxu0 %v5605
  %5650 = vmatprep.subr.bf16.mxu0 %v5608
  %5651 = vmatpush1.bf16.msra.mxu0 %v5607
  %5652 = vmatprep.subr.bf16.mxu0 %v5610
  %5653 = vmatpush1.bf16.msra.mxu0 %v5609
  %5654 = vmatprep.subr.bf16.mxu0 0
  %5655 = vmatpush1.bf16.msra.mxu0 0
  %5656 = vmatprep.subr.bf16.mxu0 0
  %5657 = vmatpush1.bf16.msra.mxu0 0
  %5658 = vmatprep.subr.bf16.mxu0 0
  %5659 = vmatpush1.bf16.msra.mxu0 0
  %5660 = vmatprep.subr.bf16.mxu0 0
  %5661 = vmatpush1.bf16.msra.mxu0 0
  %5662 = vmatprep.subr.bf16.mxu0 0
  %5663 = vmatpush1.bf16.msra.mxu0 0
  %5664 = vmatprep.subr.bf16.mxu0 0
  %5665 = vmatpush1.bf16.msra.mxu0 0
  %5666 = vmatprep.mubr.bf16.mxu0 %v5632
  %5667 = vmatmul.mubr.bf16.gmra.mrb[0].mxu0 %v5529
  %v5668 = vpop.f32.mrb[0].mxu0
  %v5669 = vadd.f32 %v5517, %v5668
  %v5670 = vpop.f32.mrb[0].mxu0
  %v5671 = vadd.f32 %v5519, %v5670
  %v5672 = vpop.f32.mrb[0].mxu0
  %v5673 = vadd.f32 %v5521, %v5672
  %v5674 = vpop.f32.mrb[0].mxu0
  %v5675 = vadd.f32 %v5523, %v5674
  %5676 = vdwg.mxu0
  %s5677 = scalar_lea.vmem %s7, 1280
  %v5678 = vld [vmem:[%s5677] sm:$0xff]
  %v5679 = vld [vmem:[%s5677 + $0x8] sm:$0xff]
  %v5680 = vld [vmem:[%s5677 + $0x10] sm:$0xff]
  %v5681 = vld [vmem:[%s5677 + $0x18] sm:$0xff]
  %v5682 = vld [vmem:[%s5677 + $0x20] sm:$0xff]
  %v5683 = vld [vmem:[%s5677 + $0x28] sm:$0xff]
  %v5684 = vld [vmem:[%s5677 + $0x30] sm:$0xff]
  %v5685 = vld [vmem:[%s5677 + $0x38] sm:$0xff]
  %v5686 = vld [vmem:[%s5677 + $0x40] sm:$0xff]
  %v5687 = vld [vmem:[%s5677 + $0x48] sm:$0xff]
  %v5688 = vld [vmem:[%s5677 + $0x50] sm:$0xff]
  %v5689 = vld [vmem:[%s5677 + $0x58] sm:$0xff]
  %v5690 = vld [vmem:[%s5677 + $0x60] sm:$0xff]
  %v5691 = vld [vmem:[%s5677 + $0x68] sm:$0xff]
  %v5692 = vld [vmem:[%s5677 + $0x70] sm:$0xff]
  %v5693 = vld [vmem:[%s5677 + $0x78] sm:$0xff]
  %v5694 = vld [vmem:[%s5677 + $0x80] sm:$0xff]
  %v5695 = vld [vmem:[%s5677 + $0x88] sm:$0xff]
  %v5696 = vld [vmem:[%s5677 + $0x90] sm:$0xff]
  %v5697 = vld [vmem:[%s5677 + $0x98] sm:$0xff]
  %v5698 = vrot.slane %v5316, 2
  %v5699 = vrot.slane %v5318, 2
  %v5700 = vsel %vm3358, %v5698, %v5699
  %v5701 = vrot.slane %v5317, 2
  %v5702 = vrot.slane %v5319, 2
  %v5703 = vsel %vm3358, %v5701, %v5702
  %5704 = vrot.lane.b32.xlu0 %v5700, 32
  %v5705 = vpop.permute.xlu0 %5704
  %5706 = vrot.lane.b32.xlu0 %v5703, 32
  %v5707 = vpop.permute.xlu0 %5706
  %v5708 = vsel %vm5376, %v5705, %v5707
  %v5730 = vunpack.c.l.b16 %v5678
  %v5731 = vunpack.c.h.b16 %v5678
  %v5732 = vunpack.c.l.b16 %v5679
  %v5733 = vunpack.c.h.b16 %v5679
  %v5734 = vunpack.c.l.b16 %v5680
  %v5735 = vunpack.c.h.b16 %v5680
  %v5736 = vunpack.c.l.b16 %v5681
  %v5737 = vunpack.c.h.b16 %v5681
  %v5738 = vunpack.c.l.b16 %v5682
  %v5739 = vunpack.c.h.b16 %v5682
  %v5740 = vunpack.c.l.b16 %v5683
  %v5741 = vunpack.c.h.b16 %v5683
  %v5742 = vunpack.c.l.b16 %v5684
  %v5743 = vunpack.c.h.b16 %v5684
  %v5744 = vunpack.c.l.b16 %v5685
  %v5745 = vunpack.c.h.b16 %v5685
  %v5746 = vunpack.c.l.b16 %v5686
  %v5747 = vunpack.c.h.b16 %v5686
  %v5748 = vunpack.c.l.b16 %v5687
  %v5749 = vunpack.c.h.b16 %v5687
  %v5750 = vunpack.c.l.b16 %v5688
  %v5751 = vunpack.c.h.b16 %v5688
  %v5752 = vunpack.c.l.b16 %v5689
  %v5753 = vunpack.c.h.b16 %v5689
  %v5754 = vunpack.c.l.b16 %v5690
  %v5755 = vunpack.c.h.b16 %v5690
  %v5756 = vunpack.c.l.b16 %v5691
  %v5757 = vunpack.c.h.b16 %v5691
  %v5758 = vunpack.c.l.b16 %v5692
  %v5759 = vunpack.c.h.b16 %v5692
  %v5760 = vunpack.c.l.b16 %v5693
  %v5761 = vunpack.c.h.b16 %v5693
  %v5762 = vunpack.c.l.b16 %v5694
  %v5763 = vunpack.c.h.b16 %v5694
  %v5764 = vunpack.c.l.b16 %v5695
  %v5765 = vunpack.c.h.b16 %v5695
  %v5766 = vunpack.c.l.b16 %v5696
  %v5767 = vunpack.c.h.b16 %v5696
  %v5768 = vunpack.c.l.b16 %v5697
  %v5769 = vunpack.c.h.b16 %v5697
  %v5770 = vpack.c.b16 %v5732, %v5730
  %v5771 = vpack.c.b16 %v5733, %v5731
  %v5772 = vpack.c.b16 %v5736, %v5734
  %v5773 = vpack.c.b16 %v5737, %v5735
  %v5774 = vpack.c.b16 %v5740, %v5738
  %v5775 = vpack.c.b16 %v5741, %v5739
  %v5776 = vpack.c.b16 %v5744, %v5742
  %v5777 = vpack.c.b16 %v5745, %v5743
  %v5778 = vpack.c.b16 %v5748, %v5746
  %v5779 = vpack.c.b16 %v5749, %v5747
  %v5780 = vpack.c.b16 %v5752, %v5750
  %v5781 = vpack.c.b16 %v5753, %v5751
  %v5782 = vpack.c.b16 %v5756, %v5754
  %v5783 = vpack.c.b16 %v5757, %v5755
  %v5784 = vpack.c.b16 %v5760, %v5758
  %v5785 = vpack.c.b16 %v5761, %v5759
  %v5786 = vpack.c.b16 %v5764, %v5762
  %v5787 = vpack.c.b16 %v5765, %v5763
  %v5788 = vpack.c.b16 %v5768, %v5766
  %v5789 = vpack.c.b16 %v5769, %v5767
  %v5811 = vsel %vm3138, %v5707, 0
  %5813 = vmatprep.subr.bf16.mxu0 %v5771
  %5814 = vmatpush1.bf16.msra.mxu0 %v5770
  %5815 = vmatprep.subr.bf16.mxu0 %v5773
  %5816 = vmatpush1.bf16.msra.mxu0 %v5772
  %5817 = vmatprep.subr.bf16.mxu0 %v5775
  %5818 = vmatpush1.bf16.msra.mxu0 %v5774
  %5819 = vmatprep.subr.bf16.mxu0 %v5777
  %5820 = vmatpush1.bf16.msra.mxu0 %v5776
  %5821 = vmatprep.subr.bf16.mxu0 %v5779
  %5822 = vmatpush1.bf16.msra.mxu0 %v5778
  %5823 = vmatprep.subr.bf16.mxu0 %v5781
  %5824 = vmatpush1.bf16.msra.mxu0 %v5780
  %5825 = vmatprep.subr.bf16.mxu0 %v5783
  %5826 = vmatpush1.bf16.msra.mxu0 %v5782
  %5827 = vmatprep.subr.bf16.mxu0 %v5785
  %5828 = vmatpush1.bf16.msra.mxu0 %v5784
  %5829 = vmatprep.subr.bf16.mxu0 %v5787
  %5830 = vmatpush1.bf16.msra.mxu0 %v5786
  %5831 = vmatprep.subr.bf16.mxu0 %v5789
  %5832 = vmatpush1.bf16.msra.mxu0 %v5788
  %5833 = vmatprep.subr.bf16.mxu0 0
  %5834 = vmatpush1.bf16.msra.mxu0 0
  %5835 = vmatprep.subr.bf16.mxu0 0
  %5836 = vmatpush1.bf16.msra.mxu0 0
  %5837 = vmatprep.subr.bf16.mxu0 0
  %5838 = vmatpush1.bf16.msra.mxu0 0
  %5839 = vmatprep.subr.bf16.mxu0 0
  %5840 = vmatpush1.bf16.msra.mxu0 0
  %5841 = vmatprep.subr.bf16.mxu0 0
  %5842 = vmatpush1.bf16.msra.mxu0 0
  %5843 = vmatprep.subr.bf16.mxu0 0
  %5844 = vmatpush1.bf16.msra.mxu0 0
  %5845 = vmatprep.mubr.bf16.mxu0 %v5811
  %5846 = vmatmul.mubr.bf16.gmra.mrb[0].mxu0 %v5708
  %v5847 = vpop.f32.mrb[0].mxu0
  %v5848 = vadd.f32 0.0, %v5847
  %v5849 = vpop.f32.mrb[0].mxu0
  %v5850 = vadd.f32 0.0, %v5849
  %v5851 = vpop.f32.mrb[0].mxu0
  %v5852 = vadd.f32 0.0, %v5851
  %v5853 = vpop.f32.mrb[0].mxu0
  %v5854 = vadd.f32 0.0, %v5853
  %5855 = vdwg.mxu0
  %v5856 = vadd.f32 %v5669, %v5848
  %v5857 = vadd.f32 %v5671, %v5850
  %v5858 = vadd.f32 %v5673, %v5852
  %v5859 = vadd.f32 %v5675, %v5854
  %s5860 = scalar_lea.vmem %s8, 4
  %v5861 = vld [vmem:[%s5860] sm:$0x3]
  %v5863 = vlaneseq
  %v5864 = vshrl.u32 %v5863, 7
  %v5865 = vsub.s32 0, %v5864
  %v5866 = vrot.slane %v5861, %v5865
  %v5867 = vlaneseq
  %v5868 = vshrl.u32 %v5867, 7
  %v5869 = vsub.s32 1, %v5868
  %v5870 = vrot.slane %v5861, %v5869
  %v5873 = vadd.f32 %v5856, %v5866
  %v5874 = vadd.f32 %v5857, %v5870
  %v5875 = vadd.f32 %v5858, %v5866
  %v5876 = vadd.f32 %v5859, %v5870
  %v5877 = vmax.f32 %v5873, 0.0
  %v5878 = vmax.f32 %v5874, 0.0
  %v5879 = vmax.f32 %v5875, 0.0
  %v5880 = vmax.f32 %v5876, 0.0
  %v5883 = vrot.slane %v5276, 2
  %v5884 = vrot.slane %v5277, 2
  %v5889 = vrot.slane %v5276, 6
  %v5890 = vrot.slane %v5277, 6
  %v5891 = vrot.slane %v5278, 6
  %v5892 = vsel %vm2945, %v5889, %v5891
  %v5893 = vrot.slane %v5279, 6
  %v5894 = vsel %vm2945, %v5890, %v5893
  %v5901 = vrot.slane %v5278, 4
  %v5902 = vrot.slane %v5279, 4
  %v5905 = vrot.slane %v5278, 2
  %v5906 = vrot.slane %v5279, 2
  %v5909 = vsel %vm1325, %v5883, %v5276
  %v5910 = vsel %vm1325, %v5884, %v5277
  %v5911 = vsel %vm2945, %v5909, %v5889
  %v5912 = vsel %vm2945, %v5910, %v5890
  %v5913 = vsel %vm2945, %v5891, %v5901
  %v5914 = vsel %vm2945, %v5893, %v5902
  %v5915 = vsel %vm2972, %v5913, %v5905
  %v5916 = vsel %vm2972, %v5914, %v5906
  %v5917 = vpack.c.bf16 %v5892, %v5911
  %v5918 = vpack.c.bf16 %v5894, %v5912
  %v5919 = vpack.c.bf16 %v5915, %v5915
  %v5920 = vpack.c.bf16 %v5916, %v5916
  %v5925 = vrot.slane %v5917, 1
  %v5926 = vrot.slane %v5919, 1
  %v5927 = vsel %vm3024, %v5925, %v5926
  %v5928 = vrot.slane %v5918, 1
  %v5929 = vrot.slane %v5920, 1
  %v5930 = vsel %vm3024, %v5928, %v5929
  %5931 = vrot.lane.b32.xlu0 %v5927, 32
  %v5932 = vpop.permute.xlu0 %5931
  %5933 = vrot.lane.b32.xlu0 %v5930, 32
  %v5934 = vpop.permute.xlu0 %5933
  %v5935 = vsel %vm5376, %v5932, %v5934
  %v5938 = vsel %vm3138, %v5934, 0
  %5940 = vmatprep.subr.bf16.mxu0 %v5440
  %5941 = vmatpush1.bf16.msra.mxu0 %v5439
  %5942 = vmatprep.subr.bf16.mxu0 %v5442
  %5943 = vmatpush1.bf16.msra.mxu0 %v5441
  %5944 = vmatprep.subr.bf16.mxu0 %v5444
  %5945 = vmatpush1.bf16.msra.mxu0 %v5443
  %5946 = vmatprep.subr.bf16.mxu0 %v5446
  %5947 = vmatpush1.bf16.msra.mxu0 %v5445
  %5948 = vmatprep.subr.bf16.mxu0 %v5448
  %5949 = vmatpush1.bf16.msra.mxu0 %v5447
  %5950 = vmatprep.subr.bf16.mxu0 %v5450
  %5951 = vmatpush1.bf16.msra.mxu0 %v5449
  %5952 = vmatprep.subr.bf16.mxu0 %v5452
  %5953 = vmatpush1.bf16.msra.mxu0 %v5451
  %5954 = vmatprep.subr.bf16.mxu0 %v5454
  %5955 = vmatpush1.bf16.msra.mxu0 %v5453
  %5956 = vmatprep.subr.bf16.mxu0 %v5456
  %5957 = vmatpush1.bf16.msra.mxu0 %v5455
  %5958 = vmatprep.subr.bf16.mxu0 %v5458
  %5959 = vmatpush1.bf16.msra.mxu0 %v5457
  %5960 = vmatprep.subr.bf16.mxu0 0
  %5961 = vmatpush1.bf16.msra.mxu0 0
  %5962 = vmatprep.subr.bf16.mxu0 0
  %5963 = vmatpush1.bf16.msra.mxu0 0
  %5964 = vmatprep.subr.bf16.mxu0 0
  %5965 = vmatpush1.bf16.msra.mxu0 0
  %5966 = vmatprep.subr.bf16.mxu0 0
  %5967 = vmatpush1.bf16.msra.mxu0 0
  %5968 = vmatprep.subr.bf16.mxu0 0
  %5969 = vmatpush1.bf16.msra.mxu0 0
  %5970 = vmatprep.subr.bf16.mxu0 0
  %5971 = vmatpush1.bf16.msra.mxu0 0
  %5972 = vmatprep.mubr.bf16.mxu0 %v5938
  %5973 = vmatmul.mubr.bf16.gmra.mrb[0].mxu0 %v5935
  %v5974 = vpop.f32.mrb[0].mxu0
  %v5975 = vadd.f32 0.0, %v5974
  %v5976 = vpop.f32.mrb[0].mxu0
  %v5977 = vadd.f32 0.0, %v5976
  %v5978 = vpop.f32.mrb[0].mxu0
  %v5979 = vadd.f32 0.0, %v5978
  %v5980 = vpop.f32.mrb[0].mxu0
  %v5981 = vadd.f32 0.0, %v5980
  %5982 = vdwg.mxu0
  %5983 = vrot.lane.b32.xlu0 %v5917, 32
  %v5984 = vpop.permute.xlu0 %5983
  %5985 = vrot.lane.b32.xlu0 %v5918, 32
  %v5986 = vpop.permute.xlu0 %5985
  %v5987 = vsel %vm5376, %v5984, %v5986
  %v5990 = vsel %vm3138, %v5986, 0
  %5992 = vmatprep.subr.bf16.mxu0 %v5592
  %5993 = vmatpush1.bf16.msra.mxu0 %v5591
  %5994 = vmatprep.subr.bf16.mxu0 %v5594
  %5995 = vmatpush1.bf16.msra.mxu0 %v5593
  %5996 = vmatprep.subr.bf16.mxu0 %v5596
  %5997 = vmatpush1.bf16.msra.mxu0 %v5595
  %5998 = vmatprep.subr.bf16.mxu0 %v5598
  %5999 = vmatpush1.bf16.msra.mxu0 %v5597
  %6000 = vmatprep.subr.bf16.mxu0 %v5600
  %6001 = vmatpush1.bf16.msra.mxu0 %v5599
  %6002 = vmatprep.subr.bf16.mxu0 %v5602
  %6003 = vmatpush1.bf16.msra.mxu0 %v5601
  %6004 = vmatprep.subr.bf16.mxu0 %v5604
  %6005 = vmatpush1.bf16.msra.mxu0 %v5603
  %6006 = vmatprep.subr.bf16.mxu0 %v5606
  %6007 = vmatpush1.bf16.msra.mxu0 %v5605
  %6008 = vmatprep.subr.bf16.mxu0 %v5608
  %6009 = vmatpush1.bf16.msra.mxu0 %v5607
  %6010 = vmatprep.subr.bf16.mxu0 %v5610
  %6011 = vmatpush1.bf16.msra.mxu0 %v5609
  %6012 = vmatprep.subr.bf16.mxu0 0
  %6013 = vmatpush1.bf16.msra.mxu0 0
  %6014 = vmatprep.subr.bf16.mxu0 0
  %6015 = vmatpush1.bf16.msra.mxu0 0
  %6016 = vmatprep.subr.bf16.mxu0 0
  %6017 = vmatpush1.bf16.msra.mxu0 0
  %6018 = vmatprep.subr.bf16.mxu0 0
  %6019 = vmatpush1.bf16.msra.mxu0 0
  %6020 = vmatprep.subr.bf16.mxu0 0
  %6021 = vmatpush1.bf16.msra.mxu0 0
  %6022 = vmatprep.subr.bf16.mxu0 0
  %6023 = vmatpush1.bf16.msra.mxu0 0
  %6024 = vmatprep.mubr.bf16.mxu0 %v5990
  %6025 = vmatmul.mubr.bf16.gmra.mrb[0].mxu0 %v5987
  %v6026 = vpop.f32.mrb[0].mxu0
  %v6027 = vadd.f32 %v5975, %v6026
  %v6028 = vpop.f32.mrb[0].mxu0
  %v6029 = vadd.f32 %v5977, %v6028
  %v6030 = vpop.f32.mrb[0].mxu0
  %v6031 = vadd.f32 %v5979, %v6030
  %v6032 = vpop.f32.mrb[0].mxu0
  %v6033 = vadd.f32 %v5981, %v6032
  %6034 = vdwg.mxu0
  %v6035 = vrot.slane %v5917, 2
  %v6036 = vrot.slane %v5919, 2
  %v6037 = vsel %vm3358, %v6035, %v6036
  %v6038 = vrot.slane %v5918, 2
  %v6039 = vrot.slane %v5920, 2
  %v6040 = vsel %vm3358, %v6038, %v6039
  %6041 = vrot.lane.b32.xlu0 %v6037, 32
  %v6042 = vpop.permute.xlu0 %6041
  %6043 = vrot.lane.b32.xlu0 %v6040, 32
  %v6044 = vpop.permute.xlu0 %6043
  %v6045 = vsel %vm5376, %v6042, %v6044
  %v6048 = vsel %vm3138, %v6044, 0
  %6050 = vmatprep.subr.bf16.mxu0 %v5771
  %6051 = vmatpush1.bf16.msra.mxu0 %v5770
  %6052 = vmatprep.subr.bf16.mxu0 %v5773
  %6053 = vmatpush1.bf16.msra.mxu0 %v5772
  %6054 = vmatprep.subr.bf16.mxu0 %v5775
  %6055 = vmatpush1.bf16.msra.mxu0 %v5774
  %6056 = vmatprep.subr.bf16.mxu0 %v5777
  %6057 = vmatpush1.bf16.msra.mxu0 %v5776
  %6058 = vmatprep.subr.bf16.mxu0 %v5779
  %6059 = vmatpush1.bf16.msra.mxu0 %v5778
  %6060 = vmatprep.subr.bf16.mxu0 %v5781
  %6061 = vmatpush1.bf16.msra.mxu0 %v5780
  %6062 = vmatprep.subr.bf16.mxu0 %v5783
  %6063 = vmatpush1.bf16.msra.mxu0 %v5782
  %6064 = vmatprep.subr.bf16.mxu0 %v5785
  %6065 = vmatpush1.bf16.msra.mxu0 %v5784
  %6066 = vmatprep.subr.bf16.mxu0 %v5787
  %6067 = vmatpush1.bf16.msra.mxu0 %v5786
  %6068 = vmatprep.subr.bf16.mxu0 %v5789
  %6069 = vmatpush1.bf16.msra.mxu0 %v5788
  %6070 = vmatprep.subr.bf16.mxu0 0
  %6071 = vmatpush1.bf16.msra.mxu0 0
  %6072 = vmatprep.subr.bf16.mxu0 0
  %6073 = vmatpush1.bf16.msra.mxu0 0
  %6074 = vmatprep.subr.bf16.mxu0 0
  %6075 = vmatpush1.bf16.msra.mxu0 0
  %6076 = vmatprep.subr.bf16.mxu0 0
  %6077 = vmatpush1.bf16.msra.mxu0 0
  %6078 = vmatprep.subr.bf16.mxu0 0
  %6079 = vmatpush1.bf16.msra.mxu0 0
  %6080 = vmatprep.subr.bf16.mxu0 0
  %6081 = vmatpush1.bf16.msra.mxu0 0
  %6082 = vmatprep.mubr.bf16.mxu0 %v6048
  %6083 = vmatmul.mubr.bf16.gmra.mrb[0].mxu0 %v6045
  %v6084 = vpop.f32.mrb[0].mxu0
  %v6085 = vadd.f32 0.0, %v6084
  %v6086 = vpop.f32.mrb[0].mxu0
  %v6087 = vadd.f32 0.0, %v6086
  %v6088 = vpop.f32.mrb[0].mxu0
  %v6089 = vadd.f32 0.0, %v6088
  %v6090 = vpop.f32.mrb[0].mxu0
  %v6091 = vadd.f32 0.0, %v6090
  %6092 = vdwg.mxu0
  %v6093 = vadd.f32 %v6027, %v6085
  %v6094 = vadd.f32 %v6029, %v6087
  %v6095 = vadd.f32 %v6031, %v6089
  %v6096 = vadd.f32 %v6033, %v6091
  %v6097 = vadd.f32 %v6093, %v5866
  %v6098 = vadd.f32 %v6094, %v5870
  %v6099 = vadd.f32 %v6095, %v5866
  %v6100 = vadd.f32 %v6096, %v5870
  %v6101 = vmax.f32 %v6097, 0.0
  %v6102 = vmax.f32 %v6098, 0.0
  %v6103 = vmax.f32 %v6099, 0.0
  %v6104 = vmax.f32 %v6100, 0.0
  %s6105 = scalar_lea.vmem %s9, 4
  %v6106 = vld [vmem:[%s6105] sm:$0x3]
  %s6107 = scalar_lea.vmem %s10, 4
  %v6108 = vld [vmem:[%s6107] sm:$0x3]
  %v6109 = vadd.f32 %v5877, %v5879
  %v6110 = vadd.f32 %v6109, %v6101
  %v6111 = vadd.f32 %v6110, %v6103
  %v6112 = vrot.slane %v6111, 4
  %v6113 = vadd.f32 %v6111, %v6112
  %v6114 = vrot.slane %v6113, 2
  %v6115 = vadd.f32 %v6113, %v6114
  %v6116 = vrot.slane %v6115, 1
  %v6117 = vadd.f32 %v6115, %v6116
  %v6118 = vsel %vm3138, %v5878, 0.0
  %v6119 = vsel %vm3138, %v5880, 0.0
  %v6120 = vadd.f32 %v6118, %v6119
  %v6121 = vsel %vm3138, %v6102, 0.0
  %v6122 = vadd.f32 %v6120, %v6121
  %v6123 = vsel %vm3138, %v6104, 0.0
  %v6124 = vadd.f32 %v6122, %v6123
  %v6125 = vrot.slane %v6124, 4
  %v6126 = vadd.f32 %v6124, %v6125
  %v6127 = vrot.slane %v6126, 2
  %v6128 = vadd.f32 %v6126, %v6127
  %v6129 = vrot.slane %v6128, 1
  %v6130 = vadd.f32 %v6128, %v6129
  %v6131 = vmul.f32 %v5877, %v5877
  %v6132 = vmul.f32 %v5878, %v5878
  %v6133 = vmul.f32 %v5879, %v5879
  %v6134 = vmul.f32 %v5880, %v5880
  %v6135 = vmul.f32 %v6101, %v6101
  %v6136 = vmul.f32 %v6102, %v6102
  %v6137 = vmul.f32 %v6103, %v6103
  %v6138 = vmul.f32 %v6104, %v6104
  %v6139 = vadd.f32 %v6131, %v6133
  %v6140 = vadd.f32 %v6139, %v6135
  %v6141 = vadd.f32 %v6140, %v6137
  %v6142 = vrot.slane %v6141, 4
  %v6143 = vadd.f32 %v6141, %v6142
  %v6144 = vrot.slane %v6143, 2
  %v6145 = vadd.f32 %v6143, %v6144
  %v6146 = vrot.slane %v6145, 1
  %v6147 = vadd.f32 %v6145, %v6146
  %v6148 = vsel %vm3138, %v6132, 0.0
  %v6149 = vsel %vm3138, %v6134, 0.0
  %v6150 = vadd.f32 %v6148, %v6149
  %v6151 = vsel %vm3138, %v6136, 0.0
  %v6152 = vadd.f32 %v6150, %v6151
  %v6153 = vsel %vm3138, %v6138, 0.0
  %v6154 = vadd.f32 %v6152, %v6153
  %v6155 = vrot.slane %v6154, 4
  %v6156 = vadd.f32 %v6154, %v6155
  %v6157 = vrot.slane %v6156, 2
  %v6158 = vadd.f32 %v6156, %v6157
  %v6159 = vrot.slane %v6158, 1
  %v6160 = vadd.f32 %v6158, %v6159
  %v6161 = vsel %vm1325, %v6117, %v6147
  %v6162 = vsel %vm1325, %v6130, %v6160
  %v6164 = vsel %vm3138, %v6162, 0
  %6166 = vmatprep.subr.mxu0 0.0
  %6167 = vmatpush1.msra.mxu0 %v3767
  %6168 = vmatprep.subr.mxu0 0.0
  %6169 = vmatpush1.msra.mxu0 %v3768
  %6170 = vmatprep.subr.mxu0 0.0
  %6171 = vmatpush1.msra.mxu0 %v3769
  %6172 = vmatprep.subr.mxu0 0.0
  %6173 = vmatpush1.msra.mxu0 %v3770
  %6174 = vmatprep.subr.mxu0 0.0
  %6175 = vmatpush1.msra.mxu0 %v3771
  %6176 = vmatprep.subr.mxu0 0.0
  %6177 = vmatpush1.msra.mxu0 %v3772
  %6178 = vmatprep.subr.mxu0 0.0
  %6179 = vmatpush1.msra.mxu0 %v3773
  %6180 = vmatprep.subr.mxu0 0.0
  %6181 = vmatpush1.msra.mxu0 %v3774
  %6182 = vmatprep.subr.mxu0 0.0
  %6183 = vmatpush1.msra.mxu0 %v3775
  %6184 = vmatprep.subr.mxu0 0.0
  %6185 = vmatpush1.msra.mxu0 %v3776
  %6186 = vmatprep.subr.mxu0 0.0
  %6187 = vmatpush1.msra.mxu0 %v3777
  %6188 = vmatprep.subr.mxu0 0.0
  %6189 = vmatpush1.msra.mxu0 %v3778
  %6190 = vmatprep.subr.mxu0 0.0
  %6191 = vmatpush1.msra.mxu0 %v3779
  %6192 = vmatprep.subr.mxu0 0.0
  %6193 = vmatpush1.msra.mxu0 %v3780
  %6194 = vmatprep.subr.mxu0 0.0
  %6195 = vmatpush1.msra.mxu0 %v3781
  %6196 = vmatprep.subr.mxu0 0.0
  %6197 = vmatpush1.msra.mxu0 %v3782
  %6198 = vmatprep.subr.mxu0 0.0
  %6199 = vmatpush1.msra.mxu0 %v3783
  %6200 = vmatprep.subr.mxu0 0.0
  %6201 = vmatpush1.msra.mxu0 %v3784
  %6202 = vmatprep.subr.mxu0 0.0
  %6203 = vmatpush1.msra.mxu0 %v3785
  %6204 = vmatprep.subr.mxu0 0.0
  %6205 = vmatpush1.msra.mxu0 %v3786
  %6206 = vmatprep.subr.mxu0 0.0
  %6207 = vmatpush1.msra.mxu0 0.0
  %6208 = vmatprep.subr.mxu0 0.0
  %6209 = vmatpush1.msra.mxu0 0.0
  %6210 = vmatprep.subr.mxu0 0.0
  %6211 = vmatpush1.msra.mxu0 0.0
  %6212 = vmatprep.subr.mxu0 0.0
  %6213 = vmatpush1.msra.mxu0 0.0
  %6214 = vmatprep.subr.mxu0 0.0
  %6215 = vmatpush1.msra.mxu0 0.0
  %6216 = vmatprep.subr.mxu0 0.0
  %6217 = vmatpush1.msra.mxu0 0.0
  %6218 = vmatprep.subr.mxu0 0.0
  %6219 = vmatpush1.msra.mxu0 0.0
  %6220 = vmatprep.subr.mxu0 0.0
  %6221 = vmatpush1.msra.mxu0 0.0
  %6222 = vmatprep.subr.mxu0 0.0
  %6223 = vmatpush1.msra.mxu0 0.0
  %6224 = vmatprep.subr.mxu0 0.0
  %6225 = vmatpush1.msra.mxu0 0.0
  %6226 = vmatprep.subr.mxu0 0.0
  %6227 = vmatpush1.msra.mxu0 0.0
  %6228 = vmatprep.subr.mxu0 0.0
  %6229 = vmatpush1.msra.mxu0 0.0
  %6230 = vmatprep.mubr.f32.mxu0 %v6164
  %6231 = vmatmul.mubr.f32.gmra.mrb[0].mxu0 %v6161
  %v6232 = vpop.f32.mrb[0].mxu0
  %v6233 = vadd.f32 0.0, %v6232
  %v6234 = vpop.f32.mrb[0].mxu0
  %6235 = vdwg.mxu0
  %v6237 = vsel %vm3917, %v6233, 0
  %6239 = vmatprep.subr.mxu0 %v3924
  %6240 = vmatpush1.msra.mxu0 %v3922
  %6241 = vmatprep.subr.mxu0 0.0
  %6242 = vmatpush1.msra.mxu0 0.0
  %6243 = vmatprep.subr.mxu0 0.0
  %6244 = vmatpush1.msra.mxu0 0.0
  %6245 = vmatprep.subr.mxu0 0.0
  %6246 = vmatpush1.msra.mxu0 0.0
  %6247 = vmatprep.subr.mxu0 0.0
  %6248 = vmatpush1.msra.mxu0 0.0
  %6249 = vmatprep.subr.mxu0 0.0
  %6250 = vmatpush1.msra.mxu0 0.0
  %6251 = vmatprep.subr.mxu0 0.0
  %6252 = vmatpush1.msra.mxu0 0.0
  %6253 = vmatprep.subr.mxu0 0.0
  %6254 = vmatpush1.msra.mxu0 0.0
  %6255 = vmatprep.subr.mxu0 0.0
  %6256 = vmatpush1.msra.mxu0 0.0
  %6257 = vmatprep.subr.mxu0 0.0
  %6258 = vmatpush1.msra.mxu0 0.0
  %6259 = vmatprep.subr.mxu0 0.0
  %6260 = vmatpush1.msra.mxu0 0.0
  %6261 = vmatprep.subr.mxu0 0.0
  %6262 = vmatpush1.msra.mxu0 0.0
  %6263 = vmatprep.subr.mxu0 0.0
  %6264 = vmatpush1.msra.mxu0 0.0
  %6265 = vmatprep.subr.mxu0 0.0
  %6266 = vmatpush1.msra.mxu0 0.0
  %6267 = vmatprep.subr.mxu0 0.0
  %6268 = vmatpush1.msra.mxu0 0.0
  %6269 = vmatprep.subr.mxu0 0.0
  %6270 = vmatpush1.msra.mxu0 0.0
  %6271 = vmatprep.subr.mxu0 0.0
  %6272 = vmatpush1.msra.mxu0 0.0
  %6273 = vmatprep.subr.mxu0 0.0
  %6274 = vmatpush1.msra.mxu0 0.0
  %6275 = vmatprep.subr.mxu0 0.0
  %6276 = vmatpush1.msra.mxu0 0.0
  %6277 = vmatprep.subr.mxu0 0.0
  %6278 = vmatpush1.msra.mxu0 0.0
  %6279 = vmatprep.subr.mxu0 0.0
  %6280 = vmatpush1.msra.mxu0 0.0
  %6281 = vmatprep.subr.mxu0 0.0
  %6282 = vmatpush1.msra.mxu0 0.0
  %6283 = vmatprep.subr.mxu0 0.0
  %6284 = vmatpush1.msra.mxu0 0.0
  %6285 = vmatprep.subr.mxu0 0.0
  %6286 = vmatpush1.msra.mxu0 0.0
  %6287 = vmatprep.subr.mxu0 0.0
  %6288 = vmatpush1.msra.mxu0 0.0
  %6289 = vmatprep.subr.mxu0 0.0
  %6290 = vmatpush1.msra.mxu0 0.0
  %6291 = vmatprep.subr.mxu0 0.0
  %6292 = vmatpush1.msra.mxu0 0.0
  %6293 = vmatprep.subr.mxu0 0.0
  %6294 = vmatpush1.msra.mxu0 0.0
  %6295 = vmatprep.subr.mxu0 0.0
  %6296 = vmatpush1.msra.mxu0 0.0
  %6297 = vmatprep.subr.mxu0 0.0
  %6298 = vmatpush1.msra.mxu0 0.0
  %6299 = vmatprep.subr.mxu0 0.0
  %6300 = vmatpush1.msra.mxu0 0.0
  %6301 = vmatprep.subr.mxu0 0.0
  %6302 = vmatpush1.msra.mxu0 0.0
  %6303 = vmatprep.mubr.f32.mxu0 0.0
  %6304 = vmatmul.mubr.f32.gmra.mrb[0].mxu0 %v6237
  %v6305 = vpop.f32.mrb[0].mxu0
  %v6306 = vadd.f32 0.0, %v6305
  %v6307 = vpop.f32.mrb[0].mxu0
  %v6308 = vadd.f32 0.0, %v6307
  %6309 = vdwg.mxu0
  %v6310 = vmul.f32 %v6306, %v1757
  %v6311 = vmul.f32 %v6308, %v1757
  %v6312 = vmul.f32 %v6310, %v6310
  %v6313 = vmul.f32 %v6311, %v6311
  %v6316 = vrot.slane %v6312, 7
  %v6317 = vrot.slane %v6313, 7
  %v6320 = vsub.f32 %v6310, %v6316
  %v6321 = vsub.f32 %v6311, %v6317
  %v6322 = vmax.f32 %v6320, 0.0
  %v6323 = vmax.f32 %v6321, 0.0
  %v6324 = vadd.f32 %v6322, 1e-05
  %v6325 = vadd.f32 %v6323, 1e-05
  %v6326 = vrsqrt.pop %v6324
  %v6327 = vrsqrt.pop %v6325
  %v6328 = vlaneseq
  %v6329 = vshrl.u32 %v6328, 7
  %v6330 = vsub.s32 0, %v6329
  %v6331 = vrot.slane %v6310, %v6330
  %v6332 = vlaneseq
  %v6333 = vshrl.u32 %v6332, 7
  %v6334 = vsub.s32 0, %v6333
  %v6335 = vrot.slane %v6311, %v6334
  %v6336 = vsub.f32 %v5877, %v6331
  %v6337 = vsub.f32 %v5878, %v6335
  %v6338 = vsub.f32 %v5879, %v6331
  %v6339 = vsub.f32 %v5880, %v6335
  %v6340 = vsub.f32 %v6101, %v6331
  %v6341 = vsub.f32 %v6102, %v6335
  %v6342 = vsub.f32 %v6103, %v6331
  %v6343 = vsub.f32 %v6104, %v6335
  %v6345 = vlaneseq
  %v6346 = vshrl.u32 %v6345, 7
  %v6347 = vsub.s32 0, %v6346
  %v6348 = vrot.slane %v6106, %v6347
  %v6349 = vlaneseq
  %v6350 = vshrl.u32 %v6349, 7
  %v6351 = vsub.s32 1, %v6350
  %v6352 = vrot.slane %v6106, %v6351
  %v6355 = vmul.f32 %v6326, %v6348
  %v6356 = vmul.f32 %v6327, %v6352
  %v6357 = vlaneseq
  %v6358 = vshrl.u32 %v6357, 7
  %v6359 = vsub.s32 1, %v6358
  %v6360 = vrot.slane %v6355, %v6359
  %v6361 = vlaneseq
  %v6362 = vshrl.u32 %v6361, 7
  %v6363 = vsub.s32 1, %v6362
  %v6364 = vrot.slane %v6356, %v6363
  %v6365 = vmul.f32 %v6336, %v6360
  %v6366 = vmul.f32 %v6337, %v6364
  %v6367 = vmul.f32 %v6338, %v6360
  %v6368 = vmul.f32 %v6339, %v6364
  %v6369 = vmul.f32 %v6340, %v6360
  %v6370 = vmul.f32 %v6341, %v6364
  %v6371 = vmul.f32 %v6342, %v6360
  %v6372 = vmul.f32 %v6343, %v6364
  %v6374 = vlaneseq
  %v6375 = vshrl.u32 %v6374, 7
  %v6376 = vsub.s32 0, %v6375
  %v6377 = vrot.slane %v6108, %v6376
  %v6378 = vlaneseq
  %v6379 = vshrl.u32 %v6378, 7
  %v6380 = vsub.s32 1, %v6379
  %v6381 = vrot.slane %v6108, %v6380
  %v6384 = vadd.f32 %v6365, %v6377
  %v6385 = vadd.f32 %v6366, %v6381
  %v6386 = vadd.f32 %v6367, %v6377
  %v6387 = vadd.f32 %v6368, %v6381
  %v6388 = vadd.f32 %v6369, %v6377
  %v6389 = vadd.f32 %v6370, %v6381
  %v6390 = vadd.f32 %v6371, %v6377
  %v6391 = vadd.f32 %v6372, %v6381
  %6392 = vrot.lane.b32.xlu0 %v4071, 32
  %v6393 = vpop.permute.xlu0 %6392
  %6394 = vrot.lane.b32.xlu0 %v4072, 32
  %v6395 = vpop.permute.xlu0 %6394
  %6396 = vrot.lane.b32.xlu0 %v4073, 32
  %v6397 = vpop.permute.xlu0 %6396
  %6398 = vrot.lane.b32.xlu0 %v4074, 32
  %v6399 = vpop.permute.xlu0 %6398
  %6400 = vrot.lane.b32.xlu0 %v4075, 32
  %v6401 = vpop.permute.xlu0 %6400
  %6402 = vrot.lane.b32.xlu0 %v4076, 32
  %v6403 = vpop.permute.xlu0 %6402
  %6404 = vrot.lane.b32.xlu0 %v4077, 32
  %v6405 = vpop.permute.xlu0 %6404
  %6406 = vrot.lane.b32.xlu0 %v4078, 32
  %v6407 = vpop.permute.xlu0 %6406
  %v6408 = vsel %vm3138, %v6393, %v6395
  %v6409 = vsel %vm3138, %v6397, %v6399
  %v6410 = vsel %vm3138, %v6401, %v6403
  %v6411 = vsel %vm3138, %v6405, %v6407
  %6420 = vrot.lane.b32.xlu0 %v5227, 64
  %v6421 = vpop.permute.xlu0 %6420
  %6422 = vrot.lane.b32.xlu0 %v5228, 64
  %v6423 = vpop.permute.xlu0 %6422
  %6424 = vrot.lane.b32.xlu0 %v5229, 64
  %v6425 = vpop.permute.xlu0 %6424
  %6426 = vrot.lane.b32.xlu0 %v5230, 64
  %v6427 = vpop.permute.xlu0 %6426
  %6428 = vrot.lane.b32.xlu0 %v5231, 64
  %v6429 = vpop.permute.xlu0 %6428
  %6430 = vrot.lane.b32.xlu0 %v5232, 64
  %v6431 = vpop.permute.xlu0 %6430
  %6432 = vrot.lane.b32.xlu0 %v5233, 64
  %v6433 = vpop.permute.xlu0 %6432
  %6434 = vrot.lane.b32.xlu0 %v5234, 64
  %v6435 = vpop.permute.xlu0 %6434
  %v6436 = vsel %vm786, %v6421, %v6423
  %v6437 = vsel %vm786, %v6425, %v6427
  %v6438 = vsel %vm786, %v6429, %v6431
  %v6439 = vsel %vm786, %v6433, %v6435
  %6456 = vrot.lane.b32.xlu0 %v6384, 96
  %v6457 = vpop.permute.xlu0 %6456
  %6458 = vrot.lane.b32.xlu0 %v6385, 96
  %v6459 = vpop.permute.xlu0 %6458
  %6460 = vrot.lane.b32.xlu0 %v6386, 96
  %v6461 = vpop.permute.xlu0 %6460
  %6462 = vrot.lane.b32.xlu0 %v6387, 96
  %v6463 = vpop.permute.xlu0 %6462
  %6464 = vrot.lane.b32.xlu0 %v6388, 96
  %v6465 = vpop.permute.xlu0 %6464
  %6466 = vrot.lane.b32.xlu0 %v6389, 96
  %v6467 = vpop.permute.xlu0 %6466
  %6468 = vrot.lane.b32.xlu0 %v6390, 96
  %v6469 = vpop.permute.xlu0 %6468
  %6470 = vrot.lane.b32.xlu0 %v6391, 96
  %v6471 = vpop.permute.xlu0 %6470
  %v6472 = vsel %vm5259, %v6457, %v6459
  %v6473 = vsel %vm5259, %v6461, %v6463
  %v6474 = vsel %vm5259, %v6465, %v6467
  %v6475 = vsel %vm5259, %v6469, %v6471
  %v6484 = vsel %vm3138, %v1941, %v6393
  %v6485 = vsel %vm3138, %v1946, %v6397
  %v6486 = vsel %vm3138, %v1951, %v6401
  %v6487 = vsel %vm3138, %v1956, %v6405
  %v6488 = vsel %vm786, %v6408, %v6421
  %v6489 = vsel %vm786, %v6409, %v6425
  %v6490 = vsel %vm786, %v6410, %v6429
  %v6491 = vsel %vm786, %v6411, %v6433
  %v6492 = vsel %vm5259, %v6436, %v6457
  %v6493 = vsel %vm5259, %v6437, %v6461
  %v6494 = vsel %vm5259, %v6438, %v6465
  %v6495 = vsel %vm5259, %v6439, %v6469
  %v6496 = vpack.c.bf16 %v1945, %v1940
  %v6497 = vpack.c.bf16 %v6485, %v6484
  %v6498 = vpack.c.bf16 %v6489, %v6488
  %v6499 = vpack.c.bf16 %v6493, %v6492
  %v6500 = vpack.c.bf16 %v6473, %v6472
  %v6501 = vpack.c.bf16 %v1955, %v1950
  %v6502 = vpack.c.bf16 %v6487, %v6486
  %v6503 = vpack.c.bf16 %v6491, %v6490
  %v6504 = vpack.c.bf16 %v6495, %v6494
  %v6505 = vpack.c.bf16 %v6475, %v6474
  %v6506 = vld [vmem:[%s11] sm:$0xff]
  %v6507 = vld [vmem:[%s11 + $0x8] sm:$0xff]
  %v6508 = vld [vmem:[%s11 + $0x10] sm:$0xf]
  %v6509 = vld [vmem:[%s11 + $0x14] sm:$0xff]
  %v6510 = vld [vmem:[%s11 + $0x1c] sm:$0xff]
  %v6511 = vld [vmem:[%s11 + $0x24] sm:$0xf]
  %v6512 = vld [vmem:[%s11 + $0x28] sm:$0xff]
  %v6513 = vld [vmem:[%s11 + $0x30] sm:$0xff]
  %v6514 = vld [vmem:[%s11 + $0x38] sm:$0xf]
  %v6515 = vld [vmem:[%s11 + $0x3c] sm:$0xff]
  %v6516 = vld [vmem:[%s11 + $0x44] sm:$0xff]
  %v6517 = vld [vmem:[%s11 + $0x4c] sm:$0xf]
  %v6518 = vld [vmem:[%s11 + $0x50] sm:$0xff]
  %v6519 = vld [vmem:[%s11 + $0x58] sm:$0xff]
  %v6520 = vld [vmem:[%s11 + $0x60] sm:$0xf]
  %v6521 = vld [vmem:[%s11 + $0x64] sm:$0xff]
  %v6522 = vld [vmem:[%s11 + $0x6c] sm:$0xff]
  %v6523 = vld [vmem:[%s11 + $0x74] sm:$0xf]
  %v6524 = vld [vmem:[%s11 + $0x78] sm:$0xff]
  %v6525 = vld [vmem:[%s11 + $0x80] sm:$0xff]
  %v6526 = vld [vmem:[%s11 + $0x88] sm:$0xf]
  %v6527 = vld [vmem:[%s11 + $0x8c] sm:$0xff]
  %v6528 = vld [vmem:[%s11 + $0x94] sm:$0xff]
  %v6529 = vld [vmem:[%s11 + $0x9c] sm:$0xf]
  %v6530 = vld [vmem:[%s11 + $0xa0] sm:$0xff]
  %v6531 = vld [vmem:[%s11 + $0xa8] sm:$0xff]
  %v6532 = vld [vmem:[%s11 + $0xb0] sm:$0xf]
  %v6533 = vld [vmem:[%s11 + $0xb4] sm:$0xff]
  %v6534 = vld [vmem:[%s11 + $0xbc] sm:$0xff]
  %v6535 = vld [vmem:[%s11 + $0xc4] sm:$0xf]
  %v6536 = vld [vmem:[%s11 + $0xc8] sm:$0xff]
  %v6537 = vld [vmem:[%s11 + $0xd0] sm:$0xff]
  %v6538 = vld [vmem:[%s11 + $0xd8] sm:$0xf]
  %v6539 = vld [vmem:[%s11 + $0xdc] sm:$0xff]
  %v6540 = vld [vmem:[%s11 + $0xe4] sm:$0xff]
  %v6541 = vld [vmem:[%s11 + $0xec] sm:$0xf]
  %v6542 = vld [vmem:[%s11 + $0xf0] sm:$0xff]
  %v6543 = vld [vmem:[%s11 + $0xf8] sm:$0xff]
  %v6544 = vld [vmem:[%s11 + $0x100] sm:$0xf]
  %v6545 = vld [vmem:[%s11 + $0x104] sm:$0xff]
  %v6546 = vld [vmem:[%s11 + $0x10c] sm:$0xff]
  %v6547 = vld [vmem:[%s11 + $0x114] sm:$0xf]
  %v6548 = vld [vmem:[%s11 + $0x118] sm:$0xff]
  %v6549 = vld [vmem:[%s11 + $0x120] sm:$0xff]
  %v6550 = vld [vmem:[%s11 + $0x128] sm:$0xf]
  %v6551 = vld [vmem:[%s11 + $0x12c] sm:$0xff]
  %v6552 = vld [vmem:[%s11 + $0x134] sm:$0xff]
  %v6553 = vld [vmem:[%s11 + $0x13c] sm:$0xf]
  %v6554 = vld [vmem:[%s11 + $0x140] sm:$0xff]
  %v6555 = vld [vmem:[%s11 + $0x148] sm:$0xff]
  %v6556 = vld [vmem:[%s11 + $0x150] sm:$0xf]
  %v6557 = vld [vmem:[%s11 + $0x154] sm:$0xff]
  %v6558 = vld [vmem:[%s11 + $0x15c] sm:$0xff]
  %v6559 = vld [vmem:[%s11 + $0x164] sm:$0xf]
  %v6560 = vld [vmem:[%s11 + $0x168] sm:$0xff]
  %v6561 = vld [vmem:[%s11 + $0x170] sm:$0xff]
  %v6562 = vld [vmem:[%s11 + $0x178] sm:$0xf]
  %v6563 = vld [vmem:[%s11 + $0x17c] sm:$0xff]
  %v6564 = vld [vmem:[%s11 + $0x184] sm:$0xff]
  %v6565 = vld [vmem:[%s11 + $0x18c] sm:$0xf]
  %v6566 = vld [vmem:[%s11 + $0x190] sm:$0xff]
  %v6567 = vld [vmem:[%s11 + $0x198] sm:$0xff]
  %v6568 = vld [vmem:[%s11 + $0x1a0] sm:$0xf]
  %v6569 = vld [vmem:[%s11 + $0x1a4] sm:$0xff]
  %v6570 = vld [vmem:[%s11 + $0x1ac] sm:$0xff]
  %v6571 = vld [vmem:[%s11 + $0x1b4] sm:$0xf]
  %v6572 = vld [vmem:[%s11 + $0x1b8] sm:$0xff]
  %v6573 = vld [vmem:[%s11 + $0x1c0] sm:$0xff]
  %v6574 = vld [vmem:[%s11 + $0x1c8] sm:$0xf]
  %v6575 = vld [vmem:[%s11 + $0x1cc] sm:$0xff]
  %v6576 = vld [vmem:[%s11 + $0x1d4] sm:$0xff]
  %v6577 = vld [vmem:[%s11 + $0x1dc] sm:$0xf]
  %v6578 = vld [vmem:[%s11 + $0x1e0] sm:$0xff]
  %v6579 = vld [vmem:[%s11 + $0x1e8] sm:$0xff]
  %v6580 = vld [vmem:[%s11 + $0x1f0] sm:$0xf]
  %v6581 = vld [vmem:[%s11 + $0x1f4] sm:$0xff]
  %v6582 = vld [vmem:[%s11 + $0x1fc] sm:$0xff]
  %v6583 = vld [vmem:[%s11 + $0x204] sm:$0xf]
  %v6584 = vld [vmem:[%s11 + $0x208] sm:$0xff]
  %v6585 = vld [vmem:[%s11 + $0x210] sm:$0xff]
  %v6586 = vld [vmem:[%s11 + $0x218] sm:$0xf]
  %v6587 = vld [vmem:[%s11 + $0x21c] sm:$0xff]
  %v6588 = vld [vmem:[%s11 + $0x224] sm:$0xff]
  %v6589 = vld [vmem:[%s11 + $0x22c] sm:$0xf]
  %v6590 = vld [vmem:[%s11 + $0x230] sm:$0xff]
  %v6591 = vld [vmem:[%s11 + $0x238] sm:$0xff]
  %v6592 = vld [vmem:[%s11 + $0x240] sm:$0xf]
  %v6593 = vld [vmem:[%s11 + $0x244] sm:$0xff]
  %v6594 = vld [vmem:[%s11 + $0x24c] sm:$0xff]
  %v6595 = vld [vmem:[%s11 + $0x254] sm:$0xf]
  %v6596 = vld [vmem:[%s11 + $0x258] sm:$0xff]
  %v6597 = vld [vmem:[%s11 + $0x260] sm:$0xff]
  %v6598 = vld [vmem:[%s11 + $0x268] sm:$0xf]
  %v6599 = vld [vmem:[%s11 + $0x26c] sm:$0xff]
  %v6600 = vld [vmem:[%s11 + $0x274] sm:$0xff]
  %v6601 = vld [vmem:[%s11 + $0x27c] sm:$0xf]
  %v6602 = vld [vmem:[%s11 + $0x280] sm:$0xff]
  %v6603 = vld [vmem:[%s11 + $0x288] sm:$0xff]
  %v6604 = vld [vmem:[%s11 + $0x290] sm:$0xf]
  %v6605 = vld [vmem:[%s11 + $0x294] sm:$0xff]
  %v6606 = vld [vmem:[%s11 + $0x29c] sm:$0xff]
  %v6607 = vld [vmem:[%s11 + $0x2a4] sm:$0xf]
  %v6608 = vld [vmem:[%s11 + $0x2a8] sm:$0xff]
  %v6609 = vld [vmem:[%s11 + $0x2b0] sm:$0xff]
  %v6610 = vld [vmem:[%s11 + $0x2b8] sm:$0xf]
  %v6611 = vld [vmem:[%s11 + $0x2bc] sm:$0xff]
  %v6612 = vld [vmem:[%s11 + $0x2c4] sm:$0xff]
  %v6613 = vld [vmem:[%s11 + $0x2cc] sm:$0xf]
  %v6614 = vld [vmem:[%s11 + $0x2d0] sm:$0xff]
  %v6615 = vld [vmem:[%s11 + $0x2d8] sm:$0xff]
  %v6616 = vld [vmem:[%s11 + $0x2e0] sm:$0xf]
  %v6617 = vld [vmem:[%s11 + $0x2e4] sm:$0xff]
  %v6618 = vld [vmem:[%s11 + $0x2ec] sm:$0xff]
  %v6619 = vld [vmem:[%s11 + $0x2f4] sm:$0xf]
  %v6620 = vld [vmem:[%s11 + $0x2f8] sm:$0xff]
  %v6621 = vld [vmem:[%s11 + $0x300] sm:$0xff]
  %v6622 = vld [vmem:[%s11 + $0x308] sm:$0xf]
  %v6623 = vld [vmem:[%s11 + $0x30c] sm:$0xff]
  %v6624 = vld [vmem:[%s11 + $0x314] sm:$0xff]
  %v6625 = vld [vmem:[%s11 + $0x31c] sm:$0xf]
  %v6626 = vld [vmem:[%s11 + $0x320] sm:$0xff]
  %v6627 = vld [vmem:[%s11 + $0x328] sm:$0xff]
  %v6628 = vld [vmem:[%s11 + $0x330] sm:$0xf]
  %v6629 = vld [vmem:[%s11 + $0x334] sm:$0xff]
  %v6630 = vld [vmem:[%s11 + $0x33c] sm:$0xff]
  %v6631 = vld [vmem:[%s11 + $0x344] sm:$0xf]
  %v6632 = vld [vmem:[%s11 + $0x348] sm:$0xff]
  %v6633 = vld [vmem:[%s11 + $0x350] sm:$0xff]
  %v6634 = vld [vmem:[%s11 + $0x358] sm:$0xf]
  %v6635 = vld [vmem:[%s11 + $0x35c] sm:$0xff]
  %v6636 = vld [vmem:[%s11 + $0x364] sm:$0xff]
  %v6637 = vld [vmem:[%s11 + $0x36c] sm:$0xf]
  %v6638 = vld [vmem:[%s11 + $0x370] sm:$0xff]
  %v6639 = vld [vmem:[%s11 + $0x378] sm:$0xff]
  %v6640 = vld [vmem:[%s11 + $0x380] sm:$0xf]
  %v6641 = vld [vmem:[%s11 + $0x384] sm:$0xff]
  %v6642 = vld [vmem:[%s11 + $0x38c] sm:$0xff]
  %v6643 = vld [vmem:[%s11 + $0x394] sm:$0xf]
  %v6644 = vld [vmem:[%s11 + $0x398] sm:$0xff]
  %v6645 = vld [vmem:[%s11 + $0x3a0] sm:$0xff]
  %v6646 = vld [vmem:[%s11 + $0x3a8] sm:$0xf]
  %v6647 = vld [vmem:[%s11 + $0x3ac] sm:$0xff]
  %v6648 = vld [vmem:[%s11 + $0x3b4] sm:$0xff]
  %v6649 = vld [vmem:[%s11 + $0x3bc] sm:$0xf]
  %v6650 = vld [vmem:[%s11 + $0x3c0] sm:$0xff]
  %v6651 = vld [vmem:[%s11 + $0x3c8] sm:$0xff]
  %v6652 = vld [vmem:[%s11 + $0x3d0] sm:$0xf]
  %v6653 = vld [vmem:[%s11 + $0x3d4] sm:$0xff]
  %v6654 = vld [vmem:[%s11 + $0x3dc] sm:$0xff]
  %v6655 = vld [vmem:[%s11 + $0x3e4] sm:$0xf]
  %v6656 = vld [vmem:[%s11 + $0x3e8] sm:$0xff]
  %v6657 = vld [vmem:[%s11 + $0x3f0] sm:$0xff]
  %v6658 = vld [vmem:[%s11 + $0x3f8] sm:$0xf]
  %v6659 = vld [vmem:[%s11 + $0x3fc] sm:$0xff]
  %v6660 = vld [vmem:[%s11 + $0x404] sm:$0xff]
  %v6661 = vld [vmem:[%s11 + $0x40c] sm:$0xf]
  %v6662 = vld [vmem:[%s11 + $0x410] sm:$0xff]
  %v6663 = vld [vmem:[%s11 + $0x418] sm:$0xff]
  %v6664 = vld [vmem:[%s11 + $0x420] sm:$0xf]
  %v6665 = vld [vmem:[%s11 + $0x424] sm:$0xff]
  %v6666 = vld [vmem:[%s11 + $0x42c] sm:$0xff]
  %v6667 = vld [vmem:[%s11 + $0x434] sm:$0xf]
  %v6668 = vld [vmem:[%s11 + $0x438] sm:$0xff]
  %v6669 = vld [vmem:[%s11 + $0x440] sm:$0xff]
  %v6670 = vld [vmem:[%s11 + $0x448] sm:$0xf]
  %v6671 = vld [vmem:[%s11 + $0x44c] sm:$0xff]
  %v6672 = vld [vmem:[%s11 + $0x454] sm:$0xff]
  %v6673 = vld [vmem:[%s11 + $0x45c] sm:$0xf]
  %v6674 = vld [vmem:[%s11 + $0x460] sm:$0xff]
  %v6675 = vld [vmem:[%s11 + $0x468] sm:$0xff]
  %v6676 = vld [vmem:[%s11 + $0x470] sm:$0xf]
  %v6677 = vld [vmem:[%s11 + $0x474] sm:$0xff]
  %v6678 = vld [vmem:[%s11 + $0x47c] sm:$0xff]
  %v6679 = vld [vmem:[%s11 + $0x484] sm:$0xf]
  %v6680 = vld [vmem:[%s11 + $0x488] sm:$0xff]
  %v6681 = vld [vmem:[%s11 + $0x490] sm:$0xff]
  %v6682 = vld [vmem:[%s11 + $0x498] sm:$0xf]
  %v6683 = vld [vmem:[%s11 + $0x49c] sm:$0xff]
  %v6684 = vld [vmem:[%s11 + $0x4a4] sm:$0xff]
  %v6685 = vld [vmem:[%s11 + $0x4ac] sm:$0xf]
  %v6686 = vld [vmem:[%s11 + $0x4b0] sm:$0xff]
  %v6687 = vld [vmem:[%s11 + $0x4b8] sm:$0xff]
  %v6688 = vld [vmem:[%s11 + $0x4c0] sm:$0xf]
  %v6689 = vld [vmem:[%s11 + $0x4c4] sm:$0xff]
  %v6690 = vld [vmem:[%s11 + $0x4cc] sm:$0xff]
  %v6691 = vld [vmem:[%s11 + $0x4d4] sm:$0xf]
  %v6692 = vld [vmem:[%s11 + $0x4d8] sm:$0xff]
  %v6693 = vld [vmem:[%s11 + $0x4e0] sm:$0xff]
  %v6694 = vld [vmem:[%s11 + $0x4e8] sm:$0xf]
  %v6695 = vld [vmem:[%s11 + $0x4ec] sm:$0xff]
  %v6696 = vld [vmem:[%s11 + $0x4f4] sm:$0xff]
  %v6697 = vld [vmem:[%s11 + $0x4fc] sm:$0xf]
  %v6698 = vld [vmem:[%s11 + $0x500] sm:$0xff]
  %v6699 = vld [vmem:[%s11 + $0x508] sm:$0xff]
  %v6700 = vld [vmem:[%s11 + $0x510] sm:$0xf]
  %v6701 = vld [vmem:[%s11 + $0x514] sm:$0xff]
  %v6702 = vld [vmem:[%s11 + $0x51c] sm:$0xff]
  %v6703 = vld [vmem:[%s11 + $0x524] sm:$0xf]
  %v6704 = vld [vmem:[%s11 + $0x528] sm:$0xff]
  %v6705 = vld [vmem:[%s11 + $0x530] sm:$0xff]
  %v6706 = vld [vmem:[%s11 + $0x538] sm:$0xf]
  %v6707 = vld [vmem:[%s11 + $0x53c] sm:$0xff]
  %v6708 = vld [vmem:[%s11 + $0x544] sm:$0xff]
  %v6709 = vld [vmem:[%s11 + $0x54c] sm:$0xf]
  %v6710 = vld [vmem:[%s11 + $0x550] sm:$0xff]
  %v6711 = vld [vmem:[%s11 + $0x558] sm:$0xff]
  %v6712 = vld [vmem:[%s11 + $0x560] sm:$0xf]
  %v6713 = vld [vmem:[%s11 + $0x564] sm:$0xff]
  %v6714 = vld [vmem:[%s11 + $0x56c] sm:$0xff]
  %v6715 = vld [vmem:[%s11 + $0x574] sm:$0xf]
  %v6716 = vld [vmem:[%s11 + $0x578] sm:$0xff]
  %v6717 = vld [vmem:[%s11 + $0x580] sm:$0xff]
  %v6718 = vld [vmem:[%s11 + $0x588] sm:$0xf]
  %v6719 = vld [vmem:[%s11 + $0x58c] sm:$0xff]
  %v6720 = vld [vmem:[%s11 + $0x594] sm:$0xff]
  %v6721 = vld [vmem:[%s11 + $0x59c] sm:$0xf]
  %v6722 = vld [vmem:[%s11 + $0x5a0] sm:$0xff]
  %v6723 = vld [vmem:[%s11 + $0x5a8] sm:$0xff]
  %v6724 = vld [vmem:[%s11 + $0x5b0] sm:$0xf]
  %v6725 = vld [vmem:[%s11 + $0x5b4] sm:$0xff]
  %v6726 = vld [vmem:[%s11 + $0x5bc] sm:$0xff]
  %v6727 = vld [vmem:[%s11 + $0x5c4] sm:$0xf]
  %v6728 = vld [vmem:[%s11 + $0x5c8] sm:$0xff]
  %v6729 = vld [vmem:[%s11 + $0x5d0] sm:$0xff]
  %v6730 = vld [vmem:[%s11 + $0x5d8] sm:$0xf]
  %v6731 = vld [vmem:[%s11 + $0x5dc] sm:$0xff]
  %v6732 = vld [vmem:[%s11 + $0x5e4] sm:$0xff]
  %v6733 = vld [vmem:[%s11 + $0x5ec] sm:$0xf]
  %v6734 = vld [vmem:[%s11 + $0x5f0] sm:$0xff]
  %v6735 = vld [vmem:[%s11 + $0x5f8] sm:$0xff]
  %v6736 = vld [vmem:[%s11 + $0x600] sm:$0xf]
  %v6737 = vld [vmem:[%s11 + $0x604] sm:$0xff]
  %v6738 = vld [vmem:[%s11 + $0x60c] sm:$0xff]
  %v6739 = vld [vmem:[%s11 + $0x614] sm:$0xf]
  %v6740 = vld [vmem:[%s11 + $0x618] sm:$0xff]
  %v6741 = vld [vmem:[%s11 + $0x620] sm:$0xff]
  %v6742 = vld [vmem:[%s11 + $0x628] sm:$0xf]
  %v6743 = vld [vmem:[%s11 + $0x62c] sm:$0xff]
  %v6744 = vld [vmem:[%s11 + $0x634] sm:$0xff]
  %v6745 = vld [vmem:[%s11 + $0x63c] sm:$0xf]
  %v6746 = vld [vmem:[%s12] sm:$0x1f]
  %v6748 = vlaneseq
  %v6749 = vshrl.u32 %v6748, 7
  %v6750 = vsub.s32 0, %v6749
  %v6751 = vrot.slane %v6746, %v6750
  %v6752 = vlaneseq
  %v6753 = vshrl.u32 %v6752, 7
  %v6754 = vsub.s32 1, %v6753
  %v6755 = vrot.slane %v6746, %v6754
  %v6756 = vlaneseq
  %v6757 = vshrl.u32 %v6756, 7
  %v6758 = vsub.s32 2, %v6757
  %v6759 = vrot.slane %v6746, %v6758
  %v6760 = vlaneseq
  %v6761 = vshrl.u32 %v6760, 7
  %v6762 = vsub.s32 3, %v6761
  %v6763 = vrot.slane %v6746, %v6762
  %v6764 = vlaneseq
  %v6765 = vshrl.u32 %v6764, 7
  %v6766 = vsub.s32 4, %v6765
  %v6767 = vrot.slane %v6746, %v6766
  %v7013 = vunpack.c.l.b16 %v6506
  %v7014 = vunpack.c.h.b16 %v6506
  %v7015 = vunpack.c.l.b16 %v6507
  %v7016 = vunpack.c.h.b16 %v6507
  %v7017 = vunpack.c.l.b16 %v6508
  %v7018 = vunpack.c.l.b16 %v6509
  %v7019 = vunpack.c.h.b16 %v6509
  %v7020 = vunpack.c.l.b16 %v6510
  %v7021 = vunpack.c.h.b16 %v6510
  %v7022 = vunpack.c.l.b16 %v6511
  %v7023 = vunpack.c.l.b16 %v6512
  %v7024 = vunpack.c.h.b16 %v6512
  %v7025 = vunpack.c.l.b16 %v6513
  %v7026 = vunpack.c.h.b16 %v6513
  %v7027 = vunpack.c.l.b16 %v6514
  %v7028 = vunpack.c.l.b16 %v6515
  %v7029 = vunpack.c.h.b16 %v6515
  %v7030 = vunpack.c.l.b16 %v6516
  %v7031 = vunpack.c.h.b16 %v6516
  %v7032 = vunpack.c.l.b16 %v6517
  %v7033 = vunpack.c.l.b16 %v6518
  %v7034 = vunpack.c.h.b16 %v6518
  %v7035 = vunpack.c.l.b16 %v6519
  %v7036 = vunpack.c.h.b16 %v6519
  %v7037 = vunpack.c.l.b16 %v6520
  %v7038 = vunpack.c.l.b16 %v6521
  %v7039 = vunpack.c.h.b16 %v6521
  %v7040 = vunpack.c.l.b16 %v6522
  %v7041 = vunpack.c.h.b16 %v6522
  %v7042 = vunpack.c.l.b16 %v6523
  %v7043 = vunpack.c.l.b16 %v6524
  %v7044 = vunpack.c.h.b16 %v6524
  %v7045 = vunpack.c.l.b16 %v6525
  %v7046 = vunpack.c.h.b16 %v6525
  %v7047 = vunpack.c.l.b16 %v6526
  %v7048 = vunpack.c.l.b16 %v6527
  %v7049 = vunpack.c.h.b16 %v6527
  %v7050 = vunpack.c.l.b16 %v6528
  %v7051 = vunpack.c.h.b16 %v6528
  %v7052 = vunpack.c.l.b16 %v6529
  %v7053 = vunpack.c.l.b16 %v6530
  %v7054 = vunpack.c.h.b16 %v6530
  %v7055 = vunpack.c.l.b16 %v6531
  %v7056 = vunpack.c.h.b16 %v6531
  %v7057 = vunpack.c.l.b16 %v6532
  %v7058 = vunpack.c.l.b16 %v6533
  %v7059 = vunpack.c.h.b16 %v6533
  %v7060 = vunpack.c.l.b16 %v6534
  %v7061 = vunpack.c.h.b16 %v6534
  %v7062 = vunpack.c.l.b16 %v6535
  %v7063 = vunpack.c.l.b16 %v6536
  %v7064 = vunpack.c.h.b16 %v6536
  %v7065 = vunpack.c.l.b16 %v6537
  %v7066 = vunpack.c.h.b16 %v6537
  %v7067 = vunpack.c.l.b16 %v6538
  %v7068 = vunpack.c.l.b16 %v6539
  %v7069 = vunpack.c.h.b16 %v6539
  %v7070 = vunpack.c.l.b16 %v6540
  %v7071 = vunpack.c.h.b16 %v6540
  %v7072 = vunpack.c.l.b16 %v6541
  %v7073 = vunpack.c.l.b16 %v6542
  %v7074 = vunpack.c.h.b16 %v6542
  %v7075 = vunpack.c.l.b16 %v6543
  %v7076 = vunpack.c.h.b16 %v6543
  %v7077 = vunpack.c.l.b16 %v6544
  %v7078 = vunpack.c.l.b16 %v6545
  %v7079 = vunpack.c.h.b16 %v6545
  %v7080 = vunpack.c.l.b16 %v6546
  %v7081 = vunpack.c.h.b16 %v6546
  %v7082 = vunpack.c.l.b16 %v6547
  %v7083 = vunpack.c.l.b16 %v6548
  %v7084 = vunpack.c.h.b16 %v6548
  %v7085 = vunpack.c.l.b16 %v6549
  %v7086 = vunpack.c.h.b16 %v6549
  %v7087 = vunpack.c.l.b16 %v6550
  %v7088 = vunpack.c.l.b16 %v6551
  %v7089 = vunpack.c.h.b16 %v6551
  %v7090 = vunpack.c.l.b16 %v6552
  %v7091 = vunpack.c.h.b16 %v6552
  %v7092 = vunpack.c.l.b16 %v6553
  %v7093 = vunpack.c.l.b16 %v6554
  %v7094 = vunpack.c.h.b16 %v6554
  %v7095 = vunpack.c.l.b16 %v6555
  %v7096 = vunpack.c.h.b16 %v6555
  %v7097 = vunpack.c.l.b16 %v6556
  %v7098 = vunpack.c.l.b16 %v6557
  %v7099 = vunpack.c.h.b16 %v6557
  %v7100 = vunpack.c.l.b16 %v6558
  %v7101 = vunpack.c.h.b16 %v6558
  %v7102 = vunpack.c.l.b16 %v6559
  %v7103 = vunpack.c.l.b16 %v6560
  %v7104 = vunpack.c.h.b16 %v6560
  %v7105 = vunpack.c.l.b16 %v6561
  %v7106 = vunpack.c.h.b16 %v6561
  %v7107 = vunpack.c.l.b16 %v6562
  %v7108 = vunpack.c.l.b16 %v6563
  %v7109 = vunpack.c.h.b16 %v6563
  %v7110 = vunpack.c.l.b16 %v6564
  %v7111 = vunpack.c.h.b16 %v6564
  %v7112 = vunpack.c.l.b16 %v6565
  %v7113 = vunpack.c.l.b16 %v6566
  %v7114 = vunpack.c.h.b16 %v6566
  %v7115 = vunpack.c.l.b16 %v6567
  %v7116 = vunpack.c.h.b16 %v6567
  %v7117 = vunpack.c.l.b16 %v6568
  %v7118 = vunpack.c.l.b16 %v6569
  %v7119 = vunpack.c.h.b16 %v6569
  %v7120 = vunpack.c.l.b16 %v6570
  %v7121 = vunpack.c.h.b16 %v6570
  %v7122 = vunpack.c.l.b16 %v6571
  %v7123 = vunpack.c.l.b16 %v6572
  %v7124 = vunpack.c.h.b16 %v6572
  %v7125 = vunpack.c.l.b16 %v6573
  %v7126 = vunpack.c.h.b16 %v6573
  %v7127 = vunpack.c.l.b16 %v6574
  %v7128 = vunpack.c.l.b16 %v6575
  %v7129 = vunpack.c.h.b16 %v6575
  %v7130 = vunpack.c.l.b16 %v6576
  %v7131 = vunpack.c.h.b16 %v6576
  %v7132 = vunpack.c.l.b16 %v6577
  %v7133 = vunpack.c.l.b16 %v6578
  %v7134 = vunpack.c.h.b16 %v6578
  %v7135 = vunpack.c.l.b16 %v6579
  %v7136 = vunpack.c.h.b16 %v6579
  %v7137 = vunpack.c.l.b16 %v6580
  %v7138 = vunpack.c.l.b16 %v6581
  %v7139 = vunpack.c.h.b16 %v6581
  %v7140 = vunpack.c.l.b16 %v6582
  %v7141 = vunpack.c.h.b16 %v6582
  %v7142 = vunpack.c.l.b16 %v6583
  %v7143 = vunpack.c.l.b16 %v6584
  %v7144 = vunpack.c.h.b16 %v6584
  %v7145 = vunpack.c.l.b16 %v6585
  %v7146 = vunpack.c.h.b16 %v6585
  %v7147 = vunpack.c.l.b16 %v6586
  %v7148 = vunpack.c.l.b16 %v6587
  %v7149 = vunpack.c.h.b16 %v6587
  %v7150 = vunpack.c.l.b16 %v6588
  %v7151 = vunpack.c.h.b16 %v6588
  %v7152 = vunpack.c.l.b16 %v6589
  %v7153 = vunpack.c.l.b16 %v6590
  %v7154 = vunpack.c.h.b16 %v6590
  %v7155 = vunpack.c.l.b16 %v6591
  %v7156 = vunpack.c.h.b16 %v6591
  %v7157 = vunpack.c.l.b16 %v6592
  %v7158 = vunpack.c.l.b16 %v6593
  %v7159 = vunpack.c.h.b16 %v6593
  %v7160 = vunpack.c.l.b16 %v6594
  %v7161 = vunpack.c.h.b16 %v6594
  %v7162 = vunpack.c.l.b16 %v6595
  %v7163 = vunpack.c.l.b16 %v6596
  %v7164 = vunpack.c.h.b16 %v6596
  %v7165 = vunpack.c.l.b16 %v6597
  %v7166 = vunpack.c.h.b16 %v6597
  %v7167 = vunpack.c.l.b16 %v6598
  %v7168 = vunpack.c.l.b16 %v6599
  %v7169 = vunpack.c.h.b16 %v6599
  %v7170 = vunpack.c.l.b16 %v6600
  %v7171 = vunpack.c.h.b16 %v6600
  %v7172 = vunpack.c.l.b16 %v6601
  %v7173 = vunpack.c.l.b16 %v6602
  %v7174 = vunpack.c.h.b16 %v6602
  %v7175 = vunpack.c.l.b16 %v6603
  %v7176 = vunpack.c.h.b16 %v6603
  %v7177 = vunpack.c.l.b16 %v6604
  %v7178 = vunpack.c.l.b16 %v6605
  %v7179 = vunpack.c.h.b16 %v6605
  %v7180 = vunpack.c.l.b16 %v6606
  %v7181 = vunpack.c.h.b16 %v6606
  %v7182 = vunpack.c.l.b16 %v6607
  %v7183 = vunpack.c.l.b16 %v6608
  %v7184 = vunpack.c.h.b16 %v6608
  %v7185 = vunpack.c.l.b16 %v6609
  %v7186 = vunpack.c.h.b16 %v6609
  %v7187 = vunpack.c.l.b16 %v6610
  %v7188 = vunpack.c.l.b16 %v6611
  %v7189 = vunpack.c.h.b16 %v6611
  %v7190 = vunpack.c.l.b16 %v6612
  %v7191 = vunpack.c.h.b16 %v6612
  %v7192 = vunpack.c.l.b16 %v6613
  %v7193 = vunpack.c.l.b16 %v6614
  %v7194 = vunpack.c.h.b16 %v6614
  %v7195 = vunpack.c.l.b16 %v6615
  %v7196 = vunpack.c.h.b16 %v6615
  %v7197 = vunpack.c.l.b16 %v6616
  %v7198 = vunpack.c.l.b16 %v6617
  %v7199 = vunpack.c.h.b16 %v6617
  %v7200 = vunpack.c.l.b16 %v6618
  %v7201 = vunpack.c.h.b16 %v6618
  %v7202 = vunpack.c.l.b16 %v6619
  %v7203 = vunpack.c.l.b16 %v6620
  %v7204 = vunpack.c.h.b16 %v6620
  %v7205 = vunpack.c.l.b16 %v6621
  %v7206 = vunpack.c.h.b16 %v6621
  %v7207 = vunpack.c.l.b16 %v6622
  %v7208 = vunpack.c.l.b16 %v6623
  %v7209 = vunpack.c.h.b16 %v6623
  %v7210 = vunpack.c.l.b16 %v6624
  %v7211 = vunpack.c.h.b16 %v6624
  %v7212 = vunpack.c.l.b16 %v6625
  %v7213 = vunpack.c.l.b16 %v6626
  %v7214 = vunpack.c.h.b16 %v6626
  %v7215 = vunpack.c.l.b16 %v6627
  %v7216 = vunpack.c.h.b16 %v6627
  %v7217 = vunpack.c.l.b16 %v6628
  %v7218 = vunpack.c.l.b16 %v6629
  %v7219 = vunpack.c.h.b16 %v6629
  %v7220 = vunpack.c.l.b16 %v6630
  %v7221 = vunpack.c.h.b16 %v6630
  %v7222 = vunpack.c.l.b16 %v6631
  %v7223 = vunpack.c.l.b16 %v6632
  %v7224 = vunpack.c.h.b16 %v6632
  %v7225 = vunpack.c.l.b16 %v6633
  %v7226 = vunpack.c.h.b16 %v6633
  %v7227 = vunpack.c.l.b16 %v6634
  %v7228 = vunpack.c.l.b16 %v6635
  %v7229 = vunpack.c.h.b16 %v6635
  %v7230 = vunpack.c.l.b16 %v6636
  %v7231 = vunpack.c.h.b16 %v6636
  %v7232 = vunpack.c.l.b16 %v6637
  %v7233 = vunpack.c.l.b16 %v6638
  %v7234 = vunpack.c.h.b16 %v6638
  %v7235 = vunpack.c.l.b16 %v6639
  %v7236 = vunpack.c.h.b16 %v6639
  %v7237 = vunpack.c.l.b16 %v6640
  %v7238 = vunpack.c.l.b16 %v6641
  %v7239 = vunpack.c.h.b16 %v6641
  %v7240 = vunpack.c.l.b16 %v6642
  %v7241 = vunpack.c.h.b16 %v6642
  %v7242 = vunpack.c.l.b16 %v6643
  %v7243 = vunpack.c.l.b16 %v6644
  %v7244 = vunpack.c.h.b16 %v6644
  %v7245 = vunpack.c.l.b16 %v6645
  %v7246 = vunpack.c.h.b16 %v6645
  %v7247 = vunpack.c.l.b16 %v6646
  %v7248 = vunpack.c.l.b16 %v6647
  %v7249 = vunpack.c.h.b16 %v6647
  %v7250 = vunpack.c.l.b16 %v6648
  %v7251 = vunpack.c.h.b16 %v6648
  %v7252 = vunpack.c.l.b16 %v6649
  %v7253 = vunpack.c.l.b16 %v6650
  %v7254 = vunpack.c.h.b16 %v6650
  %v7255 = vunpack.c.l.b16 %v6651
  %v7256 = vunpack.c.h.b16 %v6651
  %v7257 = vunpack.c.l.b16 %v6652
  %v7258 = vunpack.c.l.b16 %v6653
  %v7259 = vunpack.c.h.b16 %v6653
  %v7260 = vunpack.c.l.b16 %v6654
  %v7261 = vunpack.c.h.b16 %v6654
  %v7262 = vunpack.c.l.b16 %v6655
  %v7263 = vunpack.c.l.b16 %v6656
  %v7264 = vunpack.c.h.b16 %v6656
  %v7265 = vunpack.c.l.b16 %v6657
  %v7266 = vunpack.c.h.b16 %v6657
  %v7267 = vunpack.c.l.b16 %v6658
  %v7268 = vunpack.c.l.b16 %v6659
  %v7269 = vunpack.c.h.b16 %v6659
  %v7270 = vunpack.c.l.b16 %v6660
  %v7271 = vunpack.c.h.b16 %v6660
  %v7272 = vunpack.c.l.b16 %v6661
  %v7273 = vunpack.c.l.b16 %v6662
  %v7274 = vunpack.c.h.b16 %v6662
  %v7275 = vunpack.c.l.b16 %v6663
  %v7276 = vunpack.c.h.b16 %v6663
  %v7277 = vunpack.c.l.b16 %v6664
  %v7278 = vunpack.c.l.b16 %v6665
  %v7279 = vunpack.c.h.b16 %v6665
  %v7280 = vunpack.c.l.b16 %v6666
  %v7281 = vunpack.c.h.b16 %v6666
  %v7282 = vunpack.c.l.b16 %v6667
  %v7283 = vunpack.c.l.b16 %v6668
  %v7284 = vunpack.c.h.b16 %v6668
  %v7285 = vunpack.c.l.b16 %v6669
  %v7286 = vunpack.c.h.b16 %v6669
  %v7287 = vunpack.c.l.b16 %v6670
  %v7288 = vunpack.c.l.b16 %v6671
  %v7289 = vunpack.c.h.b16 %v6671
  %v7290 = vunpack.c.l.b16 %v6672
  %v7291 = vunpack.c.h.b16 %v6672
  %v7292 = vunpack.c.l.b16 %v6673
  %v7293 = vunpack.c.l.b16 %v6674
  %v7294 = vunpack.c.h.b16 %v6674
  %v7295 = vunpack.c.l.b16 %v6675
  %v7296 = vunpack.c.h.b16 %v6675
  %v7297 = vunpack.c.l.b16 %v6676
  %v7298 = vunpack.c.l.b16 %v6677
  %v7299 = vunpack.c.h.b16 %v6677
  %v7300 = vunpack.c.l.b16 %v6678
  %v7301 = vunpack.c.h.b16 %v6678
  %v7302 = vunpack.c.l.b16 %v6679
  %v7303 = vunpack.c.l.b16 %v6680
  %v7304 = vunpack.c.h.b16 %v6680
  %v7305 = vunpack.c.l.b16 %v6681
  %v7306 = vunpack.c.h.b16 %v6681
  %v7307 = vunpack.c.l.b16 %v6682
  %v7308 = vunpack.c.l.b16 %v6683
  %v7309 = vunpack.c.h.b16 %v6683
  %v7310 = vunpack.c.l.b16 %v6684
  %v7311 = vunpack.c.h.b16 %v6684
  %v7312 = vunpack.c.l.b16 %v6685
  %v7313 = vunpack.c.l.b16 %v6686
  %v7314 = vunpack.c.h.b16 %v6686
  %v7315 = vunpack.c.l.b16 %v6687
  %v7316 = vunpack.c.h.b16 %v6687
  %v7317 = vunpack.c.l.b16 %v6688
  %v7318 = vunpack.c.l.b16 %v6689
  %v7319 = vunpack.c.h.b16 %v6689
  %v7320 = vunpack.c.l.b16 %v6690
  %v7321 = vunpack.c.h.b16 %v6690
  %v7322 = vunpack.c.l.b16 %v6691
  %v7323 = vunpack.c.l.b16 %v6692
  %v7324 = vunpack.c.h.b16 %v6692
  %v7325 = vunpack.c.l.b16 %v6693
  %v7326 = vunpack.c.h.b16 %v6693
  %v7327 = vunpack.c.l.b16 %v6694
  %v7328 = vunpack.c.l.b16 %v6695
  %v7329 = vunpack.c.h.b16 %v6695
  %v7330 = vunpack.c.l.b16 %v6696
  %v7331 = vunpack.c.h.b16 %v6696
  %v7332 = vunpack.c.l.b16 %v6697
  %v7333 = vunpack.c.l.b16 %v6698
  %v7334 = vunpack.c.h.b16 %v6698
  %v7335 = vunpack.c.l.b16 %v6699
  %v7336 = vunpack.c.h.b16 %v6699
  %v7337 = vunpack.c.l.b16 %v6700
  %v7338 = vunpack.c.l.b16 %v6701
  %v7339 = vunpack.c.h.b16 %v6701
  %v7340 = vunpack.c.l.b16 %v6702
  %v7341 = vunpack.c.h.b16 %v6702
  %v7342 = vunpack.c.l.b16 %v6703
  %v7343 = vunpack.c.l.b16 %v6704
  %v7344 = vunpack.c.h.b16 %v6704
  %v7345 = vunpack.c.l.b16 %v6705
  %v7346 = vunpack.c.h.b16 %v6705
  %v7347 = vunpack.c.l.b16 %v6706
  %v7348 = vunpack.c.l.b16 %v6707
  %v7349 = vunpack.c.h.b16 %v6707
  %v7350 = vunpack.c.l.b16 %v6708
  %v7351 = vunpack.c.h.b16 %v6708
  %v7352 = vunpack.c.l.b16 %v6709
  %v7353 = vunpack.c.l.b16 %v6710
  %v7354 = vunpack.c.h.b16 %v6710
  %v7355 = vunpack.c.l.b16 %v6711
  %v7356 = vunpack.c.h.b16 %v6711
  %v7357 = vunpack.c.l.b16 %v6712
  %v7358 = vunpack.c.l.b16 %v6713
  %v7359 = vunpack.c.h.b16 %v6713
  %v7360 = vunpack.c.l.b16 %v6714
  %v7361 = vunpack.c.h.b16 %v6714
  %v7362 = vunpack.c.l.b16 %v6715
  %v7363 = vunpack.c.l.b16 %v6716
  %v7364 = vunpack.c.h.b16 %v6716
  %v7365 = vunpack.c.l.b16 %v6717
  %v7366 = vunpack.c.h.b16 %v6717
  %v7367 = vunpack.c.l.b16 %v6718
  %v7368 = vunpack.c.l.b16 %v6719
  %v7369 = vunpack.c.h.b16 %v6719
  %v7370 = vunpack.c.l.b16 %v6720
  %v7371 = vunpack.c.h.b16 %v6720
  %v7372 = vunpack.c.l.b16 %v6721
  %v7373 = vunpack.c.l.b16 %v6722
  %v7374 = vunpack.c.h.b16 %v6722
  %v7375 = vunpack.c.l.b16 %v6723
  %v7376 = vunpack.c.h.b16 %v6723
  %v7377 = vunpack.c.l.b16 %v6724
  %v7378 = vunpack.c.l.b16 %v6725
  %v7379 = vunpack.c.h.b16 %v6725
  %v7380 = vunpack.c.l.b16 %v6726
  %v7381 = vunpack.c.h.b16 %v6726
  %v7382 = vunpack.c.l.b16 %v6727
  %v7383 = vunpack.c.l.b16 %v6728
  %v7384 = vunpack.c.h.b16 %v6728
  %v7385 = vunpack.c.l.b16 %v6729
  %v7386 = vunpack.c.h.b16 %v6729
  %v7387 = vunpack.c.l.b16 %v6730
  %v7388 = vunpack.c.l.b16 %v6731
  %v7389 = vunpack.c.h.b16 %v6731
  %v7390 = vunpack.c.l.b16 %v6732
  %v7391 = vunpack.c.h.b16 %v6732
  %v7392 = vunpack.c.l.b16 %v6733
  %v7393 = vunpack.c.l.b16 %v6734
  %v7394 = vunpack.c.h.b16 %v6734
  %v7395 = vunpack.c.l.b16 %v6735
  %v7396 = vunpack.c.h.b16 %v6735
  %v7397 = vunpack.c.l.b16 %v6736
  %v7398 = vunpack.c.l.b16 %v6737
  %v7399 = vunpack.c.h.b16 %v6737
  %v7400 = vunpack.c.l.b16 %v6738
  %v7401 = vunpack.c.h.b16 %v6738
  %v7402 = vunpack.c.l.b16 %v6739
  %v7403 = vunpack.c.l.b16 %v6740
  %v7404 = vunpack.c.h.b16 %v6740
  %v7405 = vunpack.c.l.b16 %v6741
  %v7406 = vunpack.c.h.b16 %v6741
  %v7407 = vunpack.c.l.b16 %v6742
  %v7408 = vunpack.c.l.b16 %v6743
  %v7409 = vunpack.c.h.b16 %v6743
  %v7410 = vunpack.c.l.b16 %v6744
  %v7411 = vunpack.c.h.b16 %v6744
  %v7412 = vunpack.c.l.b16 %v6745
  %v7413 = vpack.c.b16 %v7018, %v7013
  %v7414 = vpack.c.b16 %v7019, %v7014
  %v7415 = vpack.c.b16 %v7020, %v7015
  %v7416 = vpack.c.b16 %v7021, %v7016
  %v7417 = vpack.c.b16 %v7022, %v7017
  %v7418 = vpack.c.b16 %v7028, %v7023
  %v7419 = vpack.c.b16 %v7029, %v7024
  %v7420 = vpack.c.b16 %v7030, %v7025
  %v7421 = vpack.c.b16 %v7031, %v7026
  %v7422 = vpack.c.b16 %v7032, %v7027
  %v7423 = vpack.c.b16 %v7038, %v7033
  %v7424 = vpack.c.b16 %v7039, %v7034
  %v7425 = vpack.c.b16 %v7040, %v7035
  %v7426 = vpack.c.b16 %v7041, %v7036
  %v7427 = vpack.c.b16 %v7042, %v7037
  %v7428 = vpack.c.b16 %v7048, %v7043
  %v7429 = vpack.c.b16 %v7049, %v7044
  %v7430 = vpack.c.b16 %v7050, %v7045
  %v7431 = vpack.c.b16 %v7051, %v7046
  %v7432 = vpack.c.b16 %v7052, %v7047
  %v7433 = vpack.c.b16 %v7058, %v7053
  %v7434 = vpack.c.b16 %v7059, %v7054
  %v7435 = vpack.c.b16 %v7060, %v7055
  %v7436 = vpack.c.b16 %v7061, %v7056
  %v7437 = vpack.c.b16 %v7062, %v7057
  %v7438 = vpack.c.b16 %v7068, %v7063
  %v7439 = vpack.c.b16 %v7069, %v7064
  %v7440 = vpack.c.b16 %v7070, %v7065
  %v7441 = vpack.c.b16 %v7071, %v7066
  %v7442 = vpack.c.b16 %v7072, %v7067
  %v7443 = vpack.c.b16 %v7078, %v7073
  %v7444 = vpack.c.b16 %v7079, %v7074
  %v7445 = vpack.c.b16 %v7080, %v7075
  %v7446 = vpack.c.b16 %v7081, %v7076
  %v7447 = vpack.c.b16 %v7082, %v7077
  %v7448 = vpack.c.b16 %v7088, %v7083
  %v7449 = vpack.c.b16 %v7089, %v7084
  %v7450 = vpack.c.b16 %v7090, %v7085
  %v7451 = vpack.c.b16 %v7091, %v7086
  %v7452 = vpack.c.b16 %v7092, %v7087
  %v7453 = vpack.c.b16 %v7098, %v7093
  %v7454 = vpack.c.b16 %v7099, %v7094
  %v7455 = vpack.c.b16 %v7100, %v7095
  %v7456 = vpack.c.b16 %v7101, %v7096
  %v7457 = vpack.c.b16 %v7102, %v7097
  %v7458 = vpack.c.b16 %v7108, %v7103
  %v7459 = vpack.c.b16 %v7109, %v7104
  %v7460 = vpack.c.b16 %v7110, %v7105
  %v7461 = vpack.c.b16 %v7111, %v7106
  %v7462 = vpack.c.b16 %v7112, %v7107
  %v7463 = vpack.c.b16 %v7118, %v7113
  %v7464 = vpack.c.b16 %v7119, %v7114
  %v7465 = vpack.c.b16 %v7120, %v7115
  %v7466 = vpack.c.b16 %v7121, %v7116
  %v7467 = vpack.c.b16 %v7122, %v7117
  %v7468 = vpack.c.b16 %v7128, %v7123
  %v7469 = vpack.c.b16 %v7129, %v7124
  %v7470 = vpack.c.b16 %v7130, %v7125
  %v7471 = vpack.c.b16 %v7131, %v7126
  %v7472 = vpack.c.b16 %v7132, %v7127
  %v7473 = vpack.c.b16 %v7138, %v7133
  %v7474 = vpack.c.b16 %v7139, %v7134
  %v7475 = vpack.c.b16 %v7140, %v7135
  %v7476 = vpack.c.b16 %v7141, %v7136
  %v7477 = vpack.c.b16 %v7142, %v7137
  %v7478 = vpack.c.b16 %v7148, %v7143
  %v7479 = vpack.c.b16 %v7149, %v7144
  %v7480 = vpack.c.b16 %v7150, %v7145
  %v7481 = vpack.c.b16 %v7151, %v7146
  %v7482 = vpack.c.b16 %v7152, %v7147
  %v7483 = vpack.c.b16 %v7158, %v7153
  %v7484 = vpack.c.b16 %v7159, %v7154
  %v7485 = vpack.c.b16 %v7160, %v7155
  %v7486 = vpack.c.b16 %v7161, %v7156
  %v7487 = vpack.c.b16 %v7162, %v7157
  %v7488 = vpack.c.b16 %v7168, %v7163
  %v7489 = vpack.c.b16 %v7169, %v7164
  %v7490 = vpack.c.b16 %v7170, %v7165
  %v7491 = vpack.c.b16 %v7171, %v7166
  %v7492 = vpack.c.b16 %v7172, %v7167
  %v7493 = vpack.c.b16 %v7178, %v7173
  %v7494 = vpack.c.b16 %v7179, %v7174
  %v7495 = vpack.c.b16 %v7180, %v7175
  %v7496 = vpack.c.b16 %v7181, %v7176
  %v7497 = vpack.c.b16 %v7182, %v7177
  %v7498 = vpack.c.b16 %v7188, %v7183
  %v7499 = vpack.c.b16 %v7189, %v7184
  %v7500 = vpack.c.b16 %v7190, %v7185
  %v7501 = vpack.c.b16 %v7191, %v7186
  %v7502 = vpack.c.b16 %v7192, %v7187
  %v7503 = vpack.c.b16 %v7198, %v7193
  %v7504 = vpack.c.b16 %v7199, %v7194
  %v7505 = vpack.c.b16 %v7200, %v7195
  %v7506 = vpack.c.b16 %v7201, %v7196
  %v7507 = vpack.c.b16 %v7202, %v7197
  %v7508 = vpack.c.b16 %v7208, %v7203
  %v7509 = vpack.c.b16 %v7209, %v7204
  %v7510 = vpack.c.b16 %v7210, %v7205
  %v7511 = vpack.c.b16 %v7211, %v7206
  %v7512 = vpack.c.b16 %v7212, %v7207
  %v7513 = vpack.c.b16 %v7218, %v7213
  %v7514 = vpack.c.b16 %v7219, %v7214
  %v7515 = vpack.c.b16 %v7220, %v7215
  %v7516 = vpack.c.b16 %v7221, %v7216
  %v7517 = vpack.c.b16 %v7222, %v7217
  %v7518 = vpack.c.b16 %v7228, %v7223
  %v7519 = vpack.c.b16 %v7229, %v7224
  %v7520 = vpack.c.b16 %v7230, %v7225
  %v7521 = vpack.c.b16 %v7231, %v7226
  %v7522 = vpack.c.b16 %v7232, %v7227
  %v7523 = vpack.c.b16 %v7238, %v7233
  %v7524 = vpack.c.b16 %v7239, %v7234
  %v7525 = vpack.c.b16 %v7240, %v7235
  %v7526 = vpack.c.b16 %v7241, %v7236
  %v7527 = vpack.c.b16 %v7242, %v7237
  %v7528 = vpack.c.b16 %v7248, %v7243
  %v7529 = vpack.c.b16 %v7249, %v7244
  %v7530 = vpack.c.b16 %v7250, %v7245
  %v7531 = vpack.c.b16 %v7251, %v7246
  %v7532 = vpack.c.b16 %v7252, %v7247
  %v7533 = vpack.c.b16 %v7258, %v7253
  %v7534 = vpack.c.b16 %v7259, %v7254
  %v7535 = vpack.c.b16 %v7260, %v7255
  %v7536 = vpack.c.b16 %v7261, %v7256
  %v7537 = vpack.c.b16 %v7262, %v7257
  %v7538 = vpack.c.b16 %v7268, %v7263
  %v7539 = vpack.c.b16 %v7269, %v7264
  %v7540 = vpack.c.b16 %v7270, %v7265
  %v7541 = vpack.c.b16 %v7271, %v7266
  %v7542 = vpack.c.b16 %v7272, %v7267
  %v7543 = vpack.c.b16 %v7278, %v7273
  %v7544 = vpack.c.b16 %v7279, %v7274
  %v7545 = vpack.c.b16 %v7280, %v7275
  %v7546 = vpack.c.b16 %v7281, %v7276
  %v7547 = vpack.c.b16 %v7282, %v7277
  %v7548 = vpack.c.b16 %v7288, %v7283
  %v7549 = vpack.c.b16 %v7289, %v7284
  %v7550 = vpack.c.b16 %v7290, %v7285
  %v7551 = vpack.c.b16 %v7291, %v7286
  %v7552 = vpack.c.b16 %v7292, %v7287
  %v7553 = vpack.c.b16 %v7298, %v7293
  %v7554 = vpack.c.b16 %v7299, %v7294
  %v7555 = vpack.c.b16 %v7300, %v7295
  %v7556 = vpack.c.b16 %v7301, %v7296
  %v7557 = vpack.c.b16 %v7302, %v7297
  %v7558 = vpack.c.b16 %v7308, %v7303
  %v7559 = vpack.c.b16 %v7309, %v7304
  %v7560 = vpack.c.b16 %v7310, %v7305
  %v7561 = vpack.c.b16 %v7311, %v7306
  %v7562 = vpack.c.b16 %v7312, %v7307
  %v7563 = vpack.c.b16 %v7318, %v7313
  %v7564 = vpack.c.b16 %v7319, %v7314
  %v7565 = vpack.c.b16 %v7320, %v7315
  %v7566 = vpack.c.b16 %v7321, %v7316
  %v7567 = vpack.c.b16 %v7322, %v7317
  %v7568 = vpack.c.b16 %v7328, %v7323
  %v7569 = vpack.c.b16 %v7329, %v7324
  %v7570 = vpack.c.b16 %v7330, %v7325
  %v7571 = vpack.c.b16 %v7331, %v7326
  %v7572 = vpack.c.b16 %v7332, %v7327
  %v7573 = vpack.c.b16 %v7338, %v7333
  %v7574 = vpack.c.b16 %v7339, %v7334
  %v7575 = vpack.c.b16 %v7340, %v7335
  %v7576 = vpack.c.b16 %v7341, %v7336
  %v7577 = vpack.c.b16 %v7342, %v7337
  %v7578 = vpack.c.b16 %v7348, %v7343
  %v7579 = vpack.c.b16 %v7349, %v7344
  %v7580 = vpack.c.b16 %v7350, %v7345
  %v7581 = vpack.c.b16 %v7351, %v7346
  %v7582 = vpack.c.b16 %v7352, %v7347
  %v7583 = vpack.c.b16 %v7358, %v7353
  %v7584 = vpack.c.b16 %v7359, %v7354
  %v7585 = vpack.c.b16 %v7360, %v7355
  %v7586 = vpack.c.b16 %v7361, %v7356
  %v7587 = vpack.c.b16 %v7362, %v7357
  %v7588 = vpack.c.b16 %v7368, %v7363
  %v7589 = vpack.c.b16 %v7369, %v7364
  %v7590 = vpack.c.b16 %v7370, %v7365
  %v7591 = vpack.c.b16 %v7371, %v7366
  %v7592 = vpack.c.b16 %v7372, %v7367
  %v7593 = vpack.c.b16 %v7378, %v7373
  %v7594 = vpack.c.b16 %v7379, %v7374
  %v7595 = vpack.c.b16 %v7380, %v7375
  %v7596 = vpack.c.b16 %v7381, %v7376
  %v7597 = vpack.c.b16 %v7382, %v7377
  %v7598 = vpack.c.b16 %v7388, %v7383
  %v7599 = vpack.c.b16 %v7389, %v7384
  %v7600 = vpack.c.b16 %v7390, %v7385
  %v7601 = vpack.c.b16 %v7391, %v7386
  %v7602 = vpack.c.b16 %v7392, %v7387
  %v7603 = vpack.c.b16 %v7398, %v7393
  %v7604 = vpack.c.b16 %v7399, %v7394
  %v7605 = vpack.c.b16 %v7400, %v7395
  %v7606 = vpack.c.b16 %v7401, %v7396
  %v7607 = vpack.c.b16 %v7402, %v7397
  %v7608 = vpack.c.b16 %v7408, %v7403
  %v7609 = vpack.c.b16 %v7409, %v7404
  %v7610 = vpack.c.b16 %v7410, %v7405
  %v7611 = vpack.c.b16 %v7411, %v7406
  %v7612 = vpack.c.b16 %v7412, %v7407
  %7813 = vmatprep.subr.bf16.mxu0 %v7414
  %7814 = vmatpush1.bf16.msra.mxu0 %v7413
  %7815 = vmatprep.subr.bf16.mxu0 %v7419
  %7816 = vmatpush1.bf16.msra.mxu0 %v7418
  %7817 = vmatprep.subr.bf16.mxu0 %v7424
  %7818 = vmatpush1.bf16.msra.mxu0 %v7423
  %7819 = vmatprep.subr.bf16.mxu0 %v7429
  %7820 = vmatpush1.bf16.msra.mxu0 %v7428
  %7821 = vmatprep.subr.bf16.mxu0 %v7434
  %7822 = vmatpush1.bf16.msra.mxu0 %v7433
  %7823 = vmatprep.subr.bf16.mxu0 %v7439
  %7824 = vmatpush1.bf16.msra.mxu0 %v7438
  %7825 = vmatprep.subr.bf16.mxu0 %v7444
  %7826 = vmatpush1.bf16.msra.mxu0 %v7443
  %7827 = vmatprep.subr.bf16.mxu0 %v7449
  %7828 = vmatpush1.bf16.msra.mxu0 %v7448
  %7829 = vmatprep.subr.bf16.mxu0 %v7454
  %7830 = vmatpush1.bf16.msra.mxu0 %v7453
  %7831 = vmatprep.subr.bf16.mxu0 %v7459
  %7832 = vmatpush1.bf16.msra.mxu0 %v7458
  %7833 = vmatprep.subr.bf16.mxu0 %v7464
  %7834 = vmatpush1.bf16.msra.mxu0 %v7463
  %7835 = vmatprep.subr.bf16.mxu0 %v7469
  %7836 = vmatpush1.bf16.msra.mxu0 %v7468
  %7837 = vmatprep.subr.bf16.mxu0 %v7474
  %7838 = vmatpush1.bf16.msra.mxu0 %v7473
  %7839 = vmatprep.subr.bf16.mxu0 %v7479
  %7840 = vmatpush1.bf16.msra.mxu0 %v7478
  %7841 = vmatprep.subr.bf16.mxu0 %v7484
  %7842 = vmatpush1.bf16.msra.mxu0 %v7483
  %7843 = vmatprep.subr.bf16.mxu0 %v7489
  %7844 = vmatpush1.bf16.msra.mxu0 %v7488
  %7845 = vmatprep.mubr.bf16.mxu0 %v6497
  %7846 = vmatmul.mubr.bf16.gmra.mrb[0].mxu0 %v6496
  %v7847 = vpop.f32.mrb[0].mxu0
  %v7848 = vadd.f32 %v6751, %v7847
  %v7849 = vpop.f32.mrb[0].mxu0
  %v7850 = vadd.f32 %v6755, %v7849
  %v7851 = vpop.f32.mrb[0].mxu0
  %v7852 = vadd.f32 %v6751, %v7851
  %v7853 = vpop.f32.mrb[0].mxu0
  %v7854 = vadd.f32 %v6755, %v7853
  %7855 = vmatprep.mubr.bf16.mxu0 %v6502
  %7856 = vmatmul.mubr.bf16.gmra.mrb[0].mxu0 %v6501
  %v7857 = vpop.f32.mrb[0].mxu0
  %v7858 = vadd.f32 %v6751, %v7857
  %v7859 = vpop.f32.mrb[0].mxu0
  %v7860 = vadd.f32 %v6755, %v7859
  %v7861 = vpop.f32.mrb[0].mxu0
  %v7862 = vadd.f32 %v6751, %v7861
  %v7863 = vpop.f32.mrb[0].mxu0
  %v7864 = vadd.f32 %v6755, %v7863
  %7865 = vdwg.mxu0
  %7866 = vmatprep.subr.bf16.mxu0 %v7494
  %7867 = vmatpush1.bf16.msra.mxu0 %v7493
  %7868 = vmatprep.subr.bf16.mxu0 %v7499
  %7869 = vmatpush1.bf16.msra.mxu0 %v7498
  %7870 = vmatprep.subr.bf16.mxu0 %v7504
  %7871 = vmatpush1.bf16.msra.mxu0 %v7503
  %7872 = vmatprep.subr.bf16.mxu0 %v7509
  %7873 = vmatpush1.bf16.msra.mxu0 %v7508
  %7874 = vmatprep.subr.bf16.mxu0 %v7514
  %7875 = vmatpush1.bf16.msra.mxu0 %v7513
  %7876 = vmatprep.subr.bf16.mxu0 %v7519
  %7877 = vmatpush1.bf16.msra.mxu0 %v7518
  %7878 = vmatprep.subr.bf16.mxu0 %v7524
  %7879 = vmatpush1.bf16.msra.mxu0 %v7523
  %7880 = vmatprep.subr.bf16.mxu0 %v7529
  %7881 = vmatpush1.bf16.msra.mxu0 %v7528
  %7882 = vmatprep.subr.bf16.mxu0 %v7534
  %7883 = vmatpush1.bf16.msra.mxu0 %v7533
  %7884 = vmatprep.subr.bf16.mxu0 %v7539
  %7885 = vmatpush1.bf16.msra.mxu0 %v7538
  %7886 = vmatprep.subr.bf16.mxu0 %v7544
  %7887 = vmatpush1.bf16.msra.mxu0 %v7543
  %7888 = vmatprep.subr.bf16.mxu0 %v7549
  %7889 = vmatpush1.bf16.msra.mxu0 %v7548
  %7890 = vmatprep.subr.bf16.mxu0 %v7554
  %7891 = vmatpush1.bf16.msra.mxu0 %v7553
  %7892 = vmatprep.subr.bf16.mxu0 %v7559
  %7893 = vmatpush1.bf16.msra.mxu0 %v7558
  %7894 = vmatprep.subr.bf16.mxu0 %v7564
  %7895 = vmatpush1.bf16.msra.mxu0 %v7563
  %7896 = vmatprep.subr.bf16.mxu0 %v7569
  %7897 = vmatpush1.bf16.msra.mxu0 %v7568
  %7898 = vmatprep.mubr.bf16.mxu0 %v6499
  %7899 = vmatmul.mubr.bf16.gmra.mrb[0].mxu0 %v6498
  %v7900 = vpop.f32.mrb[0].mxu0
  %v7901 = vadd.f32 %v7848, %v7900
  %v7902 = vpop.f32.mrb[0].mxu0
  %v7903 = vadd.f32 %v7850, %v7902
  %v7904 = vpop.f32.mrb[0].mxu0
  %v7905 = vadd.f32 %v7852, %v7904
  %v7906 = vpop.f32.mrb[0].mxu0
  %v7907 = vadd.f32 %v7854, %v7906
  %7908 = vmatprep.mubr.bf16.mxu0 %v6504
  %7909 = vmatmul.mubr.bf16.gmra.mrb[0].mxu0 %v6503
  %v7910 = vpop.f32.mrb[0].mxu0
  %v7911 = vadd.f32 %v7858, %v7910
  %v7912 = vpop.f32.mrb[0].mxu0
  %v7913 = vadd.f32 %v7860, %v7912
  %v7914 = vpop.f32.mrb[0].mxu0
  %v7915 = vadd.f32 %v7862, %v7914
  %v7916 = vpop.f32.mrb[0].mxu0
  %v7917 = vadd.f32 %v7864, %v7916
  %7918 = vdwg.mxu0
  %7919 = vmatprep.subr.bf16.mxu0 %v7574
  %7920 = vmatpush1.bf16.msra.mxu0 %v7573
  %7921 = vmatprep.subr.bf16.mxu0 %v7579
  %7922 = vmatpush1.bf16.msra.mxu0 %v7578
  %7923 = vmatprep.subr.bf16.mxu0 %v7584
  %7924 = vmatpush1.bf16.msra.mxu0 %v7583
  %7925 = vmatprep.subr.bf16.mxu0 %v7589
  %7926 = vmatpush1.bf16.msra.mxu0 %v7588
  %7927 = vmatprep.subr.bf16.mxu0 %v7594
  %7928 = vmatpush1.bf16.msra.mxu0 %v7593
  %7929 = vmatprep.subr.bf16.mxu0 %v7599
  %7930 = vmatpush1.bf16.msra.mxu0 %v7598
  %7931 = vmatprep.subr.bf16.mxu0 %v7604
  %7932 = vmatpush1.bf16.msra.mxu0 %v7603
  %7933 = vmatprep.subr.bf16.mxu0 %v7609
  %7934 = vmatpush1.bf16.msra.mxu0 %v7608
  %7935 = vmatprep.subr.bf16.mxu0 0
  %7936 = vmatpush1.bf16.msra.mxu0 0
  %7937 = vmatprep.subr.bf16.mxu0 0
  %7938 = vmatpush1.bf16.msra.mxu0 0
  %7939 = vmatprep.subr.bf16.mxu0 0
  %7940 = vmatpush1.bf16.msra.mxu0 0
  %7941 = vmatprep.subr.bf16.mxu0 0
  %7942 = vmatpush1.bf16.msra.mxu0 0
  %7943 = vmatprep.subr.bf16.mxu0 0
  %7944 = vmatpush1.bf16.msra.mxu0 0
  %7945 = vmatprep.subr.bf16.mxu0 0
  %7946 = vmatpush1.bf16.msra.mxu0 0
  %7947 = vmatprep.subr.bf16.mxu0 0
  %7948 = vmatpush1.bf16.msra.mxu0 0
  %7949 = vmatprep.subr.bf16.mxu0 0
  %7950 = vmatpush1.bf16.msra.mxu0 0
  %7951 = vmatprep.mubr.bf16.mxu0 0
  %7952 = vmatmul.mubr.bf16.gmra.mrb[0].mxu0 %v6500
  %v7953 = vpop.f32.mrb[0].mxu0
  %v7954 = vadd.f32 %v7901, %v7953
  %v7955 = vpop.f32.mrb[0].mxu0
  %v7956 = vadd.f32 %v7903, %v7955
  %v7957 = vpop.f32.mrb[0].mxu0
  %v7958 = vadd.f32 %v7905, %v7957
  %v7959 = vpop.f32.mrb[0].mxu0
  %v7960 = vadd.f32 %v7907, %v7959
  %7961 = vmatprep.mubr.bf16.mxu0 0
  %7962 = vmatmul.mubr.bf16.gmra.mrb[0].mxu0 %v6505
  %v7963 = vpop.f32.mrb[0].mxu0
  %v7964 = vadd.f32 %v7911, %v7963
  %v7965 = vpop.f32.mrb[0].mxu0
  %v7966 = vadd.f32 %v7913, %v7965
  %v7967 = vpop.f32.mrb[0].mxu0
  %v7968 = vadd.f32 %v7915, %v7967
  %v7969 = vpop.f32.mrb[0].mxu0
  %v7970 = vadd.f32 %v7917, %v7969
  %7971 = vdwg.mxu0
  %7972 = vmatprep.subr.bf16.mxu0 %v7416
  %7973 = vmatpush1.bf16.msra.mxu0 %v7415
  %7974 = vmatprep.subr.bf16.mxu0 %v7421
  %7975 = vmatpush1.bf16.msra.mxu0 %v7420
  %7976 = vmatprep.subr.bf16.mxu0 %v7426
  %7977 = vmatpush1.bf16.msra.mxu0 %v7425
  %7978 = vmatprep.subr.bf16.mxu0 %v7431
  %7979 = vmatpush1.bf16.msra.mxu0 %v7430
  %7980 = vmatprep.subr.bf16.mxu0 %v7436
  %7981 = vmatpush1.bf16.msra.mxu0 %v7435
  %7982 = vmatprep.subr.bf16.mxu0 %v7441
  %7983 = vmatpush1.bf16.msra.mxu0 %v7440
  %7984 = vmatprep.subr.bf16.mxu0 %v7446
  %7985 = vmatpush1.bf16.msra.mxu0 %v7445
  %7986 = vmatprep.subr.bf16.mxu0 %v7451
  %7987 = vmatpush1.bf16.msra.mxu0 %v7450
  %7988 = vmatprep.subr.bf16.mxu0 %v7456
  %7989 = vmatpush1.bf16.msra.mxu0 %v7455
  %7990 = vmatprep.subr.bf16.mxu0 %v7461
  %7991 = vmatpush1.bf16.msra.mxu0 %v7460
  %7992 = vmatprep.subr.bf16.mxu0 %v7466
  %7993 = vmatpush1.bf16.msra.mxu0 %v7465
  %7994 = vmatprep.subr.bf16.mxu0 %v7471
  %7995 = vmatpush1.bf16.msra.mxu0 %v7470
  %7996 = vmatprep.subr.bf16.mxu0 %v7476
  %7997 = vmatpush1.bf16.msra.mxu0 %v7475
  %7998 = vmatprep.subr.bf16.mxu0 %v7481
  %7999 = vmatpush1.bf16.msra.mxu0 %v7480
  %8000 = vmatprep.subr.bf16.mxu0 %v7486
  %8001 = vmatpush1.bf16.msra.mxu0 %v7485
  %8002 = vmatprep.subr.bf16.mxu0 %v7491
  %8003 = vmatpush1.bf16.msra.mxu0 %v7490
  %8004 = vmatprep.mubr.bf16.mxu0 %v6497
  %8005 = vmatmul.mubr.bf16.gmra.mrb[0].mxu0 %v6496
  %v8006 = vpop.f32.mrb[0].mxu0
  %v8007 = vadd.f32 %v6759, %v8006
  %v8008 = vpop.f32.mrb[0].mxu0
  %v8009 = vadd.f32 %v6763, %v8008
  %v8010 = vpop.f32.mrb[0].mxu0
  %v8011 = vadd.f32 %v6759, %v8010
  %v8012 = vpop.f32.mrb[0].mxu0
  %v8013 = vadd.f32 %v6763, %v8012
  %8014 = vmatprep.mubr.bf16.mxu0 %v6502
  %8015 = vmatmul.mubr.bf16.gmra.mrb[0].mxu0 %v6501
  %v8016 = vpop.f32.mrb[0].mxu0
  %v8017 = vadd.f32 %v6759, %v8016
  %v8018 = vpop.f32.mrb[0].mxu0
  %v8019 = vadd.f32 %v6763, %v8018
  %v8020 = vpop.f32.mrb[0].mxu0
  %v8021 = vadd.f32 %v6759, %v8020
  %v8022 = vpop.f32.mrb[0].mxu0
  %v8023 = vadd.f32 %v6763, %v8022
  %8024 = vdwg.mxu0
  %8025 = vmatprep.subr.bf16.mxu0 %v7496
  %8026 = vmatpush1.bf16.msra.mxu0 %v7495
  %8027 = vmatprep.subr.bf16.mxu0 %v7501
  %8028 = vmatpush1.bf16.msra.mxu0 %v7500
  %8029 = vmatprep.subr.bf16.mxu0 %v7506
  %8030 = vmatpush1.bf16.msra.mxu0 %v7505
  %8031 = vmatprep.subr.bf16.mxu0 %v7511
  %8032 = vmatpush1.bf16.msra.mxu0 %v7510
  %8033 = vmatprep.subr.bf16.mxu0 %v7516
  %8034 = vmatpush1.bf16.msra.mxu0 %v7515
  %8035 = vmatprep.subr.bf16.mxu0 %v7521
  %8036 = vmatpush1.bf16.msra.mxu0 %v7520
  %8037 = vmatprep.subr.bf16.mxu0 %v7526
  %8038 = vmatpush1.bf16.msra.mxu0 %v7525
  %8039 = vmatprep.subr.bf16.mxu0 %v7531
  %8040 = vmatpush1.bf16.msra.mxu0 %v7530
  %8041 = vmatprep.subr.bf16.mxu0 %v7536
  %8042 = vmatpush1.bf16.msra.mxu0 %v7535
  %8043 = vmatprep.subr.bf16.mxu0 %v7541
  %8044 = vmatpush1.bf16.msra.mxu0 %v7540
  %8045 = vmatprep.subr.bf16.mxu0 %v7546
  %8046 = vmatpush1.bf16.msra.mxu0 %v7545
  %8047 = vmatprep.subr.bf16.mxu0 %v7551
  %8048 = vmatpush1.bf16.msra.mxu0 %v7550
  %8049 = vmatprep.subr.bf16.mxu0 %v7556
  %8050 = vmatpush1.bf16.msra.mxu0 %v7555
  %8051 = vmatprep.subr.bf16.mxu0 %v7561
  %8052 = vmatpush1.bf16.msra.mxu0 %v7560
  %8053 = vmatprep.subr.bf16.mxu0 %v7566
  %8054 = vmatpush1.bf16.msra.mxu0 %v7565
  %8055 = vmatprep.subr.bf16.mxu0 %v7571
  %8056 = vmatpush1.bf16.msra.mxu0 %v7570
  %8057 = vmatprep.mubr.bf16.mxu0 %v6499
  %8058 = vmatmul.mubr.bf16.gmra.mrb[0].mxu0 %v6498
  %v8059 = vpop.f32.mrb[0].mxu0
  %v8060 = vadd.f32 %v8007, %v8059
  %v8061 = vpop.f32.mrb[0].mxu0
  %v8062 = vadd.f32 %v8009, %v8061
  %v8063 = vpop.f32.mrb[0].mxu0
  %v8064 = vadd.f32 %v8011, %v8063
  %v8065 = vpop.f32.mrb[0].mxu0
  %v8066 = vadd.f32 %v8013, %v8065
  %8067 = vmatprep.mubr.bf16.mxu0 %v6504
  %8068 = vmatmul.mubr.bf16.gmra.mrb[0].mxu0 %v6503
  %v8069 = vpop.f32.mrb[0].mxu0
  %v8070 = vadd.f32 %v8017, %v8069
  %v8071 = vpop.f32.mrb[0].mxu0
  %v8072 = vadd.f32 %v8019, %v8071
  %v8073 = vpop.f32.mrb[0].mxu0
  %v8074 = vadd.f32 %v8021, %v8073
  %v8075 = vpop.f32.mrb[0].mxu0
  %v8076 = vadd.f32 %v8023, %v8075
  %8077 = vdwg.mxu0
  %8078 = vmatprep.subr.bf16.mxu0 %v7576
  %8079 = vmatpush1.bf16.msra.mxu0 %v7575
  %8080 = vmatprep.subr.bf16.mxu0 %v7581
  %8081 = vmatpush1.bf16.msra.mxu0 %v7580
  %8082 = vmatprep.subr.bf16.mxu0 %v7586
  %8083 = vmatpush1.bf16.msra.mxu0 %v7585
  %8084 = vmatprep.subr.bf16.mxu0 %v7591
  %8085 = vmatpush1.bf16.msra.mxu0 %v7590
  %8086 = vmatprep.subr.bf16.mxu0 %v7596
  %8087 = vmatpush1.bf16.msra.mxu0 %v7595
  %8088 = vmatprep.subr.bf16.mxu0 %v7601
  %8089 = vmatpush1.bf16.msra.mxu0 %v7600
  %8090 = vmatprep.subr.bf16.mxu0 %v7606
  %8091 = vmatpush1.bf16.msra.mxu0 %v7605
  %8092 = vmatprep.subr.bf16.mxu0 %v7611
  %8093 = vmatpush1.bf16.msra.mxu0 %v7610
  %8094 = vmatprep.subr.bf16.mxu0 0
  %8095 = vmatpush1.bf16.msra.mxu0 0
  %8096 = vmatprep.subr.bf16.mxu0 0
  %8097 = vmatpush1.bf16.msra.mxu0 0
  %8098 = vmatprep.subr.bf16.mxu0 0
  %8099 = vmatpush1.bf16.msra.mxu0 0
  %8100 = vmatprep.subr.bf16.mxu0 0
  %8101 = vmatpush1.bf16.msra.mxu0 0
  %8102 = vmatprep.subr.bf16.mxu0 0
  %8103 = vmatpush1.bf16.msra.mxu0 0
  %8104 = vmatprep.subr.bf16.mxu0 0
  %8105 = vmatpush1.bf16.msra.mxu0 0
  %8106 = vmatprep.subr.bf16.mxu0 0
  %8107 = vmatpush1.bf16.msra.mxu0 0
  %8108 = vmatprep.subr.bf16.mxu0 0
  %8109 = vmatpush1.bf16.msra.mxu0 0
  %8110 = vmatprep.mubr.bf16.mxu0 0
  %8111 = vmatmul.mubr.bf16.gmra.mrb[0].mxu0 %v6500
  %v8112 = vpop.f32.mrb[0].mxu0
  %v8113 = vadd.f32 %v8060, %v8112
  %v8114 = vpop.f32.mrb[0].mxu0
  %v8115 = vadd.f32 %v8062, %v8114
  %v8116 = vpop.f32.mrb[0].mxu0
  %v8117 = vadd.f32 %v8064, %v8116
  %v8118 = vpop.f32.mrb[0].mxu0
  %v8119 = vadd.f32 %v8066, %v8118
  %8120 = vmatprep.mubr.bf16.mxu0 0
  %8121 = vmatmul.mubr.bf16.gmra.mrb[0].mxu0 %v6505
  %v8122 = vpop.f32.mrb[0].mxu0
  %v8123 = vadd.f32 %v8070, %v8122
  %v8124 = vpop.f32.mrb[0].mxu0
  %v8125 = vadd.f32 %v8072, %v8124
  %v8126 = vpop.f32.mrb[0].mxu0
  %v8127 = vadd.f32 %v8074, %v8126
  %v8128 = vpop.f32.mrb[0].mxu0
  %v8129 = vadd.f32 %v8076, %v8128
  %8130 = vdwg.mxu0
  %8131 = vmatprep.subr.bf16.mxu0 0
  %8132 = vmatpush1.bf16.msra.mxu0 %v7417
  %8133 = vmatprep.subr.bf16.mxu0 0
  %8134 = vmatpush1.bf16.msra.mxu0 %v7422
  %8135 = vmatprep.subr.bf16.mxu0 0
  %8136 = vmatpush1.bf16.msra.mxu0 %v7427
  %8137 = vmatprep.subr.bf16.mxu0 0
  %8138 = vmatpush1.bf16.msra.mxu0 %v7432
  %8139 = vmatprep.subr.bf16.mxu0 0
  %8140 = vmatpush1.bf16.msra.mxu0 %v7437
  %8141 = vmatprep.subr.bf16.mxu0 0
  %8142 = vmatpush1.bf16.msra.mxu0 %v7442
  %8143 = vmatprep.subr.bf16.mxu0 0
  %8144 = vmatpush1.bf16.msra.mxu0 %v7447
  %8145 = vmatprep.subr.bf16.mxu0 0
  %8146 = vmatpush1.bf16.msra.mxu0 %v7452
  %8147 = vmatprep.subr.bf16.mxu0 0
  %8148 = vmatpush1.bf16.msra.mxu0 %v7457
  %8149 = vmatprep.subr.bf16.mxu0 0
  %8150 = vmatpush1.bf16.msra.mxu0 %v7462
  %8151 = vmatprep.subr.bf16.mxu0 0
  %8152 = vmatpush1.bf16.msra.mxu0 %v7467
  %8153 = vmatprep.subr.bf16.mxu0 0
  %8154 = vmatpush1.bf16.msra.mxu0 %v7472
  %8155 = vmatprep.subr.bf16.mxu0 0
  %8156 = vmatpush1.bf16.msra.mxu0 %v7477
  %8157 = vmatprep.subr.bf16.mxu0 0
  %8158 = vmatpush1.bf16.msra.mxu0 %v7482
  %8159 = vmatprep.subr.bf16.mxu0 0
  %8160 = vmatpush1.bf16.msra.mxu0 %v7487
  %8161 = vmatprep.subr.bf16.mxu0 0
  %8162 = vmatpush1.bf16.msra.mxu0 %v7492
  %8163 = vmatprep.mubr.bf16.mxu0 %v6497
  %8164 = vmatmul.mubr.bf16.gmra.mrb[0].mxu0 %v6496
  %v8165 = vpop.f32.mrb[0].mxu0
  %v8166 = vadd.f32 %v6767, %v8165
  %v8167 = vpop.f32.mrb[0].mxu0
  %v8168 = vpop.f32.mrb[0].mxu0
  %v8169 = vadd.f32 %v6767, %v8168
  %v8170 = vpop.f32.mrb[0].mxu0
  %8171 = vmatprep.mubr.bf16.mxu0 %v6502
  %8172 = vmatmul.mubr.bf16.gmra.mrb[0].mxu0 %v6501
  %v8173 = vpop.f32.mrb[0].mxu0
  %v8174 = vadd.f32 %v6767, %v8173
  %v8175 = vpop.f32.mrb[0].mxu0
  %v8176 = vpop.f32.mrb[0].mxu0
  %v8177 = vadd.f32 %v6767, %v8176
  %v8178 = vpop.f32.mrb[0].mxu0
  %8179 = vdwg.mxu0
  %8180 = vmatprep.subr.bf16.mxu0 0
  %8181 = vmatpush1.bf16.msra.mxu0 %v7497
  %8182 = vmatprep.subr.bf16.mxu0 0
  %8183 = vmatpush1.bf16.msra.mxu0 %v7502
  %8184 = vmatprep.subr.bf16.mxu0 0
  %8185 = vmatpush1.bf16.msra.mxu0 %v7507
  %8186 = vmatprep.subr.bf16.mxu0 0
  %8187 = vmatpush1.bf16.msra.mxu0 %v7512
  %8188 = vmatprep.subr.bf16.mxu0 0
  %8189 = vmatpush1.bf16.msra.mxu0 %v7517
  %8190 = vmatprep.subr.bf16.mxu0 0
  %8191 = vmatpush1.bf16.msra.mxu0 %v7522
  %8192 = vmatprep.subr.bf16.mxu0 0
  %8193 = vmatpush1.bf16.msra.mxu0 %v7527
  %8194 = vmatprep.subr.bf16.mxu0 0
  %8195 = vmatpush1.bf16.msra.mxu0 %v7532
  %8196 = vmatprep.subr.bf16.mxu0 0
  %8197 = vmatpush1.bf16.msra.mxu0 %v7537
  %8198 = vmatprep.subr.bf16.mxu0 0
  %8199 = vmatpush1.bf16.msra.mxu0 %v7542
  %8200 = vmatprep.subr.bf16.mxu0 0
  %8201 = vmatpush1.bf16.msra.mxu0 %v7547
  %8202 = vmatprep.subr.bf16.mxu0 0
  %8203 = vmatpush1.bf16.msra.mxu0 %v7552
  %8204 = vmatprep.subr.bf16.mxu0 0
  %8205 = vmatpush1.bf16.msra.mxu0 %v7557
  %8206 = vmatprep.subr.bf16.mxu0 0
  %8207 = vmatpush1.bf16.msra.mxu0 %v7562
  %8208 = vmatprep.subr.bf16.mxu0 0
  %8209 = vmatpush1.bf16.msra.mxu0 %v7567
  %8210 = vmatprep.subr.bf16.mxu0 0
  %8211 = vmatpush1.bf16.msra.mxu0 %v7572
  %8212 = vmatprep.mubr.bf16.mxu0 %v6499
  %8213 = vmatmul.mubr.bf16.gmra.mrb[0].mxu0 %v6498
  %v8214 = vpop.f32.mrb[0].mxu0
  %v8215 = vadd.f32 %v8166, %v8214
  %v8216 = vpop.f32.mrb[0].mxu0
  %v8217 = vpop.f32.mrb[0].mxu0
  %v8218 = vadd.f32 %v8169, %v8217
  %v8219 = vpop.f32.mrb[0].mxu0
  %8220 = vmatprep.mubr.bf16.mxu0 %v6504
  %8221 = vmatmul.mubr.bf16.gmra.mrb[0].mxu0 %v6503
  %v8222 = vpop.f32.mrb[0].mxu0
  %v8223 = vadd.f32 %v8174, %v8222
  %v8224 = vpop.f32.mrb[0].mxu0
  %v8225 = vpop.f32.mrb[0].mxu0
  %v8226 = vadd.f32 %v8177, %v8225
  %v8227 = vpop.f32.mrb[0].mxu0
  %8228 = vdwg.mxu0
  %8229 = vmatprep.subr.bf16.mxu0 0
  %8230 = vmatpush1.bf16.msra.mxu0 %v7577
  %8231 = vmatprep.subr.bf16.mxu0 0
  %8232 = vmatpush1.bf16.msra.mxu0 %v7582
  %8233 = vmatprep.subr.bf16.mxu0 0
  %8234 = vmatpush1.bf16.msra.mxu0 %v7587
  %8235 = vmatprep.subr.bf16.mxu0 0
  %8236 = vmatpush1.bf16.msra.mxu0 %v7592
  %8237 = vmatprep.subr.bf16.mxu0 0
  %8238 = vmatpush1.bf16.msra.mxu0 %v7597
  %8239 = vmatprep.subr.bf16.mxu0 0
  %8240 = vmatpush1.bf16.msra.mxu0 %v7602
  %8241 = vmatprep.subr.bf16.mxu0 0
  %8242 = vmatpush1.bf16.msra.mxu0 %v7607
  %8243 = vmatprep.subr.bf16.mxu0 0
  %8244 = vmatpush1.bf16.msra.mxu0 %v7612
  %8245 = vmatprep.subr.bf16.mxu0 0
  %8246 = vmatpush1.bf16.msra.mxu0 0
  %8247 = vmatprep.subr.bf16.mxu0 0
  %8248 = vmatpush1.bf16.msra.mxu0 0
  %8249 = vmatprep.subr.bf16.mxu0 0
  %8250 = vmatpush1.bf16.msra.mxu0 0
  %8251 = vmatprep.subr.bf16.mxu0 0
  %8252 = vmatpush1.bf16.msra.mxu0 0
  %8253 = vmatprep.subr.bf16.mxu0 0
  %8254 = vmatpush1.bf16.msra.mxu0 0
  %8255 = vmatprep.subr.bf16.mxu0 0
  %8256 = vmatpush1.bf16.msra.mxu0 0
  %8257 = vmatprep.subr.bf16.mxu0 0
  %8258 = vmatpush1.bf16.msra.mxu0 0
  %8259 = vmatprep.subr.bf16.mxu0 0
  %8260 = vmatpush1.bf16.msra.mxu0 0
  %8261 = vmatprep.mubr.bf16.mxu0 0
  %8262 = vmatmul.mubr.bf16.gmra.mrb[0].mxu0 %v6500
  %v8263 = vpop.f32.mrb[0].mxu0
  %v8264 = vadd.f32 %v8215, %v8263
  %v8265 = vpop.f32.mrb[0].mxu0
  %v8266 = vpop.f32.mrb[0].mxu0
  %v8267 = vadd.f32 %v8218, %v8266
  %v8268 = vpop.f32.mrb[0].mxu0
  %8269 = vmatprep.mubr.bf16.mxu0 0
  %8270 = vmatmul.mubr.bf16.gmra.mrb[0].mxu0 %v6505
  %v8271 = vpop.f32.mrb[0].mxu0
  %v8272 = vadd.f32 %v8223, %v8271
  %v8273 = vpop.f32.mrb[0].mxu0
  %v8274 = vpop.f32.mrb[0].mxu0
  %v8275 = vadd.f32 %v8226, %v8274
  %v8276 = vpop.f32.mrb[0].mxu0
  %8277 = vdwg.mxu0
  %v8278 = vmax.f32 %v7954, 0.0
  %v8279 = vmax.f32 %v7956, 0.0
  %v8280 = vmax.f32 %v8113, 0.0
  %v8281 = vmax.f32 %v8115, 0.0
  %v8282 = vmax.f32 %v8264, 0.0
  %v8283 = vmax.f32 %v7958, 0.0
  %v8284 = vmax.f32 %v7960, 0.0
  %v8285 = vmax.f32 %v8117, 0.0
  %v8286 = vmax.f32 %v8119, 0.0
  %v8287 = vmax.f32 %v8267, 0.0
  %v8288 = vmax.f32 %v7964, 0.0
  %v8289 = vmax.f32 %v7966, 0.0
  %v8290 = vmax.f32 %v8123, 0.0
  %v8291 = vmax.f32 %v8125, 0.0
  %v8292 = vmax.f32 %v8272, 0.0
  %v8293 = vmax.f32 %v7968, 0.0
  %v8294 = vmax.f32 %v7970, 0.0
  %v8295 = vmax.f32 %v8127, 0.0
  %v8296 = vmax.f32 %v8129, 0.0
  %v8297 = vmax.f32 %v8275, 0.0
  %v8298 = vld [vmem:[%s13] sm:$0x1f]
  %v8299 = vld [vmem:[%s14] sm:$0x1f]
  %v8300 = vadd.f32 %v8278, %v8283
  %v8301 = vadd.f32 %v8300, %v8288
  %v8302 = vadd.f32 %v8301, %v8293
  %v8303 = vrot.slane %v8302, 4
  %v8304 = vadd.f32 %v8302, %v8303
  %v8305 = vrot.slane %v8304, 2
  %v8306 = vadd.f32 %v8304, %v8305
  %v8307 = vrot.slane %v8306, 1
  %v8308 = vadd.f32 %v8306, %v8307
  %v8309 = vadd.f32 %v8279, %v8284
  %v8310 = vadd.f32 %v8309, %v8289
  %v8311 = vadd.f32 %v8310, %v8294
  %v8312 = vrot.slane %v8311, 4
  %v8313 = vadd.f32 %v8311, %v8312
  %v8314 = vrot.slane %v8313, 2
  %v8315 = vadd.f32 %v8313, %v8314
  %v8316 = vrot.slane %v8315, 1
  %v8317 = vadd.f32 %v8315, %v8316
  %v8318 = vadd.f32 %v8280, %v8285
  %v8319 = vadd.f32 %v8318, %v8290
  %v8320 = vadd.f32 %v8319, %v8295
  %v8321 = vrot.slane %v8320, 4
  %v8322 = vadd.f32 %v8320, %v8321
  %v8323 = vrot.slane %v8322, 2
  %v8324 = vadd.f32 %v8322, %v8323
  %v8325 = vrot.slane %v8324, 1
  %v8326 = vadd.f32 %v8324, %v8325
  %v8327 = vadd.f32 %v8281, %v8286
  %v8328 = vadd.f32 %v8327, %v8291
  %v8329 = vadd.f32 %v8328, %v8296
  %v8330 = vrot.slane %v8329, 4
  %v8331 = vadd.f32 %v8329, %v8330
  %v8332 = vrot.slane %v8331, 2
  %v8333 = vadd.f32 %v8331, %v8332
  %v8334 = vrot.slane %v8333, 1
  %v8335 = vadd.f32 %v8333, %v8334
  %v8336 = vadd.f32 %v8282, %v8287
  %v8337 = vadd.f32 %v8336, %v8292
  %v8338 = vadd.f32 %v8337, %v8297
  %v8339 = vrot.slane %v8338, 4
  %v8340 = vadd.f32 %v8338, %v8339
  %v8341 = vrot.slane %v8340, 2
  %v8342 = vadd.f32 %v8340, %v8341
  %v8343 = vrot.slane %v8342, 1
  %v8344 = vadd.f32 %v8342, %v8343
  %v8345 = vmul.f32 %v8278, %v8278
  %v8346 = vmul.f32 %v8279, %v8279
  %v8347 = vmul.f32 %v8280, %v8280
  %v8348 = vmul.f32 %v8281, %v8281
  %v8349 = vmul.f32 %v8282, %v8282
  %v8350 = vmul.f32 %v8283, %v8283
  %v8351 = vmul.f32 %v8284, %v8284
  %v8352 = vmul.f32 %v8285, %v8285
  %v8353 = vmul.f32 %v8286, %v8286
  %v8354 = vmul.f32 %v8287, %v8287
  %v8355 = vmul.f32 %v8288, %v8288
  %v8356 = vmul.f32 %v8289, %v8289
  %v8357 = vmul.f32 %v8290, %v8290
  %v8358 = vmul.f32 %v8291, %v8291
  %v8359 = vmul.f32 %v8292, %v8292
  %v8360 = vmul.f32 %v8293, %v8293
  %v8361 = vmul.f32 %v8294, %v8294
  %v8362 = vmul.f32 %v8295, %v8295
  %v8363 = vmul.f32 %v8296, %v8296
  %v8364 = vmul.f32 %v8297, %v8297
  %v8365 = vadd.f32 %v8345, %v8350
  %v8366 = vadd.f32 %v8365, %v8355
  %v8367 = vadd.f32 %v8366, %v8360
  %v8368 = vrot.slane %v8367, 4
  %v8369 = vadd.f32 %v8367, %v8368
  %v8370 = vrot.slane %v8369, 2
  %v8371 = vadd.f32 %v8369, %v8370
  %v8372 = vrot.slane %v8371, 1
  %v8373 = vadd.f32 %v8371, %v8372
  %v8374 = vadd.f32 %v8346, %v8351
  %v8375 = vadd.f32 %v8374, %v8356
  %v8376 = vadd.f32 %v8375, %v8361
  %v8377 = vrot.slane %v8376, 4
  %v8378 = vadd.f32 %v8376, %v8377
  %v8379 = vrot.slane %v8378, 2
  %v8380 = vadd.f32 %v8378, %v8379
  %v8381 = vrot.slane %v8380, 1
  %v8382 = vadd.f32 %v8380, %v8381
  %v8383 = vadd.f32 %v8347, %v8352
  %v8384 = vadd.f32 %v8383, %v8357
  %v8385 = vadd.f32 %v8384, %v8362
  %v8386 = vrot.slane %v8385, 4
  %v8387 = vadd.f32 %v8385, %v8386
  %v8388 = vrot.slane %v8387, 2
  %v8389 = vadd.f32 %v8387, %v8388
  %v8390 = vrot.slane %v8389, 1
  %v8391 = vadd.f32 %v8389, %v8390
  %v8392 = vadd.f32 %v8348, %v8353
  %v8393 = vadd.f32 %v8392, %v8358
  %v8394 = vadd.f32 %v8393, %v8363
  %v8395 = vrot.slane %v8394, 4
  %v8396 = vadd.f32 %v8394, %v8395
  %v8397 = vrot.slane %v8396, 2
  %v8398 = vadd.f32 %v8396, %v8397
  %v8399 = vrot.slane %v8398, 1
  %v8400 = vadd.f32 %v8398, %v8399
  %v8401 = vadd.f32 %v8349, %v8354
  %v8402 = vadd.f32 %v8401, %v8359
  %v8403 = vadd.f32 %v8402, %v8364
  %v8404 = vrot.slane %v8403, 4
  %v8405 = vadd.f32 %v8403, %v8404
  %v8406 = vrot.slane %v8405, 2
  %v8407 = vadd.f32 %v8405, %v8406
  %v8408 = vrot.slane %v8407, 1
  %v8409 = vadd.f32 %v8407, %v8408
  %v8410 = vsel %vm1325, %v8308, %v8373
  %v8411 = vsel %vm1325, %v8317, %v8382
  %v8412 = vsel %vm1325, %v8326, %v8391
  %v8413 = vsel %vm1325, %v8335, %v8400
  %v8414 = vsel %vm1325, %v8344, %v8409
  %8415 = vmatprep.subr.mxu0 0.0
  %8416 = vmatpush1.msra.mxu0 %v1125
  %8417 = vmatprep.subr.mxu0 0.0
  %8418 = vmatpush1.msra.mxu0 %v1126
  %8419 = vmatprep.subr.mxu0 0.0
  %8420 = vmatpush1.msra.mxu0 %v1127
  %8421 = vmatprep.subr.mxu0 0.0
  %8422 = vmatpush1.msra.mxu0 %v1128
  %8423 = vmatprep.subr.mxu0 0.0
  %8424 = vmatpush1.msra.mxu0 %v1129
  %8425 = vmatprep.subr.mxu0 0.0
  %8426 = vmatpush1.msra.mxu0 %v1130
  %8427 = vmatprep.subr.mxu0 0.0
  %8428 = vmatpush1.msra.mxu0 %v1131
  %8429 = vmatprep.subr.mxu0 0.0
  %8430 = vmatpush1.msra.mxu0 %v1132
  %8431 = vmatprep.subr.mxu0 0.0
  %8432 = vmatpush1.msra.mxu0 %v1133
  %8433 = vmatprep.subr.mxu0 0.0
  %8434 = vmatpush1.msra.mxu0 %v1134
  %8435 = vmatprep.subr.mxu0 0.0
  %8436 = vmatpush1.msra.mxu0 %v1135
  %8437 = vmatprep.subr.mxu0 0.0
  %8438 = vmatpush1.msra.mxu0 %v1136
  %8439 = vmatprep.subr.mxu0 0.0
  %8440 = vmatpush1.msra.mxu0 %v1137
  %8441 = vmatprep.subr.mxu0 0.0
  %8442 = vmatpush1.msra.mxu0 %v1138
  %8443 = vmatprep.subr.mxu0 0.0
  %8444 = vmatpush1.msra.mxu0 %v1139
  %8445 = vmatprep.subr.mxu0 0.0
  %8446 = vmatpush1.msra.mxu0 %v1140
  %8447 = vmatprep.subr.mxu0 0.0
  %8448 = vmatpush1.msra.mxu0 %v1141
  %8449 = vmatprep.subr.mxu0 0.0
  %8450 = vmatpush1.msra.mxu0 %v1142
  %8451 = vmatprep.subr.mxu0 0.0
  %8452 = vmatpush1.msra.mxu0 %v1143
  %8453 = vmatprep.subr.mxu0 0.0
  %8454 = vmatpush1.msra.mxu0 %v1144
  %8455 = vmatprep.subr.mxu0 0.0
  %8456 = vmatpush1.msra.mxu0 %v1145
  %8457 = vmatprep.subr.mxu0 0.0
  %8458 = vmatpush1.msra.mxu0 %v1146
  %8459 = vmatprep.subr.mxu0 0.0
  %8460 = vmatpush1.msra.mxu0 %v1147
  %8461 = vmatprep.subr.mxu0 0.0
  %8462 = vmatpush1.msra.mxu0 %v1148
  %8463 = vmatprep.subr.mxu0 0.0
  %8464 = vmatpush1.msra.mxu0 %v1149
  %8465 = vmatprep.subr.mxu0 0.0
  %8466 = vmatpush1.msra.mxu0 %v1150
  %8467 = vmatprep.subr.mxu0 0.0
  %8468 = vmatpush1.msra.mxu0 %v1151
  %8469 = vmatprep.subr.mxu0 0.0
  %8470 = vmatpush1.msra.mxu0 %v1152
  %8471 = vmatprep.subr.mxu0 0.0
  %8472 = vmatpush1.msra.mxu0 %v1153
  %8473 = vmatprep.subr.mxu0 0.0
  %8474 = vmatpush1.msra.mxu0 %v1154
  %8475 = vmatprep.subr.mxu0 0.0
  %8476 = vmatpush1.msra.mxu0 %v1155
  %8477 = vmatprep.subr.mxu0 0.0
  %8478 = vmatpush1.msra.mxu0 %v1156
  %8479 = vmatprep.mubr.f32.mxu0 %v8411
  %8480 = vmatmul.mubr.f32.gmra.mrb[0].mxu0 %v8410
  %v8481 = vpop.f32.mrb[0].mxu0
  %v8482 = vadd.f32 0.0, %v8481
  %v8483 = vpop.f32.mrb[0].mxu0
  %8484 = vdwg.mxu0
  %8485 = vmatprep.subr.mxu0 0.0
  %8486 = vmatpush1.msra.mxu0 %v1157
  %8487 = vmatprep.subr.mxu0 0.0
  %8488 = vmatpush1.msra.mxu0 %v1158
  %8489 = vmatprep.subr.mxu0 0.0
  %8490 = vmatpush1.msra.mxu0 %v1159
  %8491 = vmatprep.subr.mxu0 0.0
  %8492 = vmatpush1.msra.mxu0 %v1160
  %8493 = vmatprep.subr.mxu0 0.0
  %8494 = vmatpush1.msra.mxu0 %v1161
  %8495 = vmatprep.subr.mxu0 0.0
  %8496 = vmatpush1.msra.mxu0 %v1162
  %8497 = vmatprep.subr.mxu0 0.0
  %8498 = vmatpush1.msra.mxu0 %v1163
  %8499 = vmatprep.subr.mxu0 0.0
  %8500 = vmatpush1.msra.mxu0 %v1164
  %8501 = vmatprep.subr.mxu0 0.0
  %8502 = vmatpush1.msra.mxu0 %v1165
  %8503 = vmatprep.subr.mxu0 0.0
  %8504 = vmatpush1.msra.mxu0 %v1166
  %8505 = vmatprep.subr.mxu0 0.0
  %8506 = vmatpush1.msra.mxu0 %v1167
  %8507 = vmatprep.subr.mxu0 0.0
  %8508 = vmatpush1.msra.mxu0 %v1168
  %8509 = vmatprep.subr.mxu0 0.0
  %8510 = vmatpush1.msra.mxu0 %v1169
  %8511 = vmatprep.subr.mxu0 0.0
  %8512 = vmatpush1.msra.mxu0 %v1170
  %8513 = vmatprep.subr.mxu0 0.0
  %8514 = vmatpush1.msra.mxu0 %v1171
  %8515 = vmatprep.subr.mxu0 0.0
  %8516 = vmatpush1.msra.mxu0 %v1172
  %8517 = vmatprep.subr.mxu0 0.0
  %8518 = vmatpush1.msra.mxu0 %v1173
  %8519 = vmatprep.subr.mxu0 0.0
  %8520 = vmatpush1.msra.mxu0 %v1174
  %8521 = vmatprep.subr.mxu0 0.0
  %8522 = vmatpush1.msra.mxu0 %v1175
  %8523 = vmatprep.subr.mxu0 0.0
  %8524 = vmatpush1.msra.mxu0 %v1176
  %8525 = vmatprep.subr.mxu0 0.0
  %8526 = vmatpush1.msra.mxu0 %v1177
  %8527 = vmatprep.subr.mxu0 0.0
  %8528 = vmatpush1.msra.mxu0 %v1178
  %8529 = vmatprep.subr.mxu0 0.0
  %8530 = vmatpush1.msra.mxu0 %v1179
  %8531 = vmatprep.subr.mxu0 0.0
  %8532 = vmatpush1.msra.mxu0 %v1180
  %8533 = vmatprep.subr.mxu0 0.0
  %8534 = vmatpush1.msra.mxu0 %v1181
  %8535 = vmatprep.subr.mxu0 0.0
  %8536 = vmatpush1.msra.mxu0 %v1182
  %8537 = vmatprep.subr.mxu0 0.0
  %8538 = vmatpush1.msra.mxu0 %v1183
  %8539 = vmatprep.subr.mxu0 0.0
  %8540 = vmatpush1.msra.mxu0 %v1184
  %8541 = vmatprep.subr.mxu0 0.0
  %8542 = vmatpush1.msra.mxu0 %v1185
  %8543 = vmatprep.subr.mxu0 0.0
  %8544 = vmatpush1.msra.mxu0 %v1186
  %8545 = vmatprep.subr.mxu0 0.0
  %8546 = vmatpush1.msra.mxu0 %v1187
  %8547 = vmatprep.subr.mxu0 0.0
  %8548 = vmatpush1.msra.mxu0 %v1188
  %8549 = vmatprep.mubr.f32.mxu0 %v8413
  %8550 = vmatmul.mubr.f32.gmra.mrb[0].mxu0 %v8412
  %v8551 = vpop.f32.mrb[0].mxu0
  %v8552 = vadd.f32 %v8482, %v8551
  %v8553 = vpop.f32.mrb[0].mxu0
  %8554 = vdwg.mxu0
  %8555 = vmatprep.subr.mxu0 0.0
  %8556 = vmatpush1.msra.mxu0 %v1189
  %8557 = vmatprep.subr.mxu0 0.0
  %8558 = vmatpush1.msra.mxu0 %v1190
  %8559 = vmatprep.subr.mxu0 0.0
  %8560 = vmatpush1.msra.mxu0 %v1191
  %8561 = vmatprep.subr.mxu0 0.0
  %8562 = vmatpush1.msra.mxu0 %v1192
  %8563 = vmatprep.subr.mxu0 0.0
  %8564 = vmatpush1.msra.mxu0 %v1193
  %8565 = vmatprep.subr.mxu0 0.0
  %8566 = vmatpush1.msra.mxu0 %v1194
  %8567 = vmatprep.subr.mxu0 0.0
  %8568 = vmatpush1.msra.mxu0 %v1195
  %8569 = vmatprep.subr.mxu0 0.0
  %8570 = vmatpush1.msra.mxu0 %v1196
  %8571 = vmatprep.subr.mxu0 0.0
  %8572 = vmatpush1.msra.mxu0 %v1197
  %8573 = vmatprep.subr.mxu0 0.0
  %8574 = vmatpush1.msra.mxu0 %v1198
  %8575 = vmatprep.subr.mxu0 0.0
  %8576 = vmatpush1.msra.mxu0 %v1199
  %8577 = vmatprep.subr.mxu0 0.0
  %8578 = vmatpush1.msra.mxu0 %v1200
  %8579 = vmatprep.subr.mxu0 0.0
  %8580 = vmatpush1.msra.mxu0 %v1201
  %8581 = vmatprep.subr.mxu0 0.0
  %8582 = vmatpush1.msra.mxu0 %v1202
  %8583 = vmatprep.subr.mxu0 0.0
  %8584 = vmatpush1.msra.mxu0 %v1203
  %8585 = vmatprep.subr.mxu0 0.0
  %8586 = vmatpush1.msra.mxu0 %v1204
  %8587 = vmatprep.subr.mxu0 0.0
  %8588 = vmatpush1.msra.mxu0 0.0
  %8589 = vmatprep.subr.mxu0 0.0
  %8590 = vmatpush1.msra.mxu0 0.0
  %8591 = vmatprep.subr.mxu0 0.0
  %8592 = vmatpush1.msra.mxu0 0.0
  %8593 = vmatprep.subr.mxu0 0.0
  %8594 = vmatpush1.msra.mxu0 0.0
  %8595 = vmatprep.subr.mxu0 0.0
  %8596 = vmatpush1.msra.mxu0 0.0
  %8597 = vmatprep.subr.mxu0 0.0
  %8598 = vmatpush1.msra.mxu0 0.0
  %8599 = vmatprep.subr.mxu0 0.0
  %8600 = vmatpush1.msra.mxu0 0.0
  %8601 = vmatprep.subr.mxu0 0.0
  %8602 = vmatpush1.msra.mxu0 0.0
  %8603 = vmatprep.subr.mxu0 0.0
  %8604 = vmatpush1.msra.mxu0 0.0
  %8605 = vmatprep.subr.mxu0 0.0
  %8606 = vmatpush1.msra.mxu0 0.0
  %8607 = vmatprep.subr.mxu0 0.0
  %8608 = vmatpush1.msra.mxu0 0.0
  %8609 = vmatprep.subr.mxu0 0.0
  %8610 = vmatpush1.msra.mxu0 0.0
  %8611 = vmatprep.subr.mxu0 0.0
  %8612 = vmatpush1.msra.mxu0 0.0
  %8613 = vmatprep.subr.mxu0 0.0
  %8614 = vmatpush1.msra.mxu0 0.0
  %8615 = vmatprep.subr.mxu0 0.0
  %8616 = vmatpush1.msra.mxu0 0.0
  %8617 = vmatprep.subr.mxu0 0.0
  %8618 = vmatpush1.msra.mxu0 0.0
  %8619 = vmatprep.mubr.f32.mxu0 0.0
  %8620 = vmatmul.mubr.f32.gmra.mrb[0].mxu0 %v8414
  %v8621 = vpop.f32.mrb[0].mxu0
  %v8622 = vadd.f32 %v8552, %v8621
  %v8623 = vpop.f32.mrb[0].mxu0
  %8624 = vdwg.mxu0
  %v8626 = vsel %vm1541, %v8622, 0
  %8628 = vmatprep.subr.mxu0 %v1206
  %8629 = vmatpush1.msra.mxu0 %v1205
  %8630 = vmatprep.subr.mxu0 %v1211
  %8631 = vmatpush1.msra.mxu0 %v1210
  %8632 = vmatprep.subr.mxu0 0.0
  %8633 = vmatpush1.msra.mxu0 0.0
  %8634 = vmatprep.subr.mxu0 0.0
  %8635 = vmatpush1.msra.mxu0 0.0
  %8636 = vmatprep.subr.mxu0 0.0
  %8637 = vmatpush1.msra.mxu0 0.0
  %8638 = vmatprep.subr.mxu0 0.0
  %8639 = vmatpush1.msra.mxu0 0.0
  %8640 = vmatprep.subr.mxu0 0.0
  %8641 = vmatpush1.msra.mxu0 0.0
  %8642 = vmatprep.subr.mxu0 0.0
  %8643 = vmatpush1.msra.mxu0 0.0
  %8644 = vmatprep.subr.mxu0 0.0
  %8645 = vmatpush1.msra.mxu0 0.0
  %8646 = vmatprep.subr.mxu0 0.0
  %8647 = vmatpush1.msra.mxu0 0.0
  %8648 = vmatprep.subr.mxu0 0.0
  %8649 = vmatpush1.msra.mxu0 0.0
  %8650 = vmatprep.subr.mxu0 0.0
  %8651 = vmatpush1.msra.mxu0 0.0
  %8652 = vmatprep.subr.mxu0 0.0
  %8653 = vmatpush1.msra.mxu0 0.0
  %8654 = vmatprep.subr.mxu0 0.0
  %8655 = vmatpush1.msra.mxu0 0.0
  %8656 = vmatprep.subr.mxu0 0.0
  %8657 = vmatpush1.msra.mxu0 0.0
  %8658 = vmatprep.subr.mxu0 0.0
  %8659 = vmatpush1.msra.mxu0 0.0
  %8660 = vmatprep.subr.mxu0 0.0
  %8661 = vmatpush1.msra.mxu0 0.0
  %8662 = vmatprep.subr.mxu0 0.0
  %8663 = vmatpush1.msra.mxu0 0.0
  %8664 = vmatprep.subr.mxu0 0.0
  %8665 = vmatpush1.msra.mxu0 0.0
  %8666 = vmatprep.subr.mxu0 0.0
  %8667 = vmatpush1.msra.mxu0 0.0
  %8668 = vmatprep.subr.mxu0 0.0
  %8669 = vmatpush1.msra.mxu0 0.0
  %8670 = vmatprep.subr.mxu0 0.0
  %8671 = vmatpush1.msra.mxu0 0.0
  %8672 = vmatprep.subr.mxu0 0.0
  %8673 = vmatpush1.msra.mxu0 0.0
  %8674 = vmatprep.subr.mxu0 0.0
  %8675 = vmatpush1.msra.mxu0 0.0
  %8676 = vmatprep.subr.mxu0 0.0
  %8677 = vmatpush1.msra.mxu0 0.0
  %8678 = vmatprep.subr.mxu0 0.0
  %8679 = vmatpush1.msra.mxu0 0.0
  %8680 = vmatprep.subr.mxu0 0.0
  %8681 = vmatpush1.msra.mxu0 0.0
  %8682 = vmatprep.subr.mxu0 0.0
  %8683 = vmatpush1.msra.mxu0 0.0
  %8684 = vmatprep.subr.mxu0 0.0
  %8685 = vmatpush1.msra.mxu0 0.0
  %8686 = vmatprep.subr.mxu0 0.0
  %8687 = vmatpush1.msra.mxu0 0.0
  %8688 = vmatprep.subr.mxu0 0.0
  %8689 = vmatpush1.msra.mxu0 0.0
  %8690 = vmatprep.subr.mxu0 0.0
  %8691 = vmatpush1.msra.mxu0 0.0
  %8692 = vmatprep.mubr.f32.mxu0 0.0
  %8693 = vmatmul.mubr.f32.gmra.mrb[0].mxu0 %v8626
  %v8694 = vpop.f32.mrb[0].mxu0
  %v8695 = vadd.f32 0.0, %v8694
  %v8696 = vpop.f32.mrb[0].mxu0
  %v8697 = vadd.f32 0.0, %v8696
  %8698 = vdwg.mxu0
  %8699 = vmatprep.subr.mxu0 %v1208
  %8700 = vmatpush1.msra.mxu0 %v1207
  %8701 = vmatprep.subr.mxu0 %v1213
  %8702 = vmatpush1.msra.mxu0 %v1212
  %8703 = vmatprep.subr.mxu0 0.0
  %8704 = vmatpush1.msra.mxu0 0.0
  %8705 = vmatprep.subr.mxu0 0.0
  %8706 = vmatpush1.msra.mxu0 0.0
  %8707 = vmatprep.subr.mxu0 0.0
  %8708 = vmatpush1.msra.mxu0 0.0
  %8709 = vmatprep.subr.mxu0 0.0
  %8710 = vmatpush1.msra.mxu0 0.0
  %8711 = vmatprep.subr.mxu0 0.0
  %8712 = vmatpush1.msra.mxu0 0.0
  %8713 = vmatprep.subr.mxu0 0.0
  %8714 = vmatpush1.msra.mxu0 0.0
  %8715 = vmatprep.subr.mxu0 0.0
  %8716 = vmatpush1.msra.mxu0 0.0
  %8717 = vmatprep.subr.mxu0 0.0
  %8718 = vmatpush1.msra.mxu0 0.0
  %8719 = vmatprep.subr.mxu0 0.0
  %8720 = vmatpush1.msra.mxu0 0.0
  %8721 = vmatprep.subr.mxu0 0.0
  %8722 = vmatpush1.msra.mxu0 0.0
  %8723 = vmatprep.subr.mxu0 0.0
  %8724 = vmatpush1.msra.mxu0 0.0
  %8725 = vmatprep.subr.mxu0 0.0
  %8726 = vmatpush1.msra.mxu0 0.0
  %8727 = vmatprep.subr.mxu0 0.0
  %8728 = vmatpush1.msra.mxu0 0.0
  %8729 = vmatprep.subr.mxu0 0.0
  %8730 = vmatpush1.msra.mxu0 0.0
  %8731 = vmatprep.subr.mxu0 0.0
  %8732 = vmatpush1.msra.mxu0 0.0
  %8733 = vmatprep.subr.mxu0 0.0
  %8734 = vmatpush1.msra.mxu0 0.0
  %8735 = vmatprep.subr.mxu0 0.0
  %8736 = vmatpush1.msra.mxu0 0.0
  %8737 = vmatprep.subr.mxu0 0.0
  %8738 = vmatpush1.msra.mxu0 0.0
  %8739 = vmatprep.subr.mxu0 0.0
  %8740 = vmatpush1.msra.mxu0 0.0
  %8741 = vmatprep.subr.mxu0 0.0
  %8742 = vmatpush1.msra.mxu0 0.0
  %8743 = vmatprep.subr.mxu0 0.0
  %8744 = vmatpush1.msra.mxu0 0.0
  %8745 = vmatprep.subr.mxu0 0.0
  %8746 = vmatpush1.msra.mxu0 0.0
  %8747 = vmatprep.subr.mxu0 0.0
  %8748 = vmatpush1.msra.mxu0 0.0
  %8749 = vmatprep.subr.mxu0 0.0
  %8750 = vmatpush1.msra.mxu0 0.0
  %8751 = vmatprep.subr.mxu0 0.0
  %8752 = vmatpush1.msra.mxu0 0.0
  %8753 = vmatprep.subr.mxu0 0.0
  %8754 = vmatpush1.msra.mxu0 0.0
  %8755 = vmatprep.subr.mxu0 0.0
  %8756 = vmatpush1.msra.mxu0 0.0
  %8757 = vmatprep.subr.mxu0 0.0
  %8758 = vmatpush1.msra.mxu0 0.0
  %8759 = vmatprep.subr.mxu0 0.0
  %8760 = vmatpush1.msra.mxu0 0.0
  %8761 = vmatprep.subr.mxu0 0.0
  %8762 = vmatpush1.msra.mxu0 0.0
  %8763 = vmatprep.mubr.f32.mxu0 0.0
  %8764 = vmatmul.mubr.f32.gmra.mrb[0].mxu0 %v8626
  %v8765 = vpop.f32.mrb[0].mxu0
  %v8766 = vadd.f32 0.0, %v8765
  %v8767 = vpop.f32.mrb[0].mxu0
  %v8768 = vadd.f32 0.0, %v8767
  %8769 = vdwg.mxu0
  %8770 = vmatprep.subr.mxu0 0.0
  %8771 = vmatpush1.msra.mxu0 %v1209
  %8772 = vmatprep.subr.mxu0 0.0
  %8773 = vmatpush1.msra.mxu0 %v1214
  %8774 = vmatprep.subr.mxu0 0.0
  %8775 = vmatpush1.msra.mxu0 0.0
  %8776 = vmatprep.subr.mxu0 0.0
  %8777 = vmatpush1.msra.mxu0 0.0
  %8778 = vmatprep.subr.mxu0 0.0
  %8779 = vmatpush1.msra.mxu0 0.0
  %8780 = vmatprep.subr.mxu0 0.0
  %8781 = vmatpush1.msra.mxu0 0.0
  %8782 = vmatprep.subr.mxu0 0.0
  %8783 = vmatpush1.msra.mxu0 0.0
  %8784 = vmatprep.subr.mxu0 0.0
  %8785 = vmatpush1.msra.mxu0 0.0
  %8786 = vmatprep.subr.mxu0 0.0
  %8787 = vmatpush1.msra.mxu0 0.0
  %8788 = vmatprep.subr.mxu0 0.0
  %8789 = vmatpush1.msra.mxu0 0.0
  %8790 = vmatprep.subr.mxu0 0.0
  %8791 = vmatpush1.msra.mxu0 0.0
  %8792 = vmatprep.subr.mxu0 0.0
  %8793 = vmatpush1.msra.mxu0 0.0
  %8794 = vmatprep.subr.mxu0 0.0
  %8795 = vmatpush1.msra.mxu0 0.0
  %8796 = vmatprep.subr.mxu0 0.0
  %8797 = vmatpush1.msra.mxu0 0.0
  %8798 = vmatprep.subr.mxu0 0.0
  %8799 = vmatpush1.msra.mxu0 0.0
  %8800 = vmatprep.subr.mxu0 0.0
  %8801 = vmatpush1.msra.mxu0 0.0
  %8802 = vmatprep.subr.mxu0 0.0
  %8803 = vmatpush1.msra.mxu0 0.0
  %8804 = vmatprep.subr.mxu0 0.0
  %8805 = vmatpush1.msra.mxu0 0.0
  %8806 = vmatprep.subr.mxu0 0.0
  %8807 = vmatpush1.msra.mxu0 0.0
  %8808 = vmatprep.subr.mxu0 0.0
  %8809 = vmatpush1.msra.mxu0 0.0
  %8810 = vmatprep.subr.mxu0 0.0
  %8811 = vmatpush1.msra.mxu0 0.0
  %8812 = vmatprep.subr.mxu0 0.0
  %8813 = vmatpush1.msra.mxu0 0.0
  %8814 = vmatprep.subr.mxu0 0.0
  %8815 = vmatpush1.msra.mxu0 0.0
  %8816 = vmatprep.subr.mxu0 0.0
  %8817 = vmatpush1.msra.mxu0 0.0
  %8818 = vmatprep.subr.mxu0 0.0
  %8819 = vmatpush1.msra.mxu0 0.0
  %8820 = vmatprep.subr.mxu0 0.0
  %8821 = vmatpush1.msra.mxu0 0.0
  %8822 = vmatprep.subr.mxu0 0.0
  %8823 = vmatpush1.msra.mxu0 0.0
  %8824 = vmatprep.subr.mxu0 0.0
  %8825 = vmatpush1.msra.mxu0 0.0
  %8826 = vmatprep.subr.mxu0 0.0
  %8827 = vmatpush1.msra.mxu0 0.0
  %8828 = vmatprep.subr.mxu0 0.0
  %8829 = vmatpush1.msra.mxu0 0.0
  %8830 = vmatprep.subr.mxu0 0.0
  %8831 = vmatpush1.msra.mxu0 0.0
  %8832 = vmatprep.subr.mxu0 0.0
  %8833 = vmatpush1.msra.mxu0 0.0
  %8834 = vmatprep.mubr.f32.mxu0 0.0
  %8835 = vmatmul.mubr.f32.gmra.mrb[0].mxu0 %v8626
  %v8836 = vpop.f32.mrb[0].mxu0
  %v8837 = vadd.f32 0.0, %v8836
  %v8838 = vpop.f32.mrb[0].mxu0
  %8839 = vdwg.mxu0
  %v8840 = vmul.f32 %v8695, %v1757
  %v8841 = vmul.f32 %v8697, %v1757
  %v8842 = vmul.f32 %v8766, %v1757
  %v8843 = vmul.f32 %v8768, %v1757
  %v8844 = vmul.f32 %v8837, %v1757
  %v8845 = vmul.f32 %v8840, %v8840
  %v8846 = vmul.f32 %v8841, %v8841
  %v8847 = vmul.f32 %v8842, %v8842
  %v8848 = vmul.f32 %v8843, %v8843
  %v8849 = vmul.f32 %v8844, %v8844
  %v8855 = vrot.slane %v8845, 7
  %v8856 = vrot.slane %v8846, 7
  %v8857 = vrot.slane %v8847, 7
  %v8858 = vrot.slane %v8848, 7
  %v8859 = vrot.slane %v8849, 7
  %v8865 = vsub.f32 %v8840, %v8855
  %v8866 = vsub.f32 %v8841, %v8856
  %v8867 = vsub.f32 %v8842, %v8857
  %v8868 = vsub.f32 %v8843, %v8858
  %v8869 = vsub.f32 %v8844, %v8859
  %v8870 = vmax.f32 %v8865, 0.0
  %v8871 = vmax.f32 %v8866, 0.0
  %v8872 = vmax.f32 %v8867, 0.0
  %v8873 = vmax.f32 %v8868, 0.0
  %v8874 = vmax.f32 %v8869, 0.0
  %v8875 = vadd.f32 %v8870, 1e-05
  %v8876 = vadd.f32 %v8871, 1e-05
  %v8877 = vadd.f32 %v8872, 1e-05
  %v8878 = vadd.f32 %v8873, 1e-05
  %v8879 = vadd.f32 %v8874, 1e-05
  %v8880 = vrsqrt.pop %v8875
  %v8881 = vrsqrt.pop %v8876
  %v8882 = vrsqrt.pop %v8877
  %v8883 = vrsqrt.pop %v8878
  %v8884 = vrsqrt.pop %v8879
  %v8885 = vlaneseq
  %v8886 = vshrl.u32 %v8885, 7
  %v8887 = vsub.s32 0, %v8886
  %v8888 = vrot.slane %v8840, %v8887
  %v8889 = vlaneseq
  %v8890 = vshrl.u32 %v8889, 7
  %v8891 = vsub.s32 0, %v8890
  %v8892 = vrot.slane %v8841, %v8891
  %v8893 = vlaneseq
  %v8894 = vshrl.u32 %v8893, 7
  %v8895 = vsub.s32 0, %v8894
  %v8896 = vrot.slane %v8842, %v8895
  %v8897 = vlaneseq
  %v8898 = vshrl.u32 %v8897, 7
  %v8899 = vsub.s32 0, %v8898
  %v8900 = vrot.slane %v8843, %v8899
  %v8901 = vlaneseq
  %v8902 = vshrl.u32 %v8901, 7
  %v8903 = vsub.s32 0, %v8902
  %v8904 = vrot.slane %v8844, %v8903
  %v8905 = vsub.f32 %v8278, %v8888
  %v8906 = vsub.f32 %v8279, %v8892
  %v8907 = vsub.f32 %v8280, %v8896
  %v8908 = vsub.f32 %v8281, %v8900
  %v8909 = vsub.f32 %v8282, %v8904
  %v8910 = vsub.f32 %v8283, %v8888
  %v8911 = vsub.f32 %v8284, %v8892
  %v8912 = vsub.f32 %v8285, %v8896
  %v8913 = vsub.f32 %v8286, %v8900
  %v8914 = vsub.f32 %v8287, %v8904
  %v8915 = vsub.f32 %v8288, %v8888
  %v8916 = vsub.f32 %v8289, %v8892
  %v8917 = vsub.f32 %v8290, %v8896
  %v8918 = vsub.f32 %v8291, %v8900
  %v8919 = vsub.f32 %v8292, %v8904
  %v8920 = vsub.f32 %v8293, %v8888
  %v8921 = vsub.f32 %v8294, %v8892
  %v8922 = vsub.f32 %v8295, %v8896
  %v8923 = vsub.f32 %v8296, %v8900
  %v8924 = vsub.f32 %v8297, %v8904
  %v8926 = vlaneseq
  %v8927 = vshrl.u32 %v8926, 7
  %v8928 = vsub.s32 0, %v8927
  %v8929 = vrot.slane %v8298, %v8928
  %v8930 = vlaneseq
  %v8931 = vshrl.u32 %v8930, 7
  %v8932 = vsub.s32 1, %v8931
  %v8933 = vrot.slane %v8298, %v8932
  %v8934 = vlaneseq
  %v8935 = vshrl.u32 %v8934, 7
  %v8936 = vsub.s32 2, %v8935
  %v8937 = vrot.slane %v8298, %v8936
  %v8938 = vlaneseq
  %v8939 = vshrl.u32 %v8938, 7
  %v8940 = vsub.s32 3, %v8939
  %v8941 = vrot.slane %v8298, %v8940
  %v8942 = vlaneseq
  %v8943 = vshrl.u32 %v8942, 7
  %v8944 = vsub.s32 4, %v8943
  %v8945 = vrot.slane %v8298, %v8944
  %v8951 = vmul.f32 %v8880, %v8929
  %v8952 = vmul.f32 %v8881, %v8933
  %v8953 = vmul.f32 %v8882, %v8937
  %v8954 = vmul.f32 %v8883, %v8941
  %v8955 = vmul.f32 %v8884, %v8945
  %v8956 = vlaneseq
  %v8957 = vshrl.u32 %v8956, 7
  %v8958 = vsub.s32 1, %v8957
  %v8959 = vrot.slane %v8951, %v8958
  %v8960 = vlaneseq
  %v8961 = vshrl.u32 %v8960, 7
  %v8962 = vsub.s32 1, %v8961
  %v8963 = vrot.slane %v8952, %v8962
  %v8964 = vlaneseq
  %v8965 = vshrl.u32 %v8964, 7
  %v8966 = vsub.s32 1, %v8965
  %v8967 = vrot.slane %v8953, %v8966
  %v8968 = vlaneseq
  %v8969 = vshrl.u32 %v8968, 7
  %v8970 = vsub.s32 1, %v8969
  %v8971 = vrot.slane %v8954, %v8970
  %v8972 = vlaneseq
  %v8973 = vshrl.u32 %v8972, 7
  %v8974 = vsub.s32 1, %v8973
  %v8975 = vrot.slane %v8955, %v8974
  %v8976 = vmul.f32 %v8905, %v8959
  %v8977 = vmul.f32 %v8906, %v8963
  %v8978 = vmul.f32 %v8907, %v8967
  %v8979 = vmul.f32 %v8908, %v8971
  %v8980 = vmul.f32 %v8909, %v8975
  %v8981 = vmul.f32 %v8910, %v8959
  %v8982 = vmul.f32 %v8911, %v8963
  %v8983 = vmul.f32 %v8912, %v8967
  %v8984 = vmul.f32 %v8913, %v8971
  %v8985 = vmul.f32 %v8914, %v8975
  %v8986 = vmul.f32 %v8915, %v8959
  %v8987 = vmul.f32 %v8916, %v8963
  %v8988 = vmul.f32 %v8917, %v8967
  %v8989 = vmul.f32 %v8918, %v8971
  %v8990 = vmul.f32 %v8919, %v8975
  %v8991 = vmul.f32 %v8920, %v8959
  %v8992 = vmul.f32 %v8921, %v8963
  %v8993 = vmul.f32 %v8922, %v8967
  %v8994 = vmul.f32 %v8923, %v8971
  %v8995 = vmul.f32 %v8924, %v8975
  %v8997 = vlaneseq
  %v8998 = vshrl.u32 %v8997, 7
  %v8999 = vsub.s32 0, %v8998
  %v9000 = vrot.slane %v8299, %v8999
  %v9001 = vlaneseq
  %v9002 = vshrl.u32 %v9001, 7
  %v9003 = vsub.s32 1, %v9002
  %v9004 = vrot.slane %v8299, %v9003
  %v9005 = vlaneseq
  %v9006 = vshrl.u32 %v9005, 7
  %v9007 = vsub.s32 2, %v9006
  %v9008 = vrot.slane %v8299, %v9007
  %v9009 = vlaneseq
  %v9010 = vshrl.u32 %v9009, 7
  %v9011 = vsub.s32 3, %v9010
  %v9012 = vrot.slane %v8299, %v9011
  %v9013 = vlaneseq
  %v9014 = vshrl.u32 %v9013, 7
  %v9015 = vsub.s32 4, %v9014
  %v9016 = vrot.slane %v8299, %v9015
  %v9022 = vadd.f32 %v8976, %v9000
  %v9023 = vadd.f32 %v8977, %v9004
  %v9024 = vadd.f32 %v8978, %v9008
  %v9025 = vadd.f32 %v8979, %v9012
  %v9026 = vadd.f32 %v8980, %v9016
  %v9027 = vadd.f32 %v8981, %v9000
  %v9028 = vadd.f32 %v8982, %v9004
  %v9029 = vadd.f32 %v8983, %v9008
  %v9030 = vadd.f32 %v8984, %v9012
  %v9031 = vadd.f32 %v8985, %v9016
  %v9032 = vadd.f32 %v8986, %v9000
  %v9033 = vadd.f32 %v8987, %v9004
  %v9034 = vadd.f32 %v8988, %v9008
  %v9035 = vadd.f32 %v8989, %v9012
  %v9036 = vadd.f32 %v8990, %v9016
  %v9037 = vadd.f32 %v8991, %v9000
  %v9038 = vadd.f32 %v8992, %v9004
  %v9039 = vadd.f32 %v8993, %v9008
  %v9040 = vadd.f32 %v8994, %v9012
  %v9041 = vadd.f32 %v8995, %v9016
  %v9042 = vadd.f32 %v9022, %v9027
  %v9043 = vrot.slane %v9042, 4
  %v9044 = vadd.f32 %v9042, %v9043
  %v9045 = vrot.slane %v9044, 2
  %v9046 = vadd.f32 %v9044, %v9045
  %v9047 = vrot.slane %v9046, 1
  %v9048 = vadd.f32 %v9046, %v9047
  %v9049 = vadd.f32 %v9023, %v9028
  %v9050 = vrot.slane %v9049, 4
  %v9051 = vadd.f32 %v9049, %v9050
  %v9052 = vrot.slane %v9051, 2
  %v9053 = vadd.f32 %v9051, %v9052
  %v9054 = vrot.slane %v9053, 1
  %v9055 = vadd.f32 %v9053, %v9054
  %v9056 = vadd.f32 %v9024, %v9029
  %v9057 = vrot.slane %v9056, 4
  %v9058 = vadd.f32 %v9056, %v9057
  %v9059 = vrot.slane %v9058, 2
  %v9060 = vadd.f32 %v9058, %v9059
  %v9061 = vrot.slane %v9060, 1
  %v9062 = vadd.f32 %v9060, %v9061
  %v9063 = vadd.f32 %v9025, %v9030
  %v9064 = vrot.slane %v9063, 4
  %v9065 = vadd.f32 %v9063, %v9064
  %v9066 = vrot.slane %v9065, 2
  %v9067 = vadd.f32 %v9065, %v9066
  %v9068 = vrot.slane %v9067, 1
  %v9069 = vadd.f32 %v9067, %v9068
  %v9070 = vadd.f32 %v9026, %v9031
  %v9071 = vrot.slane %v9070, 4
  %v9072 = vadd.f32 %v9070, %v9071
  %v9073 = vrot.slane %v9072, 2
  %v9074 = vadd.f32 %v9072, %v9073
  %v9075 = vrot.slane %v9074, 1
  %v9076 = vadd.f32 %v9074, %v9075
  %v9077 = vadd.f32 %v9032, %v9037
  %v9078 = vrot.slane %v9077, 4
  %v9079 = vadd.f32 %v9077, %v9078
  %v9080 = vrot.slane %v9079, 2
  %v9081 = vadd.f32 %v9079, %v9080
  %v9082 = vrot.slane %v9081, 1
  %v9083 = vadd.f32 %v9081, %v9082
  %v9084 = vadd.f32 %v9033, %v9038
  %v9085 = vrot.slane %v9084, 4
  %v9086 = vadd.f32 %v9084, %v9085
  %v9087 = vrot.slane %v9086, 2
  %v9088 = vadd.f32 %v9086, %v9087
  %v9089 = vrot.slane %v9088, 1
  %v9090 = vadd.f32 %v9088, %v9089
  %v9091 = vadd.f32 %v9034, %v9039
  %v9092 = vrot.slane %v9091, 4
  %v9093 = vadd.f32 %v9091, %v9092
  %v9094 = vrot.slane %v9093, 2
  %v9095 = vadd.f32 %v9093, %v9094
  %v9096 = vrot.slane %v9095, 1
  %v9097 = vadd.f32 %v9095, %v9096
  %v9098 = vadd.f32 %v9035, %v9040
  %v9099 = vrot.slane %v9098, 4
  %v9100 = vadd.f32 %v9098, %v9099
  %v9101 = vrot.slane %v9100, 2
  %v9102 = vadd.f32 %v9100, %v9101
  %v9103 = vrot.slane %v9102, 1
  %v9104 = vadd.f32 %v9102, %v9103
  %v9105 = vadd.f32 %v9036, %v9041
  %v9106 = vrot.slane %v9105, 4
  %v9107 = vadd.f32 %v9105, %v9106
  %v9108 = vrot.slane %v9107, 2
  %v9109 = vadd.f32 %v9107, %v9108
  %v9110 = vrot.slane %v9109, 1
  %v9111 = vadd.f32 %v9109, %v9110
  %v9112 = vsel %vm1325, %v9048, %v9083
  %v9113 = vsel %vm1325, %v9055, %v9090
  %v9114 = vsel %vm1325, %v9062, %v9097
  %v9115 = vsel %vm1325, %v9069, %v9104
  %v9116 = vsel %vm1325, %v9076, %v9111
  %v9117 = vld [vmem:[%s19] sm:$0xff]
  %v9118 = vld [vmem:[%s19 + $0x8] sm:$0xff]
  %v9119 = vld [vmem:[%s19 + $0x10] sm:$0xff]
  %v9120 = vld [vmem:[%s19 + $0x18] sm:$0xff]
  %v9121 = vld [vmem:[%s19 + $0x20] sm:$0xff]
  %v9122 = vld [vmem:[%s19 + $0x28] sm:$0xff]
  %v9123 = vld [vmem:[%s19 + $0x30] sm:$0xff]
  %v9124 = vld [vmem:[%s19 + $0x38] sm:$0xff]
  %v9125 = vld [vmem:[%s19 + $0x40] sm:$0xff]
  %v9126 = vld [vmem:[%s19 + $0x48] sm:$0xff]
  %v9127 = vld [vmem:[%s19 + $0x50] sm:$0xff]
  %v9128 = vld [vmem:[%s19 + $0x58] sm:$0xff]
  %v9129 = vld [vmem:[%s19 + $0x60] sm:$0xff]
  %v9130 = vld [vmem:[%s19 + $0x68] sm:$0xff]
  %v9131 = vld [vmem:[%s19 + $0x70] sm:$0xff]
  %v9132 = vld [vmem:[%s19 + $0x78] sm:$0xff]
  %v9133 = vld [vmem:[%s19 + $0x80] sm:$0xff]
  %v9134 = vld [vmem:[%s19 + $0x88] sm:$0xff]
  %v9135 = vld [vmem:[%s19 + $0x90] sm:$0xff]
  %v9136 = vld [vmem:[%s19 + $0x98] sm:$0xff]
  %v9137 = vld [vmem:[%s19 + $0xa0] sm:$0xff]
  %v9138 = vld [vmem:[%s19 + $0xa8] sm:$0xff]
  %v9139 = vld [vmem:[%s19 + $0xb0] sm:$0xff]
  %v9140 = vld [vmem:[%s19 + $0xb8] sm:$0xff]
  %v9141 = vld [vmem:[%s19 + $0xc0] sm:$0xff]
  %v9142 = vld [vmem:[%s19 + $0xc8] sm:$0xff]
  %v9143 = vld [vmem:[%s19 + $0xd0] sm:$0xff]
  %v9144 = vld [vmem:[%s19 + $0xd8] sm:$0xff]
  %v9145 = vld [vmem:[%s19 + $0xe0] sm:$0xff]
  %v9146 = vld [vmem:[%s19 + $0xe8] sm:$0xff]
  %v9147 = vld [vmem:[%s19 + $0xf0] sm:$0xff]
  %v9148 = vld [vmem:[%s19 + $0xf8] sm:$0xff]
  %v9149 = vld [vmem:[%s19 + $0x100] sm:$0xff]
  %v9150 = vld [vmem:[%s19 + $0x108] sm:$0xff]
  %v9151 = vld [vmem:[%s19 + $0x110] sm:$0xff]
  %v9152 = vld [vmem:[%s19 + $0x118] sm:$0xff]
  %v9153 = vld [vmem:[%s19 + $0x120] sm:$0xff]
  %v9154 = vld [vmem:[%s19 + $0x128] sm:$0xff]
  %v9155 = vld [vmem:[%s19 + $0x130] sm:$0xff]
  %v9156 = vld [vmem:[%s19 + $0x138] sm:$0xff]
  %v9157 = vld [vmem:[%s19 + $0x140] sm:$0xff]
  %v9158 = vld [vmem:[%s19 + $0x148] sm:$0xff]
  %v9159 = vld [vmem:[%s19 + $0x150] sm:$0xff]
  %v9160 = vld [vmem:[%s19 + $0x158] sm:$0xff]
  %v9161 = vld [vmem:[%s19 + $0x160] sm:$0xff]
  %v9162 = vld [vmem:[%s19 + $0x168] sm:$0xff]
  %v9163 = vld [vmem:[%s19 + $0x170] sm:$0xff]
  %v9164 = vld [vmem:[%s19 + $0x178] sm:$0xff]
  %v9165 = vld [vmem:[%s19 + $0x180] sm:$0xff]
  %v9166 = vld [vmem:[%s19 + $0x188] sm:$0xff]
  %v9167 = vld [vmem:[%s19 + $0x190] sm:$0xff]
  %v9168 = vld [vmem:[%s19 + $0x198] sm:$0xff]
  %v9169 = vld [vmem:[%s19 + $0x1a0] sm:$0xff]
  %v9170 = vld [vmem:[%s19 + $0x1a8] sm:$0xff]
  %v9171 = vld [vmem:[%s19 + $0x1b0] sm:$0xff]
  %v9172 = vld [vmem:[%s19 + $0x1b8] sm:$0xff]
  %v9173 = vld [vmem:[%s19 + $0x1c0] sm:$0xff]
  %v9174 = vld [vmem:[%s19 + $0x1c8] sm:$0xff]
  %v9175 = vld [vmem:[%s19 + $0x1d0] sm:$0xff]
  %v9176 = vld [vmem:[%s19 + $0x1d8] sm:$0xff]
  %v9177 = vld [vmem:[%s19 + $0x1e0] sm:$0xff]
  %v9178 = vld [vmem:[%s19 + $0x1e8] sm:$0xff]
  %v9179 = vld [vmem:[%s19 + $0x1f0] sm:$0xff]
  %v9180 = vld [vmem:[%s19 + $0x1f8] sm:$0xff]
  %v9181 = vld [vmem:[%s19 + $0x200] sm:$0xff]
  %v9182 = vld [vmem:[%s19 + $0x208] sm:$0xff]
  %v9183 = vld [vmem:[%s19 + $0x210] sm:$0xff]
  %v9184 = vld [vmem:[%s19 + $0x218] sm:$0xff]
  %v9185 = vld [vmem:[%s19 + $0x220] sm:$0xff]
  %v9186 = vld [vmem:[%s19 + $0x228] sm:$0xff]
  %v9187 = vld [vmem:[%s19 + $0x230] sm:$0xff]
  %v9188 = vld [vmem:[%s19 + $0x238] sm:$0xff]
  %v9189 = vld [vmem:[%s19 + $0x240] sm:$0xff]
  %v9190 = vld [vmem:[%s19 + $0x248] sm:$0xff]
  %v9191 = vld [vmem:[%s19 + $0x250] sm:$0xff]
  %v9192 = vld [vmem:[%s19 + $0x258] sm:$0xff]
  %v9193 = vld [vmem:[%s19 + $0x260] sm:$0xff]
  %v9194 = vld [vmem:[%s19 + $0x268] sm:$0xff]
  %v9195 = vld [vmem:[%s19 + $0x270] sm:$0xff]
  %v9196 = vld [vmem:[%s19 + $0x278] sm:$0xff]
  %9197 = vmatprep.subr.mxu0 0.0
  %9198 = vmatpush1.msra.mxu0 %v9117
  %9199 = vmatprep.subr.mxu0 0.0
  %9200 = vmatpush1.msra.mxu0 %v9118
  %9201 = vmatprep.subr.mxu0 0.0
  %9202 = vmatpush1.msra.mxu0 %v9119
  %9203 = vmatprep.subr.mxu0 0.0
  %9204 = vmatpush1.msra.mxu0 %v9120
  %9205 = vmatprep.subr.mxu0 0.0
  %9206 = vmatpush1.msra.mxu0 %v9121
  %9207 = vmatprep.subr.mxu0 0.0
  %9208 = vmatpush1.msra.mxu0 %v9122
  %9209 = vmatprep.subr.mxu0 0.0
  %9210 = vmatpush1.msra.mxu0 %v9123
  %9211 = vmatprep.subr.mxu0 0.0
  %9212 = vmatpush1.msra.mxu0 %v9124
  %9213 = vmatprep.subr.mxu0 0.0
  %9214 = vmatpush1.msra.mxu0 %v9125
  %9215 = vmatprep.subr.mxu0 0.0
  %9216 = vmatpush1.msra.mxu0 %v9126
  %9217 = vmatprep.subr.mxu0 0.0
  %9218 = vmatpush1.msra.mxu0 %v9127
  %9219 = vmatprep.subr.mxu0 0.0
  %9220 = vmatpush1.msra.mxu0 %v9128
  %9221 = vmatprep.subr.mxu0 0.0
  %9222 = vmatpush1.msra.mxu0 %v9129
  %9223 = vmatprep.subr.mxu0 0.0
  %9224 = vmatpush1.msra.mxu0 %v9130
  %9225 = vmatprep.subr.mxu0 0.0
  %9226 = vmatpush1.msra.mxu0 %v9131
  %9227 = vmatprep.subr.mxu0 0.0
  %9228 = vmatpush1.msra.mxu0 %v9132
  %9229 = vmatprep.subr.mxu0 0.0
  %9230 = vmatpush1.msra.mxu0 %v9133
  %9231 = vmatprep.subr.mxu0 0.0
  %9232 = vmatpush1.msra.mxu0 %v9134
  %9233 = vmatprep.subr.mxu0 0.0
  %9234 = vmatpush1.msra.mxu0 %v9135
  %9235 = vmatprep.subr.mxu0 0.0
  %9236 = vmatpush1.msra.mxu0 %v9136
  %9237 = vmatprep.subr.mxu0 0.0
  %9238 = vmatpush1.msra.mxu0 %v9137
  %9239 = vmatprep.subr.mxu0 0.0
  %9240 = vmatpush1.msra.mxu0 %v9138
  %9241 = vmatprep.subr.mxu0 0.0
  %9242 = vmatpush1.msra.mxu0 %v9139
  %9243 = vmatprep.subr.mxu0 0.0
  %9244 = vmatpush1.msra.mxu0 %v9140
  %9245 = vmatprep.subr.mxu0 0.0
  %9246 = vmatpush1.msra.mxu0 %v9141
  %9247 = vmatprep.subr.mxu0 0.0
  %9248 = vmatpush1.msra.mxu0 %v9142
  %9249 = vmatprep.subr.mxu0 0.0
  %9250 = vmatpush1.msra.mxu0 %v9143
  %9251 = vmatprep.subr.mxu0 0.0
  %9252 = vmatpush1.msra.mxu0 %v9144
  %9253 = vmatprep.subr.mxu0 0.0
  %9254 = vmatpush1.msra.mxu0 %v9145
  %9255 = vmatprep.subr.mxu0 0.0
  %9256 = vmatpush1.msra.mxu0 %v9146
  %9257 = vmatprep.subr.mxu0 0.0
  %9258 = vmatpush1.msra.mxu0 %v9147
  %9259 = vmatprep.subr.mxu0 0.0
  %9260 = vmatpush1.msra.mxu0 %v9148
  %9261 = vmatprep.mubr.f32.mxu0 %v9113
  %9262 = vmatmul.mubr.f32.gmra.mrb[0].mxu0 %v9112
  %v9263 = vpop.f32.mrb[0].mxu0
  %v9264 = vadd.f32 0.0, %v9263
  %v9265 = vpop.f32.mrb[0].mxu0
  %9266 = vdwg.mxu0
  %9267 = vmatprep.subr.mxu0 0.0
  %9268 = vmatpush1.msra.mxu0 %v9149
  %9269 = vmatprep.subr.mxu0 0.0
  %9270 = vmatpush1.msra.mxu0 %v9150
  %9271 = vmatprep.subr.mxu0 0.0
  %9272 = vmatpush1.msra.mxu0 %v9151
  %9273 = vmatprep.subr.mxu0 0.0
  %9274 = vmatpush1.msra.mxu0 %v9152
  %9275 = vmatprep.subr.mxu0 0.0
  %9276 = vmatpush1.msra.mxu0 %v9153
  %9277 = vmatprep.subr.mxu0 0.0
  %9278 = vmatpush1.msra.mxu0 %v9154
  %9279 = vmatprep.subr.mxu0 0.0
  %9280 = vmatpush1.msra.mxu0 %v9155
  %9281 = vmatprep.subr.mxu0 0.0
  %9282 = vmatpush1.msra.mxu0 %v9156
  %9283 = vmatprep.subr.mxu0 0.0
  %9284 = vmatpush1.msra.mxu0 %v9157
  %9285 = vmatprep.subr.mxu0 0.0
  %9286 = vmatpush1.msra.mxu0 %v9158
  %9287 = vmatprep.subr.mxu0 0.0
  %9288 = vmatpush1.msra.mxu0 %v9159
  %9289 = vmatprep.subr.mxu0 0.0
  %9290 = vmatpush1.msra.mxu0 %v9160
  %9291 = vmatprep.subr.mxu0 0.0
  %9292 = vmatpush1.msra.mxu0 %v9161
  %9293 = vmatprep.subr.mxu0 0.0
  %9294 = vmatpush1.msra.mxu0 %v9162
  %9295 = vmatprep.subr.mxu0 0.0
  %9296 = vmatpush1.msra.mxu0 %v9163
  %9297 = vmatprep.subr.mxu0 0.0
  %9298 = vmatpush1.msra.mxu0 %v9164
  %9299 = vmatprep.subr.mxu0 0.0
  %9300 = vmatpush1.msra.mxu0 %v9165
  %9301 = vmatprep.subr.mxu0 0.0
  %9302 = vmatpush1.msra.mxu0 %v9166
  %9303 = vmatprep.subr.mxu0 0.0
  %9304 = vmatpush1.msra.mxu0 %v9167
  %9305 = vmatprep.subr.mxu0 0.0
  %9306 = vmatpush1.msra.mxu0 %v9168
  %9307 = vmatprep.subr.mxu0 0.0
  %9308 = vmatpush1.msra.mxu0 %v9169
  %9309 = vmatprep.subr.mxu0 0.0
  %9310 = vmatpush1.msra.mxu0 %v9170
  %9311 = vmatprep.subr.mxu0 0.0
  %9312 = vmatpush1.msra.mxu0 %v9171
  %9313 = vmatprep.subr.mxu0 0.0
  %9314 = vmatpush1.msra.mxu0 %v9172
  %9315 = vmatprep.subr.mxu0 0.0
  %9316 = vmatpush1.msra.mxu0 %v9173
  %9317 = vmatprep.subr.mxu0 0.0
  %9318 = vmatpush1.msra.mxu0 %v9174
  %9319 = vmatprep.subr.mxu0 0.0
  %9320 = vmatpush1.msra.mxu0 %v9175
  %9321 = vmatprep.subr.mxu0 0.0
  %9322 = vmatpush1.msra.mxu0 %v9176
  %9323 = vmatprep.subr.mxu0 0.0
  %9324 = vmatpush1.msra.mxu0 %v9177
  %9325 = vmatprep.subr.mxu0 0.0
  %9326 = vmatpush1.msra.mxu0 %v9178
  %9327 = vmatprep.subr.mxu0 0.0
  %9328 = vmatpush1.msra.mxu0 %v9179
  %9329 = vmatprep.subr.mxu0 0.0
  %9330 = vmatpush1.msra.mxu0 %v9180
  %9331 = vmatprep.mubr.f32.mxu0 %v9115
  %9332 = vmatmul.mubr.f32.gmra.mrb[0].mxu0 %v9114
  %v9333 = vpop.f32.mrb[0].mxu0
  %v9334 = vadd.f32 %v9264, %v9333
  %v9335 = vpop.f32.mrb[0].mxu0
  %9336 = vdwg.mxu0
  %9337 = vmatprep.subr.mxu0 0.0
  %9338 = vmatpush1.msra.mxu0 %v9181
  %9339 = vmatprep.subr.mxu0 0.0
  %9340 = vmatpush1.msra.mxu0 %v9182
  %9341 = vmatprep.subr.mxu0 0.0
  %9342 = vmatpush1.msra.mxu0 %v9183
  %9343 = vmatprep.subr.mxu0 0.0
  %9344 = vmatpush1.msra.mxu0 %v9184
  %9345 = vmatprep.subr.mxu0 0.0
  %9346 = vmatpush1.msra.mxu0 %v9185
  %9347 = vmatprep.subr.mxu0 0.0
  %9348 = vmatpush1.msra.mxu0 %v9186
  %9349 = vmatprep.subr.mxu0 0.0
  %9350 = vmatpush1.msra.mxu0 %v9187
  %9351 = vmatprep.subr.mxu0 0.0
  %9352 = vmatpush1.msra.mxu0 %v9188
  %9353 = vmatprep.subr.mxu0 0.0
  %9354 = vmatpush1.msra.mxu0 %v9189
  %9355 = vmatprep.subr.mxu0 0.0
  %9356 = vmatpush1.msra.mxu0 %v9190
  %9357 = vmatprep.subr.mxu0 0.0
  %9358 = vmatpush1.msra.mxu0 %v9191
  %9359 = vmatprep.subr.mxu0 0.0
  %9360 = vmatpush1.msra.mxu0 %v9192
  %9361 = vmatprep.subr.mxu0 0.0
  %9362 = vmatpush1.msra.mxu0 %v9193
  %9363 = vmatprep.subr.mxu0 0.0
  %9364 = vmatpush1.msra.mxu0 %v9194
  %9365 = vmatprep.subr.mxu0 0.0
  %9366 = vmatpush1.msra.mxu0 %v9195
  %9367 = vmatprep.subr.mxu0 0.0
  %9368 = vmatpush1.msra.mxu0 %v9196
  %9369 = vmatprep.subr.mxu0 0.0
  %9370 = vmatpush1.msra.mxu0 0.0
  %9371 = vmatprep.subr.mxu0 0.0
  %9372 = vmatpush1.msra.mxu0 0.0
  %9373 = vmatprep.subr.mxu0 0.0
  %9374 = vmatpush1.msra.mxu0 0.0
  %9375 = vmatprep.subr.mxu0 0.0
  %9376 = vmatpush1.msra.mxu0 0.0
  %9377 = vmatprep.subr.mxu0 0.0
  %9378 = vmatpush1.msra.mxu0 0.0
  %9379 = vmatprep.subr.mxu0 0.0
  %9380 = vmatpush1.msra.mxu0 0.0
  %9381 = vmatprep.subr.mxu0 0.0
  %9382 = vmatpush1.msra.mxu0 0.0
  %9383 = vmatprep.subr.mxu0 0.0
  %9384 = vmatpush1.msra.mxu0 0.0
  %9385 = vmatprep.subr.mxu0 0.0
  %9386 = vmatpush1.msra.mxu0 0.0
  %9387 = vmatprep.subr.mxu0 0.0
  %9388 = vmatpush1.msra.mxu0 0.0
  %9389 = vmatprep.subr.mxu0 0.0
  %9390 = vmatpush1.msra.mxu0 0.0
  %9391 = vmatprep.subr.mxu0 0.0
  %9392 = vmatpush1.msra.mxu0 0.0
  %9393 = vmatprep.subr.mxu0 0.0
  %9394 = vmatpush1.msra.mxu0 0.0
  %9395 = vmatprep.subr.mxu0 0.0
  %9396 = vmatpush1.msra.mxu0 0.0
  %9397 = vmatprep.subr.mxu0 0.0
  %9398 = vmatpush1.msra.mxu0 0.0
  %9399 = vmatprep.subr.mxu0 0.0
  %9400 = vmatpush1.msra.mxu0 0.0
  %9401 = vmatprep.mubr.f32.mxu0 0.0
  %9402 = vmatmul.mubr.f32.gmra.mrb[0].mxu0 %v9116
  %v9403 = vpop.f32.mrb[0].mxu0
  %v9404 = vadd.f32 %v9334, %v9403
  %v9405 = vpop.f32.mrb[0].mxu0
  %9406 = vdwg.mxu0
  %v9407 = vrcp.pop 256.0
  %v9408 = vmul.f32 %v9404, %v9407
  %v9409 = vld [vmem:[%s21] sm:$0xff]
  %v9410 = vld [vmem:[%s21 + $0x8] sm:$0xff]
  %v9411 = vld [vmem:[%s21 + $0x10] sm:$0xff]
  %v9412 = vld [vmem:[%s21 + $0x18] sm:$0xff]
  %v9413 = vld [vmem:[%s21 + $0x20] sm:$0xff]
  %v9414 = vld [vmem:[%s22] sm:$0x1]
  %v9416 = vlaneseq
  %v9417 = vshrl.u32 %v9416, 7
  %v9418 = vsub.s32 0, %v9417
  %v9419 = vrot.slane %v9414, %v9418
  %vm9421 = vcmask 326656
  %v9423 = vsel %vm9421, %v9408, 0
  %9425 = vmatprep.subr.mxu0 0.0
  %9426 = vmatpush1.msra.mxu0 %v9409
  %9427 = vmatprep.subr.mxu0 0.0
  %9428 = vmatpush1.msra.mxu0 %v9410
  %9429 = vmatprep.subr.mxu0 0.0
  %9430 = vmatpush1.msra.mxu0 %v9411
  %9431 = vmatprep.subr.mxu0 0.0
  %9432 = vmatpush1.msra.mxu0 %v9412
  %9433 = vmatprep.subr.mxu0 0.0
  %9434 = vmatpush1.msra.mxu0 %v9413
  %9435 = vmatprep.subr.mxu0 0.0
  %9436 = vmatpush1.msra.mxu0 0.0
  %9437 = vmatprep.subr.mxu0 0.0
  %9438 = vmatpush1.msra.mxu0 0.0
  %9439 = vmatprep.subr.mxu0 0.0
  %9440 = vmatpush1.msra.mxu0 0.0
  %9441 = vmatprep.subr.mxu0 0.0
  %9442 = vmatpush1.msra.mxu0 0.0
  %9443 = vmatprep.subr.mxu0 0.0
  %9444 = vmatpush1.msra.mxu0 0.0
  %9445 = vmatprep.subr.mxu0 0.0
  %9446 = vmatpush1.msra.mxu0 0.0
  %9447 = vmatprep.subr.mxu0 0.0
  %9448 = vmatpush1.msra.mxu0 0.0
  %9449 = vmatprep.subr.mxu0 0.0
  %9450 = vmatpush1.msra.mxu0 0.0
  %9451 = vmatprep.subr.mxu0 0.0
  %9452 = vmatpush1.msra.mxu0 0.0
  %9453 = vmatprep.subr.mxu0 0.0
  %9454 = vmatpush1.msra.mxu0 0.0
  %9455 = vmatprep.subr.mxu0 0.0
  %9456 = vmatpush1.msra.mxu0 0.0
  %9457 = vmatprep.subr.mxu0 0.0
  %9458 = vmatpush1.msra.mxu0 0.0
  %9459 = vmatprep.subr.mxu0 0.0
  %9460 = vmatpush1.msra.mxu0 0.0
  %9461 = vmatprep.subr.mxu0 0.0
  %9462 = vmatpush1.msra.mxu0 0.0
  %9463 = vmatprep.subr.mxu0 0.0
  %9464 = vmatpush1.msra.mxu0 0.0
  %9465 = vmatprep.subr.mxu0 0.0
  %9466 = vmatpush1.msra.mxu0 0.0
  %9467 = vmatprep.subr.mxu0 0.0
  %9468 = vmatpush1.msra.mxu0 0.0
  %9469 = vmatprep.subr.mxu0 0.0
  %9470 = vmatpush1.msra.mxu0 0.0
  %9471 = vmatprep.subr.mxu0 0.0
  %9472 = vmatpush1.msra.mxu0 0.0
  %9473 = vmatprep.subr.mxu0 0.0
  %9474 = vmatpush1.msra.mxu0 0.0
  %9475 = vmatprep.subr.mxu0 0.0
  %9476 = vmatpush1.msra.mxu0 0.0
  %9477 = vmatprep.subr.mxu0 0.0
  %9478 = vmatpush1.msra.mxu0 0.0
  %9479 = vmatprep.subr.mxu0 0.0
  %9480 = vmatpush1.msra.mxu0 0.0
  %9481 = vmatprep.subr.mxu0 0.0
  %9482 = vmatpush1.msra.mxu0 0.0
  %9483 = vmatprep.subr.mxu0 0.0
  %9484 = vmatpush1.msra.mxu0 0.0
  %9485 = vmatprep.subr.mxu0 0.0
  %9486 = vmatpush1.msra.mxu0 0.0
  %9487 = vmatprep.subr.mxu0 0.0
  %9488 = vmatpush1.msra.mxu0 0.0
  %9489 = vmatprep.mubr.f32.mxu0 0.0
  %9490 = vmatmul.mubr.f32.gmra.mrb[0].mxu0 %v9423
  %v9491 = vpop.f32.mrb[0].mxu0
  %v9492 = vadd.f32 %v9419, %v9491
  %v9493 = vpop.f32.mrb[0].mxu0
  %9494 = vdwg.mxu0
  %v9495 = vmax.f32 %v9492, 0.0
  %v9496 = vld [vmem:[%s23] sm:$0x1f]
  %v9497 = vld [vmem:[%s24] sm:$0x1]
  %v9499 = vlaneseq
  %v9500 = vshrl.u32 %v9499, 7
  %v9501 = vsub.s32 0, %v9500
  %v9502 = vrot.slane %v9497, %v9501
  %vm9504 = vcmask 39936
  %v9506 = vsel %vm9504, %v9495, 0
  %vm9508 = vcmask 1044480
  %v9510 = vsel %vm9508, %v9496, 0
  %9512 = vmatprep.subr.mxu0 0.0
  %9513 = vmatpush1.msra.mxu0 %v9510
  %9514 = vmatprep.subr.mxu0 0.0
  %9515 = vmatpush1.msra.mxu0 0.0
  %9516 = vmatprep.subr.mxu0 0.0
  %9517 = vmatpush1.msra.mxu0 0.0
  %9518 = vmatprep.subr.mxu0 0.0
  %9519 = vmatpush1.msra.mxu0 0.0
  %9520 = vmatprep.subr.mxu0 0.0
  %9521 = vmatpush1.msra.mxu0 0.0
  %9522 = vmatprep.subr.mxu0 0.0
  %9523 = vmatpush1.msra.mxu0 0.0
  %9524 = vmatprep.subr.mxu0 0.0
  %9525 = vmatpush1.msra.mxu0 0.0
  %9526 = vmatprep.subr.mxu0 0.0
  %9527 = vmatpush1.msra.mxu0 0.0
  %9528 = vmatprep.subr.mxu0 0.0
  %9529 = vmatpush1.msra.mxu0 0.0
  %9530 = vmatprep.subr.mxu0 0.0
  %9531 = vmatpush1.msra.mxu0 0.0
  %9532 = vmatprep.subr.mxu0 0.0
  %9533 = vmatpush1.msra.mxu0 0.0
  %9534 = vmatprep.subr.mxu0 0.0
  %9535 = vmatpush1.msra.mxu0 0.0
  %9536 = vmatprep.subr.mxu0 0.0
  %9537 = vmatpush1.msra.mxu0 0.0
  %9538 = vmatprep.subr.mxu0 0.0
  %9539 = vmatpush1.msra.mxu0 0.0
  %9540 = vmatprep.subr.mxu0 0.0
  %9541 = vmatpush1.msra.mxu0 0.0
  %9542 = vmatprep.subr.mxu0 0.0
  %9543 = vmatpush1.msra.mxu0 0.0
  %9544 = vmatprep.subr.mxu0 0.0
  %9545 = vmatpush1.msra.mxu0 0.0
  %9546 = vmatprep.subr.mxu0 0.0
  %9547 = vmatpush1.msra.mxu0 0.0
  %9548 = vmatprep.subr.mxu0 0.0
  %9549 = vmatpush1.msra.mxu0 0.0
  %9550 = vmatprep.subr.mxu0 0.0
  %9551 = vmatpush1.msra.mxu0 0.0
  %9552 = vmatprep.subr.mxu0 0.0
  %9553 = vmatpush1.msra.mxu0 0.0
  %9554 = vmatprep.subr.mxu0 0.0
  %9555 = vmatpush1.msra.mxu0 0.0
  %9556 = vmatprep.subr.mxu0 0.0
  %9557 = vmatpush1.msra.mxu0 0.0
  %9558 = vmatprep.subr.mxu0 0.0
  %9559 = vmatpush1.msra.mxu0 0.0
  %9560 = vmatprep.subr.mxu0 0.0
  %9561 = vmatpush1.msra.mxu0 0.0
  %9562 = vmatprep.subr.mxu0 0.0
  %9563 = vmatpush1.msra.mxu0 0.0
  %9564 = vmatprep.subr.mxu0 0.0
  %9565 = vmatpush1.msra.mxu0 0.0
  %9566 = vmatprep.subr.mxu0 0.0
  %9567 = vmatpush1.msra.mxu0 0.0
  %9568 = vmatprep.subr.mxu0 0.0
  %9569 = vmatpush1.msra.mxu0 0.0
  %9570 = vmatprep.subr.mxu0 0.0
  %9571 = vmatpush1.msra.mxu0 0.0
  %9572 = vmatprep.subr.mxu0 0.0
  %9573 = vmatpush1.msra.mxu0 0.0
  %9574 = vmatprep.subr.mxu0 0.0
  %9575 = vmatpush1.msra.mxu0 0.0
  %9576 = vmatprep.mubr.f32.mxu0 0.0
  %9577 = vmatmul.mubr.f32.gmra.mrb[0].mxu0 %v9506
  %v9578 = vpop.f32.mrb[0].mxu0
  %v9579 = vadd.f32 %v9502, %v9578
  %v9580 = vpop.f32.mrb[0].mxu0
  %9581 = vdwg.mxu0
  %v9582 = vsub.f32 0.0, %v9579
  %v9583 = vmul.f32 %v9582, 1.442695
  %v9584 = vpow.pop %v9583
  %v9585 = vadd.f32 %v9584, 1.0
  %v9586 = vrcp.pop %v9585
  %v9587 = vmul.f32 1.0, %v9586
  %v9588 = vld [vmem:[%s20] sm:$0xff]
  %v9589 = vld [vmem:[%s20 + $0x8] sm:$0xff]
  %v9590 = vld [vmem:[%s20 + $0x10] sm:$0xff]
  %v9591 = vld [vmem:[%s20 + $0x18] sm:$0xff]
  %v9592 = vld [vmem:[%s20 + $0x20] sm:$0xff]
  %v9593 = vld [vmem:[%s20 + $0x28] sm:$0xff]
  %v9594 = vld [vmem:[%s20 + $0x30] sm:$0xff]
  %v9595 = vld [vmem:[%s20 + $0x38] sm:$0xff]
  %v9596 = vld [vmem:[%s20 + $0x40] sm:$0xff]
  %v9597 = vld [vmem:[%s20 + $0x48] sm:$0xff]
  %v9598 = vld [vmem:[%s20 + $0x50] sm:$0xff]
  %v9599 = vld [vmem:[%s20 + $0x58] sm:$0xff]
  %v9600 = vld [vmem:[%s20 + $0x60] sm:$0xff]
  %v9601 = vld [vmem:[%s20 + $0x68] sm:$0xff]
  %v9602 = vld [vmem:[%s20 + $0x70] sm:$0xff]
  %v9603 = vld [vmem:[%s20 + $0x78] sm:$0xff]
  %v9604 = vld [vmem:[%s20 + $0x80] sm:$0xff]
  %v9605 = vld [vmem:[%s20 + $0x88] sm:$0xff]
  %v9606 = vld [vmem:[%s20 + $0x90] sm:$0xff]
  %v9607 = vld [vmem:[%s20 + $0x98] sm:$0xff]
  %v9608 = vld [vmem:[%s20 + $0xa0] sm:$0xff]
  %v9609 = vld [vmem:[%s20 + $0xa8] sm:$0xff]
  %v9610 = vld [vmem:[%s20 + $0xb0] sm:$0xff]
  %v9611 = vld [vmem:[%s20 + $0xb8] sm:$0xff]
  %v9612 = vld [vmem:[%s20 + $0xc0] sm:$0xff]
  %v9614 = vsel %vm9421, %v9587, 0
  %9616 = vmatprep.subr.mxu0 %v9589
  %9617 = vmatpush1.msra.mxu0 %v9588
  %9618 = vmatprep.subr.mxu0 %v9594
  %9619 = vmatpush1.msra.mxu0 %v9593
  %9620 = vmatprep.subr.mxu0 %v9599
  %9621 = vmatpush1.msra.mxu0 %v9598
  %9622 = vmatprep.subr.mxu0 %v9604
  %9623 = vmatpush1.msra.mxu0 %v9603
  %9624 = vmatprep.subr.mxu0 %v9609
  %9625 = vmatpush1.msra.mxu0 %v9608
  %9626 = vmatprep.subr.mxu0 0.0
  %9627 = vmatpush1.msra.mxu0 0.0
  %9628 = vmatprep.subr.mxu0 0.0
  %9629 = vmatpush1.msra.mxu0 0.0
  %9630 = vmatprep.subr.mxu0 0.0
  %9631 = vmatpush1.msra.mxu0 0.0
  %9632 = vmatprep.subr.mxu0 0.0
  %9633 = vmatpush1.msra.mxu0 0.0
  %9634 = vmatprep.subr.mxu0 0.0
  %9635 = vmatpush1.msra.mxu0 0.0
  %9636 = vmatprep.subr.mxu0 0.0
  %9637 = vmatpush1.msra.mxu0 0.0
  %9638 = vmatprep.subr.mxu0 0.0
  %9639 = vmatpush1.msra.mxu0 0.0
  %9640 = vmatprep.subr.mxu0 0.0
  %9641 = vmatpush1.msra.mxu0 0.0
  %9642 = vmatprep.subr.mxu0 0.0
  %9643 = vmatpush1.msra.mxu0 0.0
  %9644 = vmatprep.subr.mxu0 0.0
  %9645 = vmatpush1.msra.mxu0 0.0
  %9646 = vmatprep.subr.mxu0 0.0
  %9647 = vmatpush1.msra.mxu0 0.0
  %9648 = vmatprep.subr.mxu0 0.0
  %9649 = vmatpush1.msra.mxu0 0.0
  %9650 = vmatprep.subr.mxu0 0.0
  %9651 = vmatpush1.msra.mxu0 0.0
  %9652 = vmatprep.subr.mxu0 0.0
  %9653 = vmatpush1.msra.mxu0 0.0
  %9654 = vmatprep.subr.mxu0 0.0
  %9655 = vmatpush1.msra.mxu0 0.0
  %9656 = vmatprep.subr.mxu0 0.0
  %9657 = vmatpush1.msra.mxu0 0.0
  %9658 = vmatprep.subr.mxu0 0.0
  %9659 = vmatpush1.msra.mxu0 0.0
  %9660 = vmatprep.subr.mxu0 0.0
  %9661 = vmatpush1.msra.mxu0 0.0
  %9662 = vmatprep.subr.mxu0 0.0
  %9663 = vmatpush1.msra.mxu0 0.0
  %9664 = vmatprep.subr.mxu0 0.0
  %9665 = vmatpush1.msra.mxu0 0.0
  %9666 = vmatprep.subr.mxu0 0.0
  %9667 = vmatpush1.msra.mxu0 0.0
  %9668 = vmatprep.subr.mxu0 0.0
  %9669 = vmatpush1.msra.mxu0 0.0
  %9670 = vmatprep.subr.mxu0 0.0
  %9671 = vmatpush1.msra.mxu0 0.0
  %9672 = vmatprep.subr.mxu0 0.0
  %9673 = vmatpush1.msra.mxu0 0.0
  %9674 = vmatprep.subr.mxu0 0.0
  %9675 = vmatpush1.msra.mxu0 0.0
  %9676 = vmatprep.subr.mxu0 0.0
  %9677 = vmatpush1.msra.mxu0 0.0
  %9678 = vmatprep.subr.mxu0 0.0
  %9679 = vmatpush1.msra.mxu0 0.0
  %9680 = vmatprep.mubr.f32.mxu0 0.0
  %9681 = vmatmul.mubr.f32.gmra.mrb[0].mxu0 %v9614
  %v9682 = vpop.f32.mrb[0].mxu0
  %v9683 = vadd.f32 0.0, %v9682
  %v9684 = vpop.f32.mrb[0].mxu0
  %v9685 = vadd.f32 0.0, %v9684
  %9686 = vdwg.mxu0
  %9687 = vmatprep.subr.mxu0 %v9591
  %9688 = vmatpush1.msra.mxu0 %v9590
  %9689 = vmatprep.subr.mxu0 %v9596
  %9690 = vmatpush1.msra.mxu0 %v9595
  %9691 = vmatprep.subr.mxu0 %v9601
  %9692 = vmatpush1.msra.mxu0 %v9600
  %9693 = vmatprep.subr.mxu0 %v9606
  %9694 = vmatpush1.msra.mxu0 %v9605
  %9695 = vmatprep.subr.mxu0 %v9611
  %9696 = vmatpush1.msra.mxu0 %v9610
  %9697 = vmatprep.subr.mxu0 0.0
  %9698 = vmatpush1.msra.mxu0 0.0
  %9699 = vmatprep.subr.mxu0 0.0
  %9700 = vmatpush1.msra.mxu0 0.0
  %9701 = vmatprep.subr.mxu0 0.0
  %9702 = vmatpush1.msra.mxu0 0.0
  %9703 = vmatprep.subr.mxu0 0.0
  %9704 = vmatpush1.msra.mxu0 0.0
  %9705 = vmatprep.subr.mxu0 0.0
  %9706 = vmatpush1.msra.mxu0 0.0
  %9707 = vmatprep.subr.mxu0 0.0
  %9708 = vmatpush1.msra.mxu0 0.0
  %9709 = vmatprep.subr.mxu0 0.0
  %9710 = vmatpush1.msra.mxu0 0.0
  %9711 = vmatprep.subr.mxu0 0.0
  %9712 = vmatpush1.msra.mxu0 0.0
  %9713 = vmatprep.subr.mxu0 0.0
  %9714 = vmatpush1.msra.mxu0 0.0
  %9715 = vmatprep.subr.mxu0 0.0
  %9716 = vmatpush1.msra.mxu0 0.0
  %9717 = vmatprep.subr.mxu0 0.0
  %9718 = vmatpush1.msra.mxu0 0.0
  %9719 = vmatprep.subr.mxu0 0.0
  %9720 = vmatpush1.msra.mxu0 0.0
  %9721 = vmatprep.subr.mxu0 0.0
  %9722 = vmatpush1.msra.mxu0 0.0
  %9723 = vmatprep.subr.mxu0 0.0
  %9724 = vmatpush1.msra.mxu0 0.0
  %9725 = vmatprep.subr.mxu0 0.0
  %9726 = vmatpush1.msra.mxu0 0.0
  %9727 = vmatprep.subr.mxu0 0.0
  %9728 = vmatpush1.msra.mxu0 0.0
  %9729 = vmatprep.subr.mxu0 0.0
  %9730 = vmatpush1.msra.mxu0 0.0
  %9731 = vmatprep.subr.mxu0 0.0
  %9732 = vmatpush1.msra.mxu0 0.0
  %9733 = vmatprep.subr.mxu0 0.0
  %9734 = vmatpush1.msra.mxu0 0.0
  %9735 = vmatprep.subr.mxu0 0.0
  %9736 = vmatpush1.msra.mxu0 0.0
  %9737 = vmatprep.subr.mxu0 0.0
  %9738 = vmatpush1.msra.mxu0 0.0
  %9739 = vmatprep.subr.mxu0 0.0
  %9740 = vmatpush1.msra.mxu0 0.0
  %9741 = vmatprep.subr.mxu0 0.0
  %9742 = vmatpush1.msra.mxu0 0.0
  %9743 = vmatprep.subr.mxu0 0.0
  %9744 = vmatpush1.msra.mxu0 0.0
  %9745 = vmatprep.subr.mxu0 0.0
  %9746 = vmatpush1.msra.mxu0 0.0
  %9747 = vmatprep.subr.mxu0 0.0
  %9748 = vmatpush1.msra.mxu0 0.0
  %9749 = vmatprep.subr.mxu0 0.0
  %9750 = vmatpush1.msra.mxu0 0.0
  %9751 = vmatprep.mubr.f32.mxu0 0.0
  %9752 = vmatmul.mubr.f32.gmra.mrb[0].mxu0 %v9614
  %v9753 = vpop.f32.mrb[0].mxu0
  %v9754 = vadd.f32 0.0, %v9753
  %v9755 = vpop.f32.mrb[0].mxu0
  %v9756 = vadd.f32 0.0, %v9755
  %9757 = vdwg.mxu0
  %9758 = vmatprep.subr.mxu0 0.0
  %9759 = vmatpush1.msra.mxu0 %v9592
  %9760 = vmatprep.subr.mxu0 0.0
  %9761 = vmatpush1.msra.mxu0 %v9597
  %9762 = vmatprep.subr.mxu0 0.0
  %9763 = vmatpush1.msra.mxu0 %v9602
  %9764 = vmatprep.subr.mxu0 0.0
  %9765 = vmatpush1.msra.mxu0 %v9607
  %9766 = vmatprep.subr.mxu0 0.0
  %9767 = vmatpush1.msra.mxu0 %v9612
  %9768 = vmatprep.subr.mxu0 0.0
  %9769 = vmatpush1.msra.mxu0 0.0
  %9770 = vmatprep.subr.mxu0 0.0
  %9771 = vmatpush1.msra.mxu0 0.0
  %9772 = vmatprep.subr.mxu0 0.0
  %9773 = vmatpush1.msra.mxu0 0.0
  %9774 = vmatprep.subr.mxu0 0.0
  %9775 = vmatpush1.msra.mxu0 0.0
  %9776 = vmatprep.subr.mxu0 0.0
  %9777 = vmatpush1.msra.mxu0 0.0
  %9778 = vmatprep.subr.mxu0 0.0
  %9779 = vmatpush1.msra.mxu0 0.0
  %9780 = vmatprep.subr.mxu0 0.0
  %9781 = vmatpush1.msra.mxu0 0.0
  %9782 = vmatprep.subr.mxu0 0.0
  %9783 = vmatpush1.msra.mxu0 0.0
  %9784 = vmatprep.subr.mxu0 0.0
  %9785 = vmatpush1.msra.mxu0 0.0
  %9786 = vmatprep.subr.mxu0 0.0
  %9787 = vmatpush1.msra.mxu0 0.0
  %9788 = vmatprep.subr.mxu0 0.0
  %9789 = vmatpush1.msra.mxu0 0.0
  %9790 = vmatprep.subr.mxu0 0.0
  %9791 = vmatpush1.msra.mxu0 0.0
  %9792 = vmatprep.subr.mxu0 0.0
  %9793 = vmatpush1.msra.mxu0 0.0
  %9794 = vmatprep.subr.mxu0 0.0
  %9795 = vmatpush1.msra.mxu0 0.0
  %9796 = vmatprep.subr.mxu0 0.0
  %9797 = vmatpush1.msra.mxu0 0.0
  %9798 = vmatprep.subr.mxu0 0.0
  %9799 = vmatpush1.msra.mxu0 0.0
  %9800 = vmatprep.subr.mxu0 0.0
  %9801 = vmatpush1.msra.mxu0 0.0
  %9802 = vmatprep.subr.mxu0 0.0
  %9803 = vmatpush1.msra.mxu0 0.0
  %9804 = vmatprep.subr.mxu0 0.0
  %9805 = vmatpush1.msra.mxu0 0.0
  %9806 = vmatprep.subr.mxu0 0.0
  %9807 = vmatpush1.msra.mxu0 0.0
  %9808 = vmatprep.subr.mxu0 0.0
  %9809 = vmatpush1.msra.mxu0 0.0
  %9810 = vmatprep.subr.mxu0 0.0
  %9811 = vmatpush1.msra.mxu0 0.0
  %9812 = vmatprep.subr.mxu0 0.0
  %9813 = vmatpush1.msra.mxu0 0.0
  %9814 = vmatprep.subr.mxu0 0.0
  %9815 = vmatpush1.msra.mxu0 0.0
  %9816 = vmatprep.subr.mxu0 0.0
  %9817 = vmatpush1.msra.mxu0 0.0
  %9818 = vmatprep.subr.mxu0 0.0
  %9819 = vmatpush1.msra.mxu0 0.0
  %9820 = vmatprep.subr.mxu0 0.0
  %9821 = vmatpush1.msra.mxu0 0.0
  %9822 = vmatprep.mubr.f32.mxu0 0.0
  %9823 = vmatmul.mubr.f32.gmra.mrb[0].mxu0 %v9614
  %v9824 = vpop.f32.mrb[0].mxu0
  %v9825 = vadd.f32 0.0, %v9824
  %v9826 = vpop.f32.mrb[0].mxu0
  %9827 = vdwg.mxu0
  %v9828 = vlaneseq
  %v9829 = vshrl.u32 %v9828, 7
  %v9830 = vsub.s32 0, %v9829
  %v9831 = vrot.slane %v9683, %v9830
  %v9832 = vlaneseq
  %v9833 = vshrl.u32 %v9832, 7
  %v9834 = vsub.s32 0, %v9833
  %v9835 = vrot.slane %v9685, %v9834
  %v9836 = vlaneseq
  %v9837 = vshrl.u32 %v9836, 7
  %v9838 = vsub.s32 0, %v9837
  %v9839 = vrot.slane %v9754, %v9838
  %v9840 = vlaneseq
  %v9841 = vshrl.u32 %v9840, 7
  %v9842 = vsub.s32 0, %v9841
  %v9843 = vrot.slane %v9756, %v9842
  %v9844 = vlaneseq
  %v9845 = vshrl.u32 %v9844, 7
  %v9846 = vsub.s32 0, %v9845
  %v9847 = vrot.slane %v9825, %v9846
  %v9848 = vlaneseq
  %v9849 = vshrl.u32 %v9848, 7
  %v9850 = vsub.s32 1, %v9849
  %v9851 = vrot.slane %v9683, %v9850
  %v9852 = vlaneseq
  %v9853 = vshrl.u32 %v9852, 7
  %v9854 = vsub.s32 1, %v9853
  %v9855 = vrot.slane %v9685, %v9854
  %v9856 = vlaneseq
  %v9857 = vshrl.u32 %v9856, 7
  %v9858 = vsub.s32 1, %v9857
  %v9859 = vrot.slane %v9754, %v9858
  %v9860 = vlaneseq
  %v9861 = vshrl.u32 %v9860, 7
  %v9862 = vsub.s32 1, %v9861
  %v9863 = vrot.slane %v9756, %v9862
  %v9864 = vlaneseq
  %v9865 = vshrl.u32 %v9864, 7
  %v9866 = vsub.s32 1, %v9865
  %v9867 = vrot.slane %v9825, %v9866
  %v9868 = vmul.f32 %v9022, %v9831
  %v9869 = vmul.f32 %v9023, %v9835
  %v9870 = vmul.f32 %v9024, %v9839
  %v9871 = vmul.f32 %v9025, %v9843
  %v9872 = vmul.f32 %v9026, %v9847
  %v9873 = vmul.f32 %v9027, %v9831
  %v9874 = vmul.f32 %v9028, %v9835
  %v9875 = vmul.f32 %v9029, %v9839
  %v9876 = vmul.f32 %v9030, %v9843
  %v9877 = vmul.f32 %v9031, %v9847
  %v9878 = vmul.f32 %v9032, %v9851
  %v9879 = vmul.f32 %v9033, %v9855
  %v9880 = vmul.f32 %v9034, %v9859
  %v9881 = vmul.f32 %v9035, %v9863
  %v9882 = vmul.f32 %v9036, %v9867
  %v9883 = vmul.f32 %v9037, %v9851
  %v9884 = vmul.f32 %v9038, %v9855
  %v9885 = vmul.f32 %v9039, %v9859
  %v9886 = vmul.f32 %v9040, %v9863
  %v9887 = vmul.f32 %v9041, %v9867
  %v9888 = vadd.f32 %v9868, %v2715
  %v9889 = vadd.f32 %v9869, %v2717
  %v9890 = vadd.f32 %v9870, %v2821
  %v9891 = vadd.f32 %v9871, %v2823
  %v9892 = vadd.f32 %v9872, %v2923
  %v9893 = vadd.f32 %v9873, %v2719
  %v9894 = vadd.f32 %v9874, %v2721
  %v9895 = vadd.f32 %v9875, %v2825
  %v9896 = vadd.f32 %v9876, %v2827
  %v9897 = vadd.f32 %v9877, %v2926
  %v9898 = vadd.f32 %v9878, %v2725
  %v9899 = vadd.f32 %v9879, %v2727
  %v9900 = vadd.f32 %v9880, %v2831
  %v9901 = vadd.f32 %v9881, %v2833
  %v9902 = vadd.f32 %v9882, %v2931
  %v9903 = vadd.f32 %v9883, %v2729
  %v9904 = vadd.f32 %v9884, %v2731
  %v9905 = vadd.f32 %v9885, %v2835
  %v9906 = vadd.f32 %v9886, %v2837
  %v9907 = vadd.f32 %v9887, %v2934
  %9908 = vst [vmem:[%s25] sm:$0xff] %v9888
  %9909 = vst [vmem:[%s25 + $0x8] sm:$0xff] %v9889
  %9910 = vst [vmem:[%s25 + $0x10] sm:$0xff] %v9890
  %9911 = vst [vmem:[%s25 + $0x18] sm:$0xff] %v9891
  %9912 = vst [vmem:[%s25 + $0x20] sm:$0xff] %v9892
  %9913 = vst [vmem:[%s25 + $0x28] sm:$0xff] %v9893
  %9914 = vst [vmem:[%s25 + $0x30] sm:$0xff] %v9894
  %9915 = vst [vmem:[%s25 + $0x38] sm:$0xff] %v9895
  %9916 = vst [vmem:[%s25 + $0x40] sm:$0xff] %v9896
  %9917 = vst [vmem:[%s25 + $0x48] sm:$0xff] %v9897
  %9918 = vst [vmem:[%s25 + $0x50] sm:$0xff] %v9898
  %9919 = vst [vmem:[%s25 + $0x58] sm:$0xff] %v9899
  %9920 = vst [vmem:[%s25 + $0x60] sm:$0xff] %v9900
  %9921 = vst [vmem:[%s25 + $0x68] sm:$0xff] %v9901
  %9922 = vst [vmem:[%s25 + $0x70] sm:$0xff] %v9902
  %9923 = vst [vmem:[%s25 + $0x78] sm:$0xff] %v9903
  %9924 = vst [vmem:[%s25 + $0x80] sm:$0xff] %v9904
  %9925 = vst [vmem:[%s25 + $0x88] sm:$0xff] %v9905
  %9926 = vst [vmem:[%s25 + $0x90] sm:$0xff] %v9906
  %9927 = vst [vmem:[%s25 + $0x98] sm:$0xff] %v9907
  // Predicated region
  $region102: #{se_res2net_block2d.1} parent=0 // pred_check
    _
  $region103: #{se_res2net_block2d.1} parent=0 // pred_check_branch
    %9929 = sbr.rel (0) target = $region105
  $region104: #{se_res2net_block2d.1} parent=0 // pred_region
    _
  $region105: #{se_res2net_block2d.1} parent=0 // pred_fallthru
    _
  // Predicated region
  $region106: #{se_res2net_block2d.1} parent=0 // pred_check
    _
  $region107: #{se_res2net_block2d.1} parent=0 // pred_check_branch
    %9931 = sbr.rel (0) target = $region109
  $region108: #{se_res2net_block2d.1} parent=0 // pred_region
    _
  $region109: #{se_res2net_block2d.1} parent=0 // pred_fallthru
    _

</llo_original>
